<compile_context>
chip_gen: v6e
topology: v6e:2x2x1
jax: 0.10.0
libtpu: 0.0.40
codegen_flags: <defaults>
</compile_context>

<pallas_src>
import functools

import jax
import jax.numpy as jnp
import numpy as np
from jax.experimental import pallas as pl
from jax.experimental.pallas import tpu as pltpu

_A = -0.75  # cubic-convolution constant used by torch grid_sample (bicubic)


def _cubic1(u):
    return ((_A + 2.0) * u - (_A + 3.0)) * u * u + 1.0


def _cubic2(u):
    return ((_A * u - 5.0 * _A) * u + 8.0 * _A) * u - 4.0 * _A


def _bicubic_weight_matrix(coord, size):
    """coord: (B, P) normalized coords (grid_sample convention, align_corners=False).
    Returns (B, P, size) f32 weights s.t. sampled = weights @ signal, with
    padding_mode='zeros' (out-of-bounds taps get weight 0)."""
    src = ((coord + 1.0) * size - 1.0) * 0.5  # unnormalize
    base = jnp.floor(src)
    t = src - base
    coeffs = jnp.stack(
        [_cubic2(t + 1.0), _cubic1(t), _cubic1(1.0 - t), _cubic2(2.0 - t)],
        axis=-1)                                                  # (B, P, 4)
    # integer tap comparison (review note: avoid float equality on floor()).
    taps = base[..., None].astype(jnp.int32) + jnp.arange(-1, 3, dtype=jnp.int32)
    grid_idx = jnp.arange(size, dtype=jnp.int32)                  # (size,)
    onehot = (taps[..., None] == grid_idx).astype(jnp.float32)    # (B,P,4,size)
    return jnp.sum(coeffs[..., None] * onehot, axis=-2)           # (B, P, size)


def _patch_embed_kernel(pix_ref, wy_ref, wxt_ref, wproj_ref, bias_ref, out_ref):
    # pix_ref  : (Bb, C*H, W)   pixel block (NCHW with C,H pre-merged), bf16/f32
    # wy_ref   : (Bb, P, H)     bicubic height-resample weights (f32)
    # wxt_ref  : (Bb, W, P)     bicubic width-resample weights, transposed (f32)
    # wproj_ref: (P, C*P, Hd)   conv weight, wproj[i, c*P+j, h] = w[h, c, i, j]
    # bias_ref : (1, Hd)
    # out_ref  : (Bb, Hd)
    f32 = jnp.float32
    Bb = pix_ref.shape[0]
    P, H = wy_ref.shape[1], wy_ref.shape[2]
    CP, Hd = wproj_ref.shape[1], wproj_ref.shape[2]
    C = CP // P

    # Constant placement matrices E_c: (P, C*P), E_c[j, c*P + j] = 1.
    jj = jax.lax.broadcasted_iota(jnp.int32, (P, CP), 0)
    kk = jax.lax.broadcasted_iota(jnp.int32, (P, CP), 1)
    e_mats = [(kk == jj + c * P).astype(f32) for c in range(C)]

    # TS[i*Bb + m, c*P + j] = bicubically sampled patch value t[m, c, i, j]
    ts = jnp.zeros((Bb * P, CP), f32)
    for m in range(Bb):                                   # static unroll
        pix_m = pix_ref[m].astype(f32)                    # (C*H, W)
        # width resample for all channels/rows in one matmul
        u = jnp.dot(pix_m, wxt_ref[m], preferred_element_type=f32)   # (C*H, P)
        wy_m = wy_ref[m]                                  # (P, H)
        t2 = jnp.zeros((P, CP), f32)
        for c in range(C):                                # static, C is 3/4
            # height resample of channel c, then place into cols [c*P,(c+1)*P)
            t_c = jnp.dot(wy_m, u[c * H:(c + 1) * H, :],
                          preferred_element_type=f32)     # (P, P)
            t2 = t2 + jnp.dot(t_c, e_mats[c], preferred_element_type=f32)
        # Scatter patch-rows i of image m to TS rows i*Bb + m via a 0/1 matmul
        # (keeps every store aligned; the shuffle runs on the MXU).
        rr = jax.lax.broadcasted_iota(jnp.int32, (Bb * P, P), 0)
        ii = jax.lax.broadcasted_iota(jnp.int32, (Bb * P, P), 1)
        s_m = (rr == ii * Bb + m).astype(f32)             # (Bb*P, P)
        ts = ts + jnp.dot(s_m, t2, preferred_element_type=f32)

    # Fused Conv2d(kernel=P) projection for the whole block: accumulate over
    # the P patch rows, each as an (Bb, C*P) @ (C*P, Hd) matmul (M = Bb).
    acc = jnp.zeros((Bb, Hd), f32)
    for i in range(P):
        acc = acc + jnp.dot(ts[i * Bb:(i + 1) * Bb, :], wproj_ref[i],
                            preferred_element_type=f32)
    out_ref[...] = acc + bias_ref[...]                    # bias added once


@functools.partial(jax.jit, static_argnames=("patch_size", "block_b"))
def saccadic_patch_embeddings(pixel_values, patch_config, conv_weight,
                              conv_bias, *, patch_size, block_b=8):
    """Equivalent of SaccadicViTPatchEmbeddings.forward (mode 'translation')."""
    # TODO(synk): 'scaling' / 'non_uniform_scaling' match arms are shape-
    # inconsistent in the PyTorch source as written; only 'translation' is
    # implemented (the separable bicubic-weight construction would extend).
    B, C, H, W = pixel_values.shape
    Hd = conv_weight.shape[0]
    P = patch_size
    f32 = jnp.float32

    lin = jnp.linspace(-1.0, 1.0, P)
    # translation affine = [[1,0],[0,1],[tx,ty]]; after grid @ affine and
    # transpose(-3,-2): patch row i samples y = lin[i]+ty, col j samples
    # x = lin[j]+tx.
    tx = patch_config[:, 0:1].astype(f32)
    ty = patch_config[:, 1:2].astype(f32)
    wx = _bicubic_weight_matrix(lin[None, :] + tx, W)          # (B, P, W)
    wy = _bicubic_weight_matrix(lin[None, :] + ty, H).astype(f32)
    wxt = jnp.swapaxes(wx, 1, 2).astype(f32)                   # (B, W, P), tiny

    # Free contiguous view reshape of NCHW -> (B, C*H, W): no transpose, no
    # extra HBM round trip for the dominant (pixel) operand; dtype preserved
    # (bf16 pixels halve its HBM traffic, kernel accumulates in f32).
    pix = pixel_values.reshape(B, C * H, W)

    # Conv2d(kernel=P) weight rearranged once: wproj[i, c*P+j, h] = w[h,c,i,j].
    wproj = jnp.transpose(conv_weight, (2, 1, 3, 0)).reshape(P, C * P, Hd)
    wproj = wproj.astype(f32)
    bias2 = conv_bias.reshape(1, Hd).astype(f32)

    # Batch-block the grid; pad B to a multiple of block_b (multiple of 8 so
    # the output block is sublane-dense).
    Bb = block_b
    assert Bb % 8 == 0, "block_b must be a multiple of 8"
    n_blk = -(-B // Bb)
    B_pad = n_blk * Bb
    if B_pad != B:
        padb = ((0, B_pad - B), (0, 0), (0, 0))
        pix = jnp.pad(pix, padb)
        wy = jnp.pad(wy, padb)
        wxt = jnp.pad(wxt, padb)

    # VMEM per step (double-buffered) is tiny here; at ViT scale keep
    # 2 * Bb * C*H*W*itemsize + wproj well under ~32 MiB (v7x has 64 MiB
    # physical).  If the pixel DMA is still exposed, pipeline_mode=
    # pl.Buffered(3) on the pixel spec is the next knob.
    grid_spec = pltpu.PrefetchScalarGridSpec(
        num_scalar_prefetch=0,
        grid=(n_blk,),
        in_specs=[
            pl.BlockSpec((Bb, C * H, W), lambda b: (b, 0, 0)),
            pl.BlockSpec((Bb, P, H), lambda b: (b, 0, 0)),
            pl.BlockSpec((Bb, W, P), lambda b: (b, 0, 0)),
            pl.BlockSpec((P, C * P, Hd), lambda b: (0, 0, 0)),  # resident
            pl.BlockSpec((1, Hd), lambda b: (0, 0)),            # resident
        ],
        out_specs=pl.BlockSpec((Bb, Hd), lambda b: (b, 0)),
    )
    out = pl.pallas_call(
        _patch_embed_kernel,
        out_shape=jax.ShapeDtypeStruct((B_pad, Hd), f32),
        grid_spec=grid_spec,
        compiler_params=pltpu.CompilerParams(
            dimension_semantics=("parallel",)),  # v7x: both TCs when n_blk >= 2
    )(pix, wy, wxt, wproj, bias2)
    return out[:B]


if __name__ == "__main__":
    B, C, H, W = 16, 4, 16, 16        # batch, num_channels, image_size
    P, HIDDEN = 8, 32                 # patch_size, hidden_size
    key = jax.random.PRNGKey(0)
    k1, k2, k3, k4 = jax.random.split(key, 4)
    # pixels carried in bf16 (halves HBM bytes of the dominant operand);
    # all accumulation inside the kernel is f32.
    pixel_values = jax.random.normal(k1, (B, C, H, W), jnp.float32).astype(
        jnp.bfloat16)
    patch_config = 0.3 * jax.random.normal(k2, (B, 2), jnp.float32)
    conv_weight = 0.05 * jax.random.normal(k3, (HIDDEN, C, P, P), jnp.float32)
    conv_bias = 0.01 * jax.random.normal(k4, (HIDDEN,), jnp.float32)

    emb = saccadic_patch_embeddings(pixel_values, patch_config, conv_weight,
                                    conv_bias, patch_size=P, block_b=8)
    emb = jax.block_until_ready(emb)
    assert emb.shape == (B, HIDDEN)

    # Reference: same separable bicubic weights, dense einsum path (pure JAX),
    # on the identical bf16-rounded pixels.
    pixf = pixel_values.astype(jnp.float32)
    lin = jnp.linspace(-1.0, 1.0, P)
    wx_ref = _bicubic_weight_matrix(lin[None] + patch_config[:, 0:1], W)
    wy_ref = _bicubic_weight_matrix(lin[None] + patch_config[:, 1:2], H)
    patches = jnp.einsum("biy,bjx,bcyx->bcij", wy_ref, wx_ref, pixf)
    ref = jnp.einsum("bcij,hcij->bh", patches, conv_weight) + conv_bias[None]
    np.testing.assert_allclose(np.asarray(emb), np.asarray(ref),
                               rtol=5e-4, atol=5e-4)
    print("KERNEL_OK")
</pallas_src>

<mosaic_0001>
module attributes {stable_mosaic.version = 11 : i64} {
  func.func @_patch_embed_kernel(%arg0: i32, %arg1: memref<8x64x16xbf16, #tpu.memory_space<vmem>>, %arg2: memref<8x8x16xf32, #tpu.memory_space<vmem>>, %arg3: memref<8x16x8xf32, #tpu.memory_space<vmem>>, %arg4: memref<8x32x32xf32, #tpu.memory_space<vmem>>, %arg5: memref<1x32xf32, #tpu.memory_space<vmem>>, %arg6: memref<8x32xf32, #tpu.memory_space<vmem>>) attributes {dimension_semantics = [#tpu.dimension_semantics<parallel>], iteration_bounds = array<i64: 2>, scalar_prefetch = 0 : i64, scratch_operands = 0 : i64, tpu.core_type = #tpu.core_type<tc>, window_params = [{transform_indices = @transform_0, window_bounds = array<i64: 8, 64, 16>}, {transform_indices = @transform_1, window_bounds = array<i64: 8, 8, 16>}, {transform_indices = @transform_2, window_bounds = array<i64: 8, 16, 8>}, {pipeline_mode = #tpu.pipeline_mode<synchronous>, transform_indices = @transform_3, window_bounds = array<i64: 8, 32, 32>}, {pipeline_mode = #tpu.pipeline_mode<synchronous>, transform_indices = @transform_4, window_bounds = array<i64: 1, 32>}, {transform_indices = @transform_5, window_bounds = array<i64: 8, 32>}]} {
    %0 = tpu.iota {dimensions = array<i32: 0>} : vector<8x32xi32>
    %1 = tpu.iota {dimensions = array<i32: 1>} : vector<8x32xi32>
    %c0_i32 = arith.constant 0 : i32
    %2 = vector.broadcast %c0_i32 : i32 to vector<8x32xi32>
    %3 = arith.addi %0, %2 : vector<8x32xi32>
    %4 = arith.cmpi eq, %1, %3 : vector<8x32xi32>
    %5 = arith.extui %4 : vector<8x32xi1> to vector<8x32xi32>
    %6 = arith.sitofp %5 : vector<8x32xi32> to vector<8x32xf32>
    %c8_i32 = arith.constant 8 : i32
    %7 = vector.broadcast %c8_i32 : i32 to vector<8x32xi32>
    %8 = arith.addi %0, %7 : vector<8x32xi32>
    %9 = arith.cmpi eq, %1, %8 : vector<8x32xi32>
    %10 = arith.extui %9 : vector<8x32xi1> to vector<8x32xi32>
    %11 = arith.sitofp %10 : vector<8x32xi32> to vector<8x32xf32>
    %c16_i32 = arith.constant 16 : i32
    %12 = vector.broadcast %c16_i32 : i32 to vector<8x32xi32>
    %13 = arith.addi %0, %12 : vector<8x32xi32>
    %14 = arith.cmpi eq, %1, %13 : vector<8x32xi32>
    %15 = arith.extui %14 : vector<8x32xi1> to vector<8x32xi32>
    %16 = arith.sitofp %15 : vector<8x32xi32> to vector<8x32xf32>
    %c24_i32 = arith.constant 24 : i32
    %17 = vector.broadcast %c24_i32 : i32 to vector<8x32xi32>
    %18 = arith.addi %0, %17 : vector<8x32xi32>
    %19 = arith.cmpi eq, %1, %18 : vector<8x32xi32>
    %20 = arith.extui %19 : vector<8x32xi1> to vector<8x32xi32>
    %21 = arith.sitofp %20 : vector<8x32xi32> to vector<8x32xf32>
    %cst = arith.constant 0.000000e+00 : f32
    %22 = vector.broadcast %cst : f32 to vector<64x32xf32>
    %c0 = arith.constant 0 : index
    %c0_0 = arith.constant 0 : index
    %c0_1 = arith.constant 0 : index
    %23 = vector.load %arg1[%c0, %c0_0, %c0_1] : memref<8x64x16xbf16, #tpu.memory_space<vmem>>, vector<1x64x16xbf16>
    %24 = vector.shape_cast %23 : vector<1x64x16xbf16> to vector<64x16xbf16>
    %25 = arith.extf %24 : vector<64x16xbf16> to vector<64x16xf32>
    %c0_2 = arith.constant 0 : index
    %c0_3 = arith.constant 0 : index
    %c0_4 = arith.constant 0 : index
    %26 = vector.load %arg3[%c0_2, %c0_3, %c0_4] : memref<8x16x8xf32, #tpu.memory_space<vmem>>, vector<1x16x8xf32>
    %27 = vector.shape_cast %26 : vector<1x16x8xf32> to vector<16x8xf32>
    %cst_5 = arith.constant dense<0.000000e+00> : vector<64x8xf32>
    %28 = tpu.matmul %25, %27, %cst_5 {dimension_numbers = #tpu.dot_dimension_numbers<[1], [0], [0], [1], [0, 0, 1, 1], [], []>} : vector<64x16xf32>, vector<16x8xf32>, vector<64x8xf32> -> vector<64x8xf32>
    %c0_6 = arith.constant 0 : index
    %c0_7 = arith.constant 0 : index
    %c0_8 = arith.constant 0 : index
    %29 = vector.load %arg2[%c0_6, %c0_7, %c0_8] : memref<8x8x16xf32, #tpu.memory_space<vmem>>, vector<1x8x16xf32>
    %30 = vector.shape_cast %29 : vector<1x8x16xf32> to vector<8x16xf32>
    %cst_9 = arith.constant 0.000000e+00 : f32
    %31 = vector.broadcast %cst_9 : f32 to vector<8x32xf32>
    %32 = vector.extract_strided_slice %28 {offsets = [0, 0], sizes = [16, 8], strides = [1, 1]} : vector<64x8xf32> to vector<16x8xf32>
    %cst_10 = arith.constant dense<0.000000e+00> : vector<8x8xf32>
    %33 = tpu.matmul %30, %32, %cst_10 {dimension_numbers = #tpu.dot_dimension_numbers<[1], [0], [0], [1], [0, 0, 1, 1], [], []>} : vector<8x16xf32>, vector<16x8xf32>, vector<8x8xf32> -> vector<8x8xf32>
    %cst_11 = arith.constant dense<0.000000e+00> : vector<8x32xf32>
    %34 = tpu.matmul %33, %6, %cst_11 {dimension_numbers = #tpu.dot_dimension_numbers<[1], [0], [0], [1], [0, 0, 1, 1], [], []>} : vector<8x8xf32>, vector<8x32xf32>, vector<8x32xf32> -> vector<8x32xf32>
    %35 = arith.addf %31, %34 : vector<8x32xf32>
    %36 = vector.extract_strided_slice %28 {offsets = [16, 0], sizes = [16, 8], strides = [1, 1]} : vector<64x8xf32> to vector<16x8xf32>
    %cst_12 = arith.constant dense<0.000000e+00> : vector<8x8xf32>
    %37 = tpu.matmul %30, %36, %cst_12 {dimension_numbers = #tpu.dot_dimension_numbers<[1], [0], [0], [1], [0, 0, 1, 1], [], []>} : vector<8x16xf32>, vector<16x8xf32>, vector<8x8xf32> -> vector<8x8xf32>
    %cst_13 = arith.constant dense<0.000000e+00> : vector<8x32xf32>
    %38 = tpu.matmul %37, %11, %cst_13 {dimension_numbers = #tpu.dot_dimension_numbers<[1], [0], [0], [1], [0, 0, 1, 1], [], []>} : vector<8x8xf32>, vector<8x32xf32>, vector<8x32xf32> -> vector<8x32xf32>
    %39 = arith.addf %35, %38 : vector<8x32xf32>
    %40 = vector.extract_strided_slice %28 {offsets = [32, 0], sizes = [16, 8], strides = [1, 1]} : vector<64x8xf32> to vector<16x8xf32>
    %cst_14 = arith.constant dense<0.000000e+00> : vector<8x8xf32>
    %41 = tpu.matmul %30, %40, %cst_14 {dimension_numbers = #tpu.dot_dimension_numbers<[1], [0], [0], [1], [0, 0, 1, 1], [], []>} : vector<8x16xf32>, vector<16x8xf32>, vector<8x8xf32> -> vector<8x8xf32>
    %cst_15 = arith.constant dense<0.000000e+00> : vector<8x32xf32>
    %42 = tpu.matmul %41, %16, %cst_15 {dimension_numbers = #tpu.dot_dimension_numbers<[1], [0], [0], [1], [0, 0, 1, 1], [], []>} : vector<8x8xf32>, vector<8x32xf32>, vector<8x32xf32> -> vector<8x32xf32>
    %43 = arith.addf %39, %42 : vector<8x32xf32>
    %44 = vector.extract_strided_slice %28 {offsets = [48, 0], sizes = [16, 8], strides = [1, 1]} : vector<64x8xf32> to vector<16x8xf32>
    %cst_16 = arith.constant dense<0.000000e+00> : vector<8x8xf32>
    %45 = tpu.matmul %30, %44, %cst_16 {dimension_numbers = #tpu.dot_dimension_numbers<[1], [0], [0], [1], [0, 0, 1, 1], [], []>} : vector<8x16xf32>, vector<16x8xf32>, vector<8x8xf32> -> vector<8x8xf32>
    %cst_17 = arith.constant dense<0.000000e+00> : vector<8x32xf32>
    %46 = tpu.matmul %45, %21, %cst_17 {dimension_numbers = #tpu.dot_dimension_numbers<[1], [0], [0], [1], [0, 0, 1, 1], [], []>} : vector<8x8xf32>, vector<8x32xf32>, vector<8x32xf32> -> vector<8x32xf32>
    %47 = arith.addf %43, %46 : vector<8x32xf32>
    %48 = tpu.iota {dimensions = array<i32: 0>} : vector<64x8xi32>
    %49 = tpu.iota {dimensions = array<i32: 1>} : vector<64x8xi32>
    %c8_i32_18 = arith.constant 8 : i32
    %50 = vector.broadcast %c8_i32_18 : i32 to vector<64x8xi32>
    %51 = arith.muli %49, %50 : vector<64x8xi32>
    %c0_i32_19 = arith.constant 0 : i32
    %52 = vector.broadcast %c0_i32_19 : i32 to vector<64x8xi32>
    %53 = arith.addi %51, %52 : vector<64x8xi32>
    %54 = arith.cmpi eq, %48, %53 : vector<64x8xi32>
    %55 = arith.extui %54 : vector<64x8xi1> to vector<64x8xi32>
    %56 = arith.sitofp %55 : vector<64x8xi32> to vector<64x8xf32>
    %cst_20 = arith.constant dense<0.000000e+00> : vector<64x32xf32>
    %57 = tpu.matmul %56, %47, %cst_20 {dimension_numbers = #tpu.dot_dimension_numbers<[1], [0], [0], [1], [0, 0, 1, 1], [], []>} : vector<64x8xf32>, vector<8x32xf32>, vector<64x32xf32> -> vector<64x32xf32>
    %58 = arith.addf %22, %57 : vector<64x32xf32>
    %c1 = arith.constant 1 : index
    %c0_21 = arith.constant 0 : index
    %c0_22 = arith.constant 0 : index
    %59 = vector.load %arg1[%c1, %c0_21, %c0_22] : memref<8x64x16xbf16, #tpu.memory_space<vmem>>, vector<1x64x16xbf16>
    %60 = vector.shape_cast %59 : vector<1x64x16xbf16> to vector<64x16xbf16>
    %61 = arith.extf %60 : vector<64x16xbf16> to vector<64x16xf32>
    %c1_23 = arith.constant 1 : index
    %c0_24 = arith.constant 0 : index
    %c0_25 = arith.constant 0 : index
    %62 = vector.load %arg3[%c1_23, %c0_24, %c0_25] : memref<8x16x8xf32, #tpu.memory_space<vmem>>, vector<1x16x8xf32>
    %63 = vector.shape_cast %62 : vector<1x16x8xf32> to vector<16x8xf32>
    %cst_26 = arith.constant dense<0.000000e+00> : vector<64x8xf32>
    %64 = tpu.matmul %61, %63, %cst_26 {dimension_numbers = #tpu.dot_dimension_numbers<[1], [0], [0], [1], [0, 0, 1, 1], [], []>} : vector<64x16xf32>, vector<16x8xf32>, vector<64x8xf32> -> vector<64x8xf32>
    %c1_27 = arith.constant 1 : index
    %c0_28 = arith.constant 0 : index
    %c0_29 = arith.constant 0 : index
    %65 = vector.load %arg2[%c1_27, %c0_28, %c0_29] : memref<8x8x16xf32, #tpu.memory_space<vmem>>, vector<1x8x16xf32>
    %66 = vector.shape_cast %65 : vector<1x8x16xf32> to vector<8x16xf32>
    %cst_30 = arith.constant 0.000000e+00 : f32
    %67 = vector.broadcast %cst_30 : f32 to vector<8x32xf32>
    %68 = vector.extract_strided_slice %64 {offsets = [0, 0], sizes = [16, 8], strides = [1, 1]} : vector<64x8xf32> to vector<16x8xf32>
    %cst_31 = arith.constant dense<0.000000e+00> : vector<8x8xf32>
    %69 = tpu.matmul %66, %68, %cst_31 {dimension_numbers = #tpu.dot_dimension_numbers<[1], [0], [0], [1], [0, 0, 1, 1], [], []>} : vector<8x16xf32>, vector<16x8xf32>, vector<8x8xf32> -> vector<8x8xf32>
    %cst_32 = arith.constant dense<0.000000e+00> : vector<8x32xf32>
    %70 = tpu.matmul %69, %6, %cst_32 {dimension_numbers = #tpu.dot_dimension_numbers<[1], [0], [0], [1], [0, 0, 1, 1], [], []>} : vector<8x8xf32>, vector<8x32xf32>, vector<8x32xf32> -> vector<8x32xf32>
    %71 = arith.addf %67, %70 : vector<8x32xf32>
    %72 = vector.extract_strided_slice %64 {offsets = [16, 0], sizes = [16, 8], strides = [1, 1]} : vector<64x8xf32> to vector<16x8xf32>
    %cst_33 = arith.constant dense<0.000000e+00> : vector<8x8xf32>
    %73 = tpu.matmul %66, %72, %cst_33 {dimension_numbers = #tpu.dot_dimension_numbers<[1], [0], [0], [1], [0, 0, 1, 1], [], []>} : vector<8x16xf32>, vector<16x8xf32>, vector<8x8xf32> -> vector<8x8xf32>
    %cst_34 = arith.constant dense<0.000000e+00> : vector<8x32xf32>
    %74 = tpu.matmul %73, %11, %cst_34 {dimension_numbers = #tpu.dot_dimension_numbers<[1], [0], [0], [1], [0, 0, 1, 1], [], []>} : vector<8x8xf32>, vector<8x32xf32>, vector<8x32xf32> -> vector<8x32xf32>
    %75 = arith.addf %71, %74 : vector<8x32xf32>
    %76 = vector.extract_strided_slice %64 {offsets = [32, 0], sizes = [16, 8], strides = [1, 1]} : vector<64x8xf32> to vector<16x8xf32>
    %cst_35 = arith.constant dense<0.000000e+00> : vector<8x8xf32>
    %77 = tpu.matmul %66, %76, %cst_35 {dimension_numbers = #tpu.dot_dimension_numbers<[1], [0], [0], [1], [0, 0, 1, 1], [], []>} : vector<8x16xf32>, vector<16x8xf32>, vector<8x8xf32> -> vector<8x8xf32>
    %cst_36 = arith.constant dense<0.000000e+00> : vector<8x32xf32>
    %78 = tpu.matmul %77, %16, %cst_36 {dimension_numbers = #tpu.dot_dimension_numbers<[1], [0], [0], [1], [0, 0, 1, 1], [], []>} : vector<8x8xf32>, vector<8x32xf32>, vector<8x32xf32> -> vector<8x32xf32>
    %79 = arith.addf %75, %78 : vector<8x32xf32>
    %80 = vector.extract_strided_slice %64 {offsets = [48, 0], sizes = [16, 8], strides = [1, 1]} : vector<64x8xf32> to vector<16x8xf32>
    %cst_37 = arith.constant dense<0.000000e+00> : vector<8x8xf32>
    %81 = tpu.matmul %66, %80, %cst_37 {dimension_numbers = #tpu.dot_dimension_numbers<[1], [0], [0], [1], [0, 0, 1, 1], [], []>} : vector<8x16xf32>, vector<16x8xf32>, vector<8x8xf32> -> vector<8x8xf32>
    %cst_38 = arith.constant dense<0.000000e+00> : vector<8x32xf32>
    %82 = tpu.matmul %81, %21, %cst_38 {dimension_numbers = #tpu.dot_dimension_numbers<[1], [0], [0], [1], [0, 0, 1, 1], [], []>} : vector<8x8xf32>, vector<8x32xf32>, vector<8x32xf32> -> vector<8x32xf32>
    %83 = arith.addf %79, %82 : vector<8x32xf32>
    %84 = tpu.iota {dimensions = array<i32: 0>} : vector<64x8xi32>
    %85 = tpu.iota {dimensions = array<i32: 1>} : vector<64x8xi32>
    %c8_i32_39 = arith.constant 8 : i32
    %86 = vector.broadcast %c8_i32_39 : i32 to vector<64x8xi32>
    %87 = arith.muli %85, %86 : vector<64x8xi32>
    %c1_i32 = arith.constant 1 : i32
    %88 = vector.broadcast %c1_i32 : i32 to vector<64x8xi32>
    %89 = arith.addi %87, %88 : vector<64x8xi32>
    %90 = arith.cmpi eq, %84, %89 : vector<64x8xi32>
    %91 = arith.extui %90 : vector<64x8xi1> to vector<64x8xi32>
    %92 = arith.sitofp %91 : vector<64x8xi32> to vector<64x8xf32>
    %cst_40 = arith.constant dense<0.000000e+00> : vector<64x32xf32>
    %93 = tpu.matmul %92, %83, %cst_40 {dimension_numbers = #tpu.dot_dimension_numbers<[1], [0], [0], [1], [0, 0, 1, 1], [], []>} : vector<64x8xf32>, vector<8x32xf32>, vector<64x32xf32> -> vector<64x32xf32>
    %94 = arith.addf %58, %93 : vector<64x32xf32>
    %c2 = arith.constant 2 : index
    %c0_41 = arith.constant 0 : index
    %c0_42 = arith.constant 0 : index
    %95 = vector.load %arg1[%c2, %c0_41, %c0_42] : memref<8x64x16xbf16, #tpu.memory_space<vmem>>, vector<1x64x16xbf16>
    %96 = vector.shape_cast %95 : vector<1x64x16xbf16> to vector<64x16xbf16>
    %97 = arith.extf %96 : vector<64x16xbf16> to vector<64x16xf32>
    %c2_43 = arith.constant 2 : index
    %c0_44 = arith.constant 0 : index
    %c0_45 = arith.constant 0 : index
    %98 = vector.load %arg3[%c2_43, %c0_44, %c0_45] : memref<8x16x8xf32, #tpu.memory_space<vmem>>, vector<1x16x8xf32>
    %99 = vector.shape_cast %98 : vector<1x16x8xf32> to vector<16x8xf32>
    %cst_46 = arith.constant dense<0.000000e+00> : vector<64x8xf32>
    %100 = tpu.matmul %97, %99, %cst_46 {dimension_numbers = #tpu.dot_dimension_numbers<[1], [0], [0], [1], [0, 0, 1, 1], [], []>} : vector<64x16xf32>, vector<16x8xf32>, vector<64x8xf32> -> vector<64x8xf32>
    %c2_47 = arith.constant 2 : index
    %c0_48 = arith.constant 0 : index
    %c0_49 = arith.constant 0 : index
    %101 = vector.load %arg2[%c2_47, %c0_48, %c0_49] : memref<8x8x16xf32, #tpu.memory_space<vmem>>, vector<1x8x16xf32>
    %102 = vector.shape_cast %101 : vector<1x8x16xf32> to vector<8x16xf32>
    %cst_50 = arith.constant 0.000000e+00 : f32
    %103 = vector.broadcast %cst_50 : f32 to vector<8x32xf32>
    %104 = vector.extract_strided_slice %100 {offsets = [0, 0], sizes = [16, 8], strides = [1, 1]} : vector<64x8xf32> to vector<16x8xf32>
    %cst_51 = arith.constant dense<0.000000e+00> : vector<8x8xf32>
    %105 = tpu.matmul %102, %104, %cst_51 {dimension_numbers = #tpu.dot_dimension_numbers<[1], [0], [0], [1], [0, 0, 1, 1], [], []>} : vector<8x16xf32>, vector<16x8xf32>, vector<8x8xf32> -> vector<8x8xf32>
    %cst_52 = arith.constant dense<0.000000e+00> : vector<8x32xf32>
    %106 = tpu.matmul %105, %6, %cst_52 {dimension_numbers = #tpu.dot_dimension_numbers<[1], [0], [0], [1], [0, 0, 1, 1], [], []>} : vector<8x8xf32>, vector<8x32xf32>, vector<8x32xf32> -> vector<8x32xf32>
    %107 = arith.addf %103, %106 : vector<8x32xf32>
    %108 = vector.extract_strided_slice %100 {offsets = [16, 0], sizes = [16, 8], strides = [1, 1]} : vector<64x8xf32> to vector<16x8xf32>
    %cst_53 = arith.constant dense<0.000000e+00> : vector<8x8xf32>
    %109 = tpu.matmul %102, %108, %cst_53 {dimension_numbers = #tpu.dot_dimension_numbers<[1], [0], [0], [1], [0, 0, 1, 1], [], []>} : vector<8x16xf32>, vector<16x8xf32>, vector<8x8xf32> -> vector<8x8xf32>
    %cst_54 = arith.constant dense<0.000000e+00> : vector<8x32xf32>
    %110 = tpu.matmul %109, %11, %cst_54 {dimension_numbers = #tpu.dot_dimension_numbers<[1], [0], [0], [1], [0, 0, 1, 1], [], []>} : vector<8x8xf32>, vector<8x32xf32>, vector<8x32xf32> -> vector<8x32xf32>
    %111 = arith.addf %107, %110 : vector<8x32xf32>
    %112 = vector.extract_strided_slice %100 {offsets = [32, 0], sizes = [16, 8], strides = [1, 1]} : vector<64x8xf32> to vector<16x8xf32>
    %cst_55 = arith.constant dense<0.000000e+00> : vector<8x8xf32>
    %113 = tpu.matmul %102, %112, %cst_55 {dimension_numbers = #tpu.dot_dimension_numbers<[1], [0], [0], [1], [0, 0, 1, 1], [], []>} : vector<8x16xf32>, vector<16x8xf32>, vector<8x8xf32> -> vector<8x8xf32>
    %cst_56 = arith.constant dense<0.000000e+00> : vector<8x32xf32>
    %114 = tpu.matmul %113, %16, %cst_56 {dimension_numbers = #tpu.dot_dimension_numbers<[1], [0], [0], [1], [0, 0, 1, 1], [], []>} : vector<8x8xf32>, vector<8x32xf32>, vector<8x32xf32> -> vector<8x32xf32>
    %115 = arith.addf %111, %114 : vector<8x32xf32>
    %116 = vector.extract_strided_slice %100 {offsets = [48, 0], sizes = [16, 8], strides = [1, 1]} : vector<64x8xf32> to vector<16x8xf32>
    %cst_57 = arith.constant dense<0.000000e+00> : vector<8x8xf32>
    %117 = tpu.matmul %102, %116, %cst_57 {dimension_numbers = #tpu.dot_dimension_numbers<[1], [0], [0], [1], [0, 0, 1, 1], [], []>} : vector<8x16xf32>, vector<16x8xf32>, vector<8x8xf32> -> vector<8x8xf32>
    %cst_58 = arith.constant dense<0.000000e+00> : vector<8x32xf32>
    %118 = tpu.matmul %117, %21, %cst_58 {dimension_numbers = #tpu.dot_dimension_numbers<[1], [0], [0], [1], [0, 0, 1, 1], [], []>} : vector<8x8xf32>, vector<8x32xf32>, vector<8x32xf32> -> vector<8x32xf32>
    %119 = arith.addf %115, %118 : vector<8x32xf32>
    %120 = tpu.iota {dimensions = array<i32: 0>} : vector<64x8xi32>
    %121 = tpu.iota {dimensions = array<i32: 1>} : vector<64x8xi32>
    %c8_i32_59 = arith.constant 8 : i32
    %122 = vector.broadcast %c8_i32_59 : i32 to vector<64x8xi32>
    %123 = arith.muli %121, %122 : vector<64x8xi32>
    %c2_i32 = arith.constant 2 : i32
    %124 = vector.broadcast %c2_i32 : i32 to vector<64x8xi32>
    %125 = arith.addi %123, %124 : vector<64x8xi32>
    %126 = arith.cmpi eq, %120, %125 : vector<64x8xi32>
    %127 = arith.extui %126 : vector<64x8xi1> to vector<64x8xi32>
    %128 = arith.sitofp %127 : vector<64x8xi32> to vector<64x8xf32>
    %cst_60 = arith.constant dense<0.000000e+00> : vector<64x32xf32>
    %129 = tpu.matmul %128, %119, %cst_60 {dimension_numbers = #tpu.dot_dimension_numbers<[1], [0], [0], [1], [0, 0, 1, 1], [], []>} : vector<64x8xf32>, vector<8x32xf32>, vector<64x32xf32> -> vector<64x32xf32>
    %130 = arith.addf %94, %129 : vector<64x32xf32>
    %c3 = arith.constant 3 : index
    %c0_61 = arith.constant 0 : index
    %c0_62 = arith.constant 0 : index
    %131 = vector.load %arg1[%c3, %c0_61, %c0_62] : memref<8x64x16xbf16, #tpu.memory_space<vmem>>, vector<1x64x16xbf16>
    %132 = vector.shape_cast %131 : vector<1x64x16xbf16> to vector<64x16xbf16>
    %133 = arith.extf %132 : vector<64x16xbf16> to vector<64x16xf32>
    %c3_63 = arith.constant 3 : index
    %c0_64 = arith.constant 0 : index
    %c0_65 = arith.constant 0 : index
    %134 = vector.load %arg3[%c3_63, %c0_64, %c0_65] : memref<8x16x8xf32, #tpu.memory_space<vmem>>, vector<1x16x8xf32>
    %135 = vector.shape_cast %134 : vector<1x16x8xf32> to vector<16x8xf32>
    %cst_66 = arith.constant dense<0.000000e+00> : vector<64x8xf32>
    %136 = tpu.matmul %133, %135, %cst_66 {dimension_numbers = #tpu.dot_dimension_numbers<[1], [0], [0], [1], [0, 0, 1, 1], [], []>} : vector<64x16xf32>, vector<16x8xf32>, vector<64x8xf32> -> vector<64x8xf32>
    %c3_67 = arith.constant 3 : index
    %c0_68 = arith.constant 0 : index
    %c0_69 = arith.constant 0 : index
    %137 = vector.load %arg2[%c3_67, %c0_68, %c0_69] : memref<8x8x16xf32, #tpu.memory_space<vmem>>, vector<1x8x16xf32>
    %138 = vector.shape_cast %137 : vector<1x8x16xf32> to vector<8x16xf32>
    %cst_70 = arith.constant 0.000000e+00 : f32
    %139 = vector.broadcast %cst_70 : f32 to vector<8x32xf32>
    %140 = vector.extract_strided_slice %136 {offsets = [0, 0], sizes = [16, 8], strides = [1, 1]} : vector<64x8xf32> to vector<16x8xf32>
    %cst_71 = arith.constant dense<0.000000e+00> : vector<8x8xf32>
    %141 = tpu.matmul %138, %140, %cst_71 {dimension_numbers = #tpu.dot_dimension_numbers<[1], [0], [0], [1], [0, 0, 1, 1], [], []>} : vector<8x16xf32>, vector<16x8xf32>, vector<8x8xf32> -> vector<8x8xf32>
    %cst_72 = arith.constant dense<0.000000e+00> : vector<8x32xf32>
    %142 = tpu.matmul %141, %6, %cst_72 {dimension_numbers = #tpu.dot_dimension_numbers<[1], [0], [0], [1], [0, 0, 1, 1], [], []>} : vector<8x8xf32>, vector<8x32xf32>, vector<8x32xf32> -> vector<8x32xf32>
    %143 = arith.addf %139, %142 : vector<8x32xf32>
    %144 = vector.extract_strided_slice %136 {offsets = [16, 0], sizes = [16, 8], strides = [1, 1]} : vector<64x8xf32> to vector<16x8xf32>
    %cst_73 = arith.constant dense<0.000000e+00> : vector<8x8xf32>
    %145 = tpu.matmul %138, %144, %cst_73 {dimension_numbers = #tpu.dot_dimension_numbers<[1], [0], [0], [1], [0, 0, 1, 1], [], []>} : vector<8x16xf32>, vector<16x8xf32>, vector<8x8xf32> -> vector<8x8xf32>
    %cst_74 = arith.constant dense<0.000000e+00> : vector<8x32xf32>
    %146 = tpu.matmul %145, %11, %cst_74 {dimension_numbers = #tpu.dot_dimension_numbers<[1], [0], [0], [1], [0, 0, 1, 1], [], []>} : vector<8x8xf32>, vector<8x32xf32>, vector<8x32xf32> -> vector<8x32xf32>
    %147 = arith.addf %143, %146 : vector<8x32xf32>
    %148 = vector.extract_strided_slice %136 {offsets = [32, 0], sizes = [16, 8], strides = [1, 1]} : vector<64x8xf32> to vector<16x8xf32>
    %cst_75 = arith.constant dense<0.000000e+00> : vector<8x8xf32>
    %149 = tpu.matmul %138, %148, %cst_75 {dimension_numbers = #tpu.dot_dimension_numbers<[1], [0], [0], [1], [0, 0, 1, 1], [], []>} : vector<8x16xf32>, vector<16x8xf32>, vector<8x8xf32> -> vector<8x8xf32>
    %cst_76 = arith.constant dense<0.000000e+00> : vector<8x32xf32>
    %150 = tpu.matmul %149, %16, %cst_76 {dimension_numbers = #tpu.dot_dimension_numbers<[1], [0], [0], [1], [0, 0, 1, 1], [], []>} : vector<8x8xf32>, vector<8x32xf32>, vector<8x32xf32> -> vector<8x32xf32>
    %151 = arith.addf %147, %150 : vector<8x32xf32>
    %152 = vector.extract_strided_slice %136 {offsets = [48, 0], sizes = [16, 8], strides = [1, 1]} : vector<64x8xf32> to vector<16x8xf32>
    %cst_77 = arith.constant dense<0.000000e+00> : vector<8x8xf32>
    %153 = tpu.matmul %138, %152, %cst_77 {dimension_numbers = #tpu.dot_dimension_numbers<[1], [0], [0], [1], [0, 0, 1, 1], [], []>} : vector<8x16xf32>, vector<16x8xf32>, vector<8x8xf32> -> vector<8x8xf32>
    %cst_78 = arith.constant dense<0.000000e+00> : vector<8x32xf32>
    %154 = tpu.matmul %153, %21, %cst_78 {dimension_numbers = #tpu.dot_dimension_numbers<[1], [0], [0], [1], [0, 0, 1, 1], [], []>} : vector<8x8xf32>, vector<8x32xf32>, vector<8x32xf32> -> vector<8x32xf32>
    %155 = arith.addf %151, %154 : vector<8x32xf32>
    %156 = tpu.iota {dimensions = array<i32: 0>} : vector<64x8xi32>
    %157 = tpu.iota {dimensions = array<i32: 1>} : vector<64x8xi32>
    %c8_i32_79 = arith.constant 8 : i32
    %158 = vector.broadcast %c8_i32_79 : i32 to vector<64x8xi32>
    %159 = arith.muli %157, %158 : vector<64x8xi32>
    %c3_i32 = arith.constant 3 : i32
    %160 = vector.broadcast %c3_i32 : i32 to vector<64x8xi32>
    %161 = arith.addi %159, %160 : vector<64x8xi32>
    %162 = arith.cmpi eq, %156, %161 : vector<64x8xi32>
    %163 = arith.extui %162 : vector<64x8xi1> to vector<64x8xi32>
    %164 = arith.sitofp %163 : vector<64x8xi32> to vector<64x8xf32>
    %cst_80 = arith.constant dense<0.000000e+00> : vector<64x32xf32>
    %165 = tpu.matmul %164, %155, %cst_80 {dimension_numbers = #tpu.dot_dimension_numbers<[1], [0], [0], [1], [0, 0, 1, 1], [], []>} : vector<64x8xf32>, vector<8x32xf32>, vector<64x32xf32> -> vector<64x32xf32>
    %166 = arith.addf %130, %165 : vector<64x32xf32>
    %c4 = arith.constant 4 : index
    %c0_81 = arith.constant 0 : index
    %c0_82 = arith.constant 0 : index
    %167 = vector.load %arg1[%c4, %c0_81, %c0_82] : memref<8x64x16xbf16, #tpu.memory_space<vmem>>, vector<1x64x16xbf16>
    %168 = vector.shape_cast %167 : vector<1x64x16xbf16> to vector<64x16xbf16>
    %169 = arith.extf %168 : vector<64x16xbf16> to vector<64x16xf32>
    %c4_83 = arith.constant 4 : index
    %c0_84 = arith.constant 0 : index
    %c0_85 = arith.constant 0 : index
    %170 = vector.load %arg3[%c4_83, %c0_84, %c0_85] : memref<8x16x8xf32, #tpu.memory_space<vmem>>, vector<1x16x8xf32>
    %171 = vector.shape_cast %170 : vector<1x16x8xf32> to vector<16x8xf32>
    %cst_86 = arith.constant dense<0.000000e+00> : vector<64x8xf32>
    %172 = tpu.matmul %169, %171, %cst_86 {dimension_numbers = #tpu.dot_dimension_numbers<[1], [0], [0], [1], [0, 0, 1, 1], [], []>} : vector<64x16xf32>, vector<16x8xf32>, vector<64x8xf32> -> vector<64x8xf32>
    %c4_87 = arith.constant 4 : index
    %c0_88 = arith.constant 0 : index
    %c0_89 = arith.constant 0 : index
    %173 = vector.load %arg2[%c4_87, %c0_88, %c0_89] : memref<8x8x16xf32, #tpu.memory_space<vmem>>, vector<1x8x16xf32>
    %174 = vector.shape_cast %173 : vector<1x8x16xf32> to vector<8x16xf32>
    %cst_90 = arith.constant 0.000000e+00 : f32
    %175 = vector.broadcast %cst_90 : f32 to vector<8x32xf32>
    %176 = vector.extract_strided_slice %172 {offsets = [0, 0], sizes = [16, 8], strides = [1, 1]} : vector<64x8xf32> to vector<16x8xf32>
    %cst_91 = arith.constant dense<0.000000e+00> : vector<8x8xf32>
    %177 = tpu.matmul %174, %176, %cst_91 {dimension_numbers = #tpu.dot_dimension_numbers<[1], [0], [0], [1], [0, 0, 1, 1], [], []>} : vector<8x16xf32>, vector<16x8xf32>, vector<8x8xf32> -> vector<8x8xf32>
    %cst_92 = arith.constant dense<0.000000e+00> : vector<8x32xf32>
    %178 = tpu.matmul %177, %6, %cst_92 {dimension_numbers = #tpu.dot_dimension_numbers<[1], [0], [0], [1], [0, 0, 1, 1], [], []>} : vector<8x8xf32>, vector<8x32xf32>, vector<8x32xf32> -> vector<8x32xf32>
    %179 = arith.addf %175, %178 : vector<8x32xf32>
    %180 = vector.extract_strided_slice %172 {offsets = [16, 0], sizes = [16, 8], strides = [1, 1]} : vector<64x8xf32> to vector<16x8xf32>
    %cst_93 = arith.constant dense<0.000000e+00> : vector<8x8xf32>
    %181 = tpu.matmul %174, %180, %cst_93 {dimension_numbers = #tpu.dot_dimension_numbers<[1], [0], [0], [1], [0, 0, 1, 1], [], []>} : vector<8x16xf32>, vector<16x8xf32>, vector<8x8xf32> -> vector<8x8xf32>
    %cst_94 = arith.constant dense<0.000000e+00> : vector<8x32xf32>
    %182 = tpu.matmul %181, %11, %cst_94 {dimension_numbers = #tpu.dot_dimension_numbers<[1], [0], [0], [1], [0, 0, 1, 1], [], []>} : vector<8x8xf32>, vector<8x32xf32>, vector<8x32xf32> -> vector<8x32xf32>
    %183 = arith.addf %179, %182 : vector<8x32xf32>
    %184 = vector.extract_strided_slice %172 {offsets = [32, 0], sizes = [16, 8], strides = [1, 1]} : vector<64x8xf32> to vector<16x8xf32>
    %cst_95 = arith.constant dense<0.000000e+00> : vector<8x8xf32>
    %185 = tpu.matmul %174, %184, %cst_95 {dimension_numbers = #tpu.dot_dimension_numbers<[1], [0], [0], [1], [0, 0, 1, 1], [], []>} : vector<8x16xf32>, vector<16x8xf32>, vector<8x8xf32> -> vector<8x8xf32>
    %cst_96 = arith.constant dense<0.000000e+00> : vector<8x32xf32>
    %186 = tpu.matmul %185, %16, %cst_96 {dimension_numbers = #tpu.dot_dimension_numbers<[1], [0], [0], [1], [0, 0, 1, 1], [], []>} : vector<8x8xf32>, vector<8x32xf32>, vector<8x32xf32> -> vector<8x32xf32>
    %187 = arith.addf %183, %186 : vector<8x32xf32>
    %188 = vector.extract_strided_slice %172 {offsets = [48, 0], sizes = [16, 8], strides = [1, 1]} : vector<64x8xf32> to vector<16x8xf32>
    %cst_97 = arith.constant dense<0.000000e+00> : vector<8x8xf32>
    %189 = tpu.matmul %174, %188, %cst_97 {dimension_numbers = #tpu.dot_dimension_numbers<[1], [0], [0], [1], [0, 0, 1, 1], [], []>} : vector<8x16xf32>, vector<16x8xf32>, vector<8x8xf32> -> vector<8x8xf32>
    %cst_98 = arith.constant dense<0.000000e+00> : vector<8x32xf32>
    %190 = tpu.matmul %189, %21, %cst_98 {dimension_numbers = #tpu.dot_dimension_numbers<[1], [0], [0], [1], [0, 0, 1, 1], [], []>} : vector<8x8xf32>, vector<8x32xf32>, vector<8x32xf32> -> vector<8x32xf32>
    %191 = arith.addf %187, %190 : vector<8x32xf32>
    %192 = tpu.iota {dimensions = array<i32: 0>} : vector<64x8xi32>
    %193 = tpu.iota {dimensions = array<i32: 1>} : vector<64x8xi32>
    %c8_i32_99 = arith.constant 8 : i32
    %194 = vector.broadcast %c8_i32_99 : i32 to vector<64x8xi32>
    %195 = arith.muli %193, %194 : vector<64x8xi32>
    %c4_i32 = arith.constant 4 : i32
    %196 = vector.broadcast %c4_i32 : i32 to vector<64x8xi32>
    %197 = arith.addi %195, %196 : vector<64x8xi32>
    %198 = arith.cmpi eq, %192, %197 : vector<64x8xi32>
    %199 = arith.extui %198 : vector<64x8xi1> to vector<64x8xi32>
    %200 = arith.sitofp %199 : vector<64x8xi32> to vector<64x8xf32>
    %cst_100 = arith.constant dense<0.000000e+00> : vector<64x32xf32>
    %201 = tpu.matmul %200, %191, %cst_100 {dimension_numbers = #tpu.dot_dimension_numbers<[1], [0], [0], [1], [0, 0, 1, 1], [], []>} : vector<64x8xf32>, vector<8x32xf32>, vector<64x32xf32> -> vector<64x32xf32>
    %202 = arith.addf %166, %201 : vector<64x32xf32>
    %c5 = arith.constant 5 : index
    %c0_101 = arith.constant 0 : index
    %c0_102 = arith.constant 0 : index
    %203 = vector.load %arg1[%c5, %c0_101, %c0_102] : memref<8x64x16xbf16, #tpu.memory_space<vmem>>, vector<1x64x16xbf16>
    %204 = vector.shape_cast %203 : vector<1x64x16xbf16> to vector<64x16xbf16>
    %205 = arith.extf %204 : vector<64x16xbf16> to vector<64x16xf32>
    %c5_103 = arith.constant 5 : index
    %c0_104 = arith.constant 0 : index
    %c0_105 = arith.constant 0 : index
    %206 = vector.load %arg3[%c5_103, %c0_104, %c0_105] : memref<8x16x8xf32, #tpu.memory_space<vmem>>, vector<1x16x8xf32>
    %207 = vector.shape_cast %206 : vector<1x16x8xf32> to vector<16x8xf32>
    %cst_106 = arith.constant dense<0.000000e+00> : vector<64x8xf32>
    %208 = tpu.matmul %205, %207, %cst_106 {dimension_numbers = #tpu.dot_dimension_numbers<[1], [0], [0], [1], [0, 0, 1, 1], [], []>} : vector<64x16xf32>, vector<16x8xf32>, vector<64x8xf32> -> vector<64x8xf32>
    %c5_107 = arith.constant 5 : index
    %c0_108 = arith.constant 0 : index
    %c0_109 = arith.constant 0 : index
    %209 = vector.load %arg2[%c5_107, %c0_108, %c0_109] : memref<8x8x16xf32, #tpu.memory_space<vmem>>, vector<1x8x16xf32>
    %210 = vector.shape_cast %209 : vector<1x8x16xf32> to vector<8x16xf32>
    %cst_110 = arith.constant 0.000000e+00 : f32
    %211 = vector.broadcast %cst_110 : f32 to vector<8x32xf32>
    %212 = vector.extract_strided_slice %208 {offsets = [0, 0], sizes = [16, 8], strides = [1, 1]} : vector<64x8xf32> to vector<16x8xf32>
    %cst_111 = arith.constant dense<0.000000e+00> : vector<8x8xf32>
    %213 = tpu.matmul %210, %212, %cst_111 {dimension_numbers = #tpu.dot_dimension_numbers<[1], [0], [0], [1], [0, 0, 1, 1], [], []>} : vector<8x16xf32>, vector<16x8xf32>, vector<8x8xf32> -> vector<8x8xf32>
    %cst_112 = arith.constant dense<0.000000e+00> : vector<8x32xf32>
    %214 = tpu.matmul %213, %6, %cst_112 {dimension_numbers = #tpu.dot_dimension_numbers<[1], [0], [0], [1], [0, 0, 1, 1], [], []>} : vector<8x8xf32>, vector<8x32xf32>, vector<8x32xf32> -> vector<8x32xf32>
    %215 = arith.addf %211, %214 : vector<8x32xf32>
    %216 = vector.extract_strided_slice %208 {offsets = [16, 0], sizes = [16, 8], strides = [1, 1]} : vector<64x8xf32> to vector<16x8xf32>
    %cst_113 = arith.constant dense<0.000000e+00> : vector<8x8xf32>
    %217 = tpu.matmul %210, %216, %cst_113 {dimension_numbers = #tpu.dot_dimension_numbers<[1], [0], [0], [1], [0, 0, 1, 1], [], []>} : vector<8x16xf32>, vector<16x8xf32>, vector<8x8xf32> -> vector<8x8xf32>
    %cst_114 = arith.constant dense<0.000000e+00> : vector<8x32xf32>
    %218 = tpu.matmul %217, %11, %cst_114 {dimension_numbers = #tpu.dot_dimension_numbers<[1], [0], [0], [1], [0, 0, 1, 1], [], []>} : vector<8x8xf32>, vector<8x32xf32>, vector<8x32xf32> -> vector<8x32xf32>
    %219 = arith.addf %215, %218 : vector<8x32xf32>
    %220 = vector.extract_strided_slice %208 {offsets = [32, 0], sizes = [16, 8], strides = [1, 1]} : vector<64x8xf32> to vector<16x8xf32>
    %cst_115 = arith.constant dense<0.000000e+00> : vector<8x8xf32>
    %221 = tpu.matmul %210, %220, %cst_115 {dimension_numbers = #tpu.dot_dimension_numbers<[1], [0], [0], [1], [0, 0, 1, 1], [], []>} : vector<8x16xf32>, vector<16x8xf32>, vector<8x8xf32> -> vector<8x8xf32>
    %cst_116 = arith.constant dense<0.000000e+00> : vector<8x32xf32>
    %222 = tpu.matmul %221, %16, %cst_116 {dimension_numbers = #tpu.dot_dimension_numbers<[1], [0], [0], [1], [0, 0, 1, 1], [], []>} : vector<8x8xf32>, vector<8x32xf32>, vector<8x32xf32> -> vector<8x32xf32>
    %223 = arith.addf %219, %222 : vector<8x32xf32>
    %224 = vector.extract_strided_slice %208 {offsets = [48, 0], sizes = [16, 8], strides = [1, 1]} : vector<64x8xf32> to vector<16x8xf32>
    %cst_117 = arith.constant dense<0.000000e+00> : vector<8x8xf32>
    %225 = tpu.matmul %210, %224, %cst_117 {dimension_numbers = #tpu.dot_dimension_numbers<[1], [0], [0], [1], [0, 0, 1, 1], [], []>} : vector<8x16xf32>, vector<16x8xf32>, vector<8x8xf32> -> vector<8x8xf32>
    %cst_118 = arith.constant dense<0.000000e+00> : vector<8x32xf32>
    %226 = tpu.matmul %225, %21, %cst_118 {dimension_numbers = #tpu.dot_dimension_numbers<[1], [0], [0], [1], [0, 0, 1, 1], [], []>} : vector<8x8xf32>, vector<8x32xf32>, vector<8x32xf32> -> vector<8x32xf32>
    %227 = arith.addf %223, %226 : vector<8x32xf32>
    %228 = tpu.iota {dimensions = array<i32: 0>} : vector<64x8xi32>
    %229 = tpu.iota {dimensions = array<i32: 1>} : vector<64x8xi32>
    %c8_i32_119 = arith.constant 8 : i32
    %230 = vector.broadcast %c8_i32_119 : i32 to vector<64x8xi32>
    %231 = arith.muli %229, %230 : vector<64x8xi32>
    %c5_i32 = arith.constant 5 : i32
    %232 = vector.broadcast %c5_i32 : i32 to vector<64x8xi32>
    %233 = arith.addi %231, %232 : vector<64x8xi32>
    %234 = arith.cmpi eq, %228, %233 : vector<64x8xi32>
    %235 = arith.extui %234 : vector<64x8xi1> to vector<64x8xi32>
    %236 = arith.sitofp %235 : vector<64x8xi32> to vector<64x8xf32>
    %cst_120 = arith.constant dense<0.000000e+00> : vector<64x32xf32>
    %237 = tpu.matmul %236, %227, %cst_120 {dimension_numbers = #tpu.dot_dimension_numbers<[1], [0], [0], [1], [0, 0, 1, 1], [], []>} : vector<64x8xf32>, vector<8x32xf32>, vector<64x32xf32> -> vector<64x32xf32>
    %238 = arith.addf %202, %237 : vector<64x32xf32>
    %c6 = arith.constant 6 : index
    %c0_121 = arith.constant 0 : index
    %c0_122 = arith.constant 0 : index
    %239 = vector.load %arg1[%c6, %c0_121, %c0_122] : memref<8x64x16xbf16, #tpu.memory_space<vmem>>, vector<1x64x16xbf16>
    %240 = vector.shape_cast %239 : vector<1x64x16xbf16> to vector<64x16xbf16>
    %241 = arith.extf %240 : vector<64x16xbf16> to vector<64x16xf32>
    %c6_123 = arith.constant 6 : index
    %c0_124 = arith.constant 0 : index
    %c0_125 = arith.constant 0 : index
    %242 = vector.load %arg3[%c6_123, %c0_124, %c0_125] : memref<8x16x8xf32, #tpu.memory_space<vmem>>, vector<1x16x8xf32>
    %243 = vector.shape_cast %242 : vector<1x16x8xf32> to vector<16x8xf32>
    %cst_126 = arith.constant dense<0.000000e+00> : vector<64x8xf32>
    %244 = tpu.matmul %241, %243, %cst_126 {dimension_numbers = #tpu.dot_dimension_numbers<[1], [0], [0], [1], [0, 0, 1, 1], [], []>} : vector<64x16xf32>, vector<16x8xf32>, vector<64x8xf32> -> vector<64x8xf32>
    %c6_127 = arith.constant 6 : index
    %c0_128 = arith.constant 0 : index
    %c0_129 = arith.constant 0 : index
    %245 = vector.load %arg2[%c6_127, %c0_128, %c0_129] : memref<8x8x16xf32, #tpu.memory_space<vmem>>, vector<1x8x16xf32>
    %246 = vector.shape_cast %245 : vector<1x8x16xf32> to vector<8x16xf32>
    %cst_130 = arith.constant 0.000000e+00 : f32
    %247 = vector.broadcast %cst_130 : f32 to vector<8x32xf32>
    %248 = vector.extract_strided_slice %244 {offsets = [0, 0], sizes = [16, 8], strides = [1, 1]} : vector<64x8xf32> to vector<16x8xf32>
    %cst_131 = arith.constant dense<0.000000e+00> : vector<8x8xf32>
    %249 = tpu.matmul %246, %248, %cst_131 {dimension_numbers = #tpu.dot_dimension_numbers<[1], [0], [0], [1], [0, 0, 1, 1], [], []>} : vector<8x16xf32>, vector<16x8xf32>, vector<8x8xf32> -> vector<8x8xf32>
    %cst_132 = arith.constant dense<0.000000e+00> : vector<8x32xf32>
    %250 = tpu.matmul %249, %6, %cst_132 {dimension_numbers = #tpu.dot_dimension_numbers<[1], [0], [0], [1], [0, 0, 1, 1], [], []>} : vector<8x8xf32>, vector<8x32xf32>, vector<8x32xf32> -> vector<8x32xf32>
    %251 = arith.addf %247, %250 : vector<8x32xf32>
    %252 = vector.extract_strided_slice %244 {offsets = [16, 0], sizes = [16, 8], strides = [1, 1]} : vector<64x8xf32> to vector<16x8xf32>
    %cst_133 = arith.constant dense<0.000000e+00> : vector<8x8xf32>
    %253 = tpu.matmul %246, %252, %cst_133 {dimension_numbers = #tpu.dot_dimension_numbers<[1], [0], [0], [1], [0, 0, 1, 1], [], []>} : vector<8x16xf32>, vector<16x8xf32>, vector<8x8xf32> -> vector<8x8xf32>
    %cst_134 = arith.constant dense<0.000000e+00> : vector<8x32xf32>
    %254 = tpu.matmul %253, %11, %cst_134 {dimension_numbers = #tpu.dot_dimension_numbers<[1], [0], [0], [1], [0, 0, 1, 1], [], []>} : vector<8x8xf32>, vector<8x32xf32>, vector<8x32xf32> -> vector<8x32xf32>
    %255 = arith.addf %251, %254 : vector<8x32xf32>
    %256 = vector.extract_strided_slice %244 {offsets = [32, 0], sizes = [16, 8], strides = [1, 1]} : vector<64x8xf32> to vector<16x8xf32>
    %cst_135 = arith.constant dense<0.000000e+00> : vector<8x8xf32>
    %257 = tpu.matmul %246, %256, %cst_135 {dimension_numbers = #tpu.dot_dimension_numbers<[1], [0], [0], [1], [0, 0, 1, 1], [], []>} : vector<8x16xf32>, vector<16x8xf32>, vector<8x8xf32> -> vector<8x8xf32>
    %cst_136 = arith.constant dense<0.000000e+00> : vector<8x32xf32>
    %258 = tpu.matmul %257, %16, %cst_136 {dimension_numbers = #tpu.dot_dimension_numbers<[1], [0], [0], [1], [0, 0, 1, 1], [], []>} : vector<8x8xf32>, vector<8x32xf32>, vector<8x32xf32> -> vector<8x32xf32>
    %259 = arith.addf %255, %258 : vector<8x32xf32>
    %260 = vector.extract_strided_slice %244 {offsets = [48, 0], sizes = [16, 8], strides = [1, 1]} : vector<64x8xf32> to vector<16x8xf32>
    %cst_137 = arith.constant dense<0.000000e+00> : vector<8x8xf32>
    %261 = tpu.matmul %246, %260, %cst_137 {dimension_numbers = #tpu.dot_dimension_numbers<[1], [0], [0], [1], [0, 0, 1, 1], [], []>} : vector<8x16xf32>, vector<16x8xf32>, vector<8x8xf32> -> vector<8x8xf32>
    %cst_138 = arith.constant dense<0.000000e+00> : vector<8x32xf32>
    %262 = tpu.matmul %261, %21, %cst_138 {dimension_numbers = #tpu.dot_dimension_numbers<[1], [0], [0], [1], [0, 0, 1, 1], [], []>} : vector<8x8xf32>, vector<8x32xf32>, vector<8x32xf32> -> vector<8x32xf32>
    %263 = arith.addf %259, %262 : vector<8x32xf32>
    %264 = tpu.iota {dimensions = array<i32: 0>} : vector<64x8xi32>
    %265 = tpu.iota {dimensions = array<i32: 1>} : vector<64x8xi32>
    %c8_i32_139 = arith.constant 8 : i32
    %266 = vector.broadcast %c8_i32_139 : i32 to vector<64x8xi32>
    %267 = arith.muli %265, %266 : vector<64x8xi32>
    %c6_i32 = arith.constant 6 : i32
    %268 = vector.broadcast %c6_i32 : i32 to vector<64x8xi32>
    %269 = arith.addi %267, %268 : vector<64x8xi32>
    %270 = arith.cmpi eq, %264, %269 : vector<64x8xi32>
    %271 = arith.extui %270 : vector<64x8xi1> to vector<64x8xi32>
    %272 = arith.sitofp %271 : vector<64x8xi32> to vector<64x8xf32>
    %cst_140 = arith.constant dense<0.000000e+00> : vector<64x32xf32>
    %273 = tpu.matmul %272, %263, %cst_140 {dimension_numbers = #tpu.dot_dimension_numbers<[1], [0], [0], [1], [0, 0, 1, 1], [], []>} : vector<64x8xf32>, vector<8x32xf32>, vector<64x32xf32> -> vector<64x32xf32>
    %274 = arith.addf %238, %273 : vector<64x32xf32>
    %c7 = arith.constant 7 : index
    %c0_141 = arith.constant 0 : index
    %c0_142 = arith.constant 0 : index
    %275 = vector.load %arg1[%c7, %c0_141, %c0_142] : memref<8x64x16xbf16, #tpu.memory_space<vmem>>, vector<1x64x16xbf16>
    %276 = vector.shape_cast %275 : vector<1x64x16xbf16> to vector<64x16xbf16>
    %277 = arith.extf %276 : vector<64x16xbf16> to vector<64x16xf32>
    %c7_143 = arith.constant 7 : index
    %c0_144 = arith.constant 0 : index
    %c0_145 = arith.constant 0 : index
    %278 = vector.load %arg3[%c7_143, %c0_144, %c0_145] : memref<8x16x8xf32, #tpu.memory_space<vmem>>, vector<1x16x8xf32>
    %279 = vector.shape_cast %278 : vector<1x16x8xf32> to vector<16x8xf32>
    %cst_146 = arith.constant dense<0.000000e+00> : vector<64x8xf32>
    %280 = tpu.matmul %277, %279, %cst_146 {dimension_numbers = #tpu.dot_dimension_numbers<[1], [0], [0], [1], [0, 0, 1, 1], [], []>} : vector<64x16xf32>, vector<16x8xf32>, vector<64x8xf32> -> vector<64x8xf32>
    %c7_147 = arith.constant 7 : index
    %c0_148 = arith.constant 0 : index
    %c0_149 = arith.constant 0 : index
    %281 = vector.load %arg2[%c7_147, %c0_148, %c0_149] : memref<8x8x16xf32, #tpu.memory_space<vmem>>, vector<1x8x16xf32>
    %282 = vector.shape_cast %281 : vector<1x8x16xf32> to vector<8x16xf32>
    %cst_150 = arith.constant 0.000000e+00 : f32
    %283 = vector.broadcast %cst_150 : f32 to vector<8x32xf32>
    %284 = vector.extract_strided_slice %280 {offsets = [0, 0], sizes = [16, 8], strides = [1, 1]} : vector<64x8xf32> to vector<16x8xf32>
    %cst_151 = arith.constant dense<0.000000e+00> : vector<8x8xf32>
    %285 = tpu.matmul %282, %284, %cst_151 {dimension_numbers = #tpu.dot_dimension_numbers<[1], [0], [0], [1], [0, 0, 1, 1], [], []>} : vector<8x16xf32>, vector<16x8xf32>, vector<8x8xf32> -> vector<8x8xf32>
    %cst_152 = arith.constant dense<0.000000e+00> : vector<8x32xf32>
    %286 = tpu.matmul %285, %6, %cst_152 {dimension_numbers = #tpu.dot_dimension_numbers<[1], [0], [0], [1], [0, 0, 1, 1], [], []>} : vector<8x8xf32>, vector<8x32xf32>, vector<8x32xf32> -> vector<8x32xf32>
    %287 = arith.addf %283, %286 : vector<8x32xf32>
    %288 = vector.extract_strided_slice %280 {offsets = [16, 0], sizes = [16, 8], strides = [1, 1]} : vector<64x8xf32> to vector<16x8xf32>
    %cst_153 = arith.constant dense<0.000000e+00> : vector<8x8xf32>
    %289 = tpu.matmul %282, %288, %cst_153 {dimension_numbers = #tpu.dot_dimension_numbers<[1], [0], [0], [1], [0, 0, 1, 1], [], []>} : vector<8x16xf32>, vector<16x8xf32>, vector<8x8xf32> -> vector<8x8xf32>
    %cst_154 = arith.constant dense<0.000000e+00> : vector<8x32xf32>
    %290 = tpu.matmul %289, %11, %cst_154 {dimension_numbers = #tpu.dot_dimension_numbers<[1], [0], [0], [1], [0, 0, 1, 1], [], []>} : vector<8x8xf32>, vector<8x32xf32>, vector<8x32xf32> -> vector<8x32xf32>
    %291 = arith.addf %287, %290 : vector<8x32xf32>
    %292 = vector.extract_strided_slice %280 {offsets = [32, 0], sizes = [16, 8], strides = [1, 1]} : vector<64x8xf32> to vector<16x8xf32>
    %cst_155 = arith.constant dense<0.000000e+00> : vector<8x8xf32>
    %293 = tpu.matmul %282, %292, %cst_155 {dimension_numbers = #tpu.dot_dimension_numbers<[1], [0], [0], [1], [0, 0, 1, 1], [], []>} : vector<8x16xf32>, vector<16x8xf32>, vector<8x8xf32> -> vector<8x8xf32>
    %cst_156 = arith.constant dense<0.000000e+00> : vector<8x32xf32>
    %294 = tpu.matmul %293, %16, %cst_156 {dimension_numbers = #tpu.dot_dimension_numbers<[1], [0], [0], [1], [0, 0, 1, 1], [], []>} : vector<8x8xf32>, vector<8x32xf32>, vector<8x32xf32> -> vector<8x32xf32>
    %295 = arith.addf %291, %294 : vector<8x32xf32>
    %296 = vector.extract_strided_slice %280 {offsets = [48, 0], sizes = [16, 8], strides = [1, 1]} : vector<64x8xf32> to vector<16x8xf32>
    %cst_157 = arith.constant dense<0.000000e+00> : vector<8x8xf32>
    %297 = tpu.matmul %282, %296, %cst_157 {dimension_numbers = #tpu.dot_dimension_numbers<[1], [0], [0], [1], [0, 0, 1, 1], [], []>} : vector<8x16xf32>, vector<16x8xf32>, vector<8x8xf32> -> vector<8x8xf32>
    %cst_158 = arith.constant dense<0.000000e+00> : vector<8x32xf32>
    %298 = tpu.matmul %297, %21, %cst_158 {dimension_numbers = #tpu.dot_dimension_numbers<[1], [0], [0], [1], [0, 0, 1, 1], [], []>} : vector<8x8xf32>, vector<8x32xf32>, vector<8x32xf32> -> vector<8x32xf32>
    %299 = arith.addf %295, %298 : vector<8x32xf32>
    %300 = tpu.iota {dimensions = array<i32: 0>} : vector<64x8xi32>
    %301 = tpu.iota {dimensions = array<i32: 1>} : vector<64x8xi32>
    %c8_i32_159 = arith.constant 8 : i32
    %302 = vector.broadcast %c8_i32_159 : i32 to vector<64x8xi32>
    %303 = arith.muli %301, %302 : vector<64x8xi32>
    %c7_i32 = arith.constant 7 : i32
    %304 = vector.broadcast %c7_i32 : i32 to vector<64x8xi32>
    %305 = arith.addi %303, %304 : vector<64x8xi32>
    %306 = arith.cmpi eq, %300, %305 : vector<64x8xi32>
    %307 = arith.extui %306 : vector<64x8xi1> to vector<64x8xi32>
    %308 = arith.sitofp %307 : vector<64x8xi32> to vector<64x8xf32>
    %cst_160 = arith.constant dense<0.000000e+00> : vector<64x32xf32>
    %309 = tpu.matmul %308, %299, %cst_160 {dimension_numbers = #tpu.dot_dimension_numbers<[1], [0], [0], [1], [0, 0, 1, 1], [], []>} : vector<64x8xf32>, vector<8x32xf32>, vector<64x32xf32> -> vector<64x32xf32>
    %310 = arith.addf %274, %309 : vector<64x32xf32>
    %cst_161 = arith.constant 0.000000e+00 : f32
    %311 = vector.broadcast %cst_161 : f32 to vector<8x32xf32>
    %312 = vector.extract_strided_slice %310 {offsets = [0, 0], sizes = [8, 32], strides = [1, 1]} : vector<64x32xf32> to vector<8x32xf32>
    %c0_162 = arith.constant 0 : index
    %c0_163 = arith.constant 0 : index
    %c0_164 = arith.constant 0 : index
    %313 = vector.load %arg4[%c0_162, %c0_163, %c0_164] : memref<8x32x32xf32, #tpu.memory_space<vmem>>, vector<1x32x32xf32>
    %314 = vector.shape_cast %313 : vector<1x32x32xf32> to vector<32x32xf32>
    %cst_165 = arith.constant dense<0.000000e+00> : vector<8x32xf32>
    %315 = tpu.matmul %312, %314, %cst_165 {dimension_numbers = #tpu.dot_dimension_numbers<[1], [0], [0], [1], [0, 0, 1, 1], [], []>} : vector<8x32xf32>, vector<32x32xf32>, vector<8x32xf32> -> vector<8x32xf32>
    %316 = arith.addf %311, %315 : vector<8x32xf32>
    %317 = vector.extract_strided_slice %310 {offsets = [8, 0], sizes = [8, 32], strides = [1, 1]} : vector<64x32xf32> to vector<8x32xf32>
    %c1_166 = arith.constant 1 : index
    %c0_167 = arith.constant 0 : index
    %c0_168 = arith.constant 0 : index
    %318 = vector.load %arg4[%c1_166, %c0_167, %c0_168] : memref<8x32x32xf32, #tpu.memory_space<vmem>>, vector<1x32x32xf32>
    %319 = vector.shape_cast %318 : vector<1x32x32xf32> to vector<32x32xf32>
    %cst_169 = arith.constant dense<0.000000e+00> : vector<8x32xf32>
    %320 = tpu.matmul %317, %319, %cst_169 {dimension_numbers = #tpu.dot_dimension_numbers<[1], [0], [0], [1], [0, 0, 1, 1], [], []>} : vector<8x32xf32>, vector<32x32xf32>, vector<8x32xf32> -> vector<8x32xf32>
    %321 = arith.addf %316, %320 : vector<8x32xf32>
    %322 = vector.extract_strided_slice %310 {offsets = [16, 0], sizes = [8, 32], strides = [1, 1]} : vector<64x32xf32> to vector<8x32xf32>
    %c2_170 = arith.constant 2 : index
    %c0_171 = arith.constant 0 : index
    %c0_172 = arith.constant 0 : index
    %323 = vector.load %arg4[%c2_170, %c0_171, %c0_172] : memref<8x32x32xf32, #tpu.memory_space<vmem>>, vector<1x32x32xf32>
    %324 = vector.shape_cast %323 : vector<1x32x32xf32> to vector<32x32xf32>
    %cst_173 = arith.constant dense<0.000000e+00> : vector<8x32xf32>
    %325 = tpu.matmul %322, %324, %cst_173 {dimension_numbers = #tpu.dot_dimension_numbers<[1], [0], [0], [1], [0, 0, 1, 1], [], []>} : vector<8x32xf32>, vector<32x32xf32>, vector<8x32xf32> -> vector<8x32xf32>
    %326 = arith.addf %321, %325 : vector<8x32xf32>
    %327 = vector.extract_strided_slice %310 {offsets = [24, 0], sizes = [8, 32], strides = [1, 1]} : vector<64x32xf32> to vector<8x32xf32>
    %c3_174 = arith.constant 3 : index
    %c0_175 = arith.constant 0 : index
    %c0_176 = arith.constant 0 : index
    %328 = vector.load %arg4[%c3_174, %c0_175, %c0_176] : memref<8x32x32xf32, #tpu.memory_space<vmem>>, vector<1x32x32xf32>
    %329 = vector.shape_cast %328 : vector<1x32x32xf32> to vector<32x32xf32>
    %cst_177 = arith.constant dense<0.000000e+00> : vector<8x32xf32>
    %330 = tpu.matmul %327, %329, %cst_177 {dimension_numbers = #tpu.dot_dimension_numbers<[1], [0], [0], [1], [0, 0, 1, 1], [], []>} : vector<8x32xf32>, vector<32x32xf32>, vector<8x32xf32> -> vector<8x32xf32>
    %331 = arith.addf %326, %330 : vector<8x32xf32>
    %332 = vector.extract_strided_slice %310 {offsets = [32, 0], sizes = [8, 32], strides = [1, 1]} : vector<64x32xf32> to vector<8x32xf32>
    %c4_178 = arith.constant 4 : index
    %c0_179 = arith.constant 0 : index
    %c0_180 = arith.constant 0 : index
    %333 = vector.load %arg4[%c4_178, %c0_179, %c0_180] : memref<8x32x32xf32, #tpu.memory_space<vmem>>, vector<1x32x32xf32>
    %334 = vector.shape_cast %333 : vector<1x32x32xf32> to vector<32x32xf32>
    %cst_181 = arith.constant dense<0.000000e+00> : vector<8x32xf32>
    %335 = tpu.matmul %332, %334, %cst_181 {dimension_numbers = #tpu.dot_dimension_numbers<[1], [0], [0], [1], [0, 0, 1, 1], [], []>} : vector<8x32xf32>, vector<32x32xf32>, vector<8x32xf32> -> vector<8x32xf32>
    %336 = arith.addf %331, %335 : vector<8x32xf32>
    %337 = vector.extract_strided_slice %310 {offsets = [40, 0], sizes = [8, 32], strides = [1, 1]} : vector<64x32xf32> to vector<8x32xf32>
    %c5_182 = arith.constant 5 : index
    %c0_183 = arith.constant 0 : index
    %c0_184 = arith.constant 0 : index
    %338 = vector.load %arg4[%c5_182, %c0_183, %c0_184] : memref<8x32x32xf32, #tpu.memory_space<vmem>>, vector<1x32x32xf32>
    %339 = vector.shape_cast %338 : vector<1x32x32xf32> to vector<32x32xf32>
    %cst_185 = arith.constant dense<0.000000e+00> : vector<8x32xf32>
    %340 = tpu.matmul %337, %339, %cst_185 {dimension_numbers = #tpu.dot_dimension_numbers<[1], [0], [0], [1], [0, 0, 1, 1], [], []>} : vector<8x32xf32>, vector<32x32xf32>, vector<8x32xf32> -> vector<8x32xf32>
    %341 = arith.addf %336, %340 : vector<8x32xf32>
    %342 = vector.extract_strided_slice %310 {offsets = [48, 0], sizes = [8, 32], strides = [1, 1]} : vector<64x32xf32> to vector<8x32xf32>
    %c6_186 = arith.constant 6 : index
    %c0_187 = arith.constant 0 : index
    %c0_188 = arith.constant 0 : index
    %343 = vector.load %arg4[%c6_186, %c0_187, %c0_188] : memref<8x32x32xf32, #tpu.memory_space<vmem>>, vector<1x32x32xf32>
    %344 = vector.shape_cast %343 : vector<1x32x32xf32> to vector<32x32xf32>
    %cst_189 = arith.constant dense<0.000000e+00> : vector<8x32xf32>
    %345 = tpu.matmul %342, %344, %cst_189 {dimension_numbers = #tpu.dot_dimension_numbers<[1], [0], [0], [1], [0, 0, 1, 1], [], []>} : vector<8x32xf32>, vector<32x32xf32>, vector<8x32xf32> -> vector<8x32xf32>
    %346 = arith.addf %341, %345 : vector<8x32xf32>
    %347 = vector.extract_strided_slice %310 {offsets = [56, 0], sizes = [8, 32], strides = [1, 1]} : vector<64x32xf32> to vector<8x32xf32>
    %c7_190 = arith.constant 7 : index
    %c0_191 = arith.constant 0 : index
    %c0_192 = arith.constant 0 : index
    %348 = vector.load %arg4[%c7_190, %c0_191, %c0_192] : memref<8x32x32xf32, #tpu.memory_space<vmem>>, vector<1x32x32xf32>
    %349 = vector.shape_cast %348 : vector<1x32x32xf32> to vector<32x32xf32>
    %cst_193 = arith.constant dense<0.000000e+00> : vector<8x32xf32>
    %350 = tpu.matmul %347, %349, %cst_193 {dimension_numbers = #tpu.dot_dimension_numbers<[1], [0], [0], [1], [0, 0, 1, 1], [], []>} : vector<8x32xf32>, vector<32x32xf32>, vector<8x32xf32> -> vector<8x32xf32>
    %351 = arith.addf %346, %350 : vector<8x32xf32>
    %c0_194 = arith.constant 0 : index
    %c0_195 = arith.constant 0 : index
    %352 = vector.load %arg5[%c0_194, %c0_195] : memref<1x32xf32, #tpu.memory_space<vmem>>, vector<1x32xf32>
    %353 = vector.broadcast %352 : vector<1x32xf32> to vector<8x32xf32>
    %354 = arith.addf %351, %353 : vector<8x32xf32>
    %c0_196 = arith.constant 0 : index
    %c0_197 = arith.constant 0 : index
    %355 = vector.load %arg6[%c0_196, %c0_197] : memref<8x32xf32, #tpu.memory_space<vmem>>, vector<8x32xf32>
    tpu.vector_store %arg6[%c0_196, %c0_197], %354 {strides = array<i32>} : memref<8x32xf32, #tpu.memory_space<vmem>>, vector<8x32xf32>,
    return
  }
  func.func @transform_0(%arg0: i32) -> (i32, i32, i32) {
    %c0_i32 = arith.constant 0 : i32
    %c0_i32_0 = arith.constant 0 : i32
    %c0_i32_1 = arith.constant 0 : i32
    return %arg0, %c0_i32, %c0_i32_0 : i32, i32, i32
  }
  func.func @transform_1(%arg0: i32) -> (i32, i32, i32) {
    %c0_i32 = arith.constant 0 : i32
    %c0_i32_0 = arith.constant 0 : i32
    %c0_i32_1 = arith.constant 0 : i32
    return %arg0, %c0_i32, %c0_i32_0 : i32, i32, i32
  }
  func.func @transform_2(%arg0: i32) -> (i32, i32, i32) {
    %c0_i32 = arith.constant 0 : i32
    %c0_i32_0 = arith.constant 0 : i32
    %c0_i32_1 = arith.constant 0 : i32
    return %arg0, %c0_i32, %c0_i32_0 : i32, i32, i32
  }
  func.func @transform_3(%arg0: i32) -> (i32, i32, i32) {
    %c0_i32 = arith.constant 0 : i32
    %c0_i32_0 = arith.constant 0 : i32
    %c0_i32_1 = arith.constant 0 : i32
    %c0_i32_2 = arith.constant 0 : i32
    return %c0_i32, %c0_i32_0, %c0_i32_1 : i32, i32, i32
  }
  func.func @transform_4(%arg0: i32) -> (i32, i32) {
    %c0_i32 = arith.constant 0 : i32
    %c0_i32_0 = arith.constant 0 : i32
    %c0_i32_1 = arith.constant 0 : i32
    return %c0_i32, %c0_i32_0 : i32, i32
  }
  func.func @transform_5(%arg0: i32) -> (i32, i32) {
    %c0_i32 = arith.constant 0 : i32
    %c0_i32_0 = arith.constant 0 : i32
    return %arg0, %c0_i32 : i32, i32
  }
}

</mosaic_0001>

<llo_original>
// kernel: saccadic_patch_embeddings.1
$region0: #{saccadic_patch_embeddings.1}
  #allocation0 [shape = 'u32[]', space=smem, size = 0x4, offset = 0x4, fixed_abs, tag = 'smem constant byte address 0x4 - core index']
  #allocation1 [shape = 'u32[144,128]{1,0:T(1,128)}', space=vmem, size = 0x12000, scoped, tag = 'internal scratch']
  %s0 = inlined_call_operand.vmem [shape: bf16[16,64,16], index: 0, kind: input, shape index: {}]
  %s1 = inlined_call_operand.vmem [shape: f32[16,8,16], index: 1, kind: input, shape index: {}]
  %s2 = inlined_call_operand.vmem [shape: f32[16,16,8], index: 2, kind: input, shape index: {}]
  %s3 = inlined_call_operand.vmem [shape: f32[8,32,32], index: 3, kind: input, shape index: {}]
  %s4 = inlined_call_operand.vmem [shape: f32[1,32], index: 4, kind: input, shape index: {}]
  %s5 = inlined_call_operand.hbm [shape: f32[16,32], index: 5, kind: output, shape index: {}]
  %s6 = sld [smem:[#allocation0]]
  $region53: #{saccadic_patch_embeddings.1} parent=0
    _
  %s8 = ssub.s32 1, %s6
  %s9 = scalar_select 0, %s8, %s6
  $region1: #{saccadic_patch_embeddings.1} parent=0
    #allocation2 [shape = 'u8[8192]{0}', space=vmem, size = 0x2000, scoped, tag = 'output window, operand 0']
    #allocation3 [shape = 's32[2]{0}', space=sflag, size = 0x8, scoped, tag = 'scoped memory for saccadic_patch_embeddings.1']
    %10 = vsyncpa [#allocation3], 0
    %s11 = scalar_lea.sflag [#allocation3], 1
    %12 = vsyncpa %s11, 0
    loop: start=0, step=1, limit=4
    $region2: #{saccadic_patch_embeddings.1} parent=1 // loop_pre_header
      _
    $region3: #{saccadic_patch_embeddings.1} parent=1 // loop_header
      %s14 = sphi 0, %s18
      %p15 = scmp.ge.s32.totalorder %s14, 4
      %s24 = sphi 0, %s26
      %s27 = sphi 0, %s24
      %s28 = sphi 0, %s27
      %s44 = sphi 0, %s28
      %s50 = sphi 0, %s52
      %s53 = sphi 0, %s50
      %s54 = sphi 0, %s53
      %s70 = sphi 0, %s54
      %s76 = sphi 0, %s78
      %s79 = sphi 0, %s76
      %s80 = sphi 0, %s79
      %s96 = sphi 0, %s80
      %s100 = sphi 0, %s100
      %s102 = sphi 0, %s100
      %s103 = sphi 0, %s102
      %s117 = sphi 0, %s103
      %s121 = sphi 0, %s121
      %s123 = sphi 0, %s121
      %s124 = sphi 0, %s123
      %s138 = sphi 0, %s124
      %s144 = sphi 0, %s146
      %s147 = sphi 0, %s144
      %s148 = sphi 0, %s147
      %s164 = sphi 0, %s148
    $region4: #{saccadic_patch_embeddings.1} parent=1 // loop_header_branch
      %17 = sbr.rel (%p15) target = $region8
    $region5: #{saccadic_patch_embeddings.1} parent=1 // loop_body
      %s19 = ssub.s32 %s14, 1
      %s20 = ssub.s32 %s14, 2
      %s21 = sadd.s32 %s14, 1
      %s22 = ssub.s32 %s14, %s21
      %p23 = scmp.eq.s32.totalorder %s22, 0
      %s25 = sadd.s32 %s24, 1
      %s26 = scalar_select %p23, %s24, %s25
      %p29 = pneg %p23
      %p30 = scmp.eq.s32.totalorder %s14, 1
      %p31 = por %p29, %p30
      %p32 = scmp.ne.s32.totalorder %s24, %s27
      %p33 = scmp.eq.s32.totalorder %s14, 0
      %p34 = por %p32, %p33
      %p35 = scmp.ne.s32.totalorder %s24, %s27
      %p36 = scmp.eq.s32.totalorder %s19, 1
      %p37 = por %p35, %p36
      %p38 = scmp.ne.s32.totalorder %s27, %s28
      %p39 = scmp.eq.s32.totalorder %s19, 0
      %p40 = por %p38, %p39
      %p41 = scmp.ne.s32.totalorder %s27, %s28
      %p42 = scmp.eq.s32.totalorder %s20, 1
      %p43 = por %p41, %p42
      %p45 = scmp.ne.s32.totalorder %s28, %s44
      %p46 = scmp.eq.s32.totalorder %s20, 0
      %p47 = por %p45, %p46
      %s48 = ssub.s32 %s14, %s21
      %p49 = scmp.eq.s32.totalorder %s48, 0
      %s51 = sadd.s32 %s50, 1
      %s52 = scalar_select %p49, %s50, %s51
      %p55 = pneg %p49
      %p56 = scmp.eq.s32.totalorder %s14, 1
      %p57 = por %p55, %p56
      %p58 = scmp.ne.s32.totalorder %s50, %s53
      %p59 = scmp.eq.s32.totalorder %s14, 0
      %p60 = por %p58, %p59
      %p61 = scmp.ne.s32.totalorder %s50, %s53
      %p62 = scmp.eq.s32.totalorder %s19, 1
      %p63 = por %p61, %p62
      %p64 = scmp.ne.s32.totalorder %s53, %s54
      %p65 = scmp.eq.s32.totalorder %s19, 0
      %p66 = por %p64, %p65
      %p67 = scmp.ne.s32.totalorder %s53, %s54
      %p68 = scmp.eq.s32.totalorder %s20, 1
      %p69 = por %p67, %p68
      %p71 = scmp.ne.s32.totalorder %s54, %s70
      %p72 = scmp.eq.s32.totalorder %s20, 0
      %p73 = por %p71, %p72
      %s74 = ssub.s32 %s14, %s21
      %p75 = scmp.eq.s32.totalorder %s74, 0
      %s77 = sadd.s32 %s76, 1
      %s78 = scalar_select %p75, %s76, %s77
      %p81 = pneg %p75
      %p82 = scmp.eq.s32.totalorder %s14, 1
      %p83 = por %p81, %p82
      %p84 = scmp.ne.s32.totalorder %s76, %s79
      %p85 = scmp.eq.s32.totalorder %s14, 0
      %p86 = por %p84, %p85
      %p87 = scmp.ne.s32.totalorder %s76, %s79
      %p88 = scmp.eq.s32.totalorder %s19, 1
      %p89 = por %p87, %p88
      %p90 = scmp.ne.s32.totalorder %s79, %s80
      %p91 = scmp.eq.s32.totalorder %s19, 0
      %p92 = por %p90, %p91
      %p93 = scmp.ne.s32.totalorder %s79, %s80
      %p94 = scmp.eq.s32.totalorder %s20, 1
      %p95 = por %p93, %p94
      %p97 = scmp.ne.s32.totalorder %s80, %s96
      %p98 = scmp.eq.s32.totalorder %s20, 0
      %p99 = por %p97, %p98
      %s101 = sadd.s32 %s100, 1
      %p104 = scmp.eq.s32.totalorder %s14, 1
      %p105 = scmp.ne.s32.totalorder %s100, %s102
      %p106 = scmp.eq.s32.totalorder %s14, 0
      %p107 = por %p105, %p106
      %p108 = scmp.ne.s32.totalorder %s100, %s102
      %p109 = scmp.eq.s32.totalorder %s19, 1
      %p110 = por %p108, %p109
      %p111 = scmp.ne.s32.totalorder %s102, %s103
      %p112 = scmp.eq.s32.totalorder %s19, 0
      %p113 = por %p111, %p112
      %p114 = scmp.ne.s32.totalorder %s102, %s103
      %p115 = scmp.eq.s32.totalorder %s20, 1
      %p116 = por %p114, %p115
      %p118 = scmp.ne.s32.totalorder %s103, %s117
      %p119 = scmp.eq.s32.totalorder %s20, 0
      %p120 = por %p118, %p119
      %s122 = sadd.s32 %s121, 1
      %p125 = scmp.eq.s32.totalorder %s14, 1
      %p126 = scmp.ne.s32.totalorder %s121, %s123
      %p127 = scmp.eq.s32.totalorder %s14, 0
      %p128 = por %p126, %p127
      %p129 = scmp.ne.s32.totalorder %s121, %s123
      %p130 = scmp.eq.s32.totalorder %s19, 1
      %p131 = por %p129, %p130
      %p132 = scmp.ne.s32.totalorder %s123, %s124
      %p133 = scmp.eq.s32.totalorder %s19, 0
      %p134 = por %p132, %p133
      %p135 = scmp.ne.s32.totalorder %s123, %s124
      %p136 = scmp.eq.s32.totalorder %s20, 1
      %p137 = por %p135, %p136
      %p139 = scmp.ne.s32.totalorder %s124, %s138
      %p140 = scmp.eq.s32.totalorder %s20, 0
      %p141 = por %p139, %p140
      %s142 = ssub.s32 %s14, %s21
      %p143 = scmp.eq.s32.totalorder %s142, 0
      %s145 = sadd.s32 %s144, 1
      %s146 = scalar_select %p143, %s144, %s145
      %p149 = pneg %p143
      %p150 = scmp.eq.s32.totalorder %s14, 1
      %p151 = por %p149, %p150
      %p152 = scmp.ne.s32.totalorder %s144, %s147
      %p153 = scmp.eq.s32.totalorder %s14, 0
      %p154 = por %p152, %p153
      %p155 = scmp.ne.s32.totalorder %s144, %s147
      %p156 = scmp.eq.s32.totalorder %s19, 1
      %p157 = por %p155, %p156
      %p158 = scmp.ne.s32.totalorder %s147, %s148
      %p159 = scmp.eq.s32.totalorder %s19, 0
      %p160 = por %p158, %p159
      %p161 = scmp.ne.s32.totalorder %s147, %s148
      %p162 = scmp.eq.s32.totalorder %s20, 1
      %p163 = por %p161, %p162
      %p165 = scmp.ne.s32.totalorder %s148, %s164
      %p166 = scmp.eq.s32.totalorder %s20, 0
      %p167 = por %p165, %p166
      %p168 = scmp.le.s32.totalorder 1, %s14
      %p169 = scmp.lt.s32.totalorder %s14, 3
      %p170 = pnand %p168, %p169
      %p171 = pneg %p170
      // Predicated region
      $region9: #{saccadic_patch_embeddings.1} parent=5 // pred_check
        _
      $region10: #{saccadic_patch_embeddings.1} parent=5 // pred_check_branch
        %173 = sbr.rel (%p170) target = $region12
      $region11: #{saccadic_patch_embeddings.1} parent=5 // pred_region
        %s174 = ssub.s32 %s14, 1
        // Predicated region
        $region13: #{saccadic_patch_embeddings.1} parent=11 // pred_check
          %p175 = pneg %p113
        $region14: #{saccadic_patch_embeddings.1} parent=11 // pred_check_branch
          %177 = sbr.rel (%p175) target = $region16
        $region15: #{saccadic_patch_embeddings.1} parent=11 // pred_region
          _
        $region16: #{saccadic_patch_embeddings.1} parent=11 // pred_fallthru
          _
        // Predicated region
        $region17: #{saccadic_patch_embeddings.1} parent=11 // pred_check
          %p178 = pneg %p134
        $region18: #{saccadic_patch_embeddings.1} parent=11 // pred_check_branch
          %180 = sbr.rel (%p178) target = $region20
        $region19: #{saccadic_patch_embeddings.1} parent=11 // pred_region
          _
        $region20: #{saccadic_patch_embeddings.1} parent=11 // pred_fallthru
          _
      $region12: #{saccadic_patch_embeddings.1} parent=5 // pred_fallthru
        _
      %p181 = scmp.lt.s32.totalorder %s14, 2
      // Predicated region
      $region21: #{saccadic_patch_embeddings.1} parent=5 // pred_check
        %p182 = pneg %p181
      $region22: #{saccadic_patch_embeddings.1} parent=5 // pred_check_branch
        %184 = sbr.rel (%p182) target = $region24
      $region23: #{saccadic_patch_embeddings.1} parent=5 // pred_region
        // Predicated region
        $region25: #{saccadic_patch_embeddings.1} parent=23 // pred_check
          %p185 = pneg %p34
        $region26: #{saccadic_patch_embeddings.1} parent=23 // pred_check_branch
          %187 = sbr.rel (%p185) target = $region28
        $region27: #{saccadic_patch_embeddings.1} parent=23 // pred_region
          %s188 = smul.u32 8, %s14
          %p189 = scmp.lt.s32.totalorder %s188, 15
          %s190 = scalar_select %p189, %s188, 15
          %s191 = smul.addr %s190, 8
          %s192 = smul.addr %s191, 4
          %s193 = scalar_lea.vmem %s0, %s192
          %s194 = smul.u32 8, %s14
        $region28: #{saccadic_patch_embeddings.1} parent=23 // pred_fallthru
          _
        // Predicated region
        $region29: #{saccadic_patch_embeddings.1} parent=23 // pred_check
          %p195 = pneg %p60
        $region30: #{saccadic_patch_embeddings.1} parent=23 // pred_check_branch
          %197 = sbr.rel (%p195) target = $region32
        $region31: #{saccadic_patch_embeddings.1} parent=23 // pred_region
          %s198 = smul.u32 8, %s14
          %p199 = scmp.lt.s32.totalorder %s198, 15
          %s200 = scalar_select %p199, %s198, 15
          %s201 = smul.addr %s200, 8
          %s202 = scalar_lea.vmem %s1, %s201
          %s203 = smul.u32 8, %s14
        $region32: #{saccadic_patch_embeddings.1} parent=23 // pred_fallthru
          _
        // Predicated region
        $region33: #{saccadic_patch_embeddings.1} parent=23 // pred_check
          %p204 = pneg %p86
        $region34: #{saccadic_patch_embeddings.1} parent=23 // pred_check_branch
          %206 = sbr.rel (%p204) target = $region36
        $region35: #{saccadic_patch_embeddings.1} parent=23 // pred_region
          %s207 = smul.u32 8, %s14
          %p208 = scmp.lt.s32.totalorder %s207, 15
          %s209 = scalar_select %p208, %s207, 15
          %s210 = smul.addr %s209, 2
          %s211 = smul.addr %s210, 8
          %s212 = scalar_lea.vmem %s2, %s211
          %s213 = smul.u32 8, %s14
        $region36: #{saccadic_patch_embeddings.1} parent=23 // pred_fallthru
          _
      $region24: #{saccadic_patch_embeddings.1} parent=5 // pred_fallthru
        _
      %p214 = scmp.le.s32.totalorder 1, %s14
      %p215 = scmp.lt.s32.totalorder %s14, 3
      %p216 = pnand %p214, %p215
      %p217 = pneg %p216
      // Predicated region
      $region37: #{saccadic_patch_embeddings.1} parent=5 // pred_check
        _
      $region38: #{saccadic_patch_embeddings.1} parent=5 // pred_check_branch
        %219 = sbr.rel (%p216) target = $region40
      $region39: #{saccadic_patch_embeddings.1} parent=5 // pred_region
        %s220 = ssub.s32 %s14, 1
        %s221 = smul.u32 8, %s19
        %p222 = scmp.lt.s32.totalorder %s221, 15
        %s223 = scalar_select %p222, %s221, 15
        %s224 = smul.addr %s223, 8
        %s225 = smul.addr %s224, 4
        %s226 = scalar_lea.vmem %s0, %s225
        %p227 = pneg %p40
        %p228 = pneg %p37
        %s229 = smul.u32 8, %s19
        %p230 = scmp.lt.s32.totalorder %s229, 15
        %s231 = scalar_select %p230, %s229, 15
        %s232 = smul.addr %s231, 8
        %s233 = scalar_lea.vmem %s1, %s232
        %p234 = pneg %p66
        %p235 = pneg %p63
        %s236 = smul.u32 8, %s19
        %p237 = scmp.lt.s32.totalorder %s236, 15
        %s238 = scalar_select %p237, %s236, 15
        %s239 = smul.addr %s238, 2
        %s240 = smul.addr %s239, 8
        %s241 = scalar_lea.vmem %s2, %s240
        %p242 = pneg %p92
        %p243 = pneg %p89
        %p244 = pneg %p113
        %p245 = pneg %p110
        %p246 = pneg %p134
        %p247 = pneg %p131
        %p248 = pneg %p160
        %p249 = pneg %p157
        %s250 = sand.u32 %s147, 1
        %s251 = scalar_lea.sflag [#allocation3], %s250
        %s252 = sand.u32 %s147, 1
        %s253 = smul.addr %s252, 8
        %s254 = scalar_lea.vmem [#allocation2], %s253
        %s255 = smul.u32 8, %s19
        %p256 = scmp.lt.s32.totalorder %s255, 15
        %s257 = scalar_select %p256, %s255, 15
        %s258 = smul.addr %s257, 8
        %s259 = smul.addr %s258, 4
        %s260 = scalar_lea.vmem %s0, %s259
        %s261 = smul.u32 8, %s19
        %s262 = smul.u32 8, %s19
        %p263 = scmp.lt.s32.totalorder %s262, 15
        %s264 = scalar_select %p263, %s262, 15
        %s265 = smul.addr %s264, 8
        %s266 = scalar_lea.vmem %s1, %s265
        %s267 = smul.u32 8, %s19
        %s268 = smul.u32 8, %s19
        %p269 = scmp.lt.s32.totalorder %s268, 15
        %s270 = scalar_select %p269, %s268, 15
        %s271 = smul.addr %s270, 2
        %s272 = smul.addr %s271, 8
        %s273 = scalar_lea.vmem %s2, %s272
        %s274 = smul.u32 8, %s19
        %v275 = vlaneseq
        %v276 = vshrl.u32 %v275, 7
        %v277 = vlaneseq
        %v278 = vand.u32 %v277, 127
        %vm279 = vcmp.eq.s32.totalorder %v278, %v276
        %v280 = vsel %vm279, 1, 0
        %v281 = vcvt.s32.f32 %v280
        %v282 = vadd.s32 %v276, 8
        %vm283 = vcmp.eq.s32.totalorder %v278, %v282
        %v284 = vsel %vm283, 1, 0
        %v285 = vcvt.s32.f32 %v284
        %v286 = vadd.s32 %v276, 16
        %vm287 = vcmp.eq.s32.totalorder %v278, %v286
        %v288 = vsel %vm287, 1, 0
        %v289 = vcvt.s32.f32 %v288
        %v290 = vadd.s32 %v276, 24
        %vm291 = vcmp.eq.s32.totalorder %v278, %v290
        %v292 = vsel %vm291, 1, 0
        %v293 = vcvt.s32.f32 %v292
        %v294 = vld [vmem:[%s260] sm:$0xf]
        %v295 = vld [vmem:[%s260 + $0x4] sm:$0xf]
        %v296 = vld [vmem:[%s260 + $0x8] sm:$0xf]
        %v297 = vld [vmem:[%s260 + $0xc] sm:$0xf]
        %v298 = vld [vmem:[%s260 + $0x10] sm:$0xf]
        %v299 = vld [vmem:[%s260 + $0x14] sm:$0xf]
        %v300 = vld [vmem:[%s260 + $0x18] sm:$0xf]
        %v301 = vld [vmem:[%s260 + $0x1c] sm:$0xf]
        %v302 = vunpack.c.l.bf16 %v294
        %v303 = vunpack.c.l.bf16 %v295
        %v304 = vunpack.c.l.bf16 %v296
        %v305 = vunpack.c.l.bf16 %v297
        %v306 = vunpack.c.l.bf16 %v298
        %v307 = vunpack.c.l.bf16 %v299
        %v308 = vunpack.c.l.bf16 %v300
        %v309 = vunpack.c.l.bf16 %v301
        %v310 = vld [vmem:[%s273] sm:$0xff]
        %v311 = vld [vmem:[%s273 + $0x8] sm:$0xff]
        %vm312 = vcmask 130048
        %v314 = vsel %vm312, %v302, 0
        %v317 = vsel %vm312, %v303, 0
        %v320 = vsel %vm312, %v304, 0
        %v323 = vsel %vm312, %v305, 0
        %v326 = vsel %vm312, %v306, 0
        %v329 = vsel %vm312, %v307, 0
        %v332 = vsel %vm312, %v308, 0
        %v335 = vsel %vm312, %v309, 0
        %337 = vmatprep.subr.mxu0 0.0
        %338 = vmatpush1.msra.mxu0 0.0
        %339 = vmatprep.subr.mxu0 0.0
        %340 = vmatpush1.msra.mxu0 0.0
        %341 = vmatprep.subr.mxu0 0.0
        %342 = vmatpush1.msra.mxu0 0.0
        %343 = vmatprep.subr.mxu0 0.0
        %344 = vmatpush1.msra.mxu0 0.0
        %345 = vmatprep.subr.mxu0 0.0
        %346 = vmatpush1.msra.mxu0 0.0
        %347 = vmatprep.subr.mxu0 0.0
        %348 = vmatpush1.msra.mxu0 0.0
        %349 = vmatprep.subr.mxu0 0.0
        %350 = vmatpush1.msra.mxu0 0.0
        %351 = vmatprep.subr.mxu0 0.0
        %352 = vmatpush1.msra.mxu0 0.0
        %353 = vmatprep.subr.mxu0 0.0
        %354 = vmatpush1.msra.mxu0 0.0
        %355 = vmatprep.subr.mxu0 0.0
        %356 = vmatpush1.msra.mxu0 0.0
        %357 = vmatprep.subr.mxu0 0.0
        %358 = vmatpush1.msra.mxu0 0.0
        %359 = vmatprep.subr.mxu0 0.0
        %360 = vmatpush1.msra.mxu0 0.0
        %361 = vmatprep.subr.mxu0 0.0
        %362 = vmatpush1.msra.mxu0 0.0
        %363 = vmatprep.subr.mxu0 0.0
        %364 = vmatpush1.msra.mxu0 0.0
        %365 = vmatprep.subr.mxu0 0.0
        %366 = vmatpush1.msra.mxu0 %v311
        %367 = vmatprep.subr.mxu0 0.0
        %368 = vmatpush1.msra.mxu0 %v310
        %369 = vmatprep.subr.mxu0 0.0
        %370 = vmatpush2.msra.mxu0 0.0
        %371 = vmatprep.subr.mxu0 0.0
        %372 = vmatpush2.msra.mxu0 0.0
        %373 = vmatprep.subr.mxu0 0.0
        %374 = vmatpush2.msra.mxu0 0.0
        %375 = vmatprep.subr.mxu0 0.0
        %376 = vmatpush2.msra.mxu0 0.0
        %377 = vmatprep.subr.mxu0 0.0
        %378 = vmatpush2.msra.mxu0 0.0
        %379 = vmatprep.subr.mxu0 0.0
        %380 = vmatpush2.msra.mxu0 0.0
        %381 = vmatprep.subr.mxu0 0.0
        %382 = vmatpush2.msra.mxu0 0.0
        %383 = vmatprep.subr.mxu0 0.0
        %384 = vmatpush2.msra.mxu0 0.0
        %385 = vmatprep.subr.mxu0 0.0
        %386 = vmatpush2.msra.mxu0 0.0
        %387 = vmatprep.subr.mxu0 0.0
        %388 = vmatpush2.msra.mxu0 0.0
        %389 = vmatprep.subr.mxu0 0.0
        %390 = vmatpush2.msra.mxu0 0.0
        %391 = vmatprep.subr.mxu0 0.0
        %392 = vmatpush2.msra.mxu0 0.0
        %393 = vmatprep.subr.mxu0 0.0
        %394 = vmatpush2.msra.mxu0 0.0
        %395 = vmatprep.subr.mxu0 0.0
        %396 = vmatpush2.msra.mxu0 0.0
        %397 = vmatprep.subr.mxu0 0.0
        %398 = vmatpush2.msra.mxu0 0.0
        %399 = vmatprep.subr.mxu0 0.0
        %400 = vmatpush2.msra.mxu0 0.0
        %401 = vmatprep.mubr.f32.mxu0 0.0
        %402 = vmatmul.mubr.f32.gmra.mxu0 %v314
        %v403 = vpop.f32.mrf.mxu0
        %v404 = vadd.f32 0.0, %v403
        %v405 = vpop.f32.mrf.mxu0
        %406 = vmatprep.mubr.f32.mxu0 0.0
        %407 = vmatmul.mubr.f32.gmra.mxu0 %v317
        %v408 = vpop.f32.mrf.mxu0
        %v409 = vadd.f32 0.0, %v408
        %v410 = vpop.f32.mrf.mxu0
        %411 = vmatprep.mubr.f32.mxu0 0.0
        %412 = vmatmul.mubr.f32.gmra.mxu0 %v320
        %v413 = vpop.f32.mrf.mxu0
        %v414 = vadd.f32 0.0, %v413
        %v415 = vpop.f32.mrf.mxu0
        %416 = vmatprep.mubr.f32.mxu0 0.0
        %417 = vmatmul.mubr.f32.gmra.mxu0 %v323
        %v418 = vpop.f32.mrf.mxu0
        %v419 = vadd.f32 0.0, %v418
        %v420 = vpop.f32.mrf.mxu0
        %421 = vmatprep.mubr.f32.mxu0 0.0
        %422 = vmatmul.mubr.f32.gmra.mxu0 %v326
        %v423 = vpop.f32.mrf.mxu0
        %v424 = vadd.f32 0.0, %v423
        %v425 = vpop.f32.mrf.mxu0
        %426 = vmatprep.mubr.f32.mxu0 0.0
        %427 = vmatmul.mubr.f32.gmra.mxu0 %v329
        %v428 = vpop.f32.mrf.mxu0
        %v429 = vadd.f32 0.0, %v428
        %v430 = vpop.f32.mrf.mxu0
        %431 = vmatprep.mubr.f32.mxu0 0.0
        %432 = vmatmul.mubr.f32.gmra.mxu0 %v332
        %v433 = vpop.f32.mrf.mxu0
        %v434 = vadd.f32 0.0, %v433
        %v435 = vpop.f32.mrf.mxu0
        %436 = vmatprep.mubr.f32.mxu0 0.0
        %437 = vmatmul.mubr.f32.gmra.mxu0 %v335
        %v438 = vpop.f32.mrf.mxu0
        %v439 = vadd.f32 0.0, %v438
        %v440 = vpop.f32.mrf.mxu0
        %441 = vdwg.mxu0
        %v442 = vld [vmem:[%s266] sm:$0xff]
        %v444 = vsel %vm312, %v442, 0
        %446 = vmatprep.subr.mxu0 0.0
        %447 = vmatpush1.msra.mxu0 0.0
        %448 = vmatprep.subr.mxu0 0.0
        %449 = vmatpush1.msra.mxu0 0.0
        %450 = vmatprep.subr.mxu0 0.0
        %451 = vmatpush1.msra.mxu0 0.0
        %452 = vmatprep.subr.mxu0 0.0
        %453 = vmatpush1.msra.mxu0 0.0
        %454 = vmatprep.subr.mxu0 0.0
        %455 = vmatpush1.msra.mxu0 0.0
        %456 = vmatprep.subr.mxu0 0.0
        %457 = vmatpush1.msra.mxu0 0.0
        %458 = vmatprep.subr.mxu0 0.0
        %459 = vmatpush1.msra.mxu0 0.0
        %460 = vmatprep.subr.mxu0 0.0
        %461 = vmatpush1.msra.mxu0 0.0
        %462 = vmatprep.subr.mxu0 0.0
        %463 = vmatpush1.msra.mxu0 0.0
        %464 = vmatprep.subr.mxu0 0.0
        %465 = vmatpush1.msra.mxu0 0.0
        %466 = vmatprep.subr.mxu0 0.0
        %467 = vmatpush1.msra.mxu0 0.0
        %468 = vmatprep.subr.mxu0 0.0
        %469 = vmatpush1.msra.mxu0 0.0
        %470 = vmatprep.subr.mxu0 0.0
        %471 = vmatpush1.msra.mxu0 0.0
        %472 = vmatprep.subr.mxu0 0.0
        %473 = vmatpush1.msra.mxu0 0.0
        %474 = vmatprep.subr.mxu0 0.0
        %475 = vmatpush1.msra.mxu0 %v409
        %476 = vmatprep.subr.mxu0 0.0
        %477 = vmatpush1.msra.mxu0 %v404
        %478 = vmatprep.subr.mxu0 0.0
        %479 = vmatpush2.msra.mxu0 0.0
        %480 = vmatprep.subr.mxu0 0.0
        %481 = vmatpush2.msra.mxu0 0.0
        %482 = vmatprep.subr.mxu0 0.0
        %483 = vmatpush2.msra.mxu0 0.0
        %484 = vmatprep.subr.mxu0 0.0
        %485 = vmatpush2.msra.mxu0 0.0
        %486 = vmatprep.subr.mxu0 0.0
        %487 = vmatpush2.msra.mxu0 0.0
        %488 = vmatprep.subr.mxu0 0.0
        %489 = vmatpush2.msra.mxu0 0.0
        %490 = vmatprep.subr.mxu0 0.0
        %491 = vmatpush2.msra.mxu0 0.0
        %492 = vmatprep.subr.mxu0 0.0
        %493 = vmatpush2.msra.mxu0 0.0
        %494 = vmatprep.subr.mxu0 0.0
        %495 = vmatpush2.msra.mxu0 0.0
        %496 = vmatprep.subr.mxu0 0.0
        %497 = vmatpush2.msra.mxu0 0.0
        %498 = vmatprep.subr.mxu0 0.0
        %499 = vmatpush2.msra.mxu0 0.0
        %500 = vmatprep.subr.mxu0 0.0
        %501 = vmatpush2.msra.mxu0 0.0
        %502 = vmatprep.subr.mxu0 0.0
        %503 = vmatpush2.msra.mxu0 0.0
        %504 = vmatprep.subr.mxu0 0.0
        %505 = vmatpush2.msra.mxu0 0.0
        %506 = vmatprep.subr.mxu0 0.0
        %507 = vmatpush2.msra.mxu0 0.0
        %508 = vmatprep.subr.mxu0 0.0
        %509 = vmatpush2.msra.mxu0 0.0
        %510 = vmatprep.mubr.f32.mxu0 0.0
        %511 = vmatmul.mubr.f32.gmra.mxu0 %v444
        %v512 = vpop.f32.mrf.mxu0
        %v513 = vadd.f32 0.0, %v512
        %v514 = vpop.f32.mrf.mxu0
        %515 = vdwg.mxu0
        %516 = vmatprep.subr.mxu0 0.0
        %517 = vmatpush1.msra.mxu0 0.0
        %518 = vmatprep.subr.mxu0 0.0
        %519 = vmatpush1.msra.mxu0 0.0
        %520 = vmatprep.subr.mxu0 0.0
        %521 = vmatpush1.msra.mxu0 0.0
        %522 = vmatprep.subr.mxu0 0.0
        %523 = vmatpush1.msra.mxu0 0.0
        %524 = vmatprep.subr.mxu0 0.0
        %525 = vmatpush1.msra.mxu0 0.0
        %526 = vmatprep.subr.mxu0 0.0
        %527 = vmatpush1.msra.mxu0 0.0
        %528 = vmatprep.subr.mxu0 0.0
        %529 = vmatpush1.msra.mxu0 0.0
        %530 = vmatprep.subr.mxu0 0.0
        %531 = vmatpush1.msra.mxu0 0.0
        %532 = vmatprep.subr.mxu0 0.0
        %533 = vmatpush1.msra.mxu0 0.0
        %534 = vmatprep.subr.mxu0 0.0
        %535 = vmatpush1.msra.mxu0 0.0
        %536 = vmatprep.subr.mxu0 0.0
        %537 = vmatpush1.msra.mxu0 0.0
        %538 = vmatprep.subr.mxu0 0.0
        %539 = vmatpush1.msra.mxu0 0.0
        %540 = vmatprep.subr.mxu0 0.0
        %541 = vmatpush1.msra.mxu0 0.0
        %542 = vmatprep.subr.mxu0 0.0
        %543 = vmatpush1.msra.mxu0 0.0
        %544 = vmatprep.subr.mxu0 0.0
        %545 = vmatpush1.msra.mxu0 %v419
        %546 = vmatprep.subr.mxu0 0.0
        %547 = vmatpush1.msra.mxu0 %v414
        %548 = vmatprep.subr.mxu0 0.0
        %549 = vmatpush2.msra.mxu0 0.0
        %550 = vmatprep.subr.mxu0 0.0
        %551 = vmatpush2.msra.mxu0 0.0
        %552 = vmatprep.subr.mxu0 0.0
        %553 = vmatpush2.msra.mxu0 0.0
        %554 = vmatprep.subr.mxu0 0.0
        %555 = vmatpush2.msra.mxu0 0.0
        %556 = vmatprep.subr.mxu0 0.0
        %557 = vmatpush2.msra.mxu0 0.0
        %558 = vmatprep.subr.mxu0 0.0
        %559 = vmatpush2.msra.mxu0 0.0
        %560 = vmatprep.subr.mxu0 0.0
        %561 = vmatpush2.msra.mxu0 0.0
        %562 = vmatprep.subr.mxu0 0.0
        %563 = vmatpush2.msra.mxu0 0.0
        %564 = vmatprep.subr.mxu0 0.0
        %565 = vmatpush2.msra.mxu0 0.0
        %566 = vmatprep.subr.mxu0 0.0
        %567 = vmatpush2.msra.mxu0 0.0
        %568 = vmatprep.subr.mxu0 0.0
        %569 = vmatpush2.msra.mxu0 0.0
        %570 = vmatprep.subr.mxu0 0.0
        %571 = vmatpush2.msra.mxu0 0.0
        %572 = vmatprep.subr.mxu0 0.0
        %573 = vmatpush2.msra.mxu0 0.0
        %574 = vmatprep.subr.mxu0 0.0
        %575 = vmatpush2.msra.mxu0 0.0
        %576 = vmatprep.subr.mxu0 0.0
        %577 = vmatpush2.msra.mxu0 0.0
        %578 = vmatprep.subr.mxu0 0.0
        %579 = vmatpush2.msra.mxu0 0.0
        %580 = vmatprep.mubr.f32.mxu0 0.0
        %581 = vmatmul.mubr.f32.gmra.mxu0 %v444
        %v582 = vpop.f32.mrf.mxu0
        %v583 = vadd.f32 0.0, %v582
        %v584 = vpop.f32.mrf.mxu0
        %585 = vdwg.mxu0
        %vm586 = vcmask 64512
        %v588 = vsel %vm586, %v583, 0
        %590 = vmatprep.subr.mxu0 0.0
        %591 = vmatpush1.msra.mxu0 0.0
        %592 = vmatprep.subr.mxu0 0.0
        %593 = vmatpush1.msra.mxu0 0.0
        %594 = vmatprep.subr.mxu0 0.0
        %595 = vmatpush1.msra.mxu0 0.0
        %596 = vmatprep.subr.mxu0 0.0
        %597 = vmatpush1.msra.mxu0 0.0
        %598 = vmatprep.subr.mxu0 0.0
        %599 = vmatpush1.msra.mxu0 0.0
        %600 = vmatprep.subr.mxu0 0.0
        %601 = vmatpush1.msra.mxu0 0.0
        %602 = vmatprep.subr.mxu0 0.0
        %603 = vmatpush1.msra.mxu0 0.0
        %604 = vmatprep.subr.mxu0 0.0
        %605 = vmatpush1.msra.mxu0 0.0
        %606 = vmatprep.subr.mxu0 0.0
        %607 = vmatpush1.msra.mxu0 0.0
        %608 = vmatprep.subr.mxu0 0.0
        %609 = vmatpush1.msra.mxu0 0.0
        %610 = vmatprep.subr.mxu0 0.0
        %611 = vmatpush1.msra.mxu0 0.0
        %612 = vmatprep.subr.mxu0 0.0
        %613 = vmatpush1.msra.mxu0 0.0
        %614 = vmatprep.subr.mxu0 0.0
        %615 = vmatpush1.msra.mxu0 0.0
        %616 = vmatprep.subr.mxu0 0.0
        %617 = vmatpush1.msra.mxu0 0.0
        %618 = vmatprep.subr.mxu0 0.0
        %619 = vmatpush1.msra.mxu0 0.0
        %620 = vmatprep.subr.mxu0 0.0
        %621 = vmatpush1.msra.mxu0 %v285
        %622 = vmatprep.subr.mxu0 0.0
        %623 = vmatpush2.msra.mxu0 0.0
        %624 = vmatprep.subr.mxu0 0.0
        %625 = vmatpush2.msra.mxu0 0.0
        %626 = vmatprep.subr.mxu0 0.0
        %627 = vmatpush2.msra.mxu0 0.0
        %628 = vmatprep.subr.mxu0 0.0
        %629 = vmatpush2.msra.mxu0 0.0
        %630 = vmatprep.subr.mxu0 0.0
        %631 = vmatpush2.msra.mxu0 0.0
        %632 = vmatprep.subr.mxu0 0.0
        %633 = vmatpush2.msra.mxu0 0.0
        %634 = vmatprep.subr.mxu0 0.0
        %635 = vmatpush2.msra.mxu0 0.0
        %636 = vmatprep.subr.mxu0 0.0
        %637 = vmatpush2.msra.mxu0 0.0
        %638 = vmatprep.subr.mxu0 0.0
        %639 = vmatpush2.msra.mxu0 0.0
        %640 = vmatprep.subr.mxu0 0.0
        %641 = vmatpush2.msra.mxu0 0.0
        %642 = vmatprep.subr.mxu0 0.0
        %643 = vmatpush2.msra.mxu0 0.0
        %644 = vmatprep.subr.mxu0 0.0
        %645 = vmatpush2.msra.mxu0 0.0
        %646 = vmatprep.subr.mxu0 0.0
        %647 = vmatpush2.msra.mxu0 0.0
        %648 = vmatprep.subr.mxu0 0.0
        %649 = vmatpush2.msra.mxu0 0.0
        %650 = vmatprep.subr.mxu0 0.0
        %651 = vmatpush2.msra.mxu0 0.0
        %652 = vmatprep.subr.mxu0 0.0
        %653 = vmatpush2.msra.mxu0 0.0
        %654 = vmatprep.mubr.f32.mxu0 0.0
        %655 = vmatmul.mubr.f32.gmra.mxu0 %v588
        %v656 = vpop.f32.mrf.mxu0
        %v657 = vadd.f32 0.0, %v656
        %v658 = vpop.f32.mrf.mxu0
        %659 = vdwg.mxu0
        %v661 = vsel %vm586, %v513, 0
        %663 = vmatprep.subr.mxu0 0.0
        %664 = vmatpush1.msra.mxu0 0.0
        %665 = vmatprep.subr.mxu0 0.0
        %666 = vmatpush1.msra.mxu0 0.0
        %667 = vmatprep.subr.mxu0 0.0
        %668 = vmatpush1.msra.mxu0 0.0
        %669 = vmatprep.subr.mxu0 0.0
        %670 = vmatpush1.msra.mxu0 0.0
        %671 = vmatprep.subr.mxu0 0.0
        %672 = vmatpush1.msra.mxu0 0.0
        %673 = vmatprep.subr.mxu0 0.0
        %674 = vmatpush1.msra.mxu0 0.0
        %675 = vmatprep.subr.mxu0 0.0
        %676 = vmatpush1.msra.mxu0 0.0
        %677 = vmatprep.subr.mxu0 0.0
        %678 = vmatpush1.msra.mxu0 0.0
        %679 = vmatprep.subr.mxu0 0.0
        %680 = vmatpush1.msra.mxu0 0.0
        %681 = vmatprep.subr.mxu0 0.0
        %682 = vmatpush1.msra.mxu0 0.0
        %683 = vmatprep.subr.mxu0 0.0
        %684 = vmatpush1.msra.mxu0 0.0
        %685 = vmatprep.subr.mxu0 0.0
        %686 = vmatpush1.msra.mxu0 0.0
        %687 = vmatprep.subr.mxu0 0.0
        %688 = vmatpush1.msra.mxu0 0.0
        %689 = vmatprep.subr.mxu0 0.0
        %690 = vmatpush1.msra.mxu0 0.0
        %691 = vmatprep.subr.mxu0 0.0
        %692 = vmatpush1.msra.mxu0 0.0
        %693 = vmatprep.subr.mxu0 0.0
        %694 = vmatpush1.msra.mxu0 %v281
        %695 = vmatprep.subr.mxu0 0.0
        %696 = vmatpush2.msra.mxu0 0.0
        %697 = vmatprep.subr.mxu0 0.0
        %698 = vmatpush2.msra.mxu0 0.0
        %699 = vmatprep.subr.mxu0 0.0
        %700 = vmatpush2.msra.mxu0 0.0
        %701 = vmatprep.subr.mxu0 0.0
        %702 = vmatpush2.msra.mxu0 0.0
        %703 = vmatprep.subr.mxu0 0.0
        %704 = vmatpush2.msra.mxu0 0.0
        %705 = vmatprep.subr.mxu0 0.0
        %706 = vmatpush2.msra.mxu0 0.0
        %707 = vmatprep.subr.mxu0 0.0
        %708 = vmatpush2.msra.mxu0 0.0
        %709 = vmatprep.subr.mxu0 0.0
        %710 = vmatpush2.msra.mxu0 0.0
        %711 = vmatprep.subr.mxu0 0.0
        %712 = vmatpush2.msra.mxu0 0.0
        %713 = vmatprep.subr.mxu0 0.0
        %714 = vmatpush2.msra.mxu0 0.0
        %715 = vmatprep.subr.mxu0 0.0
        %716 = vmatpush2.msra.mxu0 0.0
        %717 = vmatprep.subr.mxu0 0.0
        %718 = vmatpush2.msra.mxu0 0.0
        %719 = vmatprep.subr.mxu0 0.0
        %720 = vmatpush2.msra.mxu0 0.0
        %721 = vmatprep.subr.mxu0 0.0
        %722 = vmatpush2.msra.mxu0 0.0
        %723 = vmatprep.subr.mxu0 0.0
        %724 = vmatpush2.msra.mxu0 0.0
        %725 = vmatprep.subr.mxu0 0.0
        %726 = vmatpush2.msra.mxu0 0.0
        %727 = vmatprep.mubr.f32.mxu0 0.0
        %728 = vmatmul.mubr.f32.gmra.mxu0 %v661
        %v729 = vpop.f32.mrf.mxu0
        %v730 = vadd.f32 %v657, %v729
        %v731 = vpop.f32.mrf.mxu0
        %732 = vdwg.mxu0
        %733 = vmatprep.subr.mxu0 0.0
        %734 = vmatpush1.msra.mxu0 0.0
        %735 = vmatprep.subr.mxu0 0.0
        %736 = vmatpush1.msra.mxu0 0.0
        %737 = vmatprep.subr.mxu0 0.0
        %738 = vmatpush1.msra.mxu0 0.0
        %739 = vmatprep.subr.mxu0 0.0
        %740 = vmatpush1.msra.mxu0 0.0
        %741 = vmatprep.subr.mxu0 0.0
        %742 = vmatpush1.msra.mxu0 0.0
        %743 = vmatprep.subr.mxu0 0.0
        %744 = vmatpush1.msra.mxu0 0.0
        %745 = vmatprep.subr.mxu0 0.0
        %746 = vmatpush1.msra.mxu0 0.0
        %747 = vmatprep.subr.mxu0 0.0
        %748 = vmatpush1.msra.mxu0 0.0
        %749 = vmatprep.subr.mxu0 0.0
        %750 = vmatpush1.msra.mxu0 0.0
        %751 = vmatprep.subr.mxu0 0.0
        %752 = vmatpush1.msra.mxu0 0.0
        %753 = vmatprep.subr.mxu0 0.0
        %754 = vmatpush1.msra.mxu0 0.0
        %755 = vmatprep.subr.mxu0 0.0
        %756 = vmatpush1.msra.mxu0 0.0
        %757 = vmatprep.subr.mxu0 0.0
        %758 = vmatpush1.msra.mxu0 0.0
        %759 = vmatprep.subr.mxu0 0.0
        %760 = vmatpush1.msra.mxu0 0.0
        %761 = vmatprep.subr.mxu0 0.0
        %762 = vmatpush1.msra.mxu0 %v429
        %763 = vmatprep.subr.mxu0 0.0
        %764 = vmatpush1.msra.mxu0 %v424
        %765 = vmatprep.subr.mxu0 0.0
        %766 = vmatpush2.msra.mxu0 0.0
        %767 = vmatprep.subr.mxu0 0.0
        %768 = vmatpush2.msra.mxu0 0.0
        %769 = vmatprep.subr.mxu0 0.0
        %770 = vmatpush2.msra.mxu0 0.0
        %771 = vmatprep.subr.mxu0 0.0
        %772 = vmatpush2.msra.mxu0 0.0
        %773 = vmatprep.subr.mxu0 0.0
        %774 = vmatpush2.msra.mxu0 0.0
        %775 = vmatprep.subr.mxu0 0.0
        %776 = vmatpush2.msra.mxu0 0.0
        %777 = vmatprep.subr.mxu0 0.0
        %778 = vmatpush2.msra.mxu0 0.0
        %779 = vmatprep.subr.mxu0 0.0
        %780 = vmatpush2.msra.mxu0 0.0
        %781 = vmatprep.subr.mxu0 0.0
        %782 = vmatpush2.msra.mxu0 0.0
        %783 = vmatprep.subr.mxu0 0.0
        %784 = vmatpush2.msra.mxu0 0.0
        %785 = vmatprep.subr.mxu0 0.0
        %786 = vmatpush2.msra.mxu0 0.0
        %787 = vmatprep.subr.mxu0 0.0
        %788 = vmatpush2.msra.mxu0 0.0
        %789 = vmatprep.subr.mxu0 0.0
        %790 = vmatpush2.msra.mxu0 0.0
        %791 = vmatprep.subr.mxu0 0.0
        %792 = vmatpush2.msra.mxu0 0.0
        %793 = vmatprep.subr.mxu0 0.0
        %794 = vmatpush2.msra.mxu0 0.0
        %795 = vmatprep.subr.mxu0 0.0
        %796 = vmatpush2.msra.mxu0 0.0
        %797 = vmatprep.mubr.f32.mxu0 0.0
        %798 = vmatmul.mubr.f32.gmra.mxu0 %v444
        %v799 = vpop.f32.mrf.mxu0
        %v800 = vadd.f32 0.0, %v799
        %v801 = vpop.f32.mrf.mxu0
        %802 = vdwg.mxu0
        %v804 = vsel %vm586, %v800, 0
        %806 = vmatprep.subr.mxu0 0.0
        %807 = vmatpush1.msra.mxu0 0.0
        %808 = vmatprep.subr.mxu0 0.0
        %809 = vmatpush1.msra.mxu0 0.0
        %810 = vmatprep.subr.mxu0 0.0
        %811 = vmatpush1.msra.mxu0 0.0
        %812 = vmatprep.subr.mxu0 0.0
        %813 = vmatpush1.msra.mxu0 0.0
        %814 = vmatprep.subr.mxu0 0.0
        %815 = vmatpush1.msra.mxu0 0.0
        %816 = vmatprep.subr.mxu0 0.0
        %817 = vmatpush1.msra.mxu0 0.0
        %818 = vmatprep.subr.mxu0 0.0
        %819 = vmatpush1.msra.mxu0 0.0
        %820 = vmatprep.subr.mxu0 0.0
        %821 = vmatpush1.msra.mxu0 0.0
        %822 = vmatprep.subr.mxu0 0.0
        %823 = vmatpush1.msra.mxu0 0.0
        %824 = vmatprep.subr.mxu0 0.0
        %825 = vmatpush1.msra.mxu0 0.0
        %826 = vmatprep.subr.mxu0 0.0
        %827 = vmatpush1.msra.mxu0 0.0
        %828 = vmatprep.subr.mxu0 0.0
        %829 = vmatpush1.msra.mxu0 0.0
        %830 = vmatprep.subr.mxu0 0.0
        %831 = vmatpush1.msra.mxu0 0.0
        %832 = vmatprep.subr.mxu0 0.0
        %833 = vmatpush1.msra.mxu0 0.0
        %834 = vmatprep.subr.mxu0 0.0
        %835 = vmatpush1.msra.mxu0 0.0
        %836 = vmatprep.subr.mxu0 0.0
        %837 = vmatpush1.msra.mxu0 %v289
        %838 = vmatprep.subr.mxu0 0.0
        %839 = vmatpush2.msra.mxu0 0.0
        %840 = vmatprep.subr.mxu0 0.0
        %841 = vmatpush2.msra.mxu0 0.0
        %842 = vmatprep.subr.mxu0 0.0
        %843 = vmatpush2.msra.mxu0 0.0
        %844 = vmatprep.subr.mxu0 0.0
        %845 = vmatpush2.msra.mxu0 0.0
        %846 = vmatprep.subr.mxu0 0.0
        %847 = vmatpush2.msra.mxu0 0.0
        %848 = vmatprep.subr.mxu0 0.0
        %849 = vmatpush2.msra.mxu0 0.0
        %850 = vmatprep.subr.mxu0 0.0
        %851 = vmatpush2.msra.mxu0 0.0
        %852 = vmatprep.subr.mxu0 0.0
        %853 = vmatpush2.msra.mxu0 0.0
        %854 = vmatprep.subr.mxu0 0.0
        %855 = vmatpush2.msra.mxu0 0.0
        %856 = vmatprep.subr.mxu0 0.0
        %857 = vmatpush2.msra.mxu0 0.0
        %858 = vmatprep.subr.mxu0 0.0
        %859 = vmatpush2.msra.mxu0 0.0
        %860 = vmatprep.subr.mxu0 0.0
        %861 = vmatpush2.msra.mxu0 0.0
        %862 = vmatprep.subr.mxu0 0.0
        %863 = vmatpush2.msra.mxu0 0.0
        %864 = vmatprep.subr.mxu0 0.0
        %865 = vmatpush2.msra.mxu0 0.0
        %866 = vmatprep.subr.mxu0 0.0
        %867 = vmatpush2.msra.mxu0 0.0
        %868 = vmatprep.subr.mxu0 0.0
        %869 = vmatpush2.msra.mxu0 0.0
        %870 = vmatprep.mubr.f32.mxu0 0.0
        %871 = vmatmul.mubr.f32.gmra.mxu0 %v804
        %v872 = vpop.f32.mrf.mxu0
        %v873 = vadd.f32 0.0, %v872
        %v874 = vpop.f32.mrf.mxu0
        %875 = vdwg.mxu0
        %v876 = vadd.f32 %v730, %v873
        %877 = vmatprep.subr.mxu0 0.0
        %878 = vmatpush1.msra.mxu0 0.0
        %879 = vmatprep.subr.mxu0 0.0
        %880 = vmatpush1.msra.mxu0 0.0
        %881 = vmatprep.subr.mxu0 0.0
        %882 = vmatpush1.msra.mxu0 0.0
        %883 = vmatprep.subr.mxu0 0.0
        %884 = vmatpush1.msra.mxu0 0.0
        %885 = vmatprep.subr.mxu0 0.0
        %886 = vmatpush1.msra.mxu0 0.0
        %887 = vmatprep.subr.mxu0 0.0
        %888 = vmatpush1.msra.mxu0 0.0
        %889 = vmatprep.subr.mxu0 0.0
        %890 = vmatpush1.msra.mxu0 0.0
        %891 = vmatprep.subr.mxu0 0.0
        %892 = vmatpush1.msra.mxu0 0.0
        %893 = vmatprep.subr.mxu0 0.0
        %894 = vmatpush1.msra.mxu0 0.0
        %895 = vmatprep.subr.mxu0 0.0
        %896 = vmatpush1.msra.mxu0 0.0
        %897 = vmatprep.subr.mxu0 0.0
        %898 = vmatpush1.msra.mxu0 0.0
        %899 = vmatprep.subr.mxu0 0.0
        %900 = vmatpush1.msra.mxu0 0.0
        %901 = vmatprep.subr.mxu0 0.0
        %902 = vmatpush1.msra.mxu0 0.0
        %903 = vmatprep.subr.mxu0 0.0
        %904 = vmatpush1.msra.mxu0 0.0
        %905 = vmatprep.subr.mxu0 0.0
        %906 = vmatpush1.msra.mxu0 %v439
        %907 = vmatprep.subr.mxu0 0.0
        %908 = vmatpush1.msra.mxu0 %v434
        %909 = vmatprep.subr.mxu0 0.0
        %910 = vmatpush2.msra.mxu0 0.0
        %911 = vmatprep.subr.mxu0 0.0
        %912 = vmatpush2.msra.mxu0 0.0
        %913 = vmatprep.subr.mxu0 0.0
        %914 = vmatpush2.msra.mxu0 0.0
        %915 = vmatprep.subr.mxu0 0.0
        %916 = vmatpush2.msra.mxu0 0.0
        %917 = vmatprep.subr.mxu0 0.0
        %918 = vmatpush2.msra.mxu0 0.0
        %919 = vmatprep.subr.mxu0 0.0
        %920 = vmatpush2.msra.mxu0 0.0
        %921 = vmatprep.subr.mxu0 0.0
        %922 = vmatpush2.msra.mxu0 0.0
        %923 = vmatprep.subr.mxu0 0.0
        %924 = vmatpush2.msra.mxu0 0.0
        %925 = vmatprep.subr.mxu0 0.0
        %926 = vmatpush2.msra.mxu0 0.0
        %927 = vmatprep.subr.mxu0 0.0
        %928 = vmatpush2.msra.mxu0 0.0
        %929 = vmatprep.subr.mxu0 0.0
        %930 = vmatpush2.msra.mxu0 0.0
        %931 = vmatprep.subr.mxu0 0.0
        %932 = vmatpush2.msra.mxu0 0.0
        %933 = vmatprep.subr.mxu0 0.0
        %934 = vmatpush2.msra.mxu0 0.0
        %935 = vmatprep.subr.mxu0 0.0
        %936 = vmatpush2.msra.mxu0 0.0
        %937 = vmatprep.subr.mxu0 0.0
        %938 = vmatpush2.msra.mxu0 0.0
        %939 = vmatprep.subr.mxu0 0.0
        %940 = vmatpush2.msra.mxu0 0.0
        %941 = vmatprep.mubr.f32.mxu0 0.0
        %942 = vmatmul.mubr.f32.gmra.mxu0 %v444
        %v943 = vpop.f32.mrf.mxu0
        %v944 = vadd.f32 0.0, %v943
        %v945 = vpop.f32.mrf.mxu0
        %946 = vdwg.mxu0
        %v948 = vsel %vm586, %v944, 0
        %950 = vmatprep.subr.mxu0 0.0
        %951 = vmatpush1.msra.mxu0 0.0
        %952 = vmatprep.subr.mxu0 0.0
        %953 = vmatpush1.msra.mxu0 0.0
        %954 = vmatprep.subr.mxu0 0.0
        %955 = vmatpush1.msra.mxu0 0.0
        %956 = vmatprep.subr.mxu0 0.0
        %957 = vmatpush1.msra.mxu0 0.0
        %958 = vmatprep.subr.mxu0 0.0
        %959 = vmatpush1.msra.mxu0 0.0
        %960 = vmatprep.subr.mxu0 0.0
        %961 = vmatpush1.msra.mxu0 0.0
        %962 = vmatprep.subr.mxu0 0.0
        %963 = vmatpush1.msra.mxu0 0.0
        %964 = vmatprep.subr.mxu0 0.0
        %965 = vmatpush1.msra.mxu0 0.0
        %966 = vmatprep.subr.mxu0 0.0
        %967 = vmatpush1.msra.mxu0 0.0
        %968 = vmatprep.subr.mxu0 0.0
        %969 = vmatpush1.msra.mxu0 0.0
        %970 = vmatprep.subr.mxu0 0.0
        %971 = vmatpush1.msra.mxu0 0.0
        %972 = vmatprep.subr.mxu0 0.0
        %973 = vmatpush1.msra.mxu0 0.0
        %974 = vmatprep.subr.mxu0 0.0
        %975 = vmatpush1.msra.mxu0 0.0
        %976 = vmatprep.subr.mxu0 0.0
        %977 = vmatpush1.msra.mxu0 0.0
        %978 = vmatprep.subr.mxu0 0.0
        %979 = vmatpush1.msra.mxu0 0.0
        %980 = vmatprep.subr.mxu0 0.0
        %981 = vmatpush1.msra.mxu0 %v293
        %982 = vmatprep.subr.mxu0 0.0
        %983 = vmatpush2.msra.mxu0 0.0
        %984 = vmatprep.subr.mxu0 0.0
        %985 = vmatpush2.msra.mxu0 0.0
        %986 = vmatprep.subr.mxu0 0.0
        %987 = vmatpush2.msra.mxu0 0.0
        %988 = vmatprep.subr.mxu0 0.0
        %989 = vmatpush2.msra.mxu0 0.0
        %990 = vmatprep.subr.mxu0 0.0
        %991 = vmatpush2.msra.mxu0 0.0
        %992 = vmatprep.subr.mxu0 0.0
        %993 = vmatpush2.msra.mxu0 0.0
        %994 = vmatprep.subr.mxu0 0.0
        %995 = vmatpush2.msra.mxu0 0.0
        %996 = vmatprep.subr.mxu0 0.0
        %997 = vmatpush2.msra.mxu0 0.0
        %998 = vmatprep.subr.mxu0 0.0
        %999 = vmatpush2.msra.mxu0 0.0
        %1000 = vmatprep.subr.mxu0 0.0
        %1001 = vmatpush2.msra.mxu0 0.0
        %1002 = vmatprep.subr.mxu0 0.0
        %1003 = vmatpush2.msra.mxu0 0.0
        %1004 = vmatprep.subr.mxu0 0.0
        %1005 = vmatpush2.msra.mxu0 0.0
        %1006 = vmatprep.subr.mxu0 0.0
        %1007 = vmatpush2.msra.mxu0 0.0
        %1008 = vmatprep.subr.mxu0 0.0
        %1009 = vmatpush2.msra.mxu0 0.0
        %1010 = vmatprep.subr.mxu0 0.0
        %1011 = vmatpush2.msra.mxu0 0.0
        %1012 = vmatprep.subr.mxu0 0.0
        %1013 = vmatpush2.msra.mxu0 0.0
        %1014 = vmatprep.mubr.f32.mxu0 0.0
        %1015 = vmatmul.mubr.f32.gmra.mxu0 %v948
        %v1016 = vpop.f32.mrf.mxu0
        %v1017 = vadd.f32 0.0, %v1016
        %v1018 = vpop.f32.mrf.mxu0
        %1019 = vdwg.mxu0
        %v1020 = vadd.f32 %v876, %v1017
        %v1021 = vadd.s32 %v276, 32
        %v1022 = vadd.s32 %v276, 40
        %v1023 = vadd.s32 %v276, 48
        %v1024 = vadd.s32 %v276, 56
        %v1025 = vmul.u32 %v278, 8
        %vm1026 = vcmp.eq.s32.totalorder %v276, %v1025
        %vm1027 = vcmp.eq.s32.totalorder %v282, %v1025
        %vm1028 = vcmp.eq.s32.totalorder %v286, %v1025
        %vm1029 = vcmp.eq.s32.totalorder %v290, %v1025
        %vm1030 = vcmp.eq.s32.totalorder %v1021, %v1025
        %vm1031 = vcmp.eq.s32.totalorder %v1022, %v1025
        %vm1032 = vcmp.eq.s32.totalorder %v1023, %v1025
        %vm1033 = vcmp.eq.s32.totalorder %v1024, %v1025
        %v1034 = vsel %vm1026, 1, 0
        %v1035 = vsel %vm1027, 1, 0
        %v1036 = vsel %vm1028, 1, 0
        %v1037 = vsel %vm1029, 1, 0
        %v1038 = vsel %vm1030, 1, 0
        %v1039 = vsel %vm1031, 1, 0
        %v1040 = vsel %vm1032, 1, 0
        %v1041 = vsel %vm1033, 1, 0
        %v1042 = vcvt.s32.f32 %v1034
        %v1043 = vcvt.s32.f32 %v1035
        %v1044 = vcvt.s32.f32 %v1036
        %v1045 = vcvt.s32.f32 %v1037
        %v1046 = vcvt.s32.f32 %v1038
        %v1047 = vcvt.s32.f32 %v1039
        %v1048 = vcvt.s32.f32 %v1040
        %v1049 = vcvt.s32.f32 %v1041
        %s1050 = scalar_lea.vmem %s260, 32
        %v1051 = vld [vmem:[%s1050] sm:$0xf]
        %v1052 = vld [vmem:[%s1050 + $0x4] sm:$0xf]
        %v1053 = vld [vmem:[%s1050 + $0x8] sm:$0xf]
        %v1054 = vld [vmem:[%s1050 + $0xc] sm:$0xf]
        %v1055 = vld [vmem:[%s1050 + $0x10] sm:$0xf]
        %v1056 = vld [vmem:[%s1050 + $0x14] sm:$0xf]
        %v1057 = vld [vmem:[%s1050 + $0x18] sm:$0xf]
        %v1058 = vld [vmem:[%s1050 + $0x1c] sm:$0xf]
        %v1059 = vunpack.c.l.bf16 %v1051
        %v1060 = vunpack.c.l.bf16 %v1052
        %v1061 = vunpack.c.l.bf16 %v1053
        %v1062 = vunpack.c.l.bf16 %v1054
        %v1063 = vunpack.c.l.bf16 %v1055
        %v1064 = vunpack.c.l.bf16 %v1056
        %v1065 = vunpack.c.l.bf16 %v1057
        %v1066 = vunpack.c.l.bf16 %v1058
        %s1067 = scalar_lea.vmem %s273, 16
        %v1068 = vld [vmem:[%s1067] sm:$0xff]
        %v1069 = vld [vmem:[%s1067 + $0x8] sm:$0xff]
        %v1071 = vsel %vm312, %v1059, 0
        %v1074 = vsel %vm312, %v1060, 0
        %v1077 = vsel %vm312, %v1061, 0
        %v1080 = vsel %vm312, %v1062, 0
        %v1083 = vsel %vm312, %v1063, 0
        %v1086 = vsel %vm312, %v1064, 0
        %v1089 = vsel %vm312, %v1065, 0
        %v1092 = vsel %vm312, %v1066, 0
        %1094 = vmatprep.subr.mxu0 0.0
        %1095 = vmatpush1.msra.mxu0 0.0
        %1096 = vmatprep.subr.mxu0 0.0
        %1097 = vmatpush1.msra.mxu0 0.0
        %1098 = vmatprep.subr.mxu0 0.0
        %1099 = vmatpush1.msra.mxu0 0.0
        %1100 = vmatprep.subr.mxu0 0.0
        %1101 = vmatpush1.msra.mxu0 0.0
        %1102 = vmatprep.subr.mxu0 0.0
        %1103 = vmatpush1.msra.mxu0 0.0
        %1104 = vmatprep.subr.mxu0 0.0
        %1105 = vmatpush1.msra.mxu0 0.0
        %1106 = vmatprep.subr.mxu0 0.0
        %1107 = vmatpush1.msra.mxu0 0.0
        %1108 = vmatprep.subr.mxu0 0.0
        %1109 = vmatpush1.msra.mxu0 0.0
        %1110 = vmatprep.subr.mxu0 0.0
        %1111 = vmatpush1.msra.mxu0 0.0
        %1112 = vmatprep.subr.mxu0 0.0
        %1113 = vmatpush1.msra.mxu0 0.0
        %1114 = vmatprep.subr.mxu0 0.0
        %1115 = vmatpush1.msra.mxu0 0.0
        %1116 = vmatprep.subr.mxu0 0.0
        %1117 = vmatpush1.msra.mxu0 0.0
        %1118 = vmatprep.subr.mxu0 0.0
        %1119 = vmatpush1.msra.mxu0 0.0
        %1120 = vmatprep.subr.mxu0 0.0
        %1121 = vmatpush1.msra.mxu0 0.0
        %1122 = vmatprep.subr.mxu0 0.0
        %1123 = vmatpush1.msra.mxu0 %v1069
        %1124 = vmatprep.subr.mxu0 0.0
        %1125 = vmatpush1.msra.mxu0 %v1068
        %1126 = vmatprep.subr.mxu0 0.0
        %1127 = vmatpush2.msra.mxu0 0.0
        %1128 = vmatprep.subr.mxu0 0.0
        %1129 = vmatpush2.msra.mxu0 0.0
        %1130 = vmatprep.subr.mxu0 0.0
        %1131 = vmatpush2.msra.mxu0 0.0
        %1132 = vmatprep.subr.mxu0 0.0
        %1133 = vmatpush2.msra.mxu0 0.0
        %1134 = vmatprep.subr.mxu0 0.0
        %1135 = vmatpush2.msra.mxu0 0.0
        %1136 = vmatprep.subr.mxu0 0.0
        %1137 = vmatpush2.msra.mxu0 0.0
        %1138 = vmatprep.subr.mxu0 0.0
        %1139 = vmatpush2.msra.mxu0 0.0
        %1140 = vmatprep.subr.mxu0 0.0
        %1141 = vmatpush2.msra.mxu0 0.0
        %1142 = vmatprep.subr.mxu0 0.0
        %1143 = vmatpush2.msra.mxu0 0.0
        %1144 = vmatprep.subr.mxu0 0.0
        %1145 = vmatpush2.msra.mxu0 0.0
        %1146 = vmatprep.subr.mxu0 0.0
        %1147 = vmatpush2.msra.mxu0 0.0
        %1148 = vmatprep.subr.mxu0 0.0
        %1149 = vmatpush2.msra.mxu0 0.0
        %1150 = vmatprep.subr.mxu0 0.0
        %1151 = vmatpush2.msra.mxu0 0.0
        %1152 = vmatprep.subr.mxu0 0.0
        %1153 = vmatpush2.msra.mxu0 0.0
        %1154 = vmatprep.subr.mxu0 0.0
        %1155 = vmatpush2.msra.mxu0 0.0
        %1156 = vmatprep.subr.mxu0 0.0
        %1157 = vmatpush2.msra.mxu0 0.0
        %1158 = vmatprep.mubr.f32.mxu0 0.0
        %1159 = vmatmul.mubr.f32.gmra.mxu0 %v1071
        %v1160 = vpop.f32.mrf.mxu0
        %v1161 = vadd.f32 0.0, %v1160
        %v1162 = vpop.f32.mrf.mxu0
        %1163 = vmatprep.mubr.f32.mxu0 0.0
        %1164 = vmatmul.mubr.f32.gmra.mxu0 %v1074
        %v1165 = vpop.f32.mrf.mxu0
        %v1166 = vadd.f32 0.0, %v1165
        %v1167 = vpop.f32.mrf.mxu0
        %1168 = vmatprep.mubr.f32.mxu0 0.0
        %1169 = vmatmul.mubr.f32.gmra.mxu0 %v1077
        %v1170 = vpop.f32.mrf.mxu0
        %v1171 = vadd.f32 0.0, %v1170
        %v1172 = vpop.f32.mrf.mxu0
        %1173 = vmatprep.mubr.f32.mxu0 0.0
        %1174 = vmatmul.mubr.f32.gmra.mxu0 %v1080
        %v1175 = vpop.f32.mrf.mxu0
        %v1176 = vadd.f32 0.0, %v1175
        %v1177 = vpop.f32.mrf.mxu0
        %1178 = vmatprep.mubr.f32.mxu0 0.0
        %1179 = vmatmul.mubr.f32.gmra.mxu0 %v1083
        %v1180 = vpop.f32.mrf.mxu0
        %v1181 = vadd.f32 0.0, %v1180
        %v1182 = vpop.f32.mrf.mxu0
        %1183 = vmatprep.mubr.f32.mxu0 0.0
        %1184 = vmatmul.mubr.f32.gmra.mxu0 %v1086
        %v1185 = vpop.f32.mrf.mxu0
        %v1186 = vadd.f32 0.0, %v1185
        %v1187 = vpop.f32.mrf.mxu0
        %1188 = vmatprep.mubr.f32.mxu0 0.0
        %1189 = vmatmul.mubr.f32.gmra.mxu0 %v1089
        %v1190 = vpop.f32.mrf.mxu0
        %v1191 = vadd.f32 0.0, %v1190
        %v1192 = vpop.f32.mrf.mxu0
        %1193 = vmatprep.mubr.f32.mxu0 0.0
        %1194 = vmatmul.mubr.f32.gmra.mxu0 %v1092
        %v1195 = vpop.f32.mrf.mxu0
        %v1196 = vadd.f32 0.0, %v1195
        %v1197 = vpop.f32.mrf.mxu0
        %1198 = vdwg.mxu0
        %s1199 = scalar_lea.vmem %s266, 8
        %v1200 = vld [vmem:[%s1199] sm:$0xff]
        %v1202 = vsel %vm312, %v1200, 0
        %1204 = vmatprep.subr.mxu0 0.0
        %1205 = vmatpush1.msra.mxu0 0.0
        %1206 = vmatprep.subr.mxu0 0.0
        %1207 = vmatpush1.msra.mxu0 0.0
        %1208 = vmatprep.subr.mxu0 0.0
        %1209 = vmatpush1.msra.mxu0 0.0
        %1210 = vmatprep.subr.mxu0 0.0
        %1211 = vmatpush1.msra.mxu0 0.0
        %1212 = vmatprep.subr.mxu0 0.0
        %1213 = vmatpush1.msra.mxu0 0.0
        %1214 = vmatprep.subr.mxu0 0.0
        %1215 = vmatpush1.msra.mxu0 0.0
        %1216 = vmatprep.subr.mxu0 0.0
        %1217 = vmatpush1.msra.mxu0 0.0
        %1218 = vmatprep.subr.mxu0 0.0
        %1219 = vmatpush1.msra.mxu0 0.0
        %1220 = vmatprep.subr.mxu0 0.0
        %1221 = vmatpush1.msra.mxu0 0.0
        %1222 = vmatprep.subr.mxu0 0.0
        %1223 = vmatpush1.msra.mxu0 0.0
        %1224 = vmatprep.subr.mxu0 0.0
        %1225 = vmatpush1.msra.mxu0 0.0
        %1226 = vmatprep.subr.mxu0 0.0
        %1227 = vmatpush1.msra.mxu0 0.0
        %1228 = vmatprep.subr.mxu0 0.0
        %1229 = vmatpush1.msra.mxu0 0.0
        %1230 = vmatprep.subr.mxu0 0.0
        %1231 = vmatpush1.msra.mxu0 0.0
        %1232 = vmatprep.subr.mxu0 0.0
        %1233 = vmatpush1.msra.mxu0 %v1166
        %1234 = vmatprep.subr.mxu0 0.0
        %1235 = vmatpush1.msra.mxu0 %v1161
        %1236 = vmatprep.subr.mxu0 0.0
        %1237 = vmatpush2.msra.mxu0 0.0
        %1238 = vmatprep.subr.mxu0 0.0
        %1239 = vmatpush2.msra.mxu0 0.0
        %1240 = vmatprep.subr.mxu0 0.0
        %1241 = vmatpush2.msra.mxu0 0.0
        %1242 = vmatprep.subr.mxu0 0.0
        %1243 = vmatpush2.msra.mxu0 0.0
        %1244 = vmatprep.subr.mxu0 0.0
        %1245 = vmatpush2.msra.mxu0 0.0
        %1246 = vmatprep.subr.mxu0 0.0
        %1247 = vmatpush2.msra.mxu0 0.0
        %1248 = vmatprep.subr.mxu0 0.0
        %1249 = vmatpush2.msra.mxu0 0.0
        %1250 = vmatprep.subr.mxu0 0.0
        %1251 = vmatpush2.msra.mxu0 0.0
        %1252 = vmatprep.subr.mxu0 0.0
        %1253 = vmatpush2.msra.mxu0 0.0
        %1254 = vmatprep.subr.mxu0 0.0
        %1255 = vmatpush2.msra.mxu0 0.0
        %1256 = vmatprep.subr.mxu0 0.0
        %1257 = vmatpush2.msra.mxu0 0.0
        %1258 = vmatprep.subr.mxu0 0.0
        %1259 = vmatpush2.msra.mxu0 0.0
        %1260 = vmatprep.subr.mxu0 0.0
        %1261 = vmatpush2.msra.mxu0 0.0
        %1262 = vmatprep.subr.mxu0 0.0
        %1263 = vmatpush2.msra.mxu0 0.0
        %1264 = vmatprep.subr.mxu0 0.0
        %1265 = vmatpush2.msra.mxu0 0.0
        %1266 = vmatprep.subr.mxu0 0.0
        %1267 = vmatpush2.msra.mxu0 0.0
        %1268 = vmatprep.mubr.f32.mxu0 0.0
        %1269 = vmatmul.mubr.f32.gmra.mxu0 %v1202
        %v1270 = vpop.f32.mrf.mxu0
        %v1271 = vadd.f32 0.0, %v1270
        %v1272 = vpop.f32.mrf.mxu0
        %1273 = vdwg.mxu0
        %1274 = vmatprep.subr.mxu0 0.0
        %1275 = vmatpush1.msra.mxu0 0.0
        %1276 = vmatprep.subr.mxu0 0.0
        %1277 = vmatpush1.msra.mxu0 0.0
        %1278 = vmatprep.subr.mxu0 0.0
        %1279 = vmatpush1.msra.mxu0 0.0
        %1280 = vmatprep.subr.mxu0 0.0
        %1281 = vmatpush1.msra.mxu0 0.0
        %1282 = vmatprep.subr.mxu0 0.0
        %1283 = vmatpush1.msra.mxu0 0.0
        %1284 = vmatprep.subr.mxu0 0.0
        %1285 = vmatpush1.msra.mxu0 0.0
        %1286 = vmatprep.subr.mxu0 0.0
        %1287 = vmatpush1.msra.mxu0 0.0
        %1288 = vmatprep.subr.mxu0 0.0
        %1289 = vmatpush1.msra.mxu0 0.0
        %1290 = vmatprep.subr.mxu0 0.0
        %1291 = vmatpush1.msra.mxu0 0.0
        %1292 = vmatprep.subr.mxu0 0.0
        %1293 = vmatpush1.msra.mxu0 0.0
        %1294 = vmatprep.subr.mxu0 0.0
        %1295 = vmatpush1.msra.mxu0 0.0
        %1296 = vmatprep.subr.mxu0 0.0
        %1297 = vmatpush1.msra.mxu0 0.0
        %1298 = vmatprep.subr.mxu0 0.0
        %1299 = vmatpush1.msra.mxu0 0.0
        %1300 = vmatprep.subr.mxu0 0.0
        %1301 = vmatpush1.msra.mxu0 0.0
        %1302 = vmatprep.subr.mxu0 0.0
        %1303 = vmatpush1.msra.mxu0 %v1176
        %1304 = vmatprep.subr.mxu0 0.0
        %1305 = vmatpush1.msra.mxu0 %v1171
        %1306 = vmatprep.subr.mxu0 0.0
        %1307 = vmatpush2.msra.mxu0 0.0
        %1308 = vmatprep.subr.mxu0 0.0
        %1309 = vmatpush2.msra.mxu0 0.0
        %1310 = vmatprep.subr.mxu0 0.0
        %1311 = vmatpush2.msra.mxu0 0.0
        %1312 = vmatprep.subr.mxu0 0.0
        %1313 = vmatpush2.msra.mxu0 0.0
        %1314 = vmatprep.subr.mxu0 0.0
        %1315 = vmatpush2.msra.mxu0 0.0
        %1316 = vmatprep.subr.mxu0 0.0
        %1317 = vmatpush2.msra.mxu0 0.0
        %1318 = vmatprep.subr.mxu0 0.0
        %1319 = vmatpush2.msra.mxu0 0.0
        %1320 = vmatprep.subr.mxu0 0.0
        %1321 = vmatpush2.msra.mxu0 0.0
        %1322 = vmatprep.subr.mxu0 0.0
        %1323 = vmatpush2.msra.mxu0 0.0
        %1324 = vmatprep.subr.mxu0 0.0
        %1325 = vmatpush2.msra.mxu0 0.0
        %1326 = vmatprep.subr.mxu0 0.0
        %1327 = vmatpush2.msra.mxu0 0.0
        %1328 = vmatprep.subr.mxu0 0.0
        %1329 = vmatpush2.msra.mxu0 0.0
        %1330 = vmatprep.subr.mxu0 0.0
        %1331 = vmatpush2.msra.mxu0 0.0
        %1332 = vmatprep.subr.mxu0 0.0
        %1333 = vmatpush2.msra.mxu0 0.0
        %1334 = vmatprep.subr.mxu0 0.0
        %1335 = vmatpush2.msra.mxu0 0.0
        %1336 = vmatprep.subr.mxu0 0.0
        %1337 = vmatpush2.msra.mxu0 0.0
        %1338 = vmatprep.mubr.f32.mxu0 0.0
        %1339 = vmatmul.mubr.f32.gmra.mxu0 %v1202
        %v1340 = vpop.f32.mrf.mxu0
        %v1341 = vadd.f32 0.0, %v1340
        %v1342 = vpop.f32.mrf.mxu0
        %1343 = vdwg.mxu0
        %v1345 = vsel %vm586, %v1341, 0
        %1347 = vmatprep.subr.mxu0 0.0
        %1348 = vmatpush1.msra.mxu0 0.0
        %1349 = vmatprep.subr.mxu0 0.0
        %1350 = vmatpush1.msra.mxu0 0.0
        %1351 = vmatprep.subr.mxu0 0.0
        %1352 = vmatpush1.msra.mxu0 0.0
        %1353 = vmatprep.subr.mxu0 0.0
        %1354 = vmatpush1.msra.mxu0 0.0
        %1355 = vmatprep.subr.mxu0 0.0
        %1356 = vmatpush1.msra.mxu0 0.0
        %1357 = vmatprep.subr.mxu0 0.0
        %1358 = vmatpush1.msra.mxu0 0.0
        %1359 = vmatprep.subr.mxu0 0.0
        %1360 = vmatpush1.msra.mxu0 0.0
        %1361 = vmatprep.subr.mxu0 0.0
        %1362 = vmatpush1.msra.mxu0 0.0
        %1363 = vmatprep.subr.mxu0 0.0
        %1364 = vmatpush1.msra.mxu0 0.0
        %1365 = vmatprep.subr.mxu0 0.0
        %1366 = vmatpush1.msra.mxu0 0.0
        %1367 = vmatprep.subr.mxu0 0.0
        %1368 = vmatpush1.msra.mxu0 0.0
        %1369 = vmatprep.subr.mxu0 0.0
        %1370 = vmatpush1.msra.mxu0 0.0
        %1371 = vmatprep.subr.mxu0 0.0
        %1372 = vmatpush1.msra.mxu0 0.0
        %1373 = vmatprep.subr.mxu0 0.0
        %1374 = vmatpush1.msra.mxu0 0.0
        %1375 = vmatprep.subr.mxu0 0.0
        %1376 = vmatpush1.msra.mxu0 0.0
        %1377 = vmatprep.subr.mxu0 0.0
        %1378 = vmatpush1.msra.mxu0 %v285
        %1379 = vmatprep.subr.mxu0 0.0
        %1380 = vmatpush2.msra.mxu0 0.0
        %1381 = vmatprep.subr.mxu0 0.0
        %1382 = vmatpush2.msra.mxu0 0.0
        %1383 = vmatprep.subr.mxu0 0.0
        %1384 = vmatpush2.msra.mxu0 0.0
        %1385 = vmatprep.subr.mxu0 0.0
        %1386 = vmatpush2.msra.mxu0 0.0
        %1387 = vmatprep.subr.mxu0 0.0
        %1388 = vmatpush2.msra.mxu0 0.0
        %1389 = vmatprep.subr.mxu0 0.0
        %1390 = vmatpush2.msra.mxu0 0.0
        %1391 = vmatprep.subr.mxu0 0.0
        %1392 = vmatpush2.msra.mxu0 0.0
        %1393 = vmatprep.subr.mxu0 0.0
        %1394 = vmatpush2.msra.mxu0 0.0
        %1395 = vmatprep.subr.mxu0 0.0
        %1396 = vmatpush2.msra.mxu0 0.0
        %1397 = vmatprep.subr.mxu0 0.0
        %1398 = vmatpush2.msra.mxu0 0.0
        %1399 = vmatprep.subr.mxu0 0.0
        %1400 = vmatpush2.msra.mxu0 0.0
        %1401 = vmatprep.subr.mxu0 0.0
        %1402 = vmatpush2.msra.mxu0 0.0
        %1403 = vmatprep.subr.mxu0 0.0
        %1404 = vmatpush2.msra.mxu0 0.0
        %1405 = vmatprep.subr.mxu0 0.0
        %1406 = vmatpush2.msra.mxu0 0.0
        %1407 = vmatprep.subr.mxu0 0.0
        %1408 = vmatpush2.msra.mxu0 0.0
        %1409 = vmatprep.subr.mxu0 0.0
        %1410 = vmatpush2.msra.mxu0 0.0
        %1411 = vmatprep.mubr.f32.mxu0 0.0
        %1412 = vmatmul.mubr.f32.gmra.mxu0 %v1345
        %v1413 = vpop.f32.mrf.mxu0
        %v1414 = vadd.f32 0.0, %v1413
        %v1415 = vpop.f32.mrf.mxu0
        %1416 = vdwg.mxu0
        %v1418 = vsel %vm586, %v1271, 0
        %1420 = vmatprep.subr.mxu0 0.0
        %1421 = vmatpush1.msra.mxu0 0.0
        %1422 = vmatprep.subr.mxu0 0.0
        %1423 = vmatpush1.msra.mxu0 0.0
        %1424 = vmatprep.subr.mxu0 0.0
        %1425 = vmatpush1.msra.mxu0 0.0
        %1426 = vmatprep.subr.mxu0 0.0
        %1427 = vmatpush1.msra.mxu0 0.0
        %1428 = vmatprep.subr.mxu0 0.0
        %1429 = vmatpush1.msra.mxu0 0.0
        %1430 = vmatprep.subr.mxu0 0.0
        %1431 = vmatpush1.msra.mxu0 0.0
        %1432 = vmatprep.subr.mxu0 0.0
        %1433 = vmatpush1.msra.mxu0 0.0
        %1434 = vmatprep.subr.mxu0 0.0
        %1435 = vmatpush1.msra.mxu0 0.0
        %1436 = vmatprep.subr.mxu0 0.0
        %1437 = vmatpush1.msra.mxu0 0.0
        %1438 = vmatprep.subr.mxu0 0.0
        %1439 = vmatpush1.msra.mxu0 0.0
        %1440 = vmatprep.subr.mxu0 0.0
        %1441 = vmatpush1.msra.mxu0 0.0
        %1442 = vmatprep.subr.mxu0 0.0
        %1443 = vmatpush1.msra.mxu0 0.0
        %1444 = vmatprep.subr.mxu0 0.0
        %1445 = vmatpush1.msra.mxu0 0.0
        %1446 = vmatprep.subr.mxu0 0.0
        %1447 = vmatpush1.msra.mxu0 0.0
        %1448 = vmatprep.subr.mxu0 0.0
        %1449 = vmatpush1.msra.mxu0 0.0
        %1450 = vmatprep.subr.mxu0 0.0
        %1451 = vmatpush1.msra.mxu0 %v281
        %1452 = vmatprep.subr.mxu0 0.0
        %1453 = vmatpush2.msra.mxu0 0.0
        %1454 = vmatprep.subr.mxu0 0.0
        %1455 = vmatpush2.msra.mxu0 0.0
        %1456 = vmatprep.subr.mxu0 0.0
        %1457 = vmatpush2.msra.mxu0 0.0
        %1458 = vmatprep.subr.mxu0 0.0
        %1459 = vmatpush2.msra.mxu0 0.0
        %1460 = vmatprep.subr.mxu0 0.0
        %1461 = vmatpush2.msra.mxu0 0.0
        %1462 = vmatprep.subr.mxu0 0.0
        %1463 = vmatpush2.msra.mxu0 0.0
        %1464 = vmatprep.subr.mxu0 0.0
        %1465 = vmatpush2.msra.mxu0 0.0
        %1466 = vmatprep.subr.mxu0 0.0
        %1467 = vmatpush2.msra.mxu0 0.0
        %1468 = vmatprep.subr.mxu0 0.0
        %1469 = vmatpush2.msra.mxu0 0.0
        %1470 = vmatprep.subr.mxu0 0.0
        %1471 = vmatpush2.msra.mxu0 0.0
        %1472 = vmatprep.subr.mxu0 0.0
        %1473 = vmatpush2.msra.mxu0 0.0
        %1474 = vmatprep.subr.mxu0 0.0
        %1475 = vmatpush2.msra.mxu0 0.0
        %1476 = vmatprep.subr.mxu0 0.0
        %1477 = vmatpush2.msra.mxu0 0.0
        %1478 = vmatprep.subr.mxu0 0.0
        %1479 = vmatpush2.msra.mxu0 0.0
        %1480 = vmatprep.subr.mxu0 0.0
        %1481 = vmatpush2.msra.mxu0 0.0
        %1482 = vmatprep.subr.mxu0 0.0
        %1483 = vmatpush2.msra.mxu0 0.0
        %1484 = vmatprep.mubr.f32.mxu0 0.0
        %1485 = vmatmul.mubr.f32.gmra.mxu0 %v1418
        %v1486 = vpop.f32.mrf.mxu0
        %v1487 = vadd.f32 %v1414, %v1486
        %v1488 = vpop.f32.mrf.mxu0
        %1489 = vdwg.mxu0
        %1490 = vmatprep.subr.mxu0 0.0
        %1491 = vmatpush1.msra.mxu0 0.0
        %1492 = vmatprep.subr.mxu0 0.0
        %1493 = vmatpush1.msra.mxu0 0.0
        %1494 = vmatprep.subr.mxu0 0.0
        %1495 = vmatpush1.msra.mxu0 0.0
        %1496 = vmatprep.subr.mxu0 0.0
        %1497 = vmatpush1.msra.mxu0 0.0
        %1498 = vmatprep.subr.mxu0 0.0
        %1499 = vmatpush1.msra.mxu0 0.0
        %1500 = vmatprep.subr.mxu0 0.0
        %1501 = vmatpush1.msra.mxu0 0.0
        %1502 = vmatprep.subr.mxu0 0.0
        %1503 = vmatpush1.msra.mxu0 0.0
        %1504 = vmatprep.subr.mxu0 0.0
        %1505 = vmatpush1.msra.mxu0 0.0
        %1506 = vmatprep.subr.mxu0 0.0
        %1507 = vmatpush1.msra.mxu0 0.0
        %1508 = vmatprep.subr.mxu0 0.0
        %1509 = vmatpush1.msra.mxu0 0.0
        %1510 = vmatprep.subr.mxu0 0.0
        %1511 = vmatpush1.msra.mxu0 0.0
        %1512 = vmatprep.subr.mxu0 0.0
        %1513 = vmatpush1.msra.mxu0 0.0
        %1514 = vmatprep.subr.mxu0 0.0
        %1515 = vmatpush1.msra.mxu0 0.0
        %1516 = vmatprep.subr.mxu0 0.0
        %1517 = vmatpush1.msra.mxu0 0.0
        %1518 = vmatprep.subr.mxu0 0.0
        %1519 = vmatpush1.msra.mxu0 %v1186
        %1520 = vmatprep.subr.mxu0 0.0
        %1521 = vmatpush1.msra.mxu0 %v1181
        %1522 = vmatprep.subr.mxu0 0.0
        %1523 = vmatpush2.msra.mxu0 0.0
        %1524 = vmatprep.subr.mxu0 0.0
        %1525 = vmatpush2.msra.mxu0 0.0
        %1526 = vmatprep.subr.mxu0 0.0
        %1527 = vmatpush2.msra.mxu0 0.0
        %1528 = vmatprep.subr.mxu0 0.0
        %1529 = vmatpush2.msra.mxu0 0.0
        %1530 = vmatprep.subr.mxu0 0.0
        %1531 = vmatpush2.msra.mxu0 0.0
        %1532 = vmatprep.subr.mxu0 0.0
        %1533 = vmatpush2.msra.mxu0 0.0
        %1534 = vmatprep.subr.mxu0 0.0
        %1535 = vmatpush2.msra.mxu0 0.0
        %1536 = vmatprep.subr.mxu0 0.0
        %1537 = vmatpush2.msra.mxu0 0.0
        %1538 = vmatprep.subr.mxu0 0.0
        %1539 = vmatpush2.msra.mxu0 0.0
        %1540 = vmatprep.subr.mxu0 0.0
        %1541 = vmatpush2.msra.mxu0 0.0
        %1542 = vmatprep.subr.mxu0 0.0
        %1543 = vmatpush2.msra.mxu0 0.0
        %1544 = vmatprep.subr.mxu0 0.0
        %1545 = vmatpush2.msra.mxu0 0.0
        %1546 = vmatprep.subr.mxu0 0.0
        %1547 = vmatpush2.msra.mxu0 0.0
        %1548 = vmatprep.subr.mxu0 0.0
        %1549 = vmatpush2.msra.mxu0 0.0
        %1550 = vmatprep.subr.mxu0 0.0
        %1551 = vmatpush2.msra.mxu0 0.0
        %1552 = vmatprep.subr.mxu0 0.0
        %1553 = vmatpush2.msra.mxu0 0.0
        %1554 = vmatprep.mubr.f32.mxu0 0.0
        %1555 = vmatmul.mubr.f32.gmra.mxu0 %v1202
        %v1556 = vpop.f32.mrf.mxu0
        %v1557 = vadd.f32 0.0, %v1556
        %v1558 = vpop.f32.mrf.mxu0
        %1559 = vdwg.mxu0
        %v1561 = vsel %vm586, %v1557, 0
        %1563 = vmatprep.subr.mxu0 0.0
        %1564 = vmatpush1.msra.mxu0 0.0
        %1565 = vmatprep.subr.mxu0 0.0
        %1566 = vmatpush1.msra.mxu0 0.0
        %1567 = vmatprep.subr.mxu0 0.0
        %1568 = vmatpush1.msra.mxu0 0.0
        %1569 = vmatprep.subr.mxu0 0.0
        %1570 = vmatpush1.msra.mxu0 0.0
        %1571 = vmatprep.subr.mxu0 0.0
        %1572 = vmatpush1.msra.mxu0 0.0
        %1573 = vmatprep.subr.mxu0 0.0
        %1574 = vmatpush1.msra.mxu0 0.0
        %1575 = vmatprep.subr.mxu0 0.0
        %1576 = vmatpush1.msra.mxu0 0.0
        %1577 = vmatprep.subr.mxu0 0.0
        %1578 = vmatpush1.msra.mxu0 0.0
        %1579 = vmatprep.subr.mxu0 0.0
        %1580 = vmatpush1.msra.mxu0 0.0
        %1581 = vmatprep.subr.mxu0 0.0
        %1582 = vmatpush1.msra.mxu0 0.0
        %1583 = vmatprep.subr.mxu0 0.0
        %1584 = vmatpush1.msra.mxu0 0.0
        %1585 = vmatprep.subr.mxu0 0.0
        %1586 = vmatpush1.msra.mxu0 0.0
        %1587 = vmatprep.subr.mxu0 0.0
        %1588 = vmatpush1.msra.mxu0 0.0
        %1589 = vmatprep.subr.mxu0 0.0
        %1590 = vmatpush1.msra.mxu0 0.0
        %1591 = vmatprep.subr.mxu0 0.0
        %1592 = vmatpush1.msra.mxu0 0.0
        %1593 = vmatprep.subr.mxu0 0.0
        %1594 = vmatpush1.msra.mxu0 %v289
        %1595 = vmatprep.subr.mxu0 0.0
        %1596 = vmatpush2.msra.mxu0 0.0
        %1597 = vmatprep.subr.mxu0 0.0
        %1598 = vmatpush2.msra.mxu0 0.0
        %1599 = vmatprep.subr.mxu0 0.0
        %1600 = vmatpush2.msra.mxu0 0.0
        %1601 = vmatprep.subr.mxu0 0.0
        %1602 = vmatpush2.msra.mxu0 0.0
        %1603 = vmatprep.subr.mxu0 0.0
        %1604 = vmatpush2.msra.mxu0 0.0
        %1605 = vmatprep.subr.mxu0 0.0
        %1606 = vmatpush2.msra.mxu0 0.0
        %1607 = vmatprep.subr.mxu0 0.0
        %1608 = vmatpush2.msra.mxu0 0.0
        %1609 = vmatprep.subr.mxu0 0.0
        %1610 = vmatpush2.msra.mxu0 0.0
        %1611 = vmatprep.subr.mxu0 0.0
        %1612 = vmatpush2.msra.mxu0 0.0
        %1613 = vmatprep.subr.mxu0 0.0
        %1614 = vmatpush2.msra.mxu0 0.0
        %1615 = vmatprep.subr.mxu0 0.0
        %1616 = vmatpush2.msra.mxu0 0.0
        %1617 = vmatprep.subr.mxu0 0.0
        %1618 = vmatpush2.msra.mxu0 0.0
        %1619 = vmatprep.subr.mxu0 0.0
        %1620 = vmatpush2.msra.mxu0 0.0
        %1621 = vmatprep.subr.mxu0 0.0
        %1622 = vmatpush2.msra.mxu0 0.0
        %1623 = vmatprep.subr.mxu0 0.0
        %1624 = vmatpush2.msra.mxu0 0.0
        %1625 = vmatprep.subr.mxu0 0.0
        %1626 = vmatpush2.msra.mxu0 0.0
        %1627 = vmatprep.mubr.f32.mxu0 0.0
        %1628 = vmatmul.mubr.f32.gmra.mxu0 %v1561
        %v1629 = vpop.f32.mrf.mxu0
        %v1630 = vadd.f32 0.0, %v1629
        %v1631 = vpop.f32.mrf.mxu0
        %1632 = vdwg.mxu0
        %v1633 = vadd.f32 %v1487, %v1630
        %1634 = vmatprep.subr.mxu0 0.0
        %1635 = vmatpush1.msra.mxu0 0.0
        %1636 = vmatprep.subr.mxu0 0.0
        %1637 = vmatpush1.msra.mxu0 0.0
        %1638 = vmatprep.subr.mxu0 0.0
        %1639 = vmatpush1.msra.mxu0 0.0
        %1640 = vmatprep.subr.mxu0 0.0
        %1641 = vmatpush1.msra.mxu0 0.0
        %1642 = vmatprep.subr.mxu0 0.0
        %1643 = vmatpush1.msra.mxu0 0.0
        %1644 = vmatprep.subr.mxu0 0.0
        %1645 = vmatpush1.msra.mxu0 0.0
        %1646 = vmatprep.subr.mxu0 0.0
        %1647 = vmatpush1.msra.mxu0 0.0
        %1648 = vmatprep.subr.mxu0 0.0
        %1649 = vmatpush1.msra.mxu0 0.0
        %1650 = vmatprep.subr.mxu0 0.0
        %1651 = vmatpush1.msra.mxu0 0.0
        %1652 = vmatprep.subr.mxu0 0.0
        %1653 = vmatpush1.msra.mxu0 0.0
        %1654 = vmatprep.subr.mxu0 0.0
        %1655 = vmatpush1.msra.mxu0 0.0
        %1656 = vmatprep.subr.mxu0 0.0
        %1657 = vmatpush1.msra.mxu0 0.0
        %1658 = vmatprep.subr.mxu0 0.0
        %1659 = vmatpush1.msra.mxu0 0.0
        %1660 = vmatprep.subr.mxu0 0.0
        %1661 = vmatpush1.msra.mxu0 0.0
        %1662 = vmatprep.subr.mxu0 0.0
        %1663 = vmatpush1.msra.mxu0 %v1196
        %1664 = vmatprep.subr.mxu0 0.0
        %1665 = vmatpush1.msra.mxu0 %v1191
        %1666 = vmatprep.subr.mxu0 0.0
        %1667 = vmatpush2.msra.mxu0 0.0
        %1668 = vmatprep.subr.mxu0 0.0
        %1669 = vmatpush2.msra.mxu0 0.0
        %1670 = vmatprep.subr.mxu0 0.0
        %1671 = vmatpush2.msra.mxu0 0.0
        %1672 = vmatprep.subr.mxu0 0.0
        %1673 = vmatpush2.msra.mxu0 0.0
        %1674 = vmatprep.subr.mxu0 0.0
        %1675 = vmatpush2.msra.mxu0 0.0
        %1676 = vmatprep.subr.mxu0 0.0
        %1677 = vmatpush2.msra.mxu0 0.0
        %1678 = vmatprep.subr.mxu0 0.0
        %1679 = vmatpush2.msra.mxu0 0.0
        %1680 = vmatprep.subr.mxu0 0.0
        %1681 = vmatpush2.msra.mxu0 0.0
        %1682 = vmatprep.subr.mxu0 0.0
        %1683 = vmatpush2.msra.mxu0 0.0
        %1684 = vmatprep.subr.mxu0 0.0
        %1685 = vmatpush2.msra.mxu0 0.0
        %1686 = vmatprep.subr.mxu0 0.0
        %1687 = vmatpush2.msra.mxu0 0.0
        %1688 = vmatprep.subr.mxu0 0.0
        %1689 = vmatpush2.msra.mxu0 0.0
        %1690 = vmatprep.subr.mxu0 0.0
        %1691 = vmatpush2.msra.mxu0 0.0
        %1692 = vmatprep.subr.mxu0 0.0
        %1693 = vmatpush2.msra.mxu0 0.0
        %1694 = vmatprep.subr.mxu0 0.0
        %1695 = vmatpush2.msra.mxu0 0.0
        %1696 = vmatprep.subr.mxu0 0.0
        %1697 = vmatpush2.msra.mxu0 0.0
        %1698 = vmatprep.mubr.f32.mxu0 0.0
        %1699 = vmatmul.mubr.f32.gmra.mxu0 %v1202
        %v1700 = vpop.f32.mrf.mxu0
        %v1701 = vadd.f32 0.0, %v1700
        %v1702 = vpop.f32.mrf.mxu0
        %1703 = vdwg.mxu0
        %v1705 = vsel %vm586, %v1701, 0
        %1707 = vmatprep.subr.mxu0 0.0
        %1708 = vmatpush1.msra.mxu0 0.0
        %1709 = vmatprep.subr.mxu0 0.0
        %1710 = vmatpush1.msra.mxu0 0.0
        %1711 = vmatprep.subr.mxu0 0.0
        %1712 = vmatpush1.msra.mxu0 0.0
        %1713 = vmatprep.subr.mxu0 0.0
        %1714 = vmatpush1.msra.mxu0 0.0
        %1715 = vmatprep.subr.mxu0 0.0
        %1716 = vmatpush1.msra.mxu0 0.0
        %1717 = vmatprep.subr.mxu0 0.0
        %1718 = vmatpush1.msra.mxu0 0.0
        %1719 = vmatprep.subr.mxu0 0.0
        %1720 = vmatpush1.msra.mxu0 0.0
        %1721 = vmatprep.subr.mxu0 0.0
        %1722 = vmatpush1.msra.mxu0 0.0
        %1723 = vmatprep.subr.mxu0 0.0
        %1724 = vmatpush1.msra.mxu0 0.0
        %1725 = vmatprep.subr.mxu0 0.0
        %1726 = vmatpush1.msra.mxu0 0.0
        %1727 = vmatprep.subr.mxu0 0.0
        %1728 = vmatpush1.msra.mxu0 0.0
        %1729 = vmatprep.subr.mxu0 0.0
        %1730 = vmatpush1.msra.mxu0 0.0
        %1731 = vmatprep.subr.mxu0 0.0
        %1732 = vmatpush1.msra.mxu0 0.0
        %1733 = vmatprep.subr.mxu0 0.0
        %1734 = vmatpush1.msra.mxu0 0.0
        %1735 = vmatprep.subr.mxu0 0.0
        %1736 = vmatpush1.msra.mxu0 0.0
        %1737 = vmatprep.subr.mxu0 0.0
        %1738 = vmatpush1.msra.mxu0 %v293
        %1739 = vmatprep.subr.mxu0 0.0
        %1740 = vmatpush2.msra.mxu0 0.0
        %1741 = vmatprep.subr.mxu0 0.0
        %1742 = vmatpush2.msra.mxu0 0.0
        %1743 = vmatprep.subr.mxu0 0.0
        %1744 = vmatpush2.msra.mxu0 0.0
        %1745 = vmatprep.subr.mxu0 0.0
        %1746 = vmatpush2.msra.mxu0 0.0
        %1747 = vmatprep.subr.mxu0 0.0
        %1748 = vmatpush2.msra.mxu0 0.0
        %1749 = vmatprep.subr.mxu0 0.0
        %1750 = vmatpush2.msra.mxu0 0.0
        %1751 = vmatprep.subr.mxu0 0.0
        %1752 = vmatpush2.msra.mxu0 0.0
        %1753 = vmatprep.subr.mxu0 0.0
        %1754 = vmatpush2.msra.mxu0 0.0
        %1755 = vmatprep.subr.mxu0 0.0
        %1756 = vmatpush2.msra.mxu0 0.0
        %1757 = vmatprep.subr.mxu0 0.0
        %1758 = vmatpush2.msra.mxu0 0.0
        %1759 = vmatprep.subr.mxu0 0.0
        %1760 = vmatpush2.msra.mxu0 0.0
        %1761 = vmatprep.subr.mxu0 0.0
        %1762 = vmatpush2.msra.mxu0 0.0
        %1763 = vmatprep.subr.mxu0 0.0
        %1764 = vmatpush2.msra.mxu0 0.0
        %1765 = vmatprep.subr.mxu0 0.0
        %1766 = vmatpush2.msra.mxu0 0.0
        %1767 = vmatprep.subr.mxu0 0.0
        %1768 = vmatpush2.msra.mxu0 0.0
        %1769 = vmatprep.subr.mxu0 0.0
        %1770 = vmatpush2.msra.mxu0 0.0
        %1771 = vmatprep.mubr.f32.mxu0 0.0
        %1772 = vmatmul.mubr.f32.gmra.mxu0 %v1705
        %v1773 = vpop.f32.mrf.mxu0
        %v1774 = vadd.f32 0.0, %v1773
        %v1775 = vpop.f32.mrf.mxu0
        %1776 = vdwg.mxu0
        %v1777 = vadd.f32 %v1633, %v1774
        %v1778 = vadd.s32 %v1025, 1
        %vm1779 = vcmp.eq.s32.totalorder %v276, %v1778
        %vm1780 = vcmp.eq.s32.totalorder %v282, %v1778
        %vm1781 = vcmp.eq.s32.totalorder %v286, %v1778
        %vm1782 = vcmp.eq.s32.totalorder %v290, %v1778
        %vm1783 = vcmp.eq.s32.totalorder %v1021, %v1778
        %vm1784 = vcmp.eq.s32.totalorder %v1022, %v1778
        %vm1785 = vcmp.eq.s32.totalorder %v1023, %v1778
        %vm1786 = vcmp.eq.s32.totalorder %v1024, %v1778
        %v1787 = vsel %vm1779, 1, 0
        %v1788 = vsel %vm1780, 1, 0
        %v1789 = vsel %vm1781, 1, 0
        %v1790 = vsel %vm1782, 1, 0
        %v1791 = vsel %vm1783, 1, 0
        %v1792 = vsel %vm1784, 1, 0
        %v1793 = vsel %vm1785, 1, 0
        %v1794 = vsel %vm1786, 1, 0
        %v1795 = vcvt.s32.f32 %v1787
        %v1796 = vcvt.s32.f32 %v1788
        %v1797 = vcvt.s32.f32 %v1789
        %v1798 = vcvt.s32.f32 %v1790
        %v1799 = vcvt.s32.f32 %v1791
        %v1800 = vcvt.s32.f32 %v1792
        %v1801 = vcvt.s32.f32 %v1793
        %v1802 = vcvt.s32.f32 %v1794
        %v1804 = vsel %vm586, %v1795, 0
        %v1807 = vsel %vm586, %v1796, 0
        %v1810 = vsel %vm586, %v1797, 0
        %v1813 = vsel %vm586, %v1798, 0
        %v1816 = vsel %vm586, %v1799, 0
        %v1819 = vsel %vm586, %v1800, 0
        %v1822 = vsel %vm586, %v1801, 0
        %v1825 = vsel %vm586, %v1802, 0
        %1827 = vmatprep.subr.mxu0 0.0
        %1828 = vmatpush1.msra.mxu0 0.0
        %1829 = vmatprep.subr.mxu0 0.0
        %1830 = vmatpush1.msra.mxu0 0.0
        %1831 = vmatprep.subr.mxu0 0.0
        %1832 = vmatpush1.msra.mxu0 0.0
        %1833 = vmatprep.subr.mxu0 0.0
        %1834 = vmatpush1.msra.mxu0 0.0
        %1835 = vmatprep.subr.mxu0 0.0
        %1836 = vmatpush1.msra.mxu0 0.0
        %1837 = vmatprep.subr.mxu0 0.0
        %1838 = vmatpush1.msra.mxu0 0.0
        %1839 = vmatprep.subr.mxu0 0.0
        %1840 = vmatpush1.msra.mxu0 0.0
        %1841 = vmatprep.subr.mxu0 0.0
        %1842 = vmatpush1.msra.mxu0 0.0
        %1843 = vmatprep.subr.mxu0 0.0
        %1844 = vmatpush1.msra.mxu0 0.0
        %1845 = vmatprep.subr.mxu0 0.0
        %1846 = vmatpush1.msra.mxu0 0.0
        %1847 = vmatprep.subr.mxu0 0.0
        %1848 = vmatpush1.msra.mxu0 0.0
        %1849 = vmatprep.subr.mxu0 0.0
        %1850 = vmatpush1.msra.mxu0 0.0
        %1851 = vmatprep.subr.mxu0 0.0
        %1852 = vmatpush1.msra.mxu0 0.0
        %1853 = vmatprep.subr.mxu0 0.0
        %1854 = vmatpush1.msra.mxu0 0.0
        %1855 = vmatprep.subr.mxu0 0.0
        %1856 = vmatpush1.msra.mxu0 0.0
        %1857 = vmatprep.subr.mxu0 0.0
        %1858 = vmatpush1.msra.mxu0 %v1777
        %1859 = vmatprep.subr.mxu0 0.0
        %1860 = vmatpush2.msra.mxu0 0.0
        %1861 = vmatprep.subr.mxu0 0.0
        %1862 = vmatpush2.msra.mxu0 0.0
        %1863 = vmatprep.subr.mxu0 0.0
        %1864 = vmatpush2.msra.mxu0 0.0
        %1865 = vmatprep.subr.mxu0 0.0
        %1866 = vmatpush2.msra.mxu0 0.0
        %1867 = vmatprep.subr.mxu0 0.0
        %1868 = vmatpush2.msra.mxu0 0.0
        %1869 = vmatprep.subr.mxu0 0.0
        %1870 = vmatpush2.msra.mxu0 0.0
        %1871 = vmatprep.subr.mxu0 0.0
        %1872 = vmatpush2.msra.mxu0 0.0
        %1873 = vmatprep.subr.mxu0 0.0
        %1874 = vmatpush2.msra.mxu0 0.0
        %1875 = vmatprep.subr.mxu0 0.0
        %1876 = vmatpush2.msra.mxu0 0.0
        %1877 = vmatprep.subr.mxu0 0.0
        %1878 = vmatpush2.msra.mxu0 0.0
        %1879 = vmatprep.subr.mxu0 0.0
        %1880 = vmatpush2.msra.mxu0 0.0
        %1881 = vmatprep.subr.mxu0 0.0
        %1882 = vmatpush2.msra.mxu0 0.0
        %1883 = vmatprep.subr.mxu0 0.0
        %1884 = vmatpush2.msra.mxu0 0.0
        %1885 = vmatprep.subr.mxu0 0.0
        %1886 = vmatpush2.msra.mxu0 0.0
        %1887 = vmatprep.subr.mxu0 0.0
        %1888 = vmatpush2.msra.mxu0 0.0
        %1889 = vmatprep.subr.mxu0 0.0
        %1890 = vmatpush2.msra.mxu0 0.0
        %1891 = vmatprep.mubr.f32.mxu0 0.0
        %1892 = vmatmul.mubr.f32.gmra.mxu0 %v1804
        %v1893 = vpop.f32.mrf.mxu0
        %v1894 = vadd.f32 0.0, %v1893
        %v1895 = vpop.f32.mrf.mxu0
        %1896 = vmatprep.mubr.f32.mxu0 0.0
        %1897 = vmatmul.mubr.f32.gmra.mxu0 %v1807
        %v1898 = vpop.f32.mrf.mxu0
        %v1899 = vadd.f32 0.0, %v1898
        %v1900 = vpop.f32.mrf.mxu0
        %1901 = vmatprep.mubr.f32.mxu0 0.0
        %1902 = vmatmul.mubr.f32.gmra.mxu0 %v1810
        %v1903 = vpop.f32.mrf.mxu0
        %v1904 = vadd.f32 0.0, %v1903
        %v1905 = vpop.f32.mrf.mxu0
        %1906 = vmatprep.mubr.f32.mxu0 0.0
        %1907 = vmatmul.mubr.f32.gmra.mxu0 %v1813
        %v1908 = vpop.f32.mrf.mxu0
        %v1909 = vadd.f32 0.0, %v1908
        %v1910 = vpop.f32.mrf.mxu0
        %1911 = vmatprep.mubr.f32.mxu0 0.0
        %1912 = vmatmul.mubr.f32.gmra.mxu0 %v1816
        %v1913 = vpop.f32.mrf.mxu0
        %v1914 = vadd.f32 0.0, %v1913
        %v1915 = vpop.f32.mrf.mxu0
        %1916 = vmatprep.mubr.f32.mxu0 0.0
        %1917 = vmatmul.mubr.f32.gmra.mxu0 %v1819
        %v1918 = vpop.f32.mrf.mxu0
        %v1919 = vadd.f32 0.0, %v1918
        %v1920 = vpop.f32.mrf.mxu0
        %1921 = vmatprep.mubr.f32.mxu0 0.0
        %1922 = vmatmul.mubr.f32.gmra.mxu0 %v1822
        %v1923 = vpop.f32.mrf.mxu0
        %v1924 = vadd.f32 0.0, %v1923
        %v1925 = vpop.f32.mrf.mxu0
        %1926 = vmatprep.mubr.f32.mxu0 0.0
        %1927 = vmatmul.mubr.f32.gmra.mxu0 %v1825
        %v1928 = vpop.f32.mrf.mxu0
        %v1929 = vadd.f32 0.0, %v1928
        %v1930 = vpop.f32.mrf.mxu0
        %1931 = vdwg.mxu0
        %v1933 = vsel %vm586, %v1042, 0
        %v1936 = vsel %vm586, %v1043, 0
        %v1939 = vsel %vm586, %v1044, 0
        %v1942 = vsel %vm586, %v1045, 0
        %v1945 = vsel %vm586, %v1046, 0
        %v1948 = vsel %vm586, %v1047, 0
        %v1951 = vsel %vm586, %v1048, 0
        %v1954 = vsel %vm586, %v1049, 0
        %1956 = vmatprep.subr.mxu0 0.0
        %1957 = vmatpush1.msra.mxu0 0.0
        %1958 = vmatprep.subr.mxu0 0.0
        %1959 = vmatpush1.msra.mxu0 0.0
        %1960 = vmatprep.subr.mxu0 0.0
        %1961 = vmatpush1.msra.mxu0 0.0
        %1962 = vmatprep.subr.mxu0 0.0
        %1963 = vmatpush1.msra.mxu0 0.0
        %1964 = vmatprep.subr.mxu0 0.0
        %1965 = vmatpush1.msra.mxu0 0.0
        %1966 = vmatprep.subr.mxu0 0.0
        %1967 = vmatpush1.msra.mxu0 0.0
        %1968 = vmatprep.subr.mxu0 0.0
        %1969 = vmatpush1.msra.mxu0 0.0
        %1970 = vmatprep.subr.mxu0 0.0
        %1971 = vmatpush1.msra.mxu0 0.0
        %1972 = vmatprep.subr.mxu0 0.0
        %1973 = vmatpush1.msra.mxu0 0.0
        %1974 = vmatprep.subr.mxu0 0.0
        %1975 = vmatpush1.msra.mxu0 0.0
        %1976 = vmatprep.subr.mxu0 0.0
        %1977 = vmatpush1.msra.mxu0 0.0
        %1978 = vmatprep.subr.mxu0 0.0
        %1979 = vmatpush1.msra.mxu0 0.0
        %1980 = vmatprep.subr.mxu0 0.0
        %1981 = vmatpush1.msra.mxu0 0.0
        %1982 = vmatprep.subr.mxu0 0.0
        %1983 = vmatpush1.msra.mxu0 0.0
        %1984 = vmatprep.subr.mxu0 0.0
        %1985 = vmatpush1.msra.mxu0 0.0
        %1986 = vmatprep.subr.mxu0 0.0
        %1987 = vmatpush1.msra.mxu0 %v1020
        %1988 = vmatprep.subr.mxu0 0.0
        %1989 = vmatpush2.msra.mxu0 0.0
        %1990 = vmatprep.subr.mxu0 0.0
        %1991 = vmatpush2.msra.mxu0 0.0
        %1992 = vmatprep.subr.mxu0 0.0
        %1993 = vmatpush2.msra.mxu0 0.0
        %1994 = vmatprep.subr.mxu0 0.0
        %1995 = vmatpush2.msra.mxu0 0.0
        %1996 = vmatprep.subr.mxu0 0.0
        %1997 = vmatpush2.msra.mxu0 0.0
        %1998 = vmatprep.subr.mxu0 0.0
        %1999 = vmatpush2.msra.mxu0 0.0
        %2000 = vmatprep.subr.mxu0 0.0
        %2001 = vmatpush2.msra.mxu0 0.0
        %2002 = vmatprep.subr.mxu0 0.0
        %2003 = vmatpush2.msra.mxu0 0.0
        %2004 = vmatprep.subr.mxu0 0.0
        %2005 = vmatpush2.msra.mxu0 0.0
        %2006 = vmatprep.subr.mxu0 0.0
        %2007 = vmatpush2.msra.mxu0 0.0
        %2008 = vmatprep.subr.mxu0 0.0
        %2009 = vmatpush2.msra.mxu0 0.0
        %2010 = vmatprep.subr.mxu0 0.0
        %2011 = vmatpush2.msra.mxu0 0.0
        %2012 = vmatprep.subr.mxu0 0.0
        %2013 = vmatpush2.msra.mxu0 0.0
        %2014 = vmatprep.subr.mxu0 0.0
        %2015 = vmatpush2.msra.mxu0 0.0
        %2016 = vmatprep.subr.mxu0 0.0
        %2017 = vmatpush2.msra.mxu0 0.0
        %2018 = vmatprep.subr.mxu0 0.0
        %2019 = vmatpush2.msra.mxu0 0.0
        %2020 = vmatprep.mubr.f32.mxu0 0.0
        %2021 = vmatmul.mubr.f32.gmra.mxu0 %v1933
        %v2022 = vpop.f32.mrf.mxu0
        %v2023 = vadd.f32 %v1894, %v2022
        %v2024 = vpop.f32.mrf.mxu0
        %2025 = vmatprep.mubr.f32.mxu0 0.0
        %2026 = vmatmul.mubr.f32.gmra.mxu0 %v1936
        %v2027 = vpop.f32.mrf.mxu0
        %v2028 = vadd.f32 %v1899, %v2027
        %v2029 = vpop.f32.mrf.mxu0
        %2030 = vmatprep.mubr.f32.mxu0 0.0
        %2031 = vmatmul.mubr.f32.gmra.mxu0 %v1939
        %v2032 = vpop.f32.mrf.mxu0
        %v2033 = vadd.f32 %v1904, %v2032
        %v2034 = vpop.f32.mrf.mxu0
        %2035 = vmatprep.mubr.f32.mxu0 0.0
        %2036 = vmatmul.mubr.f32.gmra.mxu0 %v1942
        %v2037 = vpop.f32.mrf.mxu0
        %v2038 = vadd.f32 %v1909, %v2037
        %v2039 = vpop.f32.mrf.mxu0
        %2040 = vmatprep.mubr.f32.mxu0 0.0
        %2041 = vmatmul.mubr.f32.gmra.mxu0 %v1945
        %v2042 = vpop.f32.mrf.mxu0
        %v2043 = vadd.f32 %v1914, %v2042
        %v2044 = vpop.f32.mrf.mxu0
        %2045 = vmatprep.mubr.f32.mxu0 0.0
        %2046 = vmatmul.mubr.f32.gmra.mxu0 %v1948
        %v2047 = vpop.f32.mrf.mxu0
        %v2048 = vadd.f32 %v1919, %v2047
        %v2049 = vpop.f32.mrf.mxu0
        %2050 = vmatprep.mubr.f32.mxu0 0.0
        %2051 = vmatmul.mubr.f32.gmra.mxu0 %v1951
        %v2052 = vpop.f32.mrf.mxu0
        %v2053 = vadd.f32 %v1924, %v2052
        %v2054 = vpop.f32.mrf.mxu0
        %2055 = vmatprep.mubr.f32.mxu0 0.0
        %2056 = vmatmul.mubr.f32.gmra.mxu0 %v1954
        %v2057 = vpop.f32.mrf.mxu0
        %v2058 = vadd.f32 %v1929, %v2057
        %v2059 = vpop.f32.mrf.mxu0
        %2060 = vdwg.mxu0
        %s2061 = scalar_lea.vmem %s260, 64
        %v2062 = vld [vmem:[%s2061] sm:$0xf]
        %v2063 = vld [vmem:[%s2061 + $0x4] sm:$0xf]
        %v2064 = vld [vmem:[%s2061 + $0x8] sm:$0xf]
        %v2065 = vld [vmem:[%s2061 + $0xc] sm:$0xf]
        %v2066 = vld [vmem:[%s2061 + $0x10] sm:$0xf]
        %v2067 = vld [vmem:[%s2061 + $0x14] sm:$0xf]
        %v2068 = vld [vmem:[%s2061 + $0x18] sm:$0xf]
        %v2069 = vld [vmem:[%s2061 + $0x1c] sm:$0xf]
        %v2070 = vunpack.c.l.bf16 %v2062
        %v2071 = vunpack.c.l.bf16 %v2063
        %v2072 = vunpack.c.l.bf16 %v2064
        %v2073 = vunpack.c.l.bf16 %v2065
        %v2074 = vunpack.c.l.bf16 %v2066
        %v2075 = vunpack.c.l.bf16 %v2067
        %v2076 = vunpack.c.l.bf16 %v2068
        %v2077 = vunpack.c.l.bf16 %v2069
        %s2078 = scalar_lea.vmem %s273, 32
        %v2079 = vld [vmem:[%s2078] sm:$0xff]
        %v2080 = vld [vmem:[%s2078 + $0x8] sm:$0xff]
        %v2082 = vsel %vm312, %v2070, 0
        %v2085 = vsel %vm312, %v2071, 0
        %v2088 = vsel %vm312, %v2072, 0
        %v2091 = vsel %vm312, %v2073, 0
        %v2094 = vsel %vm312, %v2074, 0
        %v2097 = vsel %vm312, %v2075, 0
        %v2100 = vsel %vm312, %v2076, 0
        %v2103 = vsel %vm312, %v2077, 0
        %2105 = vmatprep.subr.mxu0 0.0
        %2106 = vmatpush1.msra.mxu0 0.0
        %2107 = vmatprep.subr.mxu0 0.0
        %2108 = vmatpush1.msra.mxu0 0.0
        %2109 = vmatprep.subr.mxu0 0.0
        %2110 = vmatpush1.msra.mxu0 0.0
        %2111 = vmatprep.subr.mxu0 0.0
        %2112 = vmatpush1.msra.mxu0 0.0
        %2113 = vmatprep.subr.mxu0 0.0
        %2114 = vmatpush1.msra.mxu0 0.0
        %2115 = vmatprep.subr.mxu0 0.0
        %2116 = vmatpush1.msra.mxu0 0.0
        %2117 = vmatprep.subr.mxu0 0.0
        %2118 = vmatpush1.msra.mxu0 0.0
        %2119 = vmatprep.subr.mxu0 0.0
        %2120 = vmatpush1.msra.mxu0 0.0
        %2121 = vmatprep.subr.mxu0 0.0
        %2122 = vmatpush1.msra.mxu0 0.0
        %2123 = vmatprep.subr.mxu0 0.0
        %2124 = vmatpush1.msra.mxu0 0.0
        %2125 = vmatprep.subr.mxu0 0.0
        %2126 = vmatpush1.msra.mxu0 0.0
        %2127 = vmatprep.subr.mxu0 0.0
        %2128 = vmatpush1.msra.mxu0 0.0
        %2129 = vmatprep.subr.mxu0 0.0
        %2130 = vmatpush1.msra.mxu0 0.0
        %2131 = vmatprep.subr.mxu0 0.0
        %2132 = vmatpush1.msra.mxu0 0.0
        %2133 = vmatprep.subr.mxu0 0.0
        %2134 = vmatpush1.msra.mxu0 %v2080
        %2135 = vmatprep.subr.mxu0 0.0
        %2136 = vmatpush1.msra.mxu0 %v2079
        %2137 = vmatprep.subr.mxu0 0.0
        %2138 = vmatpush2.msra.mxu0 0.0
        %2139 = vmatprep.subr.mxu0 0.0
        %2140 = vmatpush2.msra.mxu0 0.0
        %2141 = vmatprep.subr.mxu0 0.0
        %2142 = vmatpush2.msra.mxu0 0.0
        %2143 = vmatprep.subr.mxu0 0.0
        %2144 = vmatpush2.msra.mxu0 0.0
        %2145 = vmatprep.subr.mxu0 0.0
        %2146 = vmatpush2.msra.mxu0 0.0
        %2147 = vmatprep.subr.mxu0 0.0
        %2148 = vmatpush2.msra.mxu0 0.0
        %2149 = vmatprep.subr.mxu0 0.0
        %2150 = vmatpush2.msra.mxu0 0.0
        %2151 = vmatprep.subr.mxu0 0.0
        %2152 = vmatpush2.msra.mxu0 0.0
        %2153 = vmatprep.subr.mxu0 0.0
        %2154 = vmatpush2.msra.mxu0 0.0
        %2155 = vmatprep.subr.mxu0 0.0
        %2156 = vmatpush2.msra.mxu0 0.0
        %2157 = vmatprep.subr.mxu0 0.0
        %2158 = vmatpush2.msra.mxu0 0.0
        %2159 = vmatprep.subr.mxu0 0.0
        %2160 = vmatpush2.msra.mxu0 0.0
        %2161 = vmatprep.subr.mxu0 0.0
        %2162 = vmatpush2.msra.mxu0 0.0
        %2163 = vmatprep.subr.mxu0 0.0
        %2164 = vmatpush2.msra.mxu0 0.0
        %2165 = vmatprep.subr.mxu0 0.0
        %2166 = vmatpush2.msra.mxu0 0.0
        %2167 = vmatprep.subr.mxu0 0.0
        %2168 = vmatpush2.msra.mxu0 0.0
        %2169 = vmatprep.mubr.f32.mxu0 0.0
        %2170 = vmatmul.mubr.f32.gmra.mxu0 %v2082
        %v2171 = vpop.f32.mrf.mxu0
        %v2172 = vadd.f32 0.0, %v2171
        %v2173 = vpop.f32.mrf.mxu0
        %2174 = vmatprep.mubr.f32.mxu0 0.0
        %2175 = vmatmul.mubr.f32.gmra.mxu0 %v2085
        %v2176 = vpop.f32.mrf.mxu0
        %v2177 = vadd.f32 0.0, %v2176
        %v2178 = vpop.f32.mrf.mxu0
        %2179 = vmatprep.mubr.f32.mxu0 0.0
        %2180 = vmatmul.mubr.f32.gmra.mxu0 %v2088
        %v2181 = vpop.f32.mrf.mxu0
        %v2182 = vadd.f32 0.0, %v2181
        %v2183 = vpop.f32.mrf.mxu0
        %2184 = vmatprep.mubr.f32.mxu0 0.0
        %2185 = vmatmul.mubr.f32.gmra.mxu0 %v2091
        %v2186 = vpop.f32.mrf.mxu0
        %v2187 = vadd.f32 0.0, %v2186
        %v2188 = vpop.f32.mrf.mxu0
        %2189 = vmatprep.mubr.f32.mxu0 0.0
        %2190 = vmatmul.mubr.f32.gmra.mxu0 %v2094
        %v2191 = vpop.f32.mrf.mxu0
        %v2192 = vadd.f32 0.0, %v2191
        %v2193 = vpop.f32.mrf.mxu0
        %2194 = vmatprep.mubr.f32.mxu0 0.0
        %2195 = vmatmul.mubr.f32.gmra.mxu0 %v2097
        %v2196 = vpop.f32.mrf.mxu0
        %v2197 = vadd.f32 0.0, %v2196
        %v2198 = vpop.f32.mrf.mxu0
        %2199 = vmatprep.mubr.f32.mxu0 0.0
        %2200 = vmatmul.mubr.f32.gmra.mxu0 %v2100
        %v2201 = vpop.f32.mrf.mxu0
        %v2202 = vadd.f32 0.0, %v2201
        %v2203 = vpop.f32.mrf.mxu0
        %2204 = vmatprep.mubr.f32.mxu0 0.0
        %2205 = vmatmul.mubr.f32.gmra.mxu0 %v2103
        %v2206 = vpop.f32.mrf.mxu0
        %v2207 = vadd.f32 0.0, %v2206
        %v2208 = vpop.f32.mrf.mxu0
        %2209 = vdwg.mxu0
        %s2210 = scalar_lea.vmem %s266, 16
        %v2211 = vld [vmem:[%s2210] sm:$0xff]
        %v2213 = vsel %vm312, %v2211, 0
        %2215 = vmatprep.subr.mxu0 0.0
        %2216 = vmatpush1.msra.mxu0 0.0
        %2217 = vmatprep.subr.mxu0 0.0
        %2218 = vmatpush1.msra.mxu0 0.0
        %2219 = vmatprep.subr.mxu0 0.0
        %2220 = vmatpush1.msra.mxu0 0.0
        %2221 = vmatprep.subr.mxu0 0.0
        %2222 = vmatpush1.msra.mxu0 0.0
        %2223 = vmatprep.subr.mxu0 0.0
        %2224 = vmatpush1.msra.mxu0 0.0
        %2225 = vmatprep.subr.mxu0 0.0
        %2226 = vmatpush1.msra.mxu0 0.0
        %2227 = vmatprep.subr.mxu0 0.0
        %2228 = vmatpush1.msra.mxu0 0.0
        %2229 = vmatprep.subr.mxu0 0.0
        %2230 = vmatpush1.msra.mxu0 0.0
        %2231 = vmatprep.subr.mxu0 0.0
        %2232 = vmatpush1.msra.mxu0 0.0
        %2233 = vmatprep.subr.mxu0 0.0
        %2234 = vmatpush1.msra.mxu0 0.0
        %2235 = vmatprep.subr.mxu0 0.0
        %2236 = vmatpush1.msra.mxu0 0.0
        %2237 = vmatprep.subr.mxu0 0.0
        %2238 = vmatpush1.msra.mxu0 0.0
        %2239 = vmatprep.subr.mxu0 0.0
        %2240 = vmatpush1.msra.mxu0 0.0
        %2241 = vmatprep.subr.mxu0 0.0
        %2242 = vmatpush1.msra.mxu0 0.0
        %2243 = vmatprep.subr.mxu0 0.0
        %2244 = vmatpush1.msra.mxu0 %v2177
        %2245 = vmatprep.subr.mxu0 0.0
        %2246 = vmatpush1.msra.mxu0 %v2172
        %2247 = vmatprep.subr.mxu0 0.0
        %2248 = vmatpush2.msra.mxu0 0.0
        %2249 = vmatprep.subr.mxu0 0.0
        %2250 = vmatpush2.msra.mxu0 0.0
        %2251 = vmatprep.subr.mxu0 0.0
        %2252 = vmatpush2.msra.mxu0 0.0
        %2253 = vmatprep.subr.mxu0 0.0
        %2254 = vmatpush2.msra.mxu0 0.0
        %2255 = vmatprep.subr.mxu0 0.0
        %2256 = vmatpush2.msra.mxu0 0.0
        %2257 = vmatprep.subr.mxu0 0.0
        %2258 = vmatpush2.msra.mxu0 0.0
        %2259 = vmatprep.subr.mxu0 0.0
        %2260 = vmatpush2.msra.mxu0 0.0
        %2261 = vmatprep.subr.mxu0 0.0
        %2262 = vmatpush2.msra.mxu0 0.0
        %2263 = vmatprep.subr.mxu0 0.0
        %2264 = vmatpush2.msra.mxu0 0.0
        %2265 = vmatprep.subr.mxu0 0.0
        %2266 = vmatpush2.msra.mxu0 0.0
        %2267 = vmatprep.subr.mxu0 0.0
        %2268 = vmatpush2.msra.mxu0 0.0
        %2269 = vmatprep.subr.mxu0 0.0
        %2270 = vmatpush2.msra.mxu0 0.0
        %2271 = vmatprep.subr.mxu0 0.0
        %2272 = vmatpush2.msra.mxu0 0.0
        %2273 = vmatprep.subr.mxu0 0.0
        %2274 = vmatpush2.msra.mxu0 0.0
        %2275 = vmatprep.subr.mxu0 0.0
        %2276 = vmatpush2.msra.mxu0 0.0
        %2277 = vmatprep.subr.mxu0 0.0
        %2278 = vmatpush2.msra.mxu0 0.0
        %2279 = vmatprep.mubr.f32.mxu0 0.0
        %2280 = vmatmul.mubr.f32.gmra.mxu0 %v2213
        %v2281 = vpop.f32.mrf.mxu0
        %v2282 = vadd.f32 0.0, %v2281
        %v2283 = vpop.f32.mrf.mxu0
        %2284 = vdwg.mxu0
        %2285 = vmatprep.subr.mxu0 0.0
        %2286 = vmatpush1.msra.mxu0 0.0
        %2287 = vmatprep.subr.mxu0 0.0
        %2288 = vmatpush1.msra.mxu0 0.0
        %2289 = vmatprep.subr.mxu0 0.0
        %2290 = vmatpush1.msra.mxu0 0.0
        %2291 = vmatprep.subr.mxu0 0.0
        %2292 = vmatpush1.msra.mxu0 0.0
        %2293 = vmatprep.subr.mxu0 0.0
        %2294 = vmatpush1.msra.mxu0 0.0
        %2295 = vmatprep.subr.mxu0 0.0
        %2296 = vmatpush1.msra.mxu0 0.0
        %2297 = vmatprep.subr.mxu0 0.0
        %2298 = vmatpush1.msra.mxu0 0.0
        %2299 = vmatprep.subr.mxu0 0.0
        %2300 = vmatpush1.msra.mxu0 0.0
        %2301 = vmatprep.subr.mxu0 0.0
        %2302 = vmatpush1.msra.mxu0 0.0
        %2303 = vmatprep.subr.mxu0 0.0
        %2304 = vmatpush1.msra.mxu0 0.0
        %2305 = vmatprep.subr.mxu0 0.0
        %2306 = vmatpush1.msra.mxu0 0.0
        %2307 = vmatprep.subr.mxu0 0.0
        %2308 = vmatpush1.msra.mxu0 0.0
        %2309 = vmatprep.subr.mxu0 0.0
        %2310 = vmatpush1.msra.mxu0 0.0
        %2311 = vmatprep.subr.mxu0 0.0
        %2312 = vmatpush1.msra.mxu0 0.0
        %2313 = vmatprep.subr.mxu0 0.0
        %2314 = vmatpush1.msra.mxu0 %v2187
        %2315 = vmatprep.subr.mxu0 0.0
        %2316 = vmatpush1.msra.mxu0 %v2182
        %2317 = vmatprep.subr.mxu0 0.0
        %2318 = vmatpush2.msra.mxu0 0.0
        %2319 = vmatprep.subr.mxu0 0.0
        %2320 = vmatpush2.msra.mxu0 0.0
        %2321 = vmatprep.subr.mxu0 0.0
        %2322 = vmatpush2.msra.mxu0 0.0
        %2323 = vmatprep.subr.mxu0 0.0
        %2324 = vmatpush2.msra.mxu0 0.0
        %2325 = vmatprep.subr.mxu0 0.0
        %2326 = vmatpush2.msra.mxu0 0.0
        %2327 = vmatprep.subr.mxu0 0.0
        %2328 = vmatpush2.msra.mxu0 0.0
        %2329 = vmatprep.subr.mxu0 0.0
        %2330 = vmatpush2.msra.mxu0 0.0
        %2331 = vmatprep.subr.mxu0 0.0
        %2332 = vmatpush2.msra.mxu0 0.0
        %2333 = vmatprep.subr.mxu0 0.0
        %2334 = vmatpush2.msra.mxu0 0.0
        %2335 = vmatprep.subr.mxu0 0.0
        %2336 = vmatpush2.msra.mxu0 0.0
        %2337 = vmatprep.subr.mxu0 0.0
        %2338 = vmatpush2.msra.mxu0 0.0
        %2339 = vmatprep.subr.mxu0 0.0
        %2340 = vmatpush2.msra.mxu0 0.0
        %2341 = vmatprep.subr.mxu0 0.0
        %2342 = vmatpush2.msra.mxu0 0.0
        %2343 = vmatprep.subr.mxu0 0.0
        %2344 = vmatpush2.msra.mxu0 0.0
        %2345 = vmatprep.subr.mxu0 0.0
        %2346 = vmatpush2.msra.mxu0 0.0
        %2347 = vmatprep.subr.mxu0 0.0
        %2348 = vmatpush2.msra.mxu0 0.0
        %2349 = vmatprep.mubr.f32.mxu0 0.0
        %2350 = vmatmul.mubr.f32.gmra.mxu0 %v2213
        %v2351 = vpop.f32.mrf.mxu0
        %v2352 = vadd.f32 0.0, %v2351
        %v2353 = vpop.f32.mrf.mxu0
        %2354 = vdwg.mxu0
        %v2356 = vsel %vm586, %v2352, 0
        %2358 = vmatprep.subr.mxu0 0.0
        %2359 = vmatpush1.msra.mxu0 0.0
        %2360 = vmatprep.subr.mxu0 0.0
        %2361 = vmatpush1.msra.mxu0 0.0
        %2362 = vmatprep.subr.mxu0 0.0
        %2363 = vmatpush1.msra.mxu0 0.0
        %2364 = vmatprep.subr.mxu0 0.0
        %2365 = vmatpush1.msra.mxu0 0.0
        %2366 = vmatprep.subr.mxu0 0.0
        %2367 = vmatpush1.msra.mxu0 0.0
        %2368 = vmatprep.subr.mxu0 0.0
        %2369 = vmatpush1.msra.mxu0 0.0
        %2370 = vmatprep.subr.mxu0 0.0
        %2371 = vmatpush1.msra.mxu0 0.0
        %2372 = vmatprep.subr.mxu0 0.0
        %2373 = vmatpush1.msra.mxu0 0.0
        %2374 = vmatprep.subr.mxu0 0.0
        %2375 = vmatpush1.msra.mxu0 0.0
        %2376 = vmatprep.subr.mxu0 0.0
        %2377 = vmatpush1.msra.mxu0 0.0
        %2378 = vmatprep.subr.mxu0 0.0
        %2379 = vmatpush1.msra.mxu0 0.0
        %2380 = vmatprep.subr.mxu0 0.0
        %2381 = vmatpush1.msra.mxu0 0.0
        %2382 = vmatprep.subr.mxu0 0.0
        %2383 = vmatpush1.msra.mxu0 0.0
        %2384 = vmatprep.subr.mxu0 0.0
        %2385 = vmatpush1.msra.mxu0 0.0
        %2386 = vmatprep.subr.mxu0 0.0
        %2387 = vmatpush1.msra.mxu0 0.0
        %2388 = vmatprep.subr.mxu0 0.0
        %2389 = vmatpush1.msra.mxu0 %v285
        %2390 = vmatprep.subr.mxu0 0.0
        %2391 = vmatpush2.msra.mxu0 0.0
        %2392 = vmatprep.subr.mxu0 0.0
        %2393 = vmatpush2.msra.mxu0 0.0
        %2394 = vmatprep.subr.mxu0 0.0
        %2395 = vmatpush2.msra.mxu0 0.0
        %2396 = vmatprep.subr.mxu0 0.0
        %2397 = vmatpush2.msra.mxu0 0.0
        %2398 = vmatprep.subr.mxu0 0.0
        %2399 = vmatpush2.msra.mxu0 0.0
        %2400 = vmatprep.subr.mxu0 0.0
        %2401 = vmatpush2.msra.mxu0 0.0
        %2402 = vmatprep.subr.mxu0 0.0
        %2403 = vmatpush2.msra.mxu0 0.0
        %2404 = vmatprep.subr.mxu0 0.0
        %2405 = vmatpush2.msra.mxu0 0.0
        %2406 = vmatprep.subr.mxu0 0.0
        %2407 = vmatpush2.msra.mxu0 0.0
        %2408 = vmatprep.subr.mxu0 0.0
        %2409 = vmatpush2.msra.mxu0 0.0
        %2410 = vmatprep.subr.mxu0 0.0
        %2411 = vmatpush2.msra.mxu0 0.0
        %2412 = vmatprep.subr.mxu0 0.0
        %2413 = vmatpush2.msra.mxu0 0.0
        %2414 = vmatprep.subr.mxu0 0.0
        %2415 = vmatpush2.msra.mxu0 0.0
        %2416 = vmatprep.subr.mxu0 0.0
        %2417 = vmatpush2.msra.mxu0 0.0
        %2418 = vmatprep.subr.mxu0 0.0
        %2419 = vmatpush2.msra.mxu0 0.0
        %2420 = vmatprep.subr.mxu0 0.0
        %2421 = vmatpush2.msra.mxu0 0.0
        %2422 = vmatprep.mubr.f32.mxu0 0.0
        %2423 = vmatmul.mubr.f32.gmra.mxu0 %v2356
        %v2424 = vpop.f32.mrf.mxu0
        %v2425 = vadd.f32 0.0, %v2424
        %v2426 = vpop.f32.mrf.mxu0
        %2427 = vdwg.mxu0
        %v2429 = vsel %vm586, %v2282, 0
        %2431 = vmatprep.subr.mxu0 0.0
        %2432 = vmatpush1.msra.mxu0 0.0
        %2433 = vmatprep.subr.mxu0 0.0
        %2434 = vmatpush1.msra.mxu0 0.0
        %2435 = vmatprep.subr.mxu0 0.0
        %2436 = vmatpush1.msra.mxu0 0.0
        %2437 = vmatprep.subr.mxu0 0.0
        %2438 = vmatpush1.msra.mxu0 0.0
        %2439 = vmatprep.subr.mxu0 0.0
        %2440 = vmatpush1.msra.mxu0 0.0
        %2441 = vmatprep.subr.mxu0 0.0
        %2442 = vmatpush1.msra.mxu0 0.0
        %2443 = vmatprep.subr.mxu0 0.0
        %2444 = vmatpush1.msra.mxu0 0.0
        %2445 = vmatprep.subr.mxu0 0.0
        %2446 = vmatpush1.msra.mxu0 0.0
        %2447 = vmatprep.subr.mxu0 0.0
        %2448 = vmatpush1.msra.mxu0 0.0
        %2449 = vmatprep.subr.mxu0 0.0
        %2450 = vmatpush1.msra.mxu0 0.0
        %2451 = vmatprep.subr.mxu0 0.0
        %2452 = vmatpush1.msra.mxu0 0.0
        %2453 = vmatprep.subr.mxu0 0.0
        %2454 = vmatpush1.msra.mxu0 0.0
        %2455 = vmatprep.subr.mxu0 0.0
        %2456 = vmatpush1.msra.mxu0 0.0
        %2457 = vmatprep.subr.mxu0 0.0
        %2458 = vmatpush1.msra.mxu0 0.0
        %2459 = vmatprep.subr.mxu0 0.0
        %2460 = vmatpush1.msra.mxu0 0.0
        %2461 = vmatprep.subr.mxu0 0.0
        %2462 = vmatpush1.msra.mxu0 %v281
        %2463 = vmatprep.subr.mxu0 0.0
        %2464 = vmatpush2.msra.mxu0 0.0
        %2465 = vmatprep.subr.mxu0 0.0
        %2466 = vmatpush2.msra.mxu0 0.0
        %2467 = vmatprep.subr.mxu0 0.0
        %2468 = vmatpush2.msra.mxu0 0.0
        %2469 = vmatprep.subr.mxu0 0.0
        %2470 = vmatpush2.msra.mxu0 0.0
        %2471 = vmatprep.subr.mxu0 0.0
        %2472 = vmatpush2.msra.mxu0 0.0
        %2473 = vmatprep.subr.mxu0 0.0
        %2474 = vmatpush2.msra.mxu0 0.0
        %2475 = vmatprep.subr.mxu0 0.0
        %2476 = vmatpush2.msra.mxu0 0.0
        %2477 = vmatprep.subr.mxu0 0.0
        %2478 = vmatpush2.msra.mxu0 0.0
        %2479 = vmatprep.subr.mxu0 0.0
        %2480 = vmatpush2.msra.mxu0 0.0
        %2481 = vmatprep.subr.mxu0 0.0
        %2482 = vmatpush2.msra.mxu0 0.0
        %2483 = vmatprep.subr.mxu0 0.0
        %2484 = vmatpush2.msra.mxu0 0.0
        %2485 = vmatprep.subr.mxu0 0.0
        %2486 = vmatpush2.msra.mxu0 0.0
        %2487 = vmatprep.subr.mxu0 0.0
        %2488 = vmatpush2.msra.mxu0 0.0
        %2489 = vmatprep.subr.mxu0 0.0
        %2490 = vmatpush2.msra.mxu0 0.0
        %2491 = vmatprep.subr.mxu0 0.0
        %2492 = vmatpush2.msra.mxu0 0.0
        %2493 = vmatprep.subr.mxu0 0.0
        %2494 = vmatpush2.msra.mxu0 0.0
        %2495 = vmatprep.mubr.f32.mxu0 0.0
        %2496 = vmatmul.mubr.f32.gmra.mxu0 %v2429
        %v2497 = vpop.f32.mrf.mxu0
        %v2498 = vadd.f32 %v2425, %v2497
        %v2499 = vpop.f32.mrf.mxu0
        %2500 = vdwg.mxu0
        %2501 = vmatprep.subr.mxu0 0.0
        %2502 = vmatpush1.msra.mxu0 0.0
        %2503 = vmatprep.subr.mxu0 0.0
        %2504 = vmatpush1.msra.mxu0 0.0
        %2505 = vmatprep.subr.mxu0 0.0
        %2506 = vmatpush1.msra.mxu0 0.0
        %2507 = vmatprep.subr.mxu0 0.0
        %2508 = vmatpush1.msra.mxu0 0.0
        %2509 = vmatprep.subr.mxu0 0.0
        %2510 = vmatpush1.msra.mxu0 0.0
        %2511 = vmatprep.subr.mxu0 0.0
        %2512 = vmatpush1.msra.mxu0 0.0
        %2513 = vmatprep.subr.mxu0 0.0
        %2514 = vmatpush1.msra.mxu0 0.0
        %2515 = vmatprep.subr.mxu0 0.0
        %2516 = vmatpush1.msra.mxu0 0.0
        %2517 = vmatprep.subr.mxu0 0.0
        %2518 = vmatpush1.msra.mxu0 0.0
        %2519 = vmatprep.subr.mxu0 0.0
        %2520 = vmatpush1.msra.mxu0 0.0
        %2521 = vmatprep.subr.mxu0 0.0
        %2522 = vmatpush1.msra.mxu0 0.0
        %2523 = vmatprep.subr.mxu0 0.0
        %2524 = vmatpush1.msra.mxu0 0.0
        %2525 = vmatprep.subr.mxu0 0.0
        %2526 = vmatpush1.msra.mxu0 0.0
        %2527 = vmatprep.subr.mxu0 0.0
        %2528 = vmatpush1.msra.mxu0 0.0
        %2529 = vmatprep.subr.mxu0 0.0
        %2530 = vmatpush1.msra.mxu0 %v2197
        %2531 = vmatprep.subr.mxu0 0.0
        %2532 = vmatpush1.msra.mxu0 %v2192
        %2533 = vmatprep.subr.mxu0 0.0
        %2534 = vmatpush2.msra.mxu0 0.0
        %2535 = vmatprep.subr.mxu0 0.0
        %2536 = vmatpush2.msra.mxu0 0.0
        %2537 = vmatprep.subr.mxu0 0.0
        %2538 = vmatpush2.msra.mxu0 0.0
        %2539 = vmatprep.subr.mxu0 0.0
        %2540 = vmatpush2.msra.mxu0 0.0
        %2541 = vmatprep.subr.mxu0 0.0
        %2542 = vmatpush2.msra.mxu0 0.0
        %2543 = vmatprep.subr.mxu0 0.0
        %2544 = vmatpush2.msra.mxu0 0.0
        %2545 = vmatprep.subr.mxu0 0.0
        %2546 = vmatpush2.msra.mxu0 0.0
        %2547 = vmatprep.subr.mxu0 0.0
        %2548 = vmatpush2.msra.mxu0 0.0
        %2549 = vmatprep.subr.mxu0 0.0
        %2550 = vmatpush2.msra.mxu0 0.0
        %2551 = vmatprep.subr.mxu0 0.0
        %2552 = vmatpush2.msra.mxu0 0.0
        %2553 = vmatprep.subr.mxu0 0.0
        %2554 = vmatpush2.msra.mxu0 0.0
        %2555 = vmatprep.subr.mxu0 0.0
        %2556 = vmatpush2.msra.mxu0 0.0
        %2557 = vmatprep.subr.mxu0 0.0
        %2558 = vmatpush2.msra.mxu0 0.0
        %2559 = vmatprep.subr.mxu0 0.0
        %2560 = vmatpush2.msra.mxu0 0.0
        %2561 = vmatprep.subr.mxu0 0.0
        %2562 = vmatpush2.msra.mxu0 0.0
        %2563 = vmatprep.subr.mxu0 0.0
        %2564 = vmatpush2.msra.mxu0 0.0
        %2565 = vmatprep.mubr.f32.mxu0 0.0
        %2566 = vmatmul.mubr.f32.gmra.mxu0 %v2213
        %v2567 = vpop.f32.mrf.mxu0
        %v2568 = vadd.f32 0.0, %v2567
        %v2569 = vpop.f32.mrf.mxu0
        %2570 = vdwg.mxu0
        %v2572 = vsel %vm586, %v2568, 0
        %2574 = vmatprep.subr.mxu0 0.0
        %2575 = vmatpush1.msra.mxu0 0.0
        %2576 = vmatprep.subr.mxu0 0.0
        %2577 = vmatpush1.msra.mxu0 0.0
        %2578 = vmatprep.subr.mxu0 0.0
        %2579 = vmatpush1.msra.mxu0 0.0
        %2580 = vmatprep.subr.mxu0 0.0
        %2581 = vmatpush1.msra.mxu0 0.0
        %2582 = vmatprep.subr.mxu0 0.0
        %2583 = vmatpush1.msra.mxu0 0.0
        %2584 = vmatprep.subr.mxu0 0.0
        %2585 = vmatpush1.msra.mxu0 0.0
        %2586 = vmatprep.subr.mxu0 0.0
        %2587 = vmatpush1.msra.mxu0 0.0
        %2588 = vmatprep.subr.mxu0 0.0
        %2589 = vmatpush1.msra.mxu0 0.0
        %2590 = vmatprep.subr.mxu0 0.0
        %2591 = vmatpush1.msra.mxu0 0.0
        %2592 = vmatprep.subr.mxu0 0.0
        %2593 = vmatpush1.msra.mxu0 0.0
        %2594 = vmatprep.subr.mxu0 0.0
        %2595 = vmatpush1.msra.mxu0 0.0
        %2596 = vmatprep.subr.mxu0 0.0
        %2597 = vmatpush1.msra.mxu0 0.0
        %2598 = vmatprep.subr.mxu0 0.0
        %2599 = vmatpush1.msra.mxu0 0.0
        %2600 = vmatprep.subr.mxu0 0.0
        %2601 = vmatpush1.msra.mxu0 0.0
        %2602 = vmatprep.subr.mxu0 0.0
        %2603 = vmatpush1.msra.mxu0 0.0
        %2604 = vmatprep.subr.mxu0 0.0
        %2605 = vmatpush1.msra.mxu0 %v289
        %2606 = vmatprep.subr.mxu0 0.0
        %2607 = vmatpush2.msra.mxu0 0.0
        %2608 = vmatprep.subr.mxu0 0.0
        %2609 = vmatpush2.msra.mxu0 0.0
        %2610 = vmatprep.subr.mxu0 0.0
        %2611 = vmatpush2.msra.mxu0 0.0
        %2612 = vmatprep.subr.mxu0 0.0
        %2613 = vmatpush2.msra.mxu0 0.0
        %2614 = vmatprep.subr.mxu0 0.0
        %2615 = vmatpush2.msra.mxu0 0.0
        %2616 = vmatprep.subr.mxu0 0.0
        %2617 = vmatpush2.msra.mxu0 0.0
        %2618 = vmatprep.subr.mxu0 0.0
        %2619 = vmatpush2.msra.mxu0 0.0
        %2620 = vmatprep.subr.mxu0 0.0
        %2621 = vmatpush2.msra.mxu0 0.0
        %2622 = vmatprep.subr.mxu0 0.0
        %2623 = vmatpush2.msra.mxu0 0.0
        %2624 = vmatprep.subr.mxu0 0.0
        %2625 = vmatpush2.msra.mxu0 0.0
        %2626 = vmatprep.subr.mxu0 0.0
        %2627 = vmatpush2.msra.mxu0 0.0
        %2628 = vmatprep.subr.mxu0 0.0
        %2629 = vmatpush2.msra.mxu0 0.0
        %2630 = vmatprep.subr.mxu0 0.0
        %2631 = vmatpush2.msra.mxu0 0.0
        %2632 = vmatprep.subr.mxu0 0.0
        %2633 = vmatpush2.msra.mxu0 0.0
        %2634 = vmatprep.subr.mxu0 0.0
        %2635 = vmatpush2.msra.mxu0 0.0
        %2636 = vmatprep.subr.mxu0 0.0
        %2637 = vmatpush2.msra.mxu0 0.0
        %2638 = vmatprep.mubr.f32.mxu0 0.0
        %2639 = vmatmul.mubr.f32.gmra.mxu0 %v2572
        %v2640 = vpop.f32.mrf.mxu0
        %v2641 = vadd.f32 0.0, %v2640
        %v2642 = vpop.f32.mrf.mxu0
        %2643 = vdwg.mxu0
        %v2644 = vadd.f32 %v2498, %v2641
        %2645 = vmatprep.subr.mxu0 0.0
        %2646 = vmatpush1.msra.mxu0 0.0
        %2647 = vmatprep.subr.mxu0 0.0
        %2648 = vmatpush1.msra.mxu0 0.0
        %2649 = vmatprep.subr.mxu0 0.0
        %2650 = vmatpush1.msra.mxu0 0.0
        %2651 = vmatprep.subr.mxu0 0.0
        %2652 = vmatpush1.msra.mxu0 0.0
        %2653 = vmatprep.subr.mxu0 0.0
        %2654 = vmatpush1.msra.mxu0 0.0
        %2655 = vmatprep.subr.mxu0 0.0
        %2656 = vmatpush1.msra.mxu0 0.0
        %2657 = vmatprep.subr.mxu0 0.0
        %2658 = vmatpush1.msra.mxu0 0.0
        %2659 = vmatprep.subr.mxu0 0.0
        %2660 = vmatpush1.msra.mxu0 0.0
        %2661 = vmatprep.subr.mxu0 0.0
        %2662 = vmatpush1.msra.mxu0 0.0
        %2663 = vmatprep.subr.mxu0 0.0
        %2664 = vmatpush1.msra.mxu0 0.0
        %2665 = vmatprep.subr.mxu0 0.0
        %2666 = vmatpush1.msra.mxu0 0.0
        %2667 = vmatprep.subr.mxu0 0.0
        %2668 = vmatpush1.msra.mxu0 0.0
        %2669 = vmatprep.subr.mxu0 0.0
        %2670 = vmatpush1.msra.mxu0 0.0
        %2671 = vmatprep.subr.mxu0 0.0
        %2672 = vmatpush1.msra.mxu0 0.0
        %2673 = vmatprep.subr.mxu0 0.0
        %2674 = vmatpush1.msra.mxu0 %v2207
        %2675 = vmatprep.subr.mxu0 0.0
        %2676 = vmatpush1.msra.mxu0 %v2202
        %2677 = vmatprep.subr.mxu0 0.0
        %2678 = vmatpush2.msra.mxu0 0.0
        %2679 = vmatprep.subr.mxu0 0.0
        %2680 = vmatpush2.msra.mxu0 0.0
        %2681 = vmatprep.subr.mxu0 0.0
        %2682 = vmatpush2.msra.mxu0 0.0
        %2683 = vmatprep.subr.mxu0 0.0
        %2684 = vmatpush2.msra.mxu0 0.0
        %2685 = vmatprep.subr.mxu0 0.0
        %2686 = vmatpush2.msra.mxu0 0.0
        %2687 = vmatprep.subr.mxu0 0.0
        %2688 = vmatpush2.msra.mxu0 0.0
        %2689 = vmatprep.subr.mxu0 0.0
        %2690 = vmatpush2.msra.mxu0 0.0
        %2691 = vmatprep.subr.mxu0 0.0
        %2692 = vmatpush2.msra.mxu0 0.0
        %2693 = vmatprep.subr.mxu0 0.0
        %2694 = vmatpush2.msra.mxu0 0.0
        %2695 = vmatprep.subr.mxu0 0.0
        %2696 = vmatpush2.msra.mxu0 0.0
        %2697 = vmatprep.subr.mxu0 0.0
        %2698 = vmatpush2.msra.mxu0 0.0
        %2699 = vmatprep.subr.mxu0 0.0
        %2700 = vmatpush2.msra.mxu0 0.0
        %2701 = vmatprep.subr.mxu0 0.0
        %2702 = vmatpush2.msra.mxu0 0.0
        %2703 = vmatprep.subr.mxu0 0.0
        %2704 = vmatpush2.msra.mxu0 0.0
        %2705 = vmatprep.subr.mxu0 0.0
        %2706 = vmatpush2.msra.mxu0 0.0
        %2707 = vmatprep.subr.mxu0 0.0
        %2708 = vmatpush2.msra.mxu0 0.0
        %2709 = vmatprep.mubr.f32.mxu0 0.0
        %2710 = vmatmul.mubr.f32.gmra.mxu0 %v2213
        %v2711 = vpop.f32.mrf.mxu0
        %v2712 = vadd.f32 0.0, %v2711
        %v2713 = vpop.f32.mrf.mxu0
        %2714 = vdwg.mxu0
        %v2716 = vsel %vm586, %v2712, 0
        %2718 = vmatprep.subr.mxu0 0.0
        %2719 = vmatpush1.msra.mxu0 0.0
        %2720 = vmatprep.subr.mxu0 0.0
        %2721 = vmatpush1.msra.mxu0 0.0
        %2722 = vmatprep.subr.mxu0 0.0
        %2723 = vmatpush1.msra.mxu0 0.0
        %2724 = vmatprep.subr.mxu0 0.0
        %2725 = vmatpush1.msra.mxu0 0.0
        %2726 = vmatprep.subr.mxu0 0.0
        %2727 = vmatpush1.msra.mxu0 0.0
        %2728 = vmatprep.subr.mxu0 0.0
        %2729 = vmatpush1.msra.mxu0 0.0
        %2730 = vmatprep.subr.mxu0 0.0
        %2731 = vmatpush1.msra.mxu0 0.0
        %2732 = vmatprep.subr.mxu0 0.0
        %2733 = vmatpush1.msra.mxu0 0.0
        %2734 = vmatprep.subr.mxu0 0.0
        %2735 = vmatpush1.msra.mxu0 0.0
        %2736 = vmatprep.subr.mxu0 0.0
        %2737 = vmatpush1.msra.mxu0 0.0
        %2738 = vmatprep.subr.mxu0 0.0
        %2739 = vmatpush1.msra.mxu0 0.0
        %2740 = vmatprep.subr.mxu0 0.0
        %2741 = vmatpush1.msra.mxu0 0.0
        %2742 = vmatprep.subr.mxu0 0.0
        %2743 = vmatpush1.msra.mxu0 0.0
        %2744 = vmatprep.subr.mxu0 0.0
        %2745 = vmatpush1.msra.mxu0 0.0
        %2746 = vmatprep.subr.mxu0 0.0
        %2747 = vmatpush1.msra.mxu0 0.0
        %2748 = vmatprep.subr.mxu0 0.0
        %2749 = vmatpush1.msra.mxu0 %v293
        %2750 = vmatprep.subr.mxu0 0.0
        %2751 = vmatpush2.msra.mxu0 0.0
        %2752 = vmatprep.subr.mxu0 0.0
        %2753 = vmatpush2.msra.mxu0 0.0
        %2754 = vmatprep.subr.mxu0 0.0
        %2755 = vmatpush2.msra.mxu0 0.0
        %2756 = vmatprep.subr.mxu0 0.0
        %2757 = vmatpush2.msra.mxu0 0.0
        %2758 = vmatprep.subr.mxu0 0.0
        %2759 = vmatpush2.msra.mxu0 0.0
        %2760 = vmatprep.subr.mxu0 0.0
        %2761 = vmatpush2.msra.mxu0 0.0
        %2762 = vmatprep.subr.mxu0 0.0
        %2763 = vmatpush2.msra.mxu0 0.0
        %2764 = vmatprep.subr.mxu0 0.0
        %2765 = vmatpush2.msra.mxu0 0.0
        %2766 = vmatprep.subr.mxu0 0.0
        %2767 = vmatpush2.msra.mxu0 0.0
        %2768 = vmatprep.subr.mxu0 0.0
        %2769 = vmatpush2.msra.mxu0 0.0
        %2770 = vmatprep.subr.mxu0 0.0
        %2771 = vmatpush2.msra.mxu0 0.0
        %2772 = vmatprep.subr.mxu0 0.0
        %2773 = vmatpush2.msra.mxu0 0.0
        %2774 = vmatprep.subr.mxu0 0.0
        %2775 = vmatpush2.msra.mxu0 0.0
        %2776 = vmatprep.subr.mxu0 0.0
        %2777 = vmatpush2.msra.mxu0 0.0
        %2778 = vmatprep.subr.mxu0 0.0
        %2779 = vmatpush2.msra.mxu0 0.0
        %2780 = vmatprep.subr.mxu0 0.0
        %2781 = vmatpush2.msra.mxu0 0.0
        %2782 = vmatprep.mubr.f32.mxu0 0.0
        %2783 = vmatmul.mubr.f32.gmra.mxu0 %v2716
        %v2784 = vpop.f32.mrf.mxu0
        %v2785 = vadd.f32 0.0, %v2784
        %v2786 = vpop.f32.mrf.mxu0
        %2787 = vdwg.mxu0
        %v2788 = vadd.f32 %v2644, %v2785
        %v2789 = vadd.s32 %v1025, 2
        %vm2790 = vcmp.eq.s32.totalorder %v276, %v2789
        %vm2791 = vcmp.eq.s32.totalorder %v282, %v2789
        %vm2792 = vcmp.eq.s32.totalorder %v286, %v2789
        %vm2793 = vcmp.eq.s32.totalorder %v290, %v2789
        %vm2794 = vcmp.eq.s32.totalorder %v1021, %v2789
        %vm2795 = vcmp.eq.s32.totalorder %v1022, %v2789
        %vm2796 = vcmp.eq.s32.totalorder %v1023, %v2789
        %vm2797 = vcmp.eq.s32.totalorder %v1024, %v2789
        %v2798 = vsel %vm2790, 1, 0
        %v2799 = vsel %vm2791, 1, 0
        %v2800 = vsel %vm2792, 1, 0
        %v2801 = vsel %vm2793, 1, 0
        %v2802 = vsel %vm2794, 1, 0
        %v2803 = vsel %vm2795, 1, 0
        %v2804 = vsel %vm2796, 1, 0
        %v2805 = vsel %vm2797, 1, 0
        %v2806 = vcvt.s32.f32 %v2798
        %v2807 = vcvt.s32.f32 %v2799
        %v2808 = vcvt.s32.f32 %v2800
        %v2809 = vcvt.s32.f32 %v2801
        %v2810 = vcvt.s32.f32 %v2802
        %v2811 = vcvt.s32.f32 %v2803
        %v2812 = vcvt.s32.f32 %v2804
        %v2813 = vcvt.s32.f32 %v2805
        %v2815 = vsel %vm586, %v2806, 0
        %v2818 = vsel %vm586, %v2807, 0
        %v2821 = vsel %vm586, %v2808, 0
        %v2824 = vsel %vm586, %v2809, 0
        %v2827 = vsel %vm586, %v2810, 0
        %v2830 = vsel %vm586, %v2811, 0
        %v2833 = vsel %vm586, %v2812, 0
        %v2836 = vsel %vm586, %v2813, 0
        %2838 = vmatprep.subr.mxu0 0.0
        %2839 = vmatpush1.msra.mxu0 0.0
        %2840 = vmatprep.subr.mxu0 0.0
        %2841 = vmatpush1.msra.mxu0 0.0
        %2842 = vmatprep.subr.mxu0 0.0
        %2843 = vmatpush1.msra.mxu0 0.0
        %2844 = vmatprep.subr.mxu0 0.0
        %2845 = vmatpush1.msra.mxu0 0.0
        %2846 = vmatprep.subr.mxu0 0.0
        %2847 = vmatpush1.msra.mxu0 0.0
        %2848 = vmatprep.subr.mxu0 0.0
        %2849 = vmatpush1.msra.mxu0 0.0
        %2850 = vmatprep.subr.mxu0 0.0
        %2851 = vmatpush1.msra.mxu0 0.0
        %2852 = vmatprep.subr.mxu0 0.0
        %2853 = vmatpush1.msra.mxu0 0.0
        %2854 = vmatprep.subr.mxu0 0.0
        %2855 = vmatpush1.msra.mxu0 0.0
        %2856 = vmatprep.subr.mxu0 0.0
        %2857 = vmatpush1.msra.mxu0 0.0
        %2858 = vmatprep.subr.mxu0 0.0
        %2859 = vmatpush1.msra.mxu0 0.0
        %2860 = vmatprep.subr.mxu0 0.0
        %2861 = vmatpush1.msra.mxu0 0.0
        %2862 = vmatprep.subr.mxu0 0.0
        %2863 = vmatpush1.msra.mxu0 0.0
        %2864 = vmatprep.subr.mxu0 0.0
        %2865 = vmatpush1.msra.mxu0 0.0
        %2866 = vmatprep.subr.mxu0 0.0
        %2867 = vmatpush1.msra.mxu0 0.0
        %2868 = vmatprep.subr.mxu0 0.0
        %2869 = vmatpush1.msra.mxu0 %v2788
        %2870 = vmatprep.subr.mxu0 0.0
        %2871 = vmatpush2.msra.mxu0 0.0
        %2872 = vmatprep.subr.mxu0 0.0
        %2873 = vmatpush2.msra.mxu0 0.0
        %2874 = vmatprep.subr.mxu0 0.0
        %2875 = vmatpush2.msra.mxu0 0.0
        %2876 = vmatprep.subr.mxu0 0.0
        %2877 = vmatpush2.msra.mxu0 0.0
        %2878 = vmatprep.subr.mxu0 0.0
        %2879 = vmatpush2.msra.mxu0 0.0
        %2880 = vmatprep.subr.mxu0 0.0
        %2881 = vmatpush2.msra.mxu0 0.0
        %2882 = vmatprep.subr.mxu0 0.0
        %2883 = vmatpush2.msra.mxu0 0.0
        %2884 = vmatprep.subr.mxu0 0.0
        %2885 = vmatpush2.msra.mxu0 0.0
        %2886 = vmatprep.subr.mxu0 0.0
        %2887 = vmatpush2.msra.mxu0 0.0
        %2888 = vmatprep.subr.mxu0 0.0
        %2889 = vmatpush2.msra.mxu0 0.0
        %2890 = vmatprep.subr.mxu0 0.0
        %2891 = vmatpush2.msra.mxu0 0.0
        %2892 = vmatprep.subr.mxu0 0.0
        %2893 = vmatpush2.msra.mxu0 0.0
        %2894 = vmatprep.subr.mxu0 0.0
        %2895 = vmatpush2.msra.mxu0 0.0
        %2896 = vmatprep.subr.mxu0 0.0
        %2897 = vmatpush2.msra.mxu0 0.0
        %2898 = vmatprep.subr.mxu0 0.0
        %2899 = vmatpush2.msra.mxu0 0.0
        %2900 = vmatprep.subr.mxu0 0.0
        %2901 = vmatpush2.msra.mxu0 0.0
        %2902 = vmatprep.mubr.f32.mxu0 0.0
        %2903 = vmatmul.mubr.f32.gmra.mxu0 %v2815
        %v2904 = vpop.f32.mrf.mxu0
        %v2905 = vadd.f32 0.0, %v2904
        %v2906 = vpop.f32.mrf.mxu0
        %2907 = vmatprep.mubr.f32.mxu0 0.0
        %2908 = vmatmul.mubr.f32.gmra.mxu0 %v2818
        %v2909 = vpop.f32.mrf.mxu0
        %v2910 = vadd.f32 0.0, %v2909
        %v2911 = vpop.f32.mrf.mxu0
        %2912 = vmatprep.mubr.f32.mxu0 0.0
        %2913 = vmatmul.mubr.f32.gmra.mxu0 %v2821
        %v2914 = vpop.f32.mrf.mxu0
        %v2915 = vadd.f32 0.0, %v2914
        %v2916 = vpop.f32.mrf.mxu0
        %2917 = vmatprep.mubr.f32.mxu0 0.0
        %2918 = vmatmul.mubr.f32.gmra.mxu0 %v2824
        %v2919 = vpop.f32.mrf.mxu0
        %v2920 = vadd.f32 0.0, %v2919
        %v2921 = vpop.f32.mrf.mxu0
        %2922 = vmatprep.mubr.f32.mxu0 0.0
        %2923 = vmatmul.mubr.f32.gmra.mxu0 %v2827
        %v2924 = vpop.f32.mrf.mxu0
        %v2925 = vadd.f32 0.0, %v2924
        %v2926 = vpop.f32.mrf.mxu0
        %2927 = vmatprep.mubr.f32.mxu0 0.0
        %2928 = vmatmul.mubr.f32.gmra.mxu0 %v2830
        %v2929 = vpop.f32.mrf.mxu0
        %v2930 = vadd.f32 0.0, %v2929
        %v2931 = vpop.f32.mrf.mxu0
        %2932 = vmatprep.mubr.f32.mxu0 0.0
        %2933 = vmatmul.mubr.f32.gmra.mxu0 %v2833
        %v2934 = vpop.f32.mrf.mxu0
        %v2935 = vadd.f32 0.0, %v2934
        %v2936 = vpop.f32.mrf.mxu0
        %2937 = vmatprep.mubr.f32.mxu0 0.0
        %2938 = vmatmul.mubr.f32.gmra.mxu0 %v2836
        %v2939 = vpop.f32.mrf.mxu0
        %v2940 = vadd.f32 0.0, %v2939
        %v2941 = vpop.f32.mrf.mxu0
        %2942 = vdwg.mxu0
        %v2943 = vadd.f32 %v2023, %v2905
        %v2944 = vadd.f32 %v2028, %v2910
        %v2945 = vadd.f32 %v2033, %v2915
        %v2946 = vadd.f32 %v2038, %v2920
        %v2947 = vadd.f32 %v2043, %v2925
        %v2948 = vadd.f32 %v2048, %v2930
        %v2949 = vadd.f32 %v2053, %v2935
        %v2950 = vadd.f32 %v2058, %v2940
        %s2951 = scalar_lea.vmem %s260, 96
        %v2952 = vld [vmem:[%s2951] sm:$0xf]
        %v2953 = vld [vmem:[%s2951 + $0x4] sm:$0xf]
        %v2954 = vld [vmem:[%s2951 + $0x8] sm:$0xf]
        %v2955 = vld [vmem:[%s2951 + $0xc] sm:$0xf]
        %v2956 = vld [vmem:[%s2951 + $0x10] sm:$0xf]
        %v2957 = vld [vmem:[%s2951 + $0x14] sm:$0xf]
        %v2958 = vld [vmem:[%s2951 + $0x18] sm:$0xf]
        %v2959 = vld [vmem:[%s2951 + $0x1c] sm:$0xf]
        %v2960 = vunpack.c.l.bf16 %v2952
        %v2961 = vunpack.c.l.bf16 %v2953
        %v2962 = vunpack.c.l.bf16 %v2954
        %v2963 = vunpack.c.l.bf16 %v2955
        %v2964 = vunpack.c.l.bf16 %v2956
        %v2965 = vunpack.c.l.bf16 %v2957
        %v2966 = vunpack.c.l.bf16 %v2958
        %v2967 = vunpack.c.l.bf16 %v2959
        %s2968 = scalar_lea.vmem %s273, 48
        %v2969 = vld [vmem:[%s2968] sm:$0xff]
        %v2970 = vld [vmem:[%s2968 + $0x8] sm:$0xff]
        %v2972 = vsel %vm312, %v2960, 0
        %v2975 = vsel %vm312, %v2961, 0
        %v2978 = vsel %vm312, %v2962, 0
        %v2981 = vsel %vm312, %v2963, 0
        %v2984 = vsel %vm312, %v2964, 0
        %v2987 = vsel %vm312, %v2965, 0
        %v2990 = vsel %vm312, %v2966, 0
        %v2993 = vsel %vm312, %v2967, 0
        %2995 = vmatprep.subr.mxu0 0.0
        %2996 = vmatpush1.msra.mxu0 0.0
        %2997 = vmatprep.subr.mxu0 0.0
        %2998 = vmatpush1.msra.mxu0 0.0
        %2999 = vmatprep.subr.mxu0 0.0
        %3000 = vmatpush1.msra.mxu0 0.0
        %3001 = vmatprep.subr.mxu0 0.0
        %3002 = vmatpush1.msra.mxu0 0.0
        %3003 = vmatprep.subr.mxu0 0.0
        %3004 = vmatpush1.msra.mxu0 0.0
        %3005 = vmatprep.subr.mxu0 0.0
        %3006 = vmatpush1.msra.mxu0 0.0
        %3007 = vmatprep.subr.mxu0 0.0
        %3008 = vmatpush1.msra.mxu0 0.0
        %3009 = vmatprep.subr.mxu0 0.0
        %3010 = vmatpush1.msra.mxu0 0.0
        %3011 = vmatprep.subr.mxu0 0.0
        %3012 = vmatpush1.msra.mxu0 0.0
        %3013 = vmatprep.subr.mxu0 0.0
        %3014 = vmatpush1.msra.mxu0 0.0
        %3015 = vmatprep.subr.mxu0 0.0
        %3016 = vmatpush1.msra.mxu0 0.0
        %3017 = vmatprep.subr.mxu0 0.0
        %3018 = vmatpush1.msra.mxu0 0.0
        %3019 = vmatprep.subr.mxu0 0.0
        %3020 = vmatpush1.msra.mxu0 0.0
        %3021 = vmatprep.subr.mxu0 0.0
        %3022 = vmatpush1.msra.mxu0 0.0
        %3023 = vmatprep.subr.mxu0 0.0
        %3024 = vmatpush1.msra.mxu0 %v2970
        %3025 = vmatprep.subr.mxu0 0.0
        %3026 = vmatpush1.msra.mxu0 %v2969
        %3027 = vmatprep.subr.mxu0 0.0
        %3028 = vmatpush2.msra.mxu0 0.0
        %3029 = vmatprep.subr.mxu0 0.0
        %3030 = vmatpush2.msra.mxu0 0.0
        %3031 = vmatprep.subr.mxu0 0.0
        %3032 = vmatpush2.msra.mxu0 0.0
        %3033 = vmatprep.subr.mxu0 0.0
        %3034 = vmatpush2.msra.mxu0 0.0
        %3035 = vmatprep.subr.mxu0 0.0
        %3036 = vmatpush2.msra.mxu0 0.0
        %3037 = vmatprep.subr.mxu0 0.0
        %3038 = vmatpush2.msra.mxu0 0.0
        %3039 = vmatprep.subr.mxu0 0.0
        %3040 = vmatpush2.msra.mxu0 0.0
        %3041 = vmatprep.subr.mxu0 0.0
        %3042 = vmatpush2.msra.mxu0 0.0
        %3043 = vmatprep.subr.mxu0 0.0
        %3044 = vmatpush2.msra.mxu0 0.0
        %3045 = vmatprep.subr.mxu0 0.0
        %3046 = vmatpush2.msra.mxu0 0.0
        %3047 = vmatprep.subr.mxu0 0.0
        %3048 = vmatpush2.msra.mxu0 0.0
        %3049 = vmatprep.subr.mxu0 0.0
        %3050 = vmatpush2.msra.mxu0 0.0
        %3051 = vmatprep.subr.mxu0 0.0
        %3052 = vmatpush2.msra.mxu0 0.0
        %3053 = vmatprep.subr.mxu0 0.0
        %3054 = vmatpush2.msra.mxu0 0.0
        %3055 = vmatprep.subr.mxu0 0.0
        %3056 = vmatpush2.msra.mxu0 0.0
        %3057 = vmatprep.subr.mxu0 0.0
        %3058 = vmatpush2.msra.mxu0 0.0
        %3059 = vmatprep.mubr.f32.mxu0 0.0
        %3060 = vmatmul.mubr.f32.gmra.mxu0 %v2972
        %v3061 = vpop.f32.mrf.mxu0
        %v3062 = vadd.f32 0.0, %v3061
        %v3063 = vpop.f32.mrf.mxu0
        %3064 = vmatprep.mubr.f32.mxu0 0.0
        %3065 = vmatmul.mubr.f32.gmra.mxu0 %v2975
        %v3066 = vpop.f32.mrf.mxu0
        %v3067 = vadd.f32 0.0, %v3066
        %v3068 = vpop.f32.mrf.mxu0
        %3069 = vmatprep.mubr.f32.mxu0 0.0
        %3070 = vmatmul.mubr.f32.gmra.mxu0 %v2978
        %v3071 = vpop.f32.mrf.mxu0
        %v3072 = vadd.f32 0.0, %v3071
        %v3073 = vpop.f32.mrf.mxu0
        %3074 = vmatprep.mubr.f32.mxu0 0.0
        %3075 = vmatmul.mubr.f32.gmra.mxu0 %v2981
        %v3076 = vpop.f32.mrf.mxu0
        %v3077 = vadd.f32 0.0, %v3076
        %v3078 = vpop.f32.mrf.mxu0
        %3079 = vmatprep.mubr.f32.mxu0 0.0
        %3080 = vmatmul.mubr.f32.gmra.mxu0 %v2984
        %v3081 = vpop.f32.mrf.mxu0
        %v3082 = vadd.f32 0.0, %v3081
        %v3083 = vpop.f32.mrf.mxu0
        %3084 = vmatprep.mubr.f32.mxu0 0.0
        %3085 = vmatmul.mubr.f32.gmra.mxu0 %v2987
        %v3086 = vpop.f32.mrf.mxu0
        %v3087 = vadd.f32 0.0, %v3086
        %v3088 = vpop.f32.mrf.mxu0
        %3089 = vmatprep.mubr.f32.mxu0 0.0
        %3090 = vmatmul.mubr.f32.gmra.mxu0 %v2990
        %v3091 = vpop.f32.mrf.mxu0
        %v3092 = vadd.f32 0.0, %v3091
        %v3093 = vpop.f32.mrf.mxu0
        %3094 = vmatprep.mubr.f32.mxu0 0.0
        %3095 = vmatmul.mubr.f32.gmra.mxu0 %v2993
        %v3096 = vpop.f32.mrf.mxu0
        %v3097 = vadd.f32 0.0, %v3096
        %v3098 = vpop.f32.mrf.mxu0
        %3099 = vdwg.mxu0
        %s3100 = scalar_lea.vmem %s266, 24
        %v3101 = vld [vmem:[%s3100] sm:$0xff]
        %v3103 = vsel %vm312, %v3101, 0
        %3105 = vmatprep.subr.mxu0 0.0
        %3106 = vmatpush1.msra.mxu0 0.0
        %3107 = vmatprep.subr.mxu0 0.0
        %3108 = vmatpush1.msra.mxu0 0.0
        %3109 = vmatprep.subr.mxu0 0.0
        %3110 = vmatpush1.msra.mxu0 0.0
        %3111 = vmatprep.subr.mxu0 0.0
        %3112 = vmatpush1.msra.mxu0 0.0
        %3113 = vmatprep.subr.mxu0 0.0
        %3114 = vmatpush1.msra.mxu0 0.0
        %3115 = vmatprep.subr.mxu0 0.0
        %3116 = vmatpush1.msra.mxu0 0.0
        %3117 = vmatprep.subr.mxu0 0.0
        %3118 = vmatpush1.msra.mxu0 0.0
        %3119 = vmatprep.subr.mxu0 0.0
        %3120 = vmatpush1.msra.mxu0 0.0
        %3121 = vmatprep.subr.mxu0 0.0
        %3122 = vmatpush1.msra.mxu0 0.0
        %3123 = vmatprep.subr.mxu0 0.0
        %3124 = vmatpush1.msra.mxu0 0.0
        %3125 = vmatprep.subr.mxu0 0.0
        %3126 = vmatpush1.msra.mxu0 0.0
        %3127 = vmatprep.subr.mxu0 0.0
        %3128 = vmatpush1.msra.mxu0 0.0
        %3129 = vmatprep.subr.mxu0 0.0
        %3130 = vmatpush1.msra.mxu0 0.0
        %3131 = vmatprep.subr.mxu0 0.0
        %3132 = vmatpush1.msra.mxu0 0.0
        %3133 = vmatprep.subr.mxu0 0.0
        %3134 = vmatpush1.msra.mxu0 %v3067
        %3135 = vmatprep.subr.mxu0 0.0
        %3136 = vmatpush1.msra.mxu0 %v3062
        %3137 = vmatprep.subr.mxu0 0.0
        %3138 = vmatpush2.msra.mxu0 0.0
        %3139 = vmatprep.subr.mxu0 0.0
        %3140 = vmatpush2.msra.mxu0 0.0
        %3141 = vmatprep.subr.mxu0 0.0
        %3142 = vmatpush2.msra.mxu0 0.0
        %3143 = vmatprep.subr.mxu0 0.0
        %3144 = vmatpush2.msra.mxu0 0.0
        %3145 = vmatprep.subr.mxu0 0.0
        %3146 = vmatpush2.msra.mxu0 0.0
        %3147 = vmatprep.subr.mxu0 0.0
        %3148 = vmatpush2.msra.mxu0 0.0
        %3149 = vmatprep.subr.mxu0 0.0
        %3150 = vmatpush2.msra.mxu0 0.0
        %3151 = vmatprep.subr.mxu0 0.0
        %3152 = vmatpush2.msra.mxu0 0.0
        %3153 = vmatprep.subr.mxu0 0.0
        %3154 = vmatpush2.msra.mxu0 0.0
        %3155 = vmatprep.subr.mxu0 0.0
        %3156 = vmatpush2.msra.mxu0 0.0
        %3157 = vmatprep.subr.mxu0 0.0
        %3158 = vmatpush2.msra.mxu0 0.0
        %3159 = vmatprep.subr.mxu0 0.0
        %3160 = vmatpush2.msra.mxu0 0.0
        %3161 = vmatprep.subr.mxu0 0.0
        %3162 = vmatpush2.msra.mxu0 0.0
        %3163 = vmatprep.subr.mxu0 0.0
        %3164 = vmatpush2.msra.mxu0 0.0
        %3165 = vmatprep.subr.mxu0 0.0
        %3166 = vmatpush2.msra.mxu0 0.0
        %3167 = vmatprep.subr.mxu0 0.0
        %3168 = vmatpush2.msra.mxu0 0.0
        %3169 = vmatprep.mubr.f32.mxu0 0.0
        %3170 = vmatmul.mubr.f32.gmra.mxu0 %v3103
        %v3171 = vpop.f32.mrf.mxu0
        %v3172 = vadd.f32 0.0, %v3171
        %v3173 = vpop.f32.mrf.mxu0
        %3174 = vdwg.mxu0
        %3175 = vmatprep.subr.mxu0 0.0
        %3176 = vmatpush1.msra.mxu0 0.0
        %3177 = vmatprep.subr.mxu0 0.0
        %3178 = vmatpush1.msra.mxu0 0.0
        %3179 = vmatprep.subr.mxu0 0.0
        %3180 = vmatpush1.msra.mxu0 0.0
        %3181 = vmatprep.subr.mxu0 0.0
        %3182 = vmatpush1.msra.mxu0 0.0
        %3183 = vmatprep.subr.mxu0 0.0
        %3184 = vmatpush1.msra.mxu0 0.0
        %3185 = vmatprep.subr.mxu0 0.0
        %3186 = vmatpush1.msra.mxu0 0.0
        %3187 = vmatprep.subr.mxu0 0.0
        %3188 = vmatpush1.msra.mxu0 0.0
        %3189 = vmatprep.subr.mxu0 0.0
        %3190 = vmatpush1.msra.mxu0 0.0
        %3191 = vmatprep.subr.mxu0 0.0
        %3192 = vmatpush1.msra.mxu0 0.0
        %3193 = vmatprep.subr.mxu0 0.0
        %3194 = vmatpush1.msra.mxu0 0.0
        %3195 = vmatprep.subr.mxu0 0.0
        %3196 = vmatpush1.msra.mxu0 0.0
        %3197 = vmatprep.subr.mxu0 0.0
        %3198 = vmatpush1.msra.mxu0 0.0
        %3199 = vmatprep.subr.mxu0 0.0
        %3200 = vmatpush1.msra.mxu0 0.0
        %3201 = vmatprep.subr.mxu0 0.0
        %3202 = vmatpush1.msra.mxu0 0.0
        %3203 = vmatprep.subr.mxu0 0.0
        %3204 = vmatpush1.msra.mxu0 %v3077
        %3205 = vmatprep.subr.mxu0 0.0
        %3206 = vmatpush1.msra.mxu0 %v3072
        %3207 = vmatprep.subr.mxu0 0.0
        %3208 = vmatpush2.msra.mxu0 0.0
        %3209 = vmatprep.subr.mxu0 0.0
        %3210 = vmatpush2.msra.mxu0 0.0
        %3211 = vmatprep.subr.mxu0 0.0
        %3212 = vmatpush2.msra.mxu0 0.0
        %3213 = vmatprep.subr.mxu0 0.0
        %3214 = vmatpush2.msra.mxu0 0.0
        %3215 = vmatprep.subr.mxu0 0.0
        %3216 = vmatpush2.msra.mxu0 0.0
        %3217 = vmatprep.subr.mxu0 0.0
        %3218 = vmatpush2.msra.mxu0 0.0
        %3219 = vmatprep.subr.mxu0 0.0
        %3220 = vmatpush2.msra.mxu0 0.0
        %3221 = vmatprep.subr.mxu0 0.0
        %3222 = vmatpush2.msra.mxu0 0.0
        %3223 = vmatprep.subr.mxu0 0.0
        %3224 = vmatpush2.msra.mxu0 0.0
        %3225 = vmatprep.subr.mxu0 0.0
        %3226 = vmatpush2.msra.mxu0 0.0
        %3227 = vmatprep.subr.mxu0 0.0
        %3228 = vmatpush2.msra.mxu0 0.0
        %3229 = vmatprep.subr.mxu0 0.0
        %3230 = vmatpush2.msra.mxu0 0.0
        %3231 = vmatprep.subr.mxu0 0.0
        %3232 = vmatpush2.msra.mxu0 0.0
        %3233 = vmatprep.subr.mxu0 0.0
        %3234 = vmatpush2.msra.mxu0 0.0
        %3235 = vmatprep.subr.mxu0 0.0
        %3236 = vmatpush2.msra.mxu0 0.0
        %3237 = vmatprep.subr.mxu0 0.0
        %3238 = vmatpush2.msra.mxu0 0.0
        %3239 = vmatprep.mubr.f32.mxu0 0.0
        %3240 = vmatmul.mubr.f32.gmra.mxu0 %v3103
        %v3241 = vpop.f32.mrf.mxu0
        %v3242 = vadd.f32 0.0, %v3241
        %v3243 = vpop.f32.mrf.mxu0
        %3244 = vdwg.mxu0
        %v3246 = vsel %vm586, %v3242, 0
        %3248 = vmatprep.subr.mxu0 0.0
        %3249 = vmatpush1.msra.mxu0 0.0
        %3250 = vmatprep.subr.mxu0 0.0
        %3251 = vmatpush1.msra.mxu0 0.0
        %3252 = vmatprep.subr.mxu0 0.0
        %3253 = vmatpush1.msra.mxu0 0.0
        %3254 = vmatprep.subr.mxu0 0.0
        %3255 = vmatpush1.msra.mxu0 0.0
        %3256 = vmatprep.subr.mxu0 0.0
        %3257 = vmatpush1.msra.mxu0 0.0
        %3258 = vmatprep.subr.mxu0 0.0
        %3259 = vmatpush1.msra.mxu0 0.0
        %3260 = vmatprep.subr.mxu0 0.0
        %3261 = vmatpush1.msra.mxu0 0.0
        %3262 = vmatprep.subr.mxu0 0.0
        %3263 = vmatpush1.msra.mxu0 0.0
        %3264 = vmatprep.subr.mxu0 0.0
        %3265 = vmatpush1.msra.mxu0 0.0
        %3266 = vmatprep.subr.mxu0 0.0
        %3267 = vmatpush1.msra.mxu0 0.0
        %3268 = vmatprep.subr.mxu0 0.0
        %3269 = vmatpush1.msra.mxu0 0.0
        %3270 = vmatprep.subr.mxu0 0.0
        %3271 = vmatpush1.msra.mxu0 0.0
        %3272 = vmatprep.subr.mxu0 0.0
        %3273 = vmatpush1.msra.mxu0 0.0
        %3274 = vmatprep.subr.mxu0 0.0
        %3275 = vmatpush1.msra.mxu0 0.0
        %3276 = vmatprep.subr.mxu0 0.0
        %3277 = vmatpush1.msra.mxu0 0.0
        %3278 = vmatprep.subr.mxu0 0.0
        %3279 = vmatpush1.msra.mxu0 %v285
        %3280 = vmatprep.subr.mxu0 0.0
        %3281 = vmatpush2.msra.mxu0 0.0
        %3282 = vmatprep.subr.mxu0 0.0
        %3283 = vmatpush2.msra.mxu0 0.0
        %3284 = vmatprep.subr.mxu0 0.0
        %3285 = vmatpush2.msra.mxu0 0.0
        %3286 = vmatprep.subr.mxu0 0.0
        %3287 = vmatpush2.msra.mxu0 0.0
        %3288 = vmatprep.subr.mxu0 0.0
        %3289 = vmatpush2.msra.mxu0 0.0
        %3290 = vmatprep.subr.mxu0 0.0
        %3291 = vmatpush2.msra.mxu0 0.0
        %3292 = vmatprep.subr.mxu0 0.0
        %3293 = vmatpush2.msra.mxu0 0.0
        %3294 = vmatprep.subr.mxu0 0.0
        %3295 = vmatpush2.msra.mxu0 0.0
        %3296 = vmatprep.subr.mxu0 0.0
        %3297 = vmatpush2.msra.mxu0 0.0
        %3298 = vmatprep.subr.mxu0 0.0
        %3299 = vmatpush2.msra.mxu0 0.0
        %3300 = vmatprep.subr.mxu0 0.0
        %3301 = vmatpush2.msra.mxu0 0.0
        %3302 = vmatprep.subr.mxu0 0.0
        %3303 = vmatpush2.msra.mxu0 0.0
        %3304 = vmatprep.subr.mxu0 0.0
        %3305 = vmatpush2.msra.mxu0 0.0
        %3306 = vmatprep.subr.mxu0 0.0
        %3307 = vmatpush2.msra.mxu0 0.0
        %3308 = vmatprep.subr.mxu0 0.0
        %3309 = vmatpush2.msra.mxu0 0.0
        %3310 = vmatprep.subr.mxu0 0.0
        %3311 = vmatpush2.msra.mxu0 0.0
        %3312 = vmatprep.mubr.f32.mxu0 0.0
        %3313 = vmatmul.mubr.f32.gmra.mxu0 %v3246
        %v3314 = vpop.f32.mrf.mxu0
        %v3315 = vadd.f32 0.0, %v3314
        %v3316 = vpop.f32.mrf.mxu0
        %3317 = vdwg.mxu0
        %v3319 = vsel %vm586, %v3172, 0
        %3321 = vmatprep.subr.mxu0 0.0
        %3322 = vmatpush1.msra.mxu0 0.0
        %3323 = vmatprep.subr.mxu0 0.0
        %3324 = vmatpush1.msra.mxu0 0.0
        %3325 = vmatprep.subr.mxu0 0.0
        %3326 = vmatpush1.msra.mxu0 0.0
        %3327 = vmatprep.subr.mxu0 0.0
        %3328 = vmatpush1.msra.mxu0 0.0
        %3329 = vmatprep.subr.mxu0 0.0
        %3330 = vmatpush1.msra.mxu0 0.0
        %3331 = vmatprep.subr.mxu0 0.0
        %3332 = vmatpush1.msra.mxu0 0.0
        %3333 = vmatprep.subr.mxu0 0.0
        %3334 = vmatpush1.msra.mxu0 0.0
        %3335 = vmatprep.subr.mxu0 0.0
        %3336 = vmatpush1.msra.mxu0 0.0
        %3337 = vmatprep.subr.mxu0 0.0
        %3338 = vmatpush1.msra.mxu0 0.0
        %3339 = vmatprep.subr.mxu0 0.0
        %3340 = vmatpush1.msra.mxu0 0.0
        %3341 = vmatprep.subr.mxu0 0.0
        %3342 = vmatpush1.msra.mxu0 0.0
        %3343 = vmatprep.subr.mxu0 0.0
        %3344 = vmatpush1.msra.mxu0 0.0
        %3345 = vmatprep.subr.mxu0 0.0
        %3346 = vmatpush1.msra.mxu0 0.0
        %3347 = vmatprep.subr.mxu0 0.0
        %3348 = vmatpush1.msra.mxu0 0.0
        %3349 = vmatprep.subr.mxu0 0.0
        %3350 = vmatpush1.msra.mxu0 0.0
        %3351 = vmatprep.subr.mxu0 0.0
        %3352 = vmatpush1.msra.mxu0 %v281
        %3353 = vmatprep.subr.mxu0 0.0
        %3354 = vmatpush2.msra.mxu0 0.0
        %3355 = vmatprep.subr.mxu0 0.0
        %3356 = vmatpush2.msra.mxu0 0.0
        %3357 = vmatprep.subr.mxu0 0.0
        %3358 = vmatpush2.msra.mxu0 0.0
        %3359 = vmatprep.subr.mxu0 0.0
        %3360 = vmatpush2.msra.mxu0 0.0
        %3361 = vmatprep.subr.mxu0 0.0
        %3362 = vmatpush2.msra.mxu0 0.0
        %3363 = vmatprep.subr.mxu0 0.0
        %3364 = vmatpush2.msra.mxu0 0.0
        %3365 = vmatprep.subr.mxu0 0.0
        %3366 = vmatpush2.msra.mxu0 0.0
        %3367 = vmatprep.subr.mxu0 0.0
        %3368 = vmatpush2.msra.mxu0 0.0
        %3369 = vmatprep.subr.mxu0 0.0
        %3370 = vmatpush2.msra.mxu0 0.0
        %3371 = vmatprep.subr.mxu0 0.0
        %3372 = vmatpush2.msra.mxu0 0.0
        %3373 = vmatprep.subr.mxu0 0.0
        %3374 = vmatpush2.msra.mxu0 0.0
        %3375 = vmatprep.subr.mxu0 0.0
        %3376 = vmatpush2.msra.mxu0 0.0
        %3377 = vmatprep.subr.mxu0 0.0
        %3378 = vmatpush2.msra.mxu0 0.0
        %3379 = vmatprep.subr.mxu0 0.0
        %3380 = vmatpush2.msra.mxu0 0.0
        %3381 = vmatprep.subr.mxu0 0.0
        %3382 = vmatpush2.msra.mxu0 0.0
        %3383 = vmatprep.subr.mxu0 0.0
        %3384 = vmatpush2.msra.mxu0 0.0
        %3385 = vmatprep.mubr.f32.mxu0 0.0
        %3386 = vmatmul.mubr.f32.gmra.mxu0 %v3319
        %v3387 = vpop.f32.mrf.mxu0
        %v3388 = vadd.f32 %v3315, %v3387
        %v3389 = vpop.f32.mrf.mxu0
        %3390 = vdwg.mxu0
        %3391 = vmatprep.subr.mxu0 0.0
        %3392 = vmatpush1.msra.mxu0 0.0
        %3393 = vmatprep.subr.mxu0 0.0
        %3394 = vmatpush1.msra.mxu0 0.0
        %3395 = vmatprep.subr.mxu0 0.0
        %3396 = vmatpush1.msra.mxu0 0.0
        %3397 = vmatprep.subr.mxu0 0.0
        %3398 = vmatpush1.msra.mxu0 0.0
        %3399 = vmatprep.subr.mxu0 0.0
        %3400 = vmatpush1.msra.mxu0 0.0
        %3401 = vmatprep.subr.mxu0 0.0
        %3402 = vmatpush1.msra.mxu0 0.0
        %3403 = vmatprep.subr.mxu0 0.0
        %3404 = vmatpush1.msra.mxu0 0.0
        %3405 = vmatprep.subr.mxu0 0.0
        %3406 = vmatpush1.msra.mxu0 0.0
        %3407 = vmatprep.subr.mxu0 0.0
        %3408 = vmatpush1.msra.mxu0 0.0
        %3409 = vmatprep.subr.mxu0 0.0
        %3410 = vmatpush1.msra.mxu0 0.0
        %3411 = vmatprep.subr.mxu0 0.0
        %3412 = vmatpush1.msra.mxu0 0.0
        %3413 = vmatprep.subr.mxu0 0.0
        %3414 = vmatpush1.msra.mxu0 0.0
        %3415 = vmatprep.subr.mxu0 0.0
        %3416 = vmatpush1.msra.mxu0 0.0
        %3417 = vmatprep.subr.mxu0 0.0
        %3418 = vmatpush1.msra.mxu0 0.0
        %3419 = vmatprep.subr.mxu0 0.0
        %3420 = vmatpush1.msra.mxu0 %v3087
        %3421 = vmatprep.subr.mxu0 0.0
        %3422 = vmatpush1.msra.mxu0 %v3082
        %3423 = vmatprep.subr.mxu0 0.0
        %3424 = vmatpush2.msra.mxu0 0.0
        %3425 = vmatprep.subr.mxu0 0.0
        %3426 = vmatpush2.msra.mxu0 0.0
        %3427 = vmatprep.subr.mxu0 0.0
        %3428 = vmatpush2.msra.mxu0 0.0
        %3429 = vmatprep.subr.mxu0 0.0
        %3430 = vmatpush2.msra.mxu0 0.0
        %3431 = vmatprep.subr.mxu0 0.0
        %3432 = vmatpush2.msra.mxu0 0.0
        %3433 = vmatprep.subr.mxu0 0.0
        %3434 = vmatpush2.msra.mxu0 0.0
        %3435 = vmatprep.subr.mxu0 0.0
        %3436 = vmatpush2.msra.mxu0 0.0
        %3437 = vmatprep.subr.mxu0 0.0
        %3438 = vmatpush2.msra.mxu0 0.0
        %3439 = vmatprep.subr.mxu0 0.0
        %3440 = vmatpush2.msra.mxu0 0.0
        %3441 = vmatprep.subr.mxu0 0.0
        %3442 = vmatpush2.msra.mxu0 0.0
        %3443 = vmatprep.subr.mxu0 0.0
        %3444 = vmatpush2.msra.mxu0 0.0
        %3445 = vmatprep.subr.mxu0 0.0
        %3446 = vmatpush2.msra.mxu0 0.0
        %3447 = vmatprep.subr.mxu0 0.0
        %3448 = vmatpush2.msra.mxu0 0.0
        %3449 = vmatprep.subr.mxu0 0.0
        %3450 = vmatpush2.msra.mxu0 0.0
        %3451 = vmatprep.subr.mxu0 0.0
        %3452 = vmatpush2.msra.mxu0 0.0
        %3453 = vmatprep.subr.mxu0 0.0
        %3454 = vmatpush2.msra.mxu0 0.0
        %3455 = vmatprep.mubr.f32.mxu0 0.0
        %3456 = vmatmul.mubr.f32.gmra.mxu0 %v3103
        %v3457 = vpop.f32.mrf.mxu0
        %v3458 = vadd.f32 0.0, %v3457
        %v3459 = vpop.f32.mrf.mxu0
        %3460 = vdwg.mxu0
        %v3462 = vsel %vm586, %v3458, 0
        %3464 = vmatprep.subr.mxu0 0.0
        %3465 = vmatpush1.msra.mxu0 0.0
        %3466 = vmatprep.subr.mxu0 0.0
        %3467 = vmatpush1.msra.mxu0 0.0
        %3468 = vmatprep.subr.mxu0 0.0
        %3469 = vmatpush1.msra.mxu0 0.0
        %3470 = vmatprep.subr.mxu0 0.0
        %3471 = vmatpush1.msra.mxu0 0.0
        %3472 = vmatprep.subr.mxu0 0.0
        %3473 = vmatpush1.msra.mxu0 0.0
        %3474 = vmatprep.subr.mxu0 0.0
        %3475 = vmatpush1.msra.mxu0 0.0
        %3476 = vmatprep.subr.mxu0 0.0
        %3477 = vmatpush1.msra.mxu0 0.0
        %3478 = vmatprep.subr.mxu0 0.0
        %3479 = vmatpush1.msra.mxu0 0.0
        %3480 = vmatprep.subr.mxu0 0.0
        %3481 = vmatpush1.msra.mxu0 0.0
        %3482 = vmatprep.subr.mxu0 0.0
        %3483 = vmatpush1.msra.mxu0 0.0
        %3484 = vmatprep.subr.mxu0 0.0
        %3485 = vmatpush1.msra.mxu0 0.0
        %3486 = vmatprep.subr.mxu0 0.0
        %3487 = vmatpush1.msra.mxu0 0.0
        %3488 = vmatprep.subr.mxu0 0.0
        %3489 = vmatpush1.msra.mxu0 0.0
        %3490 = vmatprep.subr.mxu0 0.0
        %3491 = vmatpush1.msra.mxu0 0.0
        %3492 = vmatprep.subr.mxu0 0.0
        %3493 = vmatpush1.msra.mxu0 0.0
        %3494 = vmatprep.subr.mxu0 0.0
        %3495 = vmatpush1.msra.mxu0 %v289
        %3496 = vmatprep.subr.mxu0 0.0
        %3497 = vmatpush2.msra.mxu0 0.0
        %3498 = vmatprep.subr.mxu0 0.0
        %3499 = vmatpush2.msra.mxu0 0.0
        %3500 = vmatprep.subr.mxu0 0.0
        %3501 = vmatpush2.msra.mxu0 0.0
        %3502 = vmatprep.subr.mxu0 0.0
        %3503 = vmatpush2.msra.mxu0 0.0
        %3504 = vmatprep.subr.mxu0 0.0
        %3505 = vmatpush2.msra.mxu0 0.0
        %3506 = vmatprep.subr.mxu0 0.0
        %3507 = vmatpush2.msra.mxu0 0.0
        %3508 = vmatprep.subr.mxu0 0.0
        %3509 = vmatpush2.msra.mxu0 0.0
        %3510 = vmatprep.subr.mxu0 0.0
        %3511 = vmatpush2.msra.mxu0 0.0
        %3512 = vmatprep.subr.mxu0 0.0
        %3513 = vmatpush2.msra.mxu0 0.0
        %3514 = vmatprep.subr.mxu0 0.0
        %3515 = vmatpush2.msra.mxu0 0.0
        %3516 = vmatprep.subr.mxu0 0.0
        %3517 = vmatpush2.msra.mxu0 0.0
        %3518 = vmatprep.subr.mxu0 0.0
        %3519 = vmatpush2.msra.mxu0 0.0
        %3520 = vmatprep.subr.mxu0 0.0
        %3521 = vmatpush2.msra.mxu0 0.0
        %3522 = vmatprep.subr.mxu0 0.0
        %3523 = vmatpush2.msra.mxu0 0.0
        %3524 = vmatprep.subr.mxu0 0.0
        %3525 = vmatpush2.msra.mxu0 0.0
        %3526 = vmatprep.subr.mxu0 0.0
        %3527 = vmatpush2.msra.mxu0 0.0
        %3528 = vmatprep.mubr.f32.mxu0 0.0
        %3529 = vmatmul.mubr.f32.gmra.mxu0 %v3462
        %v3530 = vpop.f32.mrf.mxu0
        %v3531 = vadd.f32 0.0, %v3530
        %v3532 = vpop.f32.mrf.mxu0
        %3533 = vdwg.mxu0
        %v3534 = vadd.f32 %v3388, %v3531
        %3535 = vmatprep.subr.mxu0 0.0
        %3536 = vmatpush1.msra.mxu0 0.0
        %3537 = vmatprep.subr.mxu0 0.0
        %3538 = vmatpush1.msra.mxu0 0.0
        %3539 = vmatprep.subr.mxu0 0.0
        %3540 = vmatpush1.msra.mxu0 0.0
        %3541 = vmatprep.subr.mxu0 0.0
        %3542 = vmatpush1.msra.mxu0 0.0
        %3543 = vmatprep.subr.mxu0 0.0
        %3544 = vmatpush1.msra.mxu0 0.0
        %3545 = vmatprep.subr.mxu0 0.0
        %3546 = vmatpush1.msra.mxu0 0.0
        %3547 = vmatprep.subr.mxu0 0.0
        %3548 = vmatpush1.msra.mxu0 0.0
        %3549 = vmatprep.subr.mxu0 0.0
        %3550 = vmatpush1.msra.mxu0 0.0
        %3551 = vmatprep.subr.mxu0 0.0
        %3552 = vmatpush1.msra.mxu0 0.0
        %3553 = vmatprep.subr.mxu0 0.0
        %3554 = vmatpush1.msra.mxu0 0.0
        %3555 = vmatprep.subr.mxu0 0.0
        %3556 = vmatpush1.msra.mxu0 0.0
        %3557 = vmatprep.subr.mxu0 0.0
        %3558 = vmatpush1.msra.mxu0 0.0
        %3559 = vmatprep.subr.mxu0 0.0
        %3560 = vmatpush1.msra.mxu0 0.0
        %3561 = vmatprep.subr.mxu0 0.0
        %3562 = vmatpush1.msra.mxu0 0.0
        %3563 = vmatprep.subr.mxu0 0.0
        %3564 = vmatpush1.msra.mxu0 %v3097
        %3565 = vmatprep.subr.mxu0 0.0
        %3566 = vmatpush1.msra.mxu0 %v3092
        %3567 = vmatprep.subr.mxu0 0.0
        %3568 = vmatpush2.msra.mxu0 0.0
        %3569 = vmatprep.subr.mxu0 0.0
        %3570 = vmatpush2.msra.mxu0 0.0
        %3571 = vmatprep.subr.mxu0 0.0
        %3572 = vmatpush2.msra.mxu0 0.0
        %3573 = vmatprep.subr.mxu0 0.0
        %3574 = vmatpush2.msra.mxu0 0.0
        %3575 = vmatprep.subr.mxu0 0.0
        %3576 = vmatpush2.msra.mxu0 0.0
        %3577 = vmatprep.subr.mxu0 0.0
        %3578 = vmatpush2.msra.mxu0 0.0
        %3579 = vmatprep.subr.mxu0 0.0
        %3580 = vmatpush2.msra.mxu0 0.0
        %3581 = vmatprep.subr.mxu0 0.0
        %3582 = vmatpush2.msra.mxu0 0.0
        %3583 = vmatprep.subr.mxu0 0.0
        %3584 = vmatpush2.msra.mxu0 0.0
        %3585 = vmatprep.subr.mxu0 0.0
        %3586 = vmatpush2.msra.mxu0 0.0
        %3587 = vmatprep.subr.mxu0 0.0
        %3588 = vmatpush2.msra.mxu0 0.0
        %3589 = vmatprep.subr.mxu0 0.0
        %3590 = vmatpush2.msra.mxu0 0.0
        %3591 = vmatprep.subr.mxu0 0.0
        %3592 = vmatpush2.msra.mxu0 0.0
        %3593 = vmatprep.subr.mxu0 0.0
        %3594 = vmatpush2.msra.mxu0 0.0
        %3595 = vmatprep.subr.mxu0 0.0
        %3596 = vmatpush2.msra.mxu0 0.0
        %3597 = vmatprep.subr.mxu0 0.0
        %3598 = vmatpush2.msra.mxu0 0.0
        %3599 = vmatprep.mubr.f32.mxu0 0.0
        %3600 = vmatmul.mubr.f32.gmra.mxu0 %v3103
        %v3601 = vpop.f32.mrf.mxu0
        %v3602 = vadd.f32 0.0, %v3601
        %v3603 = vpop.f32.mrf.mxu0
        %3604 = vdwg.mxu0
        %v3606 = vsel %vm586, %v3602, 0
        %3608 = vmatprep.subr.mxu0 0.0
        %3609 = vmatpush1.msra.mxu0 0.0
        %3610 = vmatprep.subr.mxu0 0.0
        %3611 = vmatpush1.msra.mxu0 0.0
        %3612 = vmatprep.subr.mxu0 0.0
        %3613 = vmatpush1.msra.mxu0 0.0
        %3614 = vmatprep.subr.mxu0 0.0
        %3615 = vmatpush1.msra.mxu0 0.0
        %3616 = vmatprep.subr.mxu0 0.0
        %3617 = vmatpush1.msra.mxu0 0.0
        %3618 = vmatprep.subr.mxu0 0.0
        %3619 = vmatpush1.msra.mxu0 0.0
        %3620 = vmatprep.subr.mxu0 0.0
        %3621 = vmatpush1.msra.mxu0 0.0
        %3622 = vmatprep.subr.mxu0 0.0
        %3623 = vmatpush1.msra.mxu0 0.0
        %3624 = vmatprep.subr.mxu0 0.0
        %3625 = vmatpush1.msra.mxu0 0.0
        %3626 = vmatprep.subr.mxu0 0.0
        %3627 = vmatpush1.msra.mxu0 0.0
        %3628 = vmatprep.subr.mxu0 0.0
        %3629 = vmatpush1.msra.mxu0 0.0
        %3630 = vmatprep.subr.mxu0 0.0
        %3631 = vmatpush1.msra.mxu0 0.0
        %3632 = vmatprep.subr.mxu0 0.0
        %3633 = vmatpush1.msra.mxu0 0.0
        %3634 = vmatprep.subr.mxu0 0.0
        %3635 = vmatpush1.msra.mxu0 0.0
        %3636 = vmatprep.subr.mxu0 0.0
        %3637 = vmatpush1.msra.mxu0 0.0
        %3638 = vmatprep.subr.mxu0 0.0
        %3639 = vmatpush1.msra.mxu0 %v293
        %3640 = vmatprep.subr.mxu0 0.0
        %3641 = vmatpush2.msra.mxu0 0.0
        %3642 = vmatprep.subr.mxu0 0.0
        %3643 = vmatpush2.msra.mxu0 0.0
        %3644 = vmatprep.subr.mxu0 0.0
        %3645 = vmatpush2.msra.mxu0 0.0
        %3646 = vmatprep.subr.mxu0 0.0
        %3647 = vmatpush2.msra.mxu0 0.0
        %3648 = vmatprep.subr.mxu0 0.0
        %3649 = vmatpush2.msra.mxu0 0.0
        %3650 = vmatprep.subr.mxu0 0.0
        %3651 = vmatpush2.msra.mxu0 0.0
        %3652 = vmatprep.subr.mxu0 0.0
        %3653 = vmatpush2.msra.mxu0 0.0
        %3654 = vmatprep.subr.mxu0 0.0
        %3655 = vmatpush2.msra.mxu0 0.0
        %3656 = vmatprep.subr.mxu0 0.0
        %3657 = vmatpush2.msra.mxu0 0.0
        %3658 = vmatprep.subr.mxu0 0.0
        %3659 = vmatpush2.msra.mxu0 0.0
        %3660 = vmatprep.subr.mxu0 0.0
        %3661 = vmatpush2.msra.mxu0 0.0
        %3662 = vmatprep.subr.mxu0 0.0
        %3663 = vmatpush2.msra.mxu0 0.0
        %3664 = vmatprep.subr.mxu0 0.0
        %3665 = vmatpush2.msra.mxu0 0.0
        %3666 = vmatprep.subr.mxu0 0.0
        %3667 = vmatpush2.msra.mxu0 0.0
        %3668 = vmatprep.subr.mxu0 0.0
        %3669 = vmatpush2.msra.mxu0 0.0
        %3670 = vmatprep.subr.mxu0 0.0
        %3671 = vmatpush2.msra.mxu0 0.0
        %3672 = vmatprep.mubr.f32.mxu0 0.0
        %3673 = vmatmul.mubr.f32.gmra.mxu0 %v3606
        %v3674 = vpop.f32.mrf.mxu0
        %v3675 = vadd.f32 0.0, %v3674
        %v3676 = vpop.f32.mrf.mxu0
        %3677 = vdwg.mxu0
        %v3678 = vadd.f32 %v3534, %v3675
        %v3679 = vadd.s32 %v1025, 3
        %vm3680 = vcmp.eq.s32.totalorder %v276, %v3679
        %vm3681 = vcmp.eq.s32.totalorder %v282, %v3679
        %vm3682 = vcmp.eq.s32.totalorder %v286, %v3679
        %vm3683 = vcmp.eq.s32.totalorder %v290, %v3679
        %vm3684 = vcmp.eq.s32.totalorder %v1021, %v3679
        %vm3685 = vcmp.eq.s32.totalorder %v1022, %v3679
        %vm3686 = vcmp.eq.s32.totalorder %v1023, %v3679
        %vm3687 = vcmp.eq.s32.totalorder %v1024, %v3679
        %v3688 = vsel %vm3680, 1, 0
        %v3689 = vsel %vm3681, 1, 0
        %v3690 = vsel %vm3682, 1, 0
        %v3691 = vsel %vm3683, 1, 0
        %v3692 = vsel %vm3684, 1, 0
        %v3693 = vsel %vm3685, 1, 0
        %v3694 = vsel %vm3686, 1, 0
        %v3695 = vsel %vm3687, 1, 0
        %v3696 = vcvt.s32.f32 %v3688
        %v3697 = vcvt.s32.f32 %v3689
        %v3698 = vcvt.s32.f32 %v3690
        %v3699 = vcvt.s32.f32 %v3691
        %v3700 = vcvt.s32.f32 %v3692
        %v3701 = vcvt.s32.f32 %v3693
        %v3702 = vcvt.s32.f32 %v3694
        %v3703 = vcvt.s32.f32 %v3695
        %v3705 = vsel %vm586, %v3696, 0
        %v3708 = vsel %vm586, %v3697, 0
        %v3711 = vsel %vm586, %v3698, 0
        %v3714 = vsel %vm586, %v3699, 0
        %v3717 = vsel %vm586, %v3700, 0
        %v3720 = vsel %vm586, %v3701, 0
        %v3723 = vsel %vm586, %v3702, 0
        %v3726 = vsel %vm586, %v3703, 0
        %3728 = vmatprep.subr.mxu0 0.0
        %3729 = vmatpush1.msra.mxu0 0.0
        %3730 = vmatprep.subr.mxu0 0.0
        %3731 = vmatpush1.msra.mxu0 0.0
        %3732 = vmatprep.subr.mxu0 0.0
        %3733 = vmatpush1.msra.mxu0 0.0
        %3734 = vmatprep.subr.mxu0 0.0
        %3735 = vmatpush1.msra.mxu0 0.0
        %3736 = vmatprep.subr.mxu0 0.0
        %3737 = vmatpush1.msra.mxu0 0.0
        %3738 = vmatprep.subr.mxu0 0.0
        %3739 = vmatpush1.msra.mxu0 0.0
        %3740 = vmatprep.subr.mxu0 0.0
        %3741 = vmatpush1.msra.mxu0 0.0
        %3742 = vmatprep.subr.mxu0 0.0
        %3743 = vmatpush1.msra.mxu0 0.0
        %3744 = vmatprep.subr.mxu0 0.0
        %3745 = vmatpush1.msra.mxu0 0.0
        %3746 = vmatprep.subr.mxu0 0.0
        %3747 = vmatpush1.msra.mxu0 0.0
        %3748 = vmatprep.subr.mxu0 0.0
        %3749 = vmatpush1.msra.mxu0 0.0
        %3750 = vmatprep.subr.mxu0 0.0
        %3751 = vmatpush1.msra.mxu0 0.0
        %3752 = vmatprep.subr.mxu0 0.0
        %3753 = vmatpush1.msra.mxu0 0.0
        %3754 = vmatprep.subr.mxu0 0.0
        %3755 = vmatpush1.msra.mxu0 0.0
        %3756 = vmatprep.subr.mxu0 0.0
        %3757 = vmatpush1.msra.mxu0 0.0
        %3758 = vmatprep.subr.mxu0 0.0
        %3759 = vmatpush1.msra.mxu0 %v3678
        %3760 = vmatprep.subr.mxu0 0.0
        %3761 = vmatpush2.msra.mxu0 0.0
        %3762 = vmatprep.subr.mxu0 0.0
        %3763 = vmatpush2.msra.mxu0 0.0
        %3764 = vmatprep.subr.mxu0 0.0
        %3765 = vmatpush2.msra.mxu0 0.0
        %3766 = vmatprep.subr.mxu0 0.0
        %3767 = vmatpush2.msra.mxu0 0.0
        %3768 = vmatprep.subr.mxu0 0.0
        %3769 = vmatpush2.msra.mxu0 0.0
        %3770 = vmatprep.subr.mxu0 0.0
        %3771 = vmatpush2.msra.mxu0 0.0
        %3772 = vmatprep.subr.mxu0 0.0
        %3773 = vmatpush2.msra.mxu0 0.0
        %3774 = vmatprep.subr.mxu0 0.0
        %3775 = vmatpush2.msra.mxu0 0.0
        %3776 = vmatprep.subr.mxu0 0.0
        %3777 = vmatpush2.msra.mxu0 0.0
        %3778 = vmatprep.subr.mxu0 0.0
        %3779 = vmatpush2.msra.mxu0 0.0
        %3780 = vmatprep.subr.mxu0 0.0
        %3781 = vmatpush2.msra.mxu0 0.0
        %3782 = vmatprep.subr.mxu0 0.0
        %3783 = vmatpush2.msra.mxu0 0.0
        %3784 = vmatprep.subr.mxu0 0.0
        %3785 = vmatpush2.msra.mxu0 0.0
        %3786 = vmatprep.subr.mxu0 0.0
        %3787 = vmatpush2.msra.mxu0 0.0
        %3788 = vmatprep.subr.mxu0 0.0
        %3789 = vmatpush2.msra.mxu0 0.0
        %3790 = vmatprep.subr.mxu0 0.0
        %3791 = vmatpush2.msra.mxu0 0.0
        %3792 = vmatprep.mubr.f32.mxu0 0.0
        %3793 = vmatmul.mubr.f32.gmra.mxu0 %v3705
        %v3794 = vpop.f32.mrf.mxu0
        %v3795 = vadd.f32 0.0, %v3794
        %v3796 = vpop.f32.mrf.mxu0
        %3797 = vmatprep.mubr.f32.mxu0 0.0
        %3798 = vmatmul.mubr.f32.gmra.mxu0 %v3708
        %v3799 = vpop.f32.mrf.mxu0
        %v3800 = vadd.f32 0.0, %v3799
        %v3801 = vpop.f32.mrf.mxu0
        %3802 = vmatprep.mubr.f32.mxu0 0.0
        %3803 = vmatmul.mubr.f32.gmra.mxu0 %v3711
        %v3804 = vpop.f32.mrf.mxu0
        %v3805 = vadd.f32 0.0, %v3804
        %v3806 = vpop.f32.mrf.mxu0
        %3807 = vmatprep.mubr.f32.mxu0 0.0
        %3808 = vmatmul.mubr.f32.gmra.mxu0 %v3714
        %v3809 = vpop.f32.mrf.mxu0
        %v3810 = vadd.f32 0.0, %v3809
        %v3811 = vpop.f32.mrf.mxu0
        %3812 = vmatprep.mubr.f32.mxu0 0.0
        %3813 = vmatmul.mubr.f32.gmra.mxu0 %v3717
        %v3814 = vpop.f32.mrf.mxu0
        %v3815 = vadd.f32 0.0, %v3814
        %v3816 = vpop.f32.mrf.mxu0
        %3817 = vmatprep.mubr.f32.mxu0 0.0
        %3818 = vmatmul.mubr.f32.gmra.mxu0 %v3720
        %v3819 = vpop.f32.mrf.mxu0
        %v3820 = vadd.f32 0.0, %v3819
        %v3821 = vpop.f32.mrf.mxu0
        %3822 = vmatprep.mubr.f32.mxu0 0.0
        %3823 = vmatmul.mubr.f32.gmra.mxu0 %v3723
        %v3824 = vpop.f32.mrf.mxu0
        %v3825 = vadd.f32 0.0, %v3824
        %v3826 = vpop.f32.mrf.mxu0
        %3827 = vmatprep.mubr.f32.mxu0 0.0
        %3828 = vmatmul.mubr.f32.gmra.mxu0 %v3726
        %v3829 = vpop.f32.mrf.mxu0
        %v3830 = vadd.f32 0.0, %v3829
        %v3831 = vpop.f32.mrf.mxu0
        %3832 = vdwg.mxu0
        %v3833 = vadd.f32 %v2943, %v3795
        %v3834 = vadd.f32 %v2944, %v3800
        %v3835 = vadd.f32 %v2945, %v3805
        %v3836 = vadd.f32 %v2946, %v3810
        %v3837 = vadd.f32 %v2947, %v3815
        %v3838 = vadd.f32 %v2948, %v3820
        %v3839 = vadd.f32 %v2949, %v3825
        %v3840 = vadd.f32 %v2950, %v3830
        %s3841 = scalar_lea.vmem %s260, 128
        %v3842 = vld [vmem:[%s3841] sm:$0xf]
        %v3843 = vld [vmem:[%s3841 + $0x4] sm:$0xf]
        %v3844 = vld [vmem:[%s3841 + $0x8] sm:$0xf]
        %v3845 = vld [vmem:[%s3841 + $0xc] sm:$0xf]
        %v3846 = vld [vmem:[%s3841 + $0x10] sm:$0xf]
        %v3847 = vld [vmem:[%s3841 + $0x14] sm:$0xf]
        %v3848 = vld [vmem:[%s3841 + $0x18] sm:$0xf]
        %v3849 = vld [vmem:[%s3841 + $0x1c] sm:$0xf]
        %v3850 = vunpack.c.l.bf16 %v3842
        %v3851 = vunpack.c.l.bf16 %v3843
        %v3852 = vunpack.c.l.bf16 %v3844
        %v3853 = vunpack.c.l.bf16 %v3845
        %v3854 = vunpack.c.l.bf16 %v3846
        %v3855 = vunpack.c.l.bf16 %v3847
        %v3856 = vunpack.c.l.bf16 %v3848
        %v3857 = vunpack.c.l.bf16 %v3849
        %s3858 = scalar_lea.vmem %s273, 64
        %v3859 = vld [vmem:[%s3858] sm:$0xff]
        %v3860 = vld [vmem:[%s3858 + $0x8] sm:$0xff]
        %v3862 = vsel %vm312, %v3850, 0
        %v3865 = vsel %vm312, %v3851, 0
        %v3868 = vsel %vm312, %v3852, 0
        %v3871 = vsel %vm312, %v3853, 0
        %v3874 = vsel %vm312, %v3854, 0
        %v3877 = vsel %vm312, %v3855, 0
        %v3880 = vsel %vm312, %v3856, 0
        %v3883 = vsel %vm312, %v3857, 0
        %3885 = vmatprep.subr.mxu0 0.0
        %3886 = vmatpush1.msra.mxu0 0.0
        %3887 = vmatprep.subr.mxu0 0.0
        %3888 = vmatpush1.msra.mxu0 0.0
        %3889 = vmatprep.subr.mxu0 0.0
        %3890 = vmatpush1.msra.mxu0 0.0
        %3891 = vmatprep.subr.mxu0 0.0
        %3892 = vmatpush1.msra.mxu0 0.0
        %3893 = vmatprep.subr.mxu0 0.0
        %3894 = vmatpush1.msra.mxu0 0.0
        %3895 = vmatprep.subr.mxu0 0.0
        %3896 = vmatpush1.msra.mxu0 0.0
        %3897 = vmatprep.subr.mxu0 0.0
        %3898 = vmatpush1.msra.mxu0 0.0
        %3899 = vmatprep.subr.mxu0 0.0
        %3900 = vmatpush1.msra.mxu0 0.0
        %3901 = vmatprep.subr.mxu0 0.0
        %3902 = vmatpush1.msra.mxu0 0.0
        %3903 = vmatprep.subr.mxu0 0.0
        %3904 = vmatpush1.msra.mxu0 0.0
        %3905 = vmatprep.subr.mxu0 0.0
        %3906 = vmatpush1.msra.mxu0 0.0
        %3907 = vmatprep.subr.mxu0 0.0
        %3908 = vmatpush1.msra.mxu0 0.0
        %3909 = vmatprep.subr.mxu0 0.0
        %3910 = vmatpush1.msra.mxu0 0.0
        %3911 = vmatprep.subr.mxu0 0.0
        %3912 = vmatpush1.msra.mxu0 0.0
        %3913 = vmatprep.subr.mxu0 0.0
        %3914 = vmatpush1.msra.mxu0 %v3860
        %3915 = vmatprep.subr.mxu0 0.0
        %3916 = vmatpush1.msra.mxu0 %v3859
        %3917 = vmatprep.subr.mxu0 0.0
        %3918 = vmatpush2.msra.mxu0 0.0
        %3919 = vmatprep.subr.mxu0 0.0
        %3920 = vmatpush2.msra.mxu0 0.0
        %3921 = vmatprep.subr.mxu0 0.0
        %3922 = vmatpush2.msra.mxu0 0.0
        %3923 = vmatprep.subr.mxu0 0.0
        %3924 = vmatpush2.msra.mxu0 0.0
        %3925 = vmatprep.subr.mxu0 0.0
        %3926 = vmatpush2.msra.mxu0 0.0
        %3927 = vmatprep.subr.mxu0 0.0
        %3928 = vmatpush2.msra.mxu0 0.0
        %3929 = vmatprep.subr.mxu0 0.0
        %3930 = vmatpush2.msra.mxu0 0.0
        %3931 = vmatprep.subr.mxu0 0.0
        %3932 = vmatpush2.msra.mxu0 0.0
        %3933 = vmatprep.subr.mxu0 0.0
        %3934 = vmatpush2.msra.mxu0 0.0
        %3935 = vmatprep.subr.mxu0 0.0
        %3936 = vmatpush2.msra.mxu0 0.0
        %3937 = vmatprep.subr.mxu0 0.0
        %3938 = vmatpush2.msra.mxu0 0.0
        %3939 = vmatprep.subr.mxu0 0.0
        %3940 = vmatpush2.msra.mxu0 0.0
        %3941 = vmatprep.subr.mxu0 0.0
        %3942 = vmatpush2.msra.mxu0 0.0
        %3943 = vmatprep.subr.mxu0 0.0
        %3944 = vmatpush2.msra.mxu0 0.0
        %3945 = vmatprep.subr.mxu0 0.0
        %3946 = vmatpush2.msra.mxu0 0.0
        %3947 = vmatprep.subr.mxu0 0.0
        %3948 = vmatpush2.msra.mxu0 0.0
        %3949 = vmatprep.mubr.f32.mxu0 0.0
        %3950 = vmatmul.mubr.f32.gmra.mxu0 %v3862
        %v3951 = vpop.f32.mrf.mxu0
        %v3952 = vadd.f32 0.0, %v3951
        %v3953 = vpop.f32.mrf.mxu0
        %3954 = vmatprep.mubr.f32.mxu0 0.0
        %3955 = vmatmul.mubr.f32.gmra.mxu0 %v3865
        %v3956 = vpop.f32.mrf.mxu0
        %v3957 = vadd.f32 0.0, %v3956
        %v3958 = vpop.f32.mrf.mxu0
        %3959 = vmatprep.mubr.f32.mxu0 0.0
        %3960 = vmatmul.mubr.f32.gmra.mxu0 %v3868
        %v3961 = vpop.f32.mrf.mxu0
        %v3962 = vadd.f32 0.0, %v3961
        %v3963 = vpop.f32.mrf.mxu0
        %3964 = vmatprep.mubr.f32.mxu0 0.0
        %3965 = vmatmul.mubr.f32.gmra.mxu0 %v3871
        %v3966 = vpop.f32.mrf.mxu0
        %v3967 = vadd.f32 0.0, %v3966
        %v3968 = vpop.f32.mrf.mxu0
        %3969 = vmatprep.mubr.f32.mxu0 0.0
        %3970 = vmatmul.mubr.f32.gmra.mxu0 %v3874
        %v3971 = vpop.f32.mrf.mxu0
        %v3972 = vadd.f32 0.0, %v3971
        %v3973 = vpop.f32.mrf.mxu0
        %3974 = vmatprep.mubr.f32.mxu0 0.0
        %3975 = vmatmul.mubr.f32.gmra.mxu0 %v3877
        %v3976 = vpop.f32.mrf.mxu0
        %v3977 = vadd.f32 0.0, %v3976
        %v3978 = vpop.f32.mrf.mxu0
        %3979 = vmatprep.mubr.f32.mxu0 0.0
        %3980 = vmatmul.mubr.f32.gmra.mxu0 %v3880
        %v3981 = vpop.f32.mrf.mxu0
        %v3982 = vadd.f32 0.0, %v3981
        %v3983 = vpop.f32.mrf.mxu0
        %3984 = vmatprep.mubr.f32.mxu0 0.0
        %3985 = vmatmul.mubr.f32.gmra.mxu0 %v3883
        %v3986 = vpop.f32.mrf.mxu0
        %v3987 = vadd.f32 0.0, %v3986
        %v3988 = vpop.f32.mrf.mxu0
        %3989 = vdwg.mxu0
        %s3990 = scalar_lea.vmem %s266, 32
        %v3991 = vld [vmem:[%s3990] sm:$0xff]
        %v3993 = vsel %vm312, %v3991, 0
        %3995 = vmatprep.subr.mxu0 0.0
        %3996 = vmatpush1.msra.mxu0 0.0
        %3997 = vmatprep.subr.mxu0 0.0
        %3998 = vmatpush1.msra.mxu0 0.0
        %3999 = vmatprep.subr.mxu0 0.0
        %4000 = vmatpush1.msra.mxu0 0.0
        %4001 = vmatprep.subr.mxu0 0.0
        %4002 = vmatpush1.msra.mxu0 0.0
        %4003 = vmatprep.subr.mxu0 0.0
        %4004 = vmatpush1.msra.mxu0 0.0
        %4005 = vmatprep.subr.mxu0 0.0
        %4006 = vmatpush1.msra.mxu0 0.0
        %4007 = vmatprep.subr.mxu0 0.0
        %4008 = vmatpush1.msra.mxu0 0.0
        %4009 = vmatprep.subr.mxu0 0.0
        %4010 = vmatpush1.msra.mxu0 0.0
        %4011 = vmatprep.subr.mxu0 0.0
        %4012 = vmatpush1.msra.mxu0 0.0
        %4013 = vmatprep.subr.mxu0 0.0
        %4014 = vmatpush1.msra.mxu0 0.0
        %4015 = vmatprep.subr.mxu0 0.0
        %4016 = vmatpush1.msra.mxu0 0.0
        %4017 = vmatprep.subr.mxu0 0.0
        %4018 = vmatpush1.msra.mxu0 0.0
        %4019 = vmatprep.subr.mxu0 0.0
        %4020 = vmatpush1.msra.mxu0 0.0
        %4021 = vmatprep.subr.mxu0 0.0
        %4022 = vmatpush1.msra.mxu0 0.0
        %4023 = vmatprep.subr.mxu0 0.0
        %4024 = vmatpush1.msra.mxu0 %v3957
        %4025 = vmatprep.subr.mxu0 0.0
        %4026 = vmatpush1.msra.mxu0 %v3952
        %4027 = vmatprep.subr.mxu0 0.0
        %4028 = vmatpush2.msra.mxu0 0.0
        %4029 = vmatprep.subr.mxu0 0.0
        %4030 = vmatpush2.msra.mxu0 0.0
        %4031 = vmatprep.subr.mxu0 0.0
        %4032 = vmatpush2.msra.mxu0 0.0
        %4033 = vmatprep.subr.mxu0 0.0
        %4034 = vmatpush2.msra.mxu0 0.0
        %4035 = vmatprep.subr.mxu0 0.0
        %4036 = vmatpush2.msra.mxu0 0.0
        %4037 = vmatprep.subr.mxu0 0.0
        %4038 = vmatpush2.msra.mxu0 0.0
        %4039 = vmatprep.subr.mxu0 0.0
        %4040 = vmatpush2.msra.mxu0 0.0
        %4041 = vmatprep.subr.mxu0 0.0
        %4042 = vmatpush2.msra.mxu0 0.0
        %4043 = vmatprep.subr.mxu0 0.0
        %4044 = vmatpush2.msra.mxu0 0.0
        %4045 = vmatprep.subr.mxu0 0.0
        %4046 = vmatpush2.msra.mxu0 0.0
        %4047 = vmatprep.subr.mxu0 0.0
        %4048 = vmatpush2.msra.mxu0 0.0
        %4049 = vmatprep.subr.mxu0 0.0
        %4050 = vmatpush2.msra.mxu0 0.0
        %4051 = vmatprep.subr.mxu0 0.0
        %4052 = vmatpush2.msra.mxu0 0.0
        %4053 = vmatprep.subr.mxu0 0.0
        %4054 = vmatpush2.msra.mxu0 0.0
        %4055 = vmatprep.subr.mxu0 0.0
        %4056 = vmatpush2.msra.mxu0 0.0
        %4057 = vmatprep.subr.mxu0 0.0
        %4058 = vmatpush2.msra.mxu0 0.0
        %4059 = vmatprep.mubr.f32.mxu0 0.0
        %4060 = vmatmul.mubr.f32.gmra.mxu0 %v3993
        %v4061 = vpop.f32.mrf.mxu0
        %v4062 = vadd.f32 0.0, %v4061
        %v4063 = vpop.f32.mrf.mxu0
        %4064 = vdwg.mxu0
        %4065 = vmatprep.subr.mxu0 0.0
        %4066 = vmatpush1.msra.mxu0 0.0
        %4067 = vmatprep.subr.mxu0 0.0
        %4068 = vmatpush1.msra.mxu0 0.0
        %4069 = vmatprep.subr.mxu0 0.0
        %4070 = vmatpush1.msra.mxu0 0.0
        %4071 = vmatprep.subr.mxu0 0.0
        %4072 = vmatpush1.msra.mxu0 0.0
        %4073 = vmatprep.subr.mxu0 0.0
        %4074 = vmatpush1.msra.mxu0 0.0
        %4075 = vmatprep.subr.mxu0 0.0
        %4076 = vmatpush1.msra.mxu0 0.0
        %4077 = vmatprep.subr.mxu0 0.0
        %4078 = vmatpush1.msra.mxu0 0.0
        %4079 = vmatprep.subr.mxu0 0.0
        %4080 = vmatpush1.msra.mxu0 0.0
        %4081 = vmatprep.subr.mxu0 0.0
        %4082 = vmatpush1.msra.mxu0 0.0
        %4083 = vmatprep.subr.mxu0 0.0
        %4084 = vmatpush1.msra.mxu0 0.0
        %4085 = vmatprep.subr.mxu0 0.0
        %4086 = vmatpush1.msra.mxu0 0.0
        %4087 = vmatprep.subr.mxu0 0.0
        %4088 = vmatpush1.msra.mxu0 0.0
        %4089 = vmatprep.subr.mxu0 0.0
        %4090 = vmatpush1.msra.mxu0 0.0
        %4091 = vmatprep.subr.mxu0 0.0
        %4092 = vmatpush1.msra.mxu0 0.0
        %4093 = vmatprep.subr.mxu0 0.0
        %4094 = vmatpush1.msra.mxu0 %v3967
        %4095 = vmatprep.subr.mxu0 0.0
        %4096 = vmatpush1.msra.mxu0 %v3962
        %4097 = vmatprep.subr.mxu0 0.0
        %4098 = vmatpush2.msra.mxu0 0.0
        %4099 = vmatprep.subr.mxu0 0.0
        %4100 = vmatpush2.msra.mxu0 0.0
        %4101 = vmatprep.subr.mxu0 0.0
        %4102 = vmatpush2.msra.mxu0 0.0
        %4103 = vmatprep.subr.mxu0 0.0
        %4104 = vmatpush2.msra.mxu0 0.0
        %4105 = vmatprep.subr.mxu0 0.0
        %4106 = vmatpush2.msra.mxu0 0.0
        %4107 = vmatprep.subr.mxu0 0.0
        %4108 = vmatpush2.msra.mxu0 0.0
        %4109 = vmatprep.subr.mxu0 0.0
        %4110 = vmatpush2.msra.mxu0 0.0
        %4111 = vmatprep.subr.mxu0 0.0
        %4112 = vmatpush2.msra.mxu0 0.0
        %4113 = vmatprep.subr.mxu0 0.0
        %4114 = vmatpush2.msra.mxu0 0.0
        %4115 = vmatprep.subr.mxu0 0.0
        %4116 = vmatpush2.msra.mxu0 0.0
        %4117 = vmatprep.subr.mxu0 0.0
        %4118 = vmatpush2.msra.mxu0 0.0
        %4119 = vmatprep.subr.mxu0 0.0
        %4120 = vmatpush2.msra.mxu0 0.0
        %4121 = vmatprep.subr.mxu0 0.0
        %4122 = vmatpush2.msra.mxu0 0.0
        %4123 = vmatprep.subr.mxu0 0.0
        %4124 = vmatpush2.msra.mxu0 0.0
        %4125 = vmatprep.subr.mxu0 0.0
        %4126 = vmatpush2.msra.mxu0 0.0
        %4127 = vmatprep.subr.mxu0 0.0
        %4128 = vmatpush2.msra.mxu0 0.0
        %4129 = vmatprep.mubr.f32.mxu0 0.0
        %4130 = vmatmul.mubr.f32.gmra.mxu0 %v3993
        %v4131 = vpop.f32.mrf.mxu0
        %v4132 = vadd.f32 0.0, %v4131
        %v4133 = vpop.f32.mrf.mxu0
        %4134 = vdwg.mxu0
        %v4136 = vsel %vm586, %v4132, 0
        %4138 = vmatprep.subr.mxu0 0.0
        %4139 = vmatpush1.msra.mxu0 0.0
        %4140 = vmatprep.subr.mxu0 0.0
        %4141 = vmatpush1.msra.mxu0 0.0
        %4142 = vmatprep.subr.mxu0 0.0
        %4143 = vmatpush1.msra.mxu0 0.0
        %4144 = vmatprep.subr.mxu0 0.0
        %4145 = vmatpush1.msra.mxu0 0.0
        %4146 = vmatprep.subr.mxu0 0.0
        %4147 = vmatpush1.msra.mxu0 0.0
        %4148 = vmatprep.subr.mxu0 0.0
        %4149 = vmatpush1.msra.mxu0 0.0
        %4150 = vmatprep.subr.mxu0 0.0
        %4151 = vmatpush1.msra.mxu0 0.0
        %4152 = vmatprep.subr.mxu0 0.0
        %4153 = vmatpush1.msra.mxu0 0.0
        %4154 = vmatprep.subr.mxu0 0.0
        %4155 = vmatpush1.msra.mxu0 0.0
        %4156 = vmatprep.subr.mxu0 0.0
        %4157 = vmatpush1.msra.mxu0 0.0
        %4158 = vmatprep.subr.mxu0 0.0
        %4159 = vmatpush1.msra.mxu0 0.0
        %4160 = vmatprep.subr.mxu0 0.0
        %4161 = vmatpush1.msra.mxu0 0.0
        %4162 = vmatprep.subr.mxu0 0.0
        %4163 = vmatpush1.msra.mxu0 0.0
        %4164 = vmatprep.subr.mxu0 0.0
        %4165 = vmatpush1.msra.mxu0 0.0
        %4166 = vmatprep.subr.mxu0 0.0
        %4167 = vmatpush1.msra.mxu0 0.0
        %4168 = vmatprep.subr.mxu0 0.0
        %4169 = vmatpush1.msra.mxu0 %v285
        %4170 = vmatprep.subr.mxu0 0.0
        %4171 = vmatpush2.msra.mxu0 0.0
        %4172 = vmatprep.subr.mxu0 0.0
        %4173 = vmatpush2.msra.mxu0 0.0
        %4174 = vmatprep.subr.mxu0 0.0
        %4175 = vmatpush2.msra.mxu0 0.0
        %4176 = vmatprep.subr.mxu0 0.0
        %4177 = vmatpush2.msra.mxu0 0.0
        %4178 = vmatprep.subr.mxu0 0.0
        %4179 = vmatpush2.msra.mxu0 0.0
        %4180 = vmatprep.subr.mxu0 0.0
        %4181 = vmatpush2.msra.mxu0 0.0
        %4182 = vmatprep.subr.mxu0 0.0
        %4183 = vmatpush2.msra.mxu0 0.0
        %4184 = vmatprep.subr.mxu0 0.0
        %4185 = vmatpush2.msra.mxu0 0.0
        %4186 = vmatprep.subr.mxu0 0.0
        %4187 = vmatpush2.msra.mxu0 0.0
        %4188 = vmatprep.subr.mxu0 0.0
        %4189 = vmatpush2.msra.mxu0 0.0
        %4190 = vmatprep.subr.mxu0 0.0
        %4191 = vmatpush2.msra.mxu0 0.0
        %4192 = vmatprep.subr.mxu0 0.0
        %4193 = vmatpush2.msra.mxu0 0.0
        %4194 = vmatprep.subr.mxu0 0.0
        %4195 = vmatpush2.msra.mxu0 0.0
        %4196 = vmatprep.subr.mxu0 0.0
        %4197 = vmatpush2.msra.mxu0 0.0
        %4198 = vmatprep.subr.mxu0 0.0
        %4199 = vmatpush2.msra.mxu0 0.0
        %4200 = vmatprep.subr.mxu0 0.0
        %4201 = vmatpush2.msra.mxu0 0.0
        %4202 = vmatprep.mubr.f32.mxu0 0.0
        %4203 = vmatmul.mubr.f32.gmra.mxu0 %v4136
        %v4204 = vpop.f32.mrf.mxu0
        %v4205 = vadd.f32 0.0, %v4204
        %v4206 = vpop.f32.mrf.mxu0
        %4207 = vdwg.mxu0
        %v4209 = vsel %vm586, %v4062, 0
        %4211 = vmatprep.subr.mxu0 0.0
        %4212 = vmatpush1.msra.mxu0 0.0
        %4213 = vmatprep.subr.mxu0 0.0
        %4214 = vmatpush1.msra.mxu0 0.0
        %4215 = vmatprep.subr.mxu0 0.0
        %4216 = vmatpush1.msra.mxu0 0.0
        %4217 = vmatprep.subr.mxu0 0.0
        %4218 = vmatpush1.msra.mxu0 0.0
        %4219 = vmatprep.subr.mxu0 0.0
        %4220 = vmatpush1.msra.mxu0 0.0
        %4221 = vmatprep.subr.mxu0 0.0
        %4222 = vmatpush1.msra.mxu0 0.0
        %4223 = vmatprep.subr.mxu0 0.0
        %4224 = vmatpush1.msra.mxu0 0.0
        %4225 = vmatprep.subr.mxu0 0.0
        %4226 = vmatpush1.msra.mxu0 0.0
        %4227 = vmatprep.subr.mxu0 0.0
        %4228 = vmatpush1.msra.mxu0 0.0
        %4229 = vmatprep.subr.mxu0 0.0
        %4230 = vmatpush1.msra.mxu0 0.0
        %4231 = vmatprep.subr.mxu0 0.0
        %4232 = vmatpush1.msra.mxu0 0.0
        %4233 = vmatprep.subr.mxu0 0.0
        %4234 = vmatpush1.msra.mxu0 0.0
        %4235 = vmatprep.subr.mxu0 0.0
        %4236 = vmatpush1.msra.mxu0 0.0
        %4237 = vmatprep.subr.mxu0 0.0
        %4238 = vmatpush1.msra.mxu0 0.0
        %4239 = vmatprep.subr.mxu0 0.0
        %4240 = vmatpush1.msra.mxu0 0.0
        %4241 = vmatprep.subr.mxu0 0.0
        %4242 = vmatpush1.msra.mxu0 %v281
        %4243 = vmatprep.subr.mxu0 0.0
        %4244 = vmatpush2.msra.mxu0 0.0
        %4245 = vmatprep.subr.mxu0 0.0
        %4246 = vmatpush2.msra.mxu0 0.0
        %4247 = vmatprep.subr.mxu0 0.0
        %4248 = vmatpush2.msra.mxu0 0.0
        %4249 = vmatprep.subr.mxu0 0.0
        %4250 = vmatpush2.msra.mxu0 0.0
        %4251 = vmatprep.subr.mxu0 0.0
        %4252 = vmatpush2.msra.mxu0 0.0
        %4253 = vmatprep.subr.mxu0 0.0
        %4254 = vmatpush2.msra.mxu0 0.0
        %4255 = vmatprep.subr.mxu0 0.0
        %4256 = vmatpush2.msra.mxu0 0.0
        %4257 = vmatprep.subr.mxu0 0.0
        %4258 = vmatpush2.msra.mxu0 0.0
        %4259 = vmatprep.subr.mxu0 0.0
        %4260 = vmatpush2.msra.mxu0 0.0
        %4261 = vmatprep.subr.mxu0 0.0
        %4262 = vmatpush2.msra.mxu0 0.0
        %4263 = vmatprep.subr.mxu0 0.0
        %4264 = vmatpush2.msra.mxu0 0.0
        %4265 = vmatprep.subr.mxu0 0.0
        %4266 = vmatpush2.msra.mxu0 0.0
        %4267 = vmatprep.subr.mxu0 0.0
        %4268 = vmatpush2.msra.mxu0 0.0
        %4269 = vmatprep.subr.mxu0 0.0
        %4270 = vmatpush2.msra.mxu0 0.0
        %4271 = vmatprep.subr.mxu0 0.0
        %4272 = vmatpush2.msra.mxu0 0.0
        %4273 = vmatprep.subr.mxu0 0.0
        %4274 = vmatpush2.msra.mxu0 0.0
        %4275 = vmatprep.mubr.f32.mxu0 0.0
        %4276 = vmatmul.mubr.f32.gmra.mxu0 %v4209
        %v4277 = vpop.f32.mrf.mxu0
        %v4278 = vadd.f32 %v4205, %v4277
        %v4279 = vpop.f32.mrf.mxu0
        %4280 = vdwg.mxu0
        %4281 = vmatprep.subr.mxu0 0.0
        %4282 = vmatpush1.msra.mxu0 0.0
        %4283 = vmatprep.subr.mxu0 0.0
        %4284 = vmatpush1.msra.mxu0 0.0
        %4285 = vmatprep.subr.mxu0 0.0
        %4286 = vmatpush1.msra.mxu0 0.0
        %4287 = vmatprep.subr.mxu0 0.0
        %4288 = vmatpush1.msra.mxu0 0.0
        %4289 = vmatprep.subr.mxu0 0.0
        %4290 = vmatpush1.msra.mxu0 0.0
        %4291 = vmatprep.subr.mxu0 0.0
        %4292 = vmatpush1.msra.mxu0 0.0
        %4293 = vmatprep.subr.mxu0 0.0
        %4294 = vmatpush1.msra.mxu0 0.0
        %4295 = vmatprep.subr.mxu0 0.0
        %4296 = vmatpush1.msra.mxu0 0.0
        %4297 = vmatprep.subr.mxu0 0.0
        %4298 = vmatpush1.msra.mxu0 0.0
        %4299 = vmatprep.subr.mxu0 0.0
        %4300 = vmatpush1.msra.mxu0 0.0
        %4301 = vmatprep.subr.mxu0 0.0
        %4302 = vmatpush1.msra.mxu0 0.0
        %4303 = vmatprep.subr.mxu0 0.0
        %4304 = vmatpush1.msra.mxu0 0.0
        %4305 = vmatprep.subr.mxu0 0.0
        %4306 = vmatpush1.msra.mxu0 0.0
        %4307 = vmatprep.subr.mxu0 0.0
        %4308 = vmatpush1.msra.mxu0 0.0
        %4309 = vmatprep.subr.mxu0 0.0
        %4310 = vmatpush1.msra.mxu0 %v3977
        %4311 = vmatprep.subr.mxu0 0.0
        %4312 = vmatpush1.msra.mxu0 %v3972
        %4313 = vmatprep.subr.mxu0 0.0
        %4314 = vmatpush2.msra.mxu0 0.0
        %4315 = vmatprep.subr.mxu0 0.0
        %4316 = vmatpush2.msra.mxu0 0.0
        %4317 = vmatprep.subr.mxu0 0.0
        %4318 = vmatpush2.msra.mxu0 0.0
        %4319 = vmatprep.subr.mxu0 0.0
        %4320 = vmatpush2.msra.mxu0 0.0
        %4321 = vmatprep.subr.mxu0 0.0
        %4322 = vmatpush2.msra.mxu0 0.0
        %4323 = vmatprep.subr.mxu0 0.0
        %4324 = vmatpush2.msra.mxu0 0.0
        %4325 = vmatprep.subr.mxu0 0.0
        %4326 = vmatpush2.msra.mxu0 0.0
        %4327 = vmatprep.subr.mxu0 0.0
        %4328 = vmatpush2.msra.mxu0 0.0
        %4329 = vmatprep.subr.mxu0 0.0
        %4330 = vmatpush2.msra.mxu0 0.0
        %4331 = vmatprep.subr.mxu0 0.0
        %4332 = vmatpush2.msra.mxu0 0.0
        %4333 = vmatprep.subr.mxu0 0.0
        %4334 = vmatpush2.msra.mxu0 0.0
        %4335 = vmatprep.subr.mxu0 0.0
        %4336 = vmatpush2.msra.mxu0 0.0
        %4337 = vmatprep.subr.mxu0 0.0
        %4338 = vmatpush2.msra.mxu0 0.0
        %4339 = vmatprep.subr.mxu0 0.0
        %4340 = vmatpush2.msra.mxu0 0.0
        %4341 = vmatprep.subr.mxu0 0.0
        %4342 = vmatpush2.msra.mxu0 0.0
        %4343 = vmatprep.subr.mxu0 0.0
        %4344 = vmatpush2.msra.mxu0 0.0
        %4345 = vmatprep.mubr.f32.mxu0 0.0
        %4346 = vmatmul.mubr.f32.gmra.mxu0 %v3993
        %v4347 = vpop.f32.mrf.mxu0
        %v4348 = vadd.f32 0.0, %v4347
        %v4349 = vpop.f32.mrf.mxu0
        %4350 = vdwg.mxu0
        %v4352 = vsel %vm586, %v4348, 0
        %4354 = vmatprep.subr.mxu0 0.0
        %4355 = vmatpush1.msra.mxu0 0.0
        %4356 = vmatprep.subr.mxu0 0.0
        %4357 = vmatpush1.msra.mxu0 0.0
        %4358 = vmatprep.subr.mxu0 0.0
        %4359 = vmatpush1.msra.mxu0 0.0
        %4360 = vmatprep.subr.mxu0 0.0
        %4361 = vmatpush1.msra.mxu0 0.0
        %4362 = vmatprep.subr.mxu0 0.0
        %4363 = vmatpush1.msra.mxu0 0.0
        %4364 = vmatprep.subr.mxu0 0.0
        %4365 = vmatpush1.msra.mxu0 0.0
        %4366 = vmatprep.subr.mxu0 0.0
        %4367 = vmatpush1.msra.mxu0 0.0
        %4368 = vmatprep.subr.mxu0 0.0
        %4369 = vmatpush1.msra.mxu0 0.0
        %4370 = vmatprep.subr.mxu0 0.0
        %4371 = vmatpush1.msra.mxu0 0.0
        %4372 = vmatprep.subr.mxu0 0.0
        %4373 = vmatpush1.msra.mxu0 0.0
        %4374 = vmatprep.subr.mxu0 0.0
        %4375 = vmatpush1.msra.mxu0 0.0
        %4376 = vmatprep.subr.mxu0 0.0
        %4377 = vmatpush1.msra.mxu0 0.0
        %4378 = vmatprep.subr.mxu0 0.0
        %4379 = vmatpush1.msra.mxu0 0.0
        %4380 = vmatprep.subr.mxu0 0.0
        %4381 = vmatpush1.msra.mxu0 0.0
        %4382 = vmatprep.subr.mxu0 0.0
        %4383 = vmatpush1.msra.mxu0 0.0
        %4384 = vmatprep.subr.mxu0 0.0
        %4385 = vmatpush1.msra.mxu0 %v289
        %4386 = vmatprep.subr.mxu0 0.0
        %4387 = vmatpush2.msra.mxu0 0.0
        %4388 = vmatprep.subr.mxu0 0.0
        %4389 = vmatpush2.msra.mxu0 0.0
        %4390 = vmatprep.subr.mxu0 0.0
        %4391 = vmatpush2.msra.mxu0 0.0
        %4392 = vmatprep.subr.mxu0 0.0
        %4393 = vmatpush2.msra.mxu0 0.0
        %4394 = vmatprep.subr.mxu0 0.0
        %4395 = vmatpush2.msra.mxu0 0.0
        %4396 = vmatprep.subr.mxu0 0.0
        %4397 = vmatpush2.msra.mxu0 0.0
        %4398 = vmatprep.subr.mxu0 0.0
        %4399 = vmatpush2.msra.mxu0 0.0
        %4400 = vmatprep.subr.mxu0 0.0
        %4401 = vmatpush2.msra.mxu0 0.0
        %4402 = vmatprep.subr.mxu0 0.0
        %4403 = vmatpush2.msra.mxu0 0.0
        %4404 = vmatprep.subr.mxu0 0.0
        %4405 = vmatpush2.msra.mxu0 0.0
        %4406 = vmatprep.subr.mxu0 0.0
        %4407 = vmatpush2.msra.mxu0 0.0
        %4408 = vmatprep.subr.mxu0 0.0
        %4409 = vmatpush2.msra.mxu0 0.0
        %4410 = vmatprep.subr.mxu0 0.0
        %4411 = vmatpush2.msra.mxu0 0.0
        %4412 = vmatprep.subr.mxu0 0.0
        %4413 = vmatpush2.msra.mxu0 0.0
        %4414 = vmatprep.subr.mxu0 0.0
        %4415 = vmatpush2.msra.mxu0 0.0
        %4416 = vmatprep.subr.mxu0 0.0
        %4417 = vmatpush2.msra.mxu0 0.0
        %4418 = vmatprep.mubr.f32.mxu0 0.0
        %4419 = vmatmul.mubr.f32.gmra.mxu0 %v4352
        %v4420 = vpop.f32.mrf.mxu0
        %v4421 = vadd.f32 0.0, %v4420
        %v4422 = vpop.f32.mrf.mxu0
        %4423 = vdwg.mxu0
        %v4424 = vadd.f32 %v4278, %v4421
        %4425 = vmatprep.subr.mxu0 0.0
        %4426 = vmatpush1.msra.mxu0 0.0
        %4427 = vmatprep.subr.mxu0 0.0
        %4428 = vmatpush1.msra.mxu0 0.0
        %4429 = vmatprep.subr.mxu0 0.0
        %4430 = vmatpush1.msra.mxu0 0.0
        %4431 = vmatprep.subr.mxu0 0.0
        %4432 = vmatpush1.msra.mxu0 0.0
        %4433 = vmatprep.subr.mxu0 0.0
        %4434 = vmatpush1.msra.mxu0 0.0
        %4435 = vmatprep.subr.mxu0 0.0
        %4436 = vmatpush1.msra.mxu0 0.0
        %4437 = vmatprep.subr.mxu0 0.0
        %4438 = vmatpush1.msra.mxu0 0.0
        %4439 = vmatprep.subr.mxu0 0.0
        %4440 = vmatpush1.msra.mxu0 0.0
        %4441 = vmatprep.subr.mxu0 0.0
        %4442 = vmatpush1.msra.mxu0 0.0
        %4443 = vmatprep.subr.mxu0 0.0
        %4444 = vmatpush1.msra.mxu0 0.0
        %4445 = vmatprep.subr.mxu0 0.0
        %4446 = vmatpush1.msra.mxu0 0.0
        %4447 = vmatprep.subr.mxu0 0.0
        %4448 = vmatpush1.msra.mxu0 0.0
        %4449 = vmatprep.subr.mxu0 0.0
        %4450 = vmatpush1.msra.mxu0 0.0
        %4451 = vmatprep.subr.mxu0 0.0
        %4452 = vmatpush1.msra.mxu0 0.0
        %4453 = vmatprep.subr.mxu0 0.0
        %4454 = vmatpush1.msra.mxu0 %v3987
        %4455 = vmatprep.subr.mxu0 0.0
        %4456 = vmatpush1.msra.mxu0 %v3982
        %4457 = vmatprep.subr.mxu0 0.0
        %4458 = vmatpush2.msra.mxu0 0.0
        %4459 = vmatprep.subr.mxu0 0.0
        %4460 = vmatpush2.msra.mxu0 0.0
        %4461 = vmatprep.subr.mxu0 0.0
        %4462 = vmatpush2.msra.mxu0 0.0
        %4463 = vmatprep.subr.mxu0 0.0
        %4464 = vmatpush2.msra.mxu0 0.0
        %4465 = vmatprep.subr.mxu0 0.0
        %4466 = vmatpush2.msra.mxu0 0.0
        %4467 = vmatprep.subr.mxu0 0.0
        %4468 = vmatpush2.msra.mxu0 0.0
        %4469 = vmatprep.subr.mxu0 0.0
        %4470 = vmatpush2.msra.mxu0 0.0
        %4471 = vmatprep.subr.mxu0 0.0
        %4472 = vmatpush2.msra.mxu0 0.0
        %4473 = vmatprep.subr.mxu0 0.0
        %4474 = vmatpush2.msra.mxu0 0.0
        %4475 = vmatprep.subr.mxu0 0.0
        %4476 = vmatpush2.msra.mxu0 0.0
        %4477 = vmatprep.subr.mxu0 0.0
        %4478 = vmatpush2.msra.mxu0 0.0
        %4479 = vmatprep.subr.mxu0 0.0
        %4480 = vmatpush2.msra.mxu0 0.0
        %4481 = vmatprep.subr.mxu0 0.0
        %4482 = vmatpush2.msra.mxu0 0.0
        %4483 = vmatprep.subr.mxu0 0.0
        %4484 = vmatpush2.msra.mxu0 0.0
        %4485 = vmatprep.subr.mxu0 0.0
        %4486 = vmatpush2.msra.mxu0 0.0
        %4487 = vmatprep.subr.mxu0 0.0
        %4488 = vmatpush2.msra.mxu0 0.0
        %4489 = vmatprep.mubr.f32.mxu0 0.0
        %4490 = vmatmul.mubr.f32.gmra.mxu0 %v3993
        %v4491 = vpop.f32.mrf.mxu0
        %v4492 = vadd.f32 0.0, %v4491
        %v4493 = vpop.f32.mrf.mxu0
        %4494 = vdwg.mxu0
        %v4496 = vsel %vm586, %v4492, 0
        %4498 = vmatprep.subr.mxu0 0.0
        %4499 = vmatpush1.msra.mxu0 0.0
        %4500 = vmatprep.subr.mxu0 0.0
        %4501 = vmatpush1.msra.mxu0 0.0
        %4502 = vmatprep.subr.mxu0 0.0
        %4503 = vmatpush1.msra.mxu0 0.0
        %4504 = vmatprep.subr.mxu0 0.0
        %4505 = vmatpush1.msra.mxu0 0.0
        %4506 = vmatprep.subr.mxu0 0.0
        %4507 = vmatpush1.msra.mxu0 0.0
        %4508 = vmatprep.subr.mxu0 0.0
        %4509 = vmatpush1.msra.mxu0 0.0
        %4510 = vmatprep.subr.mxu0 0.0
        %4511 = vmatpush1.msra.mxu0 0.0
        %4512 = vmatprep.subr.mxu0 0.0
        %4513 = vmatpush1.msra.mxu0 0.0
        %4514 = vmatprep.subr.mxu0 0.0
        %4515 = vmatpush1.msra.mxu0 0.0
        %4516 = vmatprep.subr.mxu0 0.0
        %4517 = vmatpush1.msra.mxu0 0.0
        %4518 = vmatprep.subr.mxu0 0.0
        %4519 = vmatpush1.msra.mxu0 0.0
        %4520 = vmatprep.subr.mxu0 0.0
        %4521 = vmatpush1.msra.mxu0 0.0
        %4522 = vmatprep.subr.mxu0 0.0
        %4523 = vmatpush1.msra.mxu0 0.0
        %4524 = vmatprep.subr.mxu0 0.0
        %4525 = vmatpush1.msra.mxu0 0.0
        %4526 = vmatprep.subr.mxu0 0.0
        %4527 = vmatpush1.msra.mxu0 0.0
        %4528 = vmatprep.subr.mxu0 0.0
        %4529 = vmatpush1.msra.mxu0 %v293
        %4530 = vmatprep.subr.mxu0 0.0
        %4531 = vmatpush2.msra.mxu0 0.0
        %4532 = vmatprep.subr.mxu0 0.0
        %4533 = vmatpush2.msra.mxu0 0.0
        %4534 = vmatprep.subr.mxu0 0.0
        %4535 = vmatpush2.msra.mxu0 0.0
        %4536 = vmatprep.subr.mxu0 0.0
        %4537 = vmatpush2.msra.mxu0 0.0
        %4538 = vmatprep.subr.mxu0 0.0
        %4539 = vmatpush2.msra.mxu0 0.0
        %4540 = vmatprep.subr.mxu0 0.0
        %4541 = vmatpush2.msra.mxu0 0.0
        %4542 = vmatprep.subr.mxu0 0.0
        %4543 = vmatpush2.msra.mxu0 0.0
        %4544 = vmatprep.subr.mxu0 0.0
        %4545 = vmatpush2.msra.mxu0 0.0
        %4546 = vmatprep.subr.mxu0 0.0
        %4547 = vmatpush2.msra.mxu0 0.0
        %4548 = vmatprep.subr.mxu0 0.0
        %4549 = vmatpush2.msra.mxu0 0.0
        %4550 = vmatprep.subr.mxu0 0.0
        %4551 = vmatpush2.msra.mxu0 0.0
        %4552 = vmatprep.subr.mxu0 0.0
        %4553 = vmatpush2.msra.mxu0 0.0
        %4554 = vmatprep.subr.mxu0 0.0
        %4555 = vmatpush2.msra.mxu0 0.0
        %4556 = vmatprep.subr.mxu0 0.0
        %4557 = vmatpush2.msra.mxu0 0.0
        %4558 = vmatprep.subr.mxu0 0.0
        %4559 = vmatpush2.msra.mxu0 0.0
        %4560 = vmatprep.subr.mxu0 0.0
        %4561 = vmatpush2.msra.mxu0 0.0
        %4562 = vmatprep.mubr.f32.mxu0 0.0
        %4563 = vmatmul.mubr.f32.gmra.mxu0 %v4496
        %v4564 = vpop.f32.mrf.mxu0
        %v4565 = vadd.f32 0.0, %v4564
        %v4566 = vpop.f32.mrf.mxu0
        %4567 = vdwg.mxu0
        %v4568 = vadd.f32 %v4424, %v4565
        %v4569 = vadd.s32 %v1025, 4
        %vm4570 = vcmp.eq.s32.totalorder %v276, %v4569
        %vm4571 = vcmp.eq.s32.totalorder %v282, %v4569
        %vm4572 = vcmp.eq.s32.totalorder %v286, %v4569
        %vm4573 = vcmp.eq.s32.totalorder %v290, %v4569
        %vm4574 = vcmp.eq.s32.totalorder %v1021, %v4569
        %vm4575 = vcmp.eq.s32.totalorder %v1022, %v4569
        %vm4576 = vcmp.eq.s32.totalorder %v1023, %v4569
        %vm4577 = vcmp.eq.s32.totalorder %v1024, %v4569
        %v4578 = vsel %vm4570, 1, 0
        %v4579 = vsel %vm4571, 1, 0
        %v4580 = vsel %vm4572, 1, 0
        %v4581 = vsel %vm4573, 1, 0
        %v4582 = vsel %vm4574, 1, 0
        %v4583 = vsel %vm4575, 1, 0
        %v4584 = vsel %vm4576, 1, 0
        %v4585 = vsel %vm4577, 1, 0
        %v4586 = vcvt.s32.f32 %v4578
        %v4587 = vcvt.s32.f32 %v4579
        %v4588 = vcvt.s32.f32 %v4580
        %v4589 = vcvt.s32.f32 %v4581
        %v4590 = vcvt.s32.f32 %v4582
        %v4591 = vcvt.s32.f32 %v4583
        %v4592 = vcvt.s32.f32 %v4584
        %v4593 = vcvt.s32.f32 %v4585
        %v4595 = vsel %vm586, %v4586, 0
        %v4598 = vsel %vm586, %v4587, 0
        %v4601 = vsel %vm586, %v4588, 0
        %v4604 = vsel %vm586, %v4589, 0
        %v4607 = vsel %vm586, %v4590, 0
        %v4610 = vsel %vm586, %v4591, 0
        %v4613 = vsel %vm586, %v4592, 0
        %v4616 = vsel %vm586, %v4593, 0
        %4618 = vmatprep.subr.mxu0 0.0
        %4619 = vmatpush1.msra.mxu0 0.0
        %4620 = vmatprep.subr.mxu0 0.0
        %4621 = vmatpush1.msra.mxu0 0.0
        %4622 = vmatprep.subr.mxu0 0.0
        %4623 = vmatpush1.msra.mxu0 0.0
        %4624 = vmatprep.subr.mxu0 0.0
        %4625 = vmatpush1.msra.mxu0 0.0
        %4626 = vmatprep.subr.mxu0 0.0
        %4627 = vmatpush1.msra.mxu0 0.0
        %4628 = vmatprep.subr.mxu0 0.0
        %4629 = vmatpush1.msra.mxu0 0.0
        %4630 = vmatprep.subr.mxu0 0.0
        %4631 = vmatpush1.msra.mxu0 0.0
        %4632 = vmatprep.subr.mxu0 0.0
        %4633 = vmatpush1.msra.mxu0 0.0
        %4634 = vmatprep.subr.mxu0 0.0
        %4635 = vmatpush1.msra.mxu0 0.0
        %4636 = vmatprep.subr.mxu0 0.0
        %4637 = vmatpush1.msra.mxu0 0.0
        %4638 = vmatprep.subr.mxu0 0.0
        %4639 = vmatpush1.msra.mxu0 0.0
        %4640 = vmatprep.subr.mxu0 0.0
        %4641 = vmatpush1.msra.mxu0 0.0
        %4642 = vmatprep.subr.mxu0 0.0
        %4643 = vmatpush1.msra.mxu0 0.0
        %4644 = vmatprep.subr.mxu0 0.0
        %4645 = vmatpush1.msra.mxu0 0.0
        %4646 = vmatprep.subr.mxu0 0.0
        %4647 = vmatpush1.msra.mxu0 0.0
        %4648 = vmatprep.subr.mxu0 0.0
        %4649 = vmatpush1.msra.mxu0 %v4568
        %4650 = vmatprep.subr.mxu0 0.0
        %4651 = vmatpush2.msra.mxu0 0.0
        %4652 = vmatprep.subr.mxu0 0.0
        %4653 = vmatpush2.msra.mxu0 0.0
        %4654 = vmatprep.subr.mxu0 0.0
        %4655 = vmatpush2.msra.mxu0 0.0
        %4656 = vmatprep.subr.mxu0 0.0
        %4657 = vmatpush2.msra.mxu0 0.0
        %4658 = vmatprep.subr.mxu0 0.0
        %4659 = vmatpush2.msra.mxu0 0.0
        %4660 = vmatprep.subr.mxu0 0.0
        %4661 = vmatpush2.msra.mxu0 0.0
        %4662 = vmatprep.subr.mxu0 0.0
        %4663 = vmatpush2.msra.mxu0 0.0
        %4664 = vmatprep.subr.mxu0 0.0
        %4665 = vmatpush2.msra.mxu0 0.0
        %4666 = vmatprep.subr.mxu0 0.0
        %4667 = vmatpush2.msra.mxu0 0.0
        %4668 = vmatprep.subr.mxu0 0.0
        %4669 = vmatpush2.msra.mxu0 0.0
        %4670 = vmatprep.subr.mxu0 0.0
        %4671 = vmatpush2.msra.mxu0 0.0
        %4672 = vmatprep.subr.mxu0 0.0
        %4673 = vmatpush2.msra.mxu0 0.0
        %4674 = vmatprep.subr.mxu0 0.0
        %4675 = vmatpush2.msra.mxu0 0.0
        %4676 = vmatprep.subr.mxu0 0.0
        %4677 = vmatpush2.msra.mxu0 0.0
        %4678 = vmatprep.subr.mxu0 0.0
        %4679 = vmatpush2.msra.mxu0 0.0
        %4680 = vmatprep.subr.mxu0 0.0
        %4681 = vmatpush2.msra.mxu0 0.0
        %4682 = vmatprep.mubr.f32.mxu0 0.0
        %4683 = vmatmul.mubr.f32.gmra.mxu0 %v4595
        %v4684 = vpop.f32.mrf.mxu0
        %v4685 = vadd.f32 0.0, %v4684
        %v4686 = vpop.f32.mrf.mxu0
        %4687 = vmatprep.mubr.f32.mxu0 0.0
        %4688 = vmatmul.mubr.f32.gmra.mxu0 %v4598
        %v4689 = vpop.f32.mrf.mxu0
        %v4690 = vadd.f32 0.0, %v4689
        %v4691 = vpop.f32.mrf.mxu0
        %4692 = vmatprep.mubr.f32.mxu0 0.0
        %4693 = vmatmul.mubr.f32.gmra.mxu0 %v4601
        %v4694 = vpop.f32.mrf.mxu0
        %v4695 = vadd.f32 0.0, %v4694
        %v4696 = vpop.f32.mrf.mxu0
        %4697 = vmatprep.mubr.f32.mxu0 0.0
        %4698 = vmatmul.mubr.f32.gmra.mxu0 %v4604
        %v4699 = vpop.f32.mrf.mxu0
        %v4700 = vadd.f32 0.0, %v4699
        %v4701 = vpop.f32.mrf.mxu0
        %4702 = vmatprep.mubr.f32.mxu0 0.0
        %4703 = vmatmul.mubr.f32.gmra.mxu0 %v4607
        %v4704 = vpop.f32.mrf.mxu0
        %v4705 = vadd.f32 0.0, %v4704
        %v4706 = vpop.f32.mrf.mxu0
        %4707 = vmatprep.mubr.f32.mxu0 0.0
        %4708 = vmatmul.mubr.f32.gmra.mxu0 %v4610
        %v4709 = vpop.f32.mrf.mxu0
        %v4710 = vadd.f32 0.0, %v4709
        %v4711 = vpop.f32.mrf.mxu0
        %4712 = vmatprep.mubr.f32.mxu0 0.0
        %4713 = vmatmul.mubr.f32.gmra.mxu0 %v4613
        %v4714 = vpop.f32.mrf.mxu0
        %v4715 = vadd.f32 0.0, %v4714
        %v4716 = vpop.f32.mrf.mxu0
        %4717 = vmatprep.mubr.f32.mxu0 0.0
        %4718 = vmatmul.mubr.f32.gmra.mxu0 %v4616
        %v4719 = vpop.f32.mrf.mxu0
        %v4720 = vadd.f32 0.0, %v4719
        %v4721 = vpop.f32.mrf.mxu0
        %4722 = vdwg.mxu0
        %v4723 = vadd.f32 %v3833, %v4685
        %v4724 = vadd.f32 %v3834, %v4690
        %v4725 = vadd.f32 %v3835, %v4695
        %v4726 = vadd.f32 %v3836, %v4700
        %v4727 = vadd.f32 %v3837, %v4705
        %v4728 = vadd.f32 %v3838, %v4710
        %v4729 = vadd.f32 %v3839, %v4715
        %v4730 = vadd.f32 %v3840, %v4720
        %s4731 = scalar_lea.vmem %s260, 160
        %v4732 = vld [vmem:[%s4731] sm:$0xf]
        %v4733 = vld [vmem:[%s4731 + $0x4] sm:$0xf]
        %v4734 = vld [vmem:[%s4731 + $0x8] sm:$0xf]
        %v4735 = vld [vmem:[%s4731 + $0xc] sm:$0xf]
        %v4736 = vld [vmem:[%s4731 + $0x10] sm:$0xf]
        %v4737 = vld [vmem:[%s4731 + $0x14] sm:$0xf]
        %v4738 = vld [vmem:[%s4731 + $0x18] sm:$0xf]
        %v4739 = vld [vmem:[%s4731 + $0x1c] sm:$0xf]
        %v4740 = vunpack.c.l.bf16 %v4732
        %v4741 = vunpack.c.l.bf16 %v4733
        %v4742 = vunpack.c.l.bf16 %v4734
        %v4743 = vunpack.c.l.bf16 %v4735
        %v4744 = vunpack.c.l.bf16 %v4736
        %v4745 = vunpack.c.l.bf16 %v4737
        %v4746 = vunpack.c.l.bf16 %v4738
        %v4747 = vunpack.c.l.bf16 %v4739
        %s4748 = scalar_lea.vmem %s273, 80
        %v4749 = vld [vmem:[%s4748] sm:$0xff]
        %v4750 = vld [vmem:[%s4748 + $0x8] sm:$0xff]
        %v4752 = vsel %vm312, %v4740, 0
        %v4755 = vsel %vm312, %v4741, 0
        %v4758 = vsel %vm312, %v4742, 0
        %v4761 = vsel %vm312, %v4743, 0
        %v4764 = vsel %vm312, %v4744, 0
        %v4767 = vsel %vm312, %v4745, 0
        %v4770 = vsel %vm312, %v4746, 0
        %v4773 = vsel %vm312, %v4747, 0
        %4775 = vmatprep.subr.mxu0 0.0
        %4776 = vmatpush1.msra.mxu0 0.0
        %4777 = vmatprep.subr.mxu0 0.0
        %4778 = vmatpush1.msra.mxu0 0.0
        %4779 = vmatprep.subr.mxu0 0.0
        %4780 = vmatpush1.msra.mxu0 0.0
        %4781 = vmatprep.subr.mxu0 0.0
        %4782 = vmatpush1.msra.mxu0 0.0
        %4783 = vmatprep.subr.mxu0 0.0
        %4784 = vmatpush1.msra.mxu0 0.0
        %4785 = vmatprep.subr.mxu0 0.0
        %4786 = vmatpush1.msra.mxu0 0.0
        %4787 = vmatprep.subr.mxu0 0.0
        %4788 = vmatpush1.msra.mxu0 0.0
        %4789 = vmatprep.subr.mxu0 0.0
        %4790 = vmatpush1.msra.mxu0 0.0
        %4791 = vmatprep.subr.mxu0 0.0
        %4792 = vmatpush1.msra.mxu0 0.0
        %4793 = vmatprep.subr.mxu0 0.0
        %4794 = vmatpush1.msra.mxu0 0.0
        %4795 = vmatprep.subr.mxu0 0.0
        %4796 = vmatpush1.msra.mxu0 0.0
        %4797 = vmatprep.subr.mxu0 0.0
        %4798 = vmatpush1.msra.mxu0 0.0
        %4799 = vmatprep.subr.mxu0 0.0
        %4800 = vmatpush1.msra.mxu0 0.0
        %4801 = vmatprep.subr.mxu0 0.0
        %4802 = vmatpush1.msra.mxu0 0.0
        %4803 = vmatprep.subr.mxu0 0.0
        %4804 = vmatpush1.msra.mxu0 %v4750
        %4805 = vmatprep.subr.mxu0 0.0
        %4806 = vmatpush1.msra.mxu0 %v4749
        %4807 = vmatprep.subr.mxu0 0.0
        %4808 = vmatpush2.msra.mxu0 0.0
        %4809 = vmatprep.subr.mxu0 0.0
        %4810 = vmatpush2.msra.mxu0 0.0
        %4811 = vmatprep.subr.mxu0 0.0
        %4812 = vmatpush2.msra.mxu0 0.0
        %4813 = vmatprep.subr.mxu0 0.0
        %4814 = vmatpush2.msra.mxu0 0.0
        %4815 = vmatprep.subr.mxu0 0.0
        %4816 = vmatpush2.msra.mxu0 0.0
        %4817 = vmatprep.subr.mxu0 0.0
        %4818 = vmatpush2.msra.mxu0 0.0
        %4819 = vmatprep.subr.mxu0 0.0
        %4820 = vmatpush2.msra.mxu0 0.0
        %4821 = vmatprep.subr.mxu0 0.0
        %4822 = vmatpush2.msra.mxu0 0.0
        %4823 = vmatprep.subr.mxu0 0.0
        %4824 = vmatpush2.msra.mxu0 0.0
        %4825 = vmatprep.subr.mxu0 0.0
        %4826 = vmatpush2.msra.mxu0 0.0
        %4827 = vmatprep.subr.mxu0 0.0
        %4828 = vmatpush2.msra.mxu0 0.0
        %4829 = vmatprep.subr.mxu0 0.0
        %4830 = vmatpush2.msra.mxu0 0.0
        %4831 = vmatprep.subr.mxu0 0.0
        %4832 = vmatpush2.msra.mxu0 0.0
        %4833 = vmatprep.subr.mxu0 0.0
        %4834 = vmatpush2.msra.mxu0 0.0
        %4835 = vmatprep.subr.mxu0 0.0
        %4836 = vmatpush2.msra.mxu0 0.0
        %4837 = vmatprep.subr.mxu0 0.0
        %4838 = vmatpush2.msra.mxu0 0.0
        %4839 = vmatprep.mubr.f32.mxu0 0.0
        %4840 = vmatmul.mubr.f32.gmra.mxu0 %v4752
        %v4841 = vpop.f32.mrf.mxu0
        %v4842 = vadd.f32 0.0, %v4841
        %v4843 = vpop.f32.mrf.mxu0
        %4844 = vmatprep.mubr.f32.mxu0 0.0
        %4845 = vmatmul.mubr.f32.gmra.mxu0 %v4755
        %v4846 = vpop.f32.mrf.mxu0
        %v4847 = vadd.f32 0.0, %v4846
        %v4848 = vpop.f32.mrf.mxu0
        %4849 = vmatprep.mubr.f32.mxu0 0.0
        %4850 = vmatmul.mubr.f32.gmra.mxu0 %v4758
        %v4851 = vpop.f32.mrf.mxu0
        %v4852 = vadd.f32 0.0, %v4851
        %v4853 = vpop.f32.mrf.mxu0
        %4854 = vmatprep.mubr.f32.mxu0 0.0
        %4855 = vmatmul.mubr.f32.gmra.mxu0 %v4761
        %v4856 = vpop.f32.mrf.mxu0
        %v4857 = vadd.f32 0.0, %v4856
        %v4858 = vpop.f32.mrf.mxu0
        %4859 = vmatprep.mubr.f32.mxu0 0.0
        %4860 = vmatmul.mubr.f32.gmra.mxu0 %v4764
        %v4861 = vpop.f32.mrf.mxu0
        %v4862 = vadd.f32 0.0, %v4861
        %v4863 = vpop.f32.mrf.mxu0
        %4864 = vmatprep.mubr.f32.mxu0 0.0
        %4865 = vmatmul.mubr.f32.gmra.mxu0 %v4767
        %v4866 = vpop.f32.mrf.mxu0
        %v4867 = vadd.f32 0.0, %v4866
        %v4868 = vpop.f32.mrf.mxu0
        %4869 = vmatprep.mubr.f32.mxu0 0.0
        %4870 = vmatmul.mubr.f32.gmra.mxu0 %v4770
        %v4871 = vpop.f32.mrf.mxu0
        %v4872 = vadd.f32 0.0, %v4871
        %v4873 = vpop.f32.mrf.mxu0
        %4874 = vmatprep.mubr.f32.mxu0 0.0
        %4875 = vmatmul.mubr.f32.gmra.mxu0 %v4773
        %v4876 = vpop.f32.mrf.mxu0
        %v4877 = vadd.f32 0.0, %v4876
        %v4878 = vpop.f32.mrf.mxu0
        %4879 = vdwg.mxu0
        %s4880 = scalar_lea.vmem %s266, 40
        %v4881 = vld [vmem:[%s4880] sm:$0xff]
        %v4883 = vsel %vm312, %v4881, 0
        %4885 = vmatprep.subr.mxu0 0.0
        %4886 = vmatpush1.msra.mxu0 0.0
        %4887 = vmatprep.subr.mxu0 0.0
        %4888 = vmatpush1.msra.mxu0 0.0
        %4889 = vmatprep.subr.mxu0 0.0
        %4890 = vmatpush1.msra.mxu0 0.0
        %4891 = vmatprep.subr.mxu0 0.0
        %4892 = vmatpush1.msra.mxu0 0.0
        %4893 = vmatprep.subr.mxu0 0.0
        %4894 = vmatpush1.msra.mxu0 0.0
        %4895 = vmatprep.subr.mxu0 0.0
        %4896 = vmatpush1.msra.mxu0 0.0
        %4897 = vmatprep.subr.mxu0 0.0
        %4898 = vmatpush1.msra.mxu0 0.0
        %4899 = vmatprep.subr.mxu0 0.0
        %4900 = vmatpush1.msra.mxu0 0.0
        %4901 = vmatprep.subr.mxu0 0.0
        %4902 = vmatpush1.msra.mxu0 0.0
        %4903 = vmatprep.subr.mxu0 0.0
        %4904 = vmatpush1.msra.mxu0 0.0
        %4905 = vmatprep.subr.mxu0 0.0
        %4906 = vmatpush1.msra.mxu0 0.0
        %4907 = vmatprep.subr.mxu0 0.0
        %4908 = vmatpush1.msra.mxu0 0.0
        %4909 = vmatprep.subr.mxu0 0.0
        %4910 = vmatpush1.msra.mxu0 0.0
        %4911 = vmatprep.subr.mxu0 0.0
        %4912 = vmatpush1.msra.mxu0 0.0
        %4913 = vmatprep.subr.mxu0 0.0
        %4914 = vmatpush1.msra.mxu0 %v4847
        %4915 = vmatprep.subr.mxu0 0.0
        %4916 = vmatpush1.msra.mxu0 %v4842
        %4917 = vmatprep.subr.mxu0 0.0
        %4918 = vmatpush2.msra.mxu0 0.0
        %4919 = vmatprep.subr.mxu0 0.0
        %4920 = vmatpush2.msra.mxu0 0.0
        %4921 = vmatprep.subr.mxu0 0.0
        %4922 = vmatpush2.msra.mxu0 0.0
        %4923 = vmatprep.subr.mxu0 0.0
        %4924 = vmatpush2.msra.mxu0 0.0
        %4925 = vmatprep.subr.mxu0 0.0
        %4926 = vmatpush2.msra.mxu0 0.0
        %4927 = vmatprep.subr.mxu0 0.0
        %4928 = vmatpush2.msra.mxu0 0.0
        %4929 = vmatprep.subr.mxu0 0.0
        %4930 = vmatpush2.msra.mxu0 0.0
        %4931 = vmatprep.subr.mxu0 0.0
        %4932 = vmatpush2.msra.mxu0 0.0
        %4933 = vmatprep.subr.mxu0 0.0
        %4934 = vmatpush2.msra.mxu0 0.0
        %4935 = vmatprep.subr.mxu0 0.0
        %4936 = vmatpush2.msra.mxu0 0.0
        %4937 = vmatprep.subr.mxu0 0.0
        %4938 = vmatpush2.msra.mxu0 0.0
        %4939 = vmatprep.subr.mxu0 0.0
        %4940 = vmatpush2.msra.mxu0 0.0
        %4941 = vmatprep.subr.mxu0 0.0
        %4942 = vmatpush2.msra.mxu0 0.0
        %4943 = vmatprep.subr.mxu0 0.0
        %4944 = vmatpush2.msra.mxu0 0.0
        %4945 = vmatprep.subr.mxu0 0.0
        %4946 = vmatpush2.msra.mxu0 0.0
        %4947 = vmatprep.subr.mxu0 0.0
        %4948 = vmatpush2.msra.mxu0 0.0
        %4949 = vmatprep.mubr.f32.mxu0 0.0
        %4950 = vmatmul.mubr.f32.gmra.mxu0 %v4883
        %v4951 = vpop.f32.mrf.mxu0
        %v4952 = vadd.f32 0.0, %v4951
        %v4953 = vpop.f32.mrf.mxu0
        %4954 = vdwg.mxu0
        %4955 = vmatprep.subr.mxu0 0.0
        %4956 = vmatpush1.msra.mxu0 0.0
        %4957 = vmatprep.subr.mxu0 0.0
        %4958 = vmatpush1.msra.mxu0 0.0
        %4959 = vmatprep.subr.mxu0 0.0
        %4960 = vmatpush1.msra.mxu0 0.0
        %4961 = vmatprep.subr.mxu0 0.0
        %4962 = vmatpush1.msra.mxu0 0.0
        %4963 = vmatprep.subr.mxu0 0.0
        %4964 = vmatpush1.msra.mxu0 0.0
        %4965 = vmatprep.subr.mxu0 0.0
        %4966 = vmatpush1.msra.mxu0 0.0
        %4967 = vmatprep.subr.mxu0 0.0
        %4968 = vmatpush1.msra.mxu0 0.0
        %4969 = vmatprep.subr.mxu0 0.0
        %4970 = vmatpush1.msra.mxu0 0.0
        %4971 = vmatprep.subr.mxu0 0.0
        %4972 = vmatpush1.msra.mxu0 0.0
        %4973 = vmatprep.subr.mxu0 0.0
        %4974 = vmatpush1.msra.mxu0 0.0
        %4975 = vmatprep.subr.mxu0 0.0
        %4976 = vmatpush1.msra.mxu0 0.0
        %4977 = vmatprep.subr.mxu0 0.0
        %4978 = vmatpush1.msra.mxu0 0.0
        %4979 = vmatprep.subr.mxu0 0.0
        %4980 = vmatpush1.msra.mxu0 0.0
        %4981 = vmatprep.subr.mxu0 0.0
        %4982 = vmatpush1.msra.mxu0 0.0
        %4983 = vmatprep.subr.mxu0 0.0
        %4984 = vmatpush1.msra.mxu0 %v4857
        %4985 = vmatprep.subr.mxu0 0.0
        %4986 = vmatpush1.msra.mxu0 %v4852
        %4987 = vmatprep.subr.mxu0 0.0
        %4988 = vmatpush2.msra.mxu0 0.0
        %4989 = vmatprep.subr.mxu0 0.0
        %4990 = vmatpush2.msra.mxu0 0.0
        %4991 = vmatprep.subr.mxu0 0.0
        %4992 = vmatpush2.msra.mxu0 0.0
        %4993 = vmatprep.subr.mxu0 0.0
        %4994 = vmatpush2.msra.mxu0 0.0
        %4995 = vmatprep.subr.mxu0 0.0
        %4996 = vmatpush2.msra.mxu0 0.0
        %4997 = vmatprep.subr.mxu0 0.0
        %4998 = vmatpush2.msra.mxu0 0.0
        %4999 = vmatprep.subr.mxu0 0.0
        %5000 = vmatpush2.msra.mxu0 0.0
        %5001 = vmatprep.subr.mxu0 0.0
        %5002 = vmatpush2.msra.mxu0 0.0
        %5003 = vmatprep.subr.mxu0 0.0
        %5004 = vmatpush2.msra.mxu0 0.0
        %5005 = vmatprep.subr.mxu0 0.0
        %5006 = vmatpush2.msra.mxu0 0.0
        %5007 = vmatprep.subr.mxu0 0.0
        %5008 = vmatpush2.msra.mxu0 0.0
        %5009 = vmatprep.subr.mxu0 0.0
        %5010 = vmatpush2.msra.mxu0 0.0
        %5011 = vmatprep.subr.mxu0 0.0
        %5012 = vmatpush2.msra.mxu0 0.0
        %5013 = vmatprep.subr.mxu0 0.0
        %5014 = vmatpush2.msra.mxu0 0.0
        %5015 = vmatprep.subr.mxu0 0.0
        %5016 = vmatpush2.msra.mxu0 0.0
        %5017 = vmatprep.subr.mxu0 0.0
        %5018 = vmatpush2.msra.mxu0 0.0
        %5019 = vmatprep.mubr.f32.mxu0 0.0
        %5020 = vmatmul.mubr.f32.gmra.mxu0 %v4883
        %v5021 = vpop.f32.mrf.mxu0
        %v5022 = vadd.f32 0.0, %v5021
        %v5023 = vpop.f32.mrf.mxu0
        %5024 = vdwg.mxu0
        %v5026 = vsel %vm586, %v5022, 0
        %5028 = vmatprep.subr.mxu0 0.0
        %5029 = vmatpush1.msra.mxu0 0.0
        %5030 = vmatprep.subr.mxu0 0.0
        %5031 = vmatpush1.msra.mxu0 0.0
        %5032 = vmatprep.subr.mxu0 0.0
        %5033 = vmatpush1.msra.mxu0 0.0
        %5034 = vmatprep.subr.mxu0 0.0
        %5035 = vmatpush1.msra.mxu0 0.0
        %5036 = vmatprep.subr.mxu0 0.0
        %5037 = vmatpush1.msra.mxu0 0.0
        %5038 = vmatprep.subr.mxu0 0.0
        %5039 = vmatpush1.msra.mxu0 0.0
        %5040 = vmatprep.subr.mxu0 0.0
        %5041 = vmatpush1.msra.mxu0 0.0
        %5042 = vmatprep.subr.mxu0 0.0
        %5043 = vmatpush1.msra.mxu0 0.0
        %5044 = vmatprep.subr.mxu0 0.0
        %5045 = vmatpush1.msra.mxu0 0.0
        %5046 = vmatprep.subr.mxu0 0.0
        %5047 = vmatpush1.msra.mxu0 0.0
        %5048 = vmatprep.subr.mxu0 0.0
        %5049 = vmatpush1.msra.mxu0 0.0
        %5050 = vmatprep.subr.mxu0 0.0
        %5051 = vmatpush1.msra.mxu0 0.0
        %5052 = vmatprep.subr.mxu0 0.0
        %5053 = vmatpush1.msra.mxu0 0.0
        %5054 = vmatprep.subr.mxu0 0.0
        %5055 = vmatpush1.msra.mxu0 0.0
        %5056 = vmatprep.subr.mxu0 0.0
        %5057 = vmatpush1.msra.mxu0 0.0
        %5058 = vmatprep.subr.mxu0 0.0
        %5059 = vmatpush1.msra.mxu0 %v285
        %5060 = vmatprep.subr.mxu0 0.0
        %5061 = vmatpush2.msra.mxu0 0.0
        %5062 = vmatprep.subr.mxu0 0.0
        %5063 = vmatpush2.msra.mxu0 0.0
        %5064 = vmatprep.subr.mxu0 0.0
        %5065 = vmatpush2.msra.mxu0 0.0
        %5066 = vmatprep.subr.mxu0 0.0
        %5067 = vmatpush2.msra.mxu0 0.0
        %5068 = vmatprep.subr.mxu0 0.0
        %5069 = vmatpush2.msra.mxu0 0.0
        %5070 = vmatprep.subr.mxu0 0.0
        %5071 = vmatpush2.msra.mxu0 0.0
        %5072 = vmatprep.subr.mxu0 0.0
        %5073 = vmatpush2.msra.mxu0 0.0
        %5074 = vmatprep.subr.mxu0 0.0
        %5075 = vmatpush2.msra.mxu0 0.0
        %5076 = vmatprep.subr.mxu0 0.0
        %5077 = vmatpush2.msra.mxu0 0.0
        %5078 = vmatprep.subr.mxu0 0.0
        %5079 = vmatpush2.msra.mxu0 0.0
        %5080 = vmatprep.subr.mxu0 0.0
        %5081 = vmatpush2.msra.mxu0 0.0
        %5082 = vmatprep.subr.mxu0 0.0
        %5083 = vmatpush2.msra.mxu0 0.0
        %5084 = vmatprep.subr.mxu0 0.0
        %5085 = vmatpush2.msra.mxu0 0.0
        %5086 = vmatprep.subr.mxu0 0.0
        %5087 = vmatpush2.msra.mxu0 0.0
        %5088 = vmatprep.subr.mxu0 0.0
        %5089 = vmatpush2.msra.mxu0 0.0
        %5090 = vmatprep.subr.mxu0 0.0
        %5091 = vmatpush2.msra.mxu0 0.0
        %5092 = vmatprep.mubr.f32.mxu0 0.0
        %5093 = vmatmul.mubr.f32.gmra.mxu0 %v5026
        %v5094 = vpop.f32.mrf.mxu0
        %v5095 = vadd.f32 0.0, %v5094
        %v5096 = vpop.f32.mrf.mxu0
        %5097 = vdwg.mxu0
        %v5099 = vsel %vm586, %v4952, 0
        %5101 = vmatprep.subr.mxu0 0.0
        %5102 = vmatpush1.msra.mxu0 0.0
        %5103 = vmatprep.subr.mxu0 0.0
        %5104 = vmatpush1.msra.mxu0 0.0
        %5105 = vmatprep.subr.mxu0 0.0
        %5106 = vmatpush1.msra.mxu0 0.0
        %5107 = vmatprep.subr.mxu0 0.0
        %5108 = vmatpush1.msra.mxu0 0.0
        %5109 = vmatprep.subr.mxu0 0.0
        %5110 = vmatpush1.msra.mxu0 0.0
        %5111 = vmatprep.subr.mxu0 0.0
        %5112 = vmatpush1.msra.mxu0 0.0
        %5113 = vmatprep.subr.mxu0 0.0
        %5114 = vmatpush1.msra.mxu0 0.0
        %5115 = vmatprep.subr.mxu0 0.0
        %5116 = vmatpush1.msra.mxu0 0.0
        %5117 = vmatprep.subr.mxu0 0.0
        %5118 = vmatpush1.msra.mxu0 0.0
        %5119 = vmatprep.subr.mxu0 0.0
        %5120 = vmatpush1.msra.mxu0 0.0
        %5121 = vmatprep.subr.mxu0 0.0
        %5122 = vmatpush1.msra.mxu0 0.0
        %5123 = vmatprep.subr.mxu0 0.0
        %5124 = vmatpush1.msra.mxu0 0.0
        %5125 = vmatprep.subr.mxu0 0.0
        %5126 = vmatpush1.msra.mxu0 0.0
        %5127 = vmatprep.subr.mxu0 0.0
        %5128 = vmatpush1.msra.mxu0 0.0
        %5129 = vmatprep.subr.mxu0 0.0
        %5130 = vmatpush1.msra.mxu0 0.0
        %5131 = vmatprep.subr.mxu0 0.0
        %5132 = vmatpush1.msra.mxu0 %v281
        %5133 = vmatprep.subr.mxu0 0.0
        %5134 = vmatpush2.msra.mxu0 0.0
        %5135 = vmatprep.subr.mxu0 0.0
        %5136 = vmatpush2.msra.mxu0 0.0
        %5137 = vmatprep.subr.mxu0 0.0
        %5138 = vmatpush2.msra.mxu0 0.0
        %5139 = vmatprep.subr.mxu0 0.0
        %5140 = vmatpush2.msra.mxu0 0.0
        %5141 = vmatprep.subr.mxu0 0.0
        %5142 = vmatpush2.msra.mxu0 0.0
        %5143 = vmatprep.subr.mxu0 0.0
        %5144 = vmatpush2.msra.mxu0 0.0
        %5145 = vmatprep.subr.mxu0 0.0
        %5146 = vmatpush2.msra.mxu0 0.0
        %5147 = vmatprep.subr.mxu0 0.0
        %5148 = vmatpush2.msra.mxu0 0.0
        %5149 = vmatprep.subr.mxu0 0.0
        %5150 = vmatpush2.msra.mxu0 0.0
        %5151 = vmatprep.subr.mxu0 0.0
        %5152 = vmatpush2.msra.mxu0 0.0
        %5153 = vmatprep.subr.mxu0 0.0
        %5154 = vmatpush2.msra.mxu0 0.0
        %5155 = vmatprep.subr.mxu0 0.0
        %5156 = vmatpush2.msra.mxu0 0.0
        %5157 = vmatprep.subr.mxu0 0.0
        %5158 = vmatpush2.msra.mxu0 0.0
        %5159 = vmatprep.subr.mxu0 0.0
        %5160 = vmatpush2.msra.mxu0 0.0
        %5161 = vmatprep.subr.mxu0 0.0
        %5162 = vmatpush2.msra.mxu0 0.0
        %5163 = vmatprep.subr.mxu0 0.0
        %5164 = vmatpush2.msra.mxu0 0.0
        %5165 = vmatprep.mubr.f32.mxu0 0.0
        %5166 = vmatmul.mubr.f32.gmra.mxu0 %v5099
        %v5167 = vpop.f32.mrf.mxu0
        %v5168 = vadd.f32 %v5095, %v5167
        %v5169 = vpop.f32.mrf.mxu0
        %5170 = vdwg.mxu0
        %5171 = vmatprep.subr.mxu0 0.0
        %5172 = vmatpush1.msra.mxu0 0.0
        %5173 = vmatprep.subr.mxu0 0.0
        %5174 = vmatpush1.msra.mxu0 0.0
        %5175 = vmatprep.subr.mxu0 0.0
        %5176 = vmatpush1.msra.mxu0 0.0
        %5177 = vmatprep.subr.mxu0 0.0
        %5178 = vmatpush1.msra.mxu0 0.0
        %5179 = vmatprep.subr.mxu0 0.0
        %5180 = vmatpush1.msra.mxu0 0.0
        %5181 = vmatprep.subr.mxu0 0.0
        %5182 = vmatpush1.msra.mxu0 0.0
        %5183 = vmatprep.subr.mxu0 0.0
        %5184 = vmatpush1.msra.mxu0 0.0
        %5185 = vmatprep.subr.mxu0 0.0
        %5186 = vmatpush1.msra.mxu0 0.0
        %5187 = vmatprep.subr.mxu0 0.0
        %5188 = vmatpush1.msra.mxu0 0.0
        %5189 = vmatprep.subr.mxu0 0.0
        %5190 = vmatpush1.msra.mxu0 0.0
        %5191 = vmatprep.subr.mxu0 0.0
        %5192 = vmatpush1.msra.mxu0 0.0
        %5193 = vmatprep.subr.mxu0 0.0
        %5194 = vmatpush1.msra.mxu0 0.0
        %5195 = vmatprep.subr.mxu0 0.0
        %5196 = vmatpush1.msra.mxu0 0.0
        %5197 = vmatprep.subr.mxu0 0.0
        %5198 = vmatpush1.msra.mxu0 0.0
        %5199 = vmatprep.subr.mxu0 0.0
        %5200 = vmatpush1.msra.mxu0 %v4867
        %5201 = vmatprep.subr.mxu0 0.0
        %5202 = vmatpush1.msra.mxu0 %v4862
        %5203 = vmatprep.subr.mxu0 0.0
        %5204 = vmatpush2.msra.mxu0 0.0
        %5205 = vmatprep.subr.mxu0 0.0
        %5206 = vmatpush2.msra.mxu0 0.0
        %5207 = vmatprep.subr.mxu0 0.0
        %5208 = vmatpush2.msra.mxu0 0.0
        %5209 = vmatprep.subr.mxu0 0.0
        %5210 = vmatpush2.msra.mxu0 0.0
        %5211 = vmatprep.subr.mxu0 0.0
        %5212 = vmatpush2.msra.mxu0 0.0
        %5213 = vmatprep.subr.mxu0 0.0
        %5214 = vmatpush2.msra.mxu0 0.0
        %5215 = vmatprep.subr.mxu0 0.0
        %5216 = vmatpush2.msra.mxu0 0.0
        %5217 = vmatprep.subr.mxu0 0.0
        %5218 = vmatpush2.msra.mxu0 0.0
        %5219 = vmatprep.subr.mxu0 0.0
        %5220 = vmatpush2.msra.mxu0 0.0
        %5221 = vmatprep.subr.mxu0 0.0
        %5222 = vmatpush2.msra.mxu0 0.0
        %5223 = vmatprep.subr.mxu0 0.0
        %5224 = vmatpush2.msra.mxu0 0.0
        %5225 = vmatprep.subr.mxu0 0.0
        %5226 = vmatpush2.msra.mxu0 0.0
        %5227 = vmatprep.subr.mxu0 0.0
        %5228 = vmatpush2.msra.mxu0 0.0
        %5229 = vmatprep.subr.mxu0 0.0
        %5230 = vmatpush2.msra.mxu0 0.0
        %5231 = vmatprep.subr.mxu0 0.0
        %5232 = vmatpush2.msra.mxu0 0.0
        %5233 = vmatprep.subr.mxu0 0.0
        %5234 = vmatpush2.msra.mxu0 0.0
        %5235 = vmatprep.mubr.f32.mxu0 0.0
        %5236 = vmatmul.mubr.f32.gmra.mxu0 %v4883
        %v5237 = vpop.f32.mrf.mxu0
        %v5238 = vadd.f32 0.0, %v5237
        %v5239 = vpop.f32.mrf.mxu0
        %5240 = vdwg.mxu0
        %v5242 = vsel %vm586, %v5238, 0
        %5244 = vmatprep.subr.mxu0 0.0
        %5245 = vmatpush1.msra.mxu0 0.0
        %5246 = vmatprep.subr.mxu0 0.0
        %5247 = vmatpush1.msra.mxu0 0.0
        %5248 = vmatprep.subr.mxu0 0.0
        %5249 = vmatpush1.msra.mxu0 0.0
        %5250 = vmatprep.subr.mxu0 0.0
        %5251 = vmatpush1.msra.mxu0 0.0
        %5252 = vmatprep.subr.mxu0 0.0
        %5253 = vmatpush1.msra.mxu0 0.0
        %5254 = vmatprep.subr.mxu0 0.0
        %5255 = vmatpush1.msra.mxu0 0.0
        %5256 = vmatprep.subr.mxu0 0.0
        %5257 = vmatpush1.msra.mxu0 0.0
        %5258 = vmatprep.subr.mxu0 0.0
        %5259 = vmatpush1.msra.mxu0 0.0
        %5260 = vmatprep.subr.mxu0 0.0
        %5261 = vmatpush1.msra.mxu0 0.0
        %5262 = vmatprep.subr.mxu0 0.0
        %5263 = vmatpush1.msra.mxu0 0.0
        %5264 = vmatprep.subr.mxu0 0.0
        %5265 = vmatpush1.msra.mxu0 0.0
        %5266 = vmatprep.subr.mxu0 0.0
        %5267 = vmatpush1.msra.mxu0 0.0
        %5268 = vmatprep.subr.mxu0 0.0
        %5269 = vmatpush1.msra.mxu0 0.0
        %5270 = vmatprep.subr.mxu0 0.0
        %5271 = vmatpush1.msra.mxu0 0.0
        %5272 = vmatprep.subr.mxu0 0.0
        %5273 = vmatpush1.msra.mxu0 0.0
        %5274 = vmatprep.subr.mxu0 0.0
        %5275 = vmatpush1.msra.mxu0 %v289
        %5276 = vmatprep.subr.mxu0 0.0
        %5277 = vmatpush2.msra.mxu0 0.0
        %5278 = vmatprep.subr.mxu0 0.0
        %5279 = vmatpush2.msra.mxu0 0.0
        %5280 = vmatprep.subr.mxu0 0.0
        %5281 = vmatpush2.msra.mxu0 0.0
        %5282 = vmatprep.subr.mxu0 0.0
        %5283 = vmatpush2.msra.mxu0 0.0
        %5284 = vmatprep.subr.mxu0 0.0
        %5285 = vmatpush2.msra.mxu0 0.0
        %5286 = vmatprep.subr.mxu0 0.0
        %5287 = vmatpush2.msra.mxu0 0.0
        %5288 = vmatprep.subr.mxu0 0.0
        %5289 = vmatpush2.msra.mxu0 0.0
        %5290 = vmatprep.subr.mxu0 0.0
        %5291 = vmatpush2.msra.mxu0 0.0
        %5292 = vmatprep.subr.mxu0 0.0
        %5293 = vmatpush2.msra.mxu0 0.0
        %5294 = vmatprep.subr.mxu0 0.0
        %5295 = vmatpush2.msra.mxu0 0.0
        %5296 = vmatprep.subr.mxu0 0.0
        %5297 = vmatpush2.msra.mxu0 0.0
        %5298 = vmatprep.subr.mxu0 0.0
        %5299 = vmatpush2.msra.mxu0 0.0
        %5300 = vmatprep.subr.mxu0 0.0
        %5301 = vmatpush2.msra.mxu0 0.0
        %5302 = vmatprep.subr.mxu0 0.0
        %5303 = vmatpush2.msra.mxu0 0.0
        %5304 = vmatprep.subr.mxu0 0.0
        %5305 = vmatpush2.msra.mxu0 0.0
        %5306 = vmatprep.subr.mxu0 0.0
        %5307 = vmatpush2.msra.mxu0 0.0
        %5308 = vmatprep.mubr.f32.mxu0 0.0
        %5309 = vmatmul.mubr.f32.gmra.mxu0 %v5242
        %v5310 = vpop.f32.mrf.mxu0
        %v5311 = vadd.f32 0.0, %v5310
        %v5312 = vpop.f32.mrf.mxu0
        %5313 = vdwg.mxu0
        %v5314 = vadd.f32 %v5168, %v5311
        %5315 = vmatprep.subr.mxu0 0.0
        %5316 = vmatpush1.msra.mxu0 0.0
        %5317 = vmatprep.subr.mxu0 0.0
        %5318 = vmatpush1.msra.mxu0 0.0
        %5319 = vmatprep.subr.mxu0 0.0
        %5320 = vmatpush1.msra.mxu0 0.0
        %5321 = vmatprep.subr.mxu0 0.0
        %5322 = vmatpush1.msra.mxu0 0.0
        %5323 = vmatprep.subr.mxu0 0.0
        %5324 = vmatpush1.msra.mxu0 0.0
        %5325 = vmatprep.subr.mxu0 0.0
        %5326 = vmatpush1.msra.mxu0 0.0
        %5327 = vmatprep.subr.mxu0 0.0
        %5328 = vmatpush1.msra.mxu0 0.0
        %5329 = vmatprep.subr.mxu0 0.0
        %5330 = vmatpush1.msra.mxu0 0.0
        %5331 = vmatprep.subr.mxu0 0.0
        %5332 = vmatpush1.msra.mxu0 0.0
        %5333 = vmatprep.subr.mxu0 0.0
        %5334 = vmatpush1.msra.mxu0 0.0
        %5335 = vmatprep.subr.mxu0 0.0
        %5336 = vmatpush1.msra.mxu0 0.0
        %5337 = vmatprep.subr.mxu0 0.0
        %5338 = vmatpush1.msra.mxu0 0.0
        %5339 = vmatprep.subr.mxu0 0.0
        %5340 = vmatpush1.msra.mxu0 0.0
        %5341 = vmatprep.subr.mxu0 0.0
        %5342 = vmatpush1.msra.mxu0 0.0
        %5343 = vmatprep.subr.mxu0 0.0
        %5344 = vmatpush1.msra.mxu0 %v4877
        %5345 = vmatprep.subr.mxu0 0.0
        %5346 = vmatpush1.msra.mxu0 %v4872
        %5347 = vmatprep.subr.mxu0 0.0
        %5348 = vmatpush2.msra.mxu0 0.0
        %5349 = vmatprep.subr.mxu0 0.0
        %5350 = vmatpush2.msra.mxu0 0.0
        %5351 = vmatprep.subr.mxu0 0.0
        %5352 = vmatpush2.msra.mxu0 0.0
        %5353 = vmatprep.subr.mxu0 0.0
        %5354 = vmatpush2.msra.mxu0 0.0
        %5355 = vmatprep.subr.mxu0 0.0
        %5356 = vmatpush2.msra.mxu0 0.0
        %5357 = vmatprep.subr.mxu0 0.0
        %5358 = vmatpush2.msra.mxu0 0.0
        %5359 = vmatprep.subr.mxu0 0.0
        %5360 = vmatpush2.msra.mxu0 0.0
        %5361 = vmatprep.subr.mxu0 0.0
        %5362 = vmatpush2.msra.mxu0 0.0
        %5363 = vmatprep.subr.mxu0 0.0
        %5364 = vmatpush2.msra.mxu0 0.0
        %5365 = vmatprep.subr.mxu0 0.0
        %5366 = vmatpush2.msra.mxu0 0.0
        %5367 = vmatprep.subr.mxu0 0.0
        %5368 = vmatpush2.msra.mxu0 0.0
        %5369 = vmatprep.subr.mxu0 0.0
        %5370 = vmatpush2.msra.mxu0 0.0
        %5371 = vmatprep.subr.mxu0 0.0
        %5372 = vmatpush2.msra.mxu0 0.0
        %5373 = vmatprep.subr.mxu0 0.0
        %5374 = vmatpush2.msra.mxu0 0.0
        %5375 = vmatprep.subr.mxu0 0.0
        %5376 = vmatpush2.msra.mxu0 0.0
        %5377 = vmatprep.subr.mxu0 0.0
        %5378 = vmatpush2.msra.mxu0 0.0
        %5379 = vmatprep.mubr.f32.mxu0 0.0
        %5380 = vmatmul.mubr.f32.gmra.mxu0 %v4883
        %v5381 = vpop.f32.mrf.mxu0
        %v5382 = vadd.f32 0.0, %v5381
        %v5383 = vpop.f32.mrf.mxu0
        %5384 = vdwg.mxu0
        %v5386 = vsel %vm586, %v5382, 0
        %5388 = vmatprep.subr.mxu0 0.0
        %5389 = vmatpush1.msra.mxu0 0.0
        %5390 = vmatprep.subr.mxu0 0.0
        %5391 = vmatpush1.msra.mxu0 0.0
        %5392 = vmatprep.subr.mxu0 0.0
        %5393 = vmatpush1.msra.mxu0 0.0
        %5394 = vmatprep.subr.mxu0 0.0
        %5395 = vmatpush1.msra.mxu0 0.0
        %5396 = vmatprep.subr.mxu0 0.0
        %5397 = vmatpush1.msra.mxu0 0.0
        %5398 = vmatprep.subr.mxu0 0.0
        %5399 = vmatpush1.msra.mxu0 0.0
        %5400 = vmatprep.subr.mxu0 0.0
        %5401 = vmatpush1.msra.mxu0 0.0
        %5402 = vmatprep.subr.mxu0 0.0
        %5403 = vmatpush1.msra.mxu0 0.0
        %5404 = vmatprep.subr.mxu0 0.0
        %5405 = vmatpush1.msra.mxu0 0.0
        %5406 = vmatprep.subr.mxu0 0.0
        %5407 = vmatpush1.msra.mxu0 0.0
        %5408 = vmatprep.subr.mxu0 0.0
        %5409 = vmatpush1.msra.mxu0 0.0
        %5410 = vmatprep.subr.mxu0 0.0
        %5411 = vmatpush1.msra.mxu0 0.0
        %5412 = vmatprep.subr.mxu0 0.0
        %5413 = vmatpush1.msra.mxu0 0.0
        %5414 = vmatprep.subr.mxu0 0.0
        %5415 = vmatpush1.msra.mxu0 0.0
        %5416 = vmatprep.subr.mxu0 0.0
        %5417 = vmatpush1.msra.mxu0 0.0
        %5418 = vmatprep.subr.mxu0 0.0
        %5419 = vmatpush1.msra.mxu0 %v293
        %5420 = vmatprep.subr.mxu0 0.0
        %5421 = vmatpush2.msra.mxu0 0.0
        %5422 = vmatprep.subr.mxu0 0.0
        %5423 = vmatpush2.msra.mxu0 0.0
        %5424 = vmatprep.subr.mxu0 0.0
        %5425 = vmatpush2.msra.mxu0 0.0
        %5426 = vmatprep.subr.mxu0 0.0
        %5427 = vmatpush2.msra.mxu0 0.0
        %5428 = vmatprep.subr.mxu0 0.0
        %5429 = vmatpush2.msra.mxu0 0.0
        %5430 = vmatprep.subr.mxu0 0.0
        %5431 = vmatpush2.msra.mxu0 0.0
        %5432 = vmatprep.subr.mxu0 0.0
        %5433 = vmatpush2.msra.mxu0 0.0
        %5434 = vmatprep.subr.mxu0 0.0
        %5435 = vmatpush2.msra.mxu0 0.0
        %5436 = vmatprep.subr.mxu0 0.0
        %5437 = vmatpush2.msra.mxu0 0.0
        %5438 = vmatprep.subr.mxu0 0.0
        %5439 = vmatpush2.msra.mxu0 0.0
        %5440 = vmatprep.subr.mxu0 0.0
        %5441 = vmatpush2.msra.mxu0 0.0
        %5442 = vmatprep.subr.mxu0 0.0
        %5443 = vmatpush2.msra.mxu0 0.0
        %5444 = vmatprep.subr.mxu0 0.0
        %5445 = vmatpush2.msra.mxu0 0.0
        %5446 = vmatprep.subr.mxu0 0.0
        %5447 = vmatpush2.msra.mxu0 0.0
        %5448 = vmatprep.subr.mxu0 0.0
        %5449 = vmatpush2.msra.mxu0 0.0
        %5450 = vmatprep.subr.mxu0 0.0
        %5451 = vmatpush2.msra.mxu0 0.0
        %5452 = vmatprep.mubr.f32.mxu0 0.0
        %5453 = vmatmul.mubr.f32.gmra.mxu0 %v5386
        %v5454 = vpop.f32.mrf.mxu0
        %v5455 = vadd.f32 0.0, %v5454
        %v5456 = vpop.f32.mrf.mxu0
        %5457 = vdwg.mxu0
        %v5458 = vadd.f32 %v5314, %v5455
        %v5459 = vadd.s32 %v1025, 5
        %vm5460 = vcmp.eq.s32.totalorder %v276, %v5459
        %vm5461 = vcmp.eq.s32.totalorder %v282, %v5459
        %vm5462 = vcmp.eq.s32.totalorder %v286, %v5459
        %vm5463 = vcmp.eq.s32.totalorder %v290, %v5459
        %vm5464 = vcmp.eq.s32.totalorder %v1021, %v5459
        %vm5465 = vcmp.eq.s32.totalorder %v1022, %v5459
        %vm5466 = vcmp.eq.s32.totalorder %v1023, %v5459
        %vm5467 = vcmp.eq.s32.totalorder %v1024, %v5459
        %v5468 = vsel %vm5460, 1, 0
        %v5469 = vsel %vm5461, 1, 0
        %v5470 = vsel %vm5462, 1, 0
        %v5471 = vsel %vm5463, 1, 0
        %v5472 = vsel %vm5464, 1, 0
        %v5473 = vsel %vm5465, 1, 0
        %v5474 = vsel %vm5466, 1, 0
        %v5475 = vsel %vm5467, 1, 0
        %v5476 = vcvt.s32.f32 %v5468
        %v5477 = vcvt.s32.f32 %v5469
        %v5478 = vcvt.s32.f32 %v5470
        %v5479 = vcvt.s32.f32 %v5471
        %v5480 = vcvt.s32.f32 %v5472
        %v5481 = vcvt.s32.f32 %v5473
        %v5482 = vcvt.s32.f32 %v5474
        %v5483 = vcvt.s32.f32 %v5475
        %v5485 = vsel %vm586, %v5476, 0
        %v5488 = vsel %vm586, %v5477, 0
        %v5491 = vsel %vm586, %v5478, 0
        %v5494 = vsel %vm586, %v5479, 0
        %v5497 = vsel %vm586, %v5480, 0
        %v5500 = vsel %vm586, %v5481, 0
        %v5503 = vsel %vm586, %v5482, 0
        %v5506 = vsel %vm586, %v5483, 0
        %5508 = vmatprep.subr.mxu0 0.0
        %5509 = vmatpush1.msra.mxu0 0.0
        %5510 = vmatprep.subr.mxu0 0.0
        %5511 = vmatpush1.msra.mxu0 0.0
        %5512 = vmatprep.subr.mxu0 0.0
        %5513 = vmatpush1.msra.mxu0 0.0
        %5514 = vmatprep.subr.mxu0 0.0
        %5515 = vmatpush1.msra.mxu0 0.0
        %5516 = vmatprep.subr.mxu0 0.0
        %5517 = vmatpush1.msra.mxu0 0.0
        %5518 = vmatprep.subr.mxu0 0.0
        %5519 = vmatpush1.msra.mxu0 0.0
        %5520 = vmatprep.subr.mxu0 0.0
        %5521 = vmatpush1.msra.mxu0 0.0
        %5522 = vmatprep.subr.mxu0 0.0
        %5523 = vmatpush1.msra.mxu0 0.0
        %5524 = vmatprep.subr.mxu0 0.0
        %5525 = vmatpush1.msra.mxu0 0.0
        %5526 = vmatprep.subr.mxu0 0.0
        %5527 = vmatpush1.msra.mxu0 0.0
        %5528 = vmatprep.subr.mxu0 0.0
        %5529 = vmatpush1.msra.mxu0 0.0
        %5530 = vmatprep.subr.mxu0 0.0
        %5531 = vmatpush1.msra.mxu0 0.0
        %5532 = vmatprep.subr.mxu0 0.0
        %5533 = vmatpush1.msra.mxu0 0.0
        %5534 = vmatprep.subr.mxu0 0.0
        %5535 = vmatpush1.msra.mxu0 0.0
        %5536 = vmatprep.subr.mxu0 0.0
        %5537 = vmatpush1.msra.mxu0 0.0
        %5538 = vmatprep.subr.mxu0 0.0
        %5539 = vmatpush1.msra.mxu0 %v5458
        %5540 = vmatprep.subr.mxu0 0.0
        %5541 = vmatpush2.msra.mxu0 0.0
        %5542 = vmatprep.subr.mxu0 0.0
        %5543 = vmatpush2.msra.mxu0 0.0
        %5544 = vmatprep.subr.mxu0 0.0
        %5545 = vmatpush2.msra.mxu0 0.0
        %5546 = vmatprep.subr.mxu0 0.0
        %5547 = vmatpush2.msra.mxu0 0.0
        %5548 = vmatprep.subr.mxu0 0.0
        %5549 = vmatpush2.msra.mxu0 0.0
        %5550 = vmatprep.subr.mxu0 0.0
        %5551 = vmatpush2.msra.mxu0 0.0
        %5552 = vmatprep.subr.mxu0 0.0
        %5553 = vmatpush2.msra.mxu0 0.0
        %5554 = vmatprep.subr.mxu0 0.0
        %5555 = vmatpush2.msra.mxu0 0.0
        %5556 = vmatprep.subr.mxu0 0.0
        %5557 = vmatpush2.msra.mxu0 0.0
        %5558 = vmatprep.subr.mxu0 0.0
        %5559 = vmatpush2.msra.mxu0 0.0
        %5560 = vmatprep.subr.mxu0 0.0
        %5561 = vmatpush2.msra.mxu0 0.0
        %5562 = vmatprep.subr.mxu0 0.0
        %5563 = vmatpush2.msra.mxu0 0.0
        %5564 = vmatprep.subr.mxu0 0.0
        %5565 = vmatpush2.msra.mxu0 0.0
        %5566 = vmatprep.subr.mxu0 0.0
        %5567 = vmatpush2.msra.mxu0 0.0
        %5568 = vmatprep.subr.mxu0 0.0
        %5569 = vmatpush2.msra.mxu0 0.0
        %5570 = vmatprep.subr.mxu0 0.0
        %5571 = vmatpush2.msra.mxu0 0.0
        %5572 = vmatprep.mubr.f32.mxu0 0.0
        %5573 = vmatmul.mubr.f32.gmra.mxu0 %v5485
        %v5574 = vpop.f32.mrf.mxu0
        %v5575 = vadd.f32 0.0, %v5574
        %v5576 = vpop.f32.mrf.mxu0
        %5577 = vmatprep.mubr.f32.mxu0 0.0
        %5578 = vmatmul.mubr.f32.gmra.mxu0 %v5488
        %v5579 = vpop.f32.mrf.mxu0
        %v5580 = vadd.f32 0.0, %v5579
        %v5581 = vpop.f32.mrf.mxu0
        %5582 = vmatprep.mubr.f32.mxu0 0.0
        %5583 = vmatmul.mubr.f32.gmra.mxu0 %v5491
        %v5584 = vpop.f32.mrf.mxu0
        %v5585 = vadd.f32 0.0, %v5584
        %v5586 = vpop.f32.mrf.mxu0
        %5587 = vmatprep.mubr.f32.mxu0 0.0
        %5588 = vmatmul.mubr.f32.gmra.mxu0 %v5494
        %v5589 = vpop.f32.mrf.mxu0
        %v5590 = vadd.f32 0.0, %v5589
        %v5591 = vpop.f32.mrf.mxu0
        %5592 = vmatprep.mubr.f32.mxu0 0.0
        %5593 = vmatmul.mubr.f32.gmra.mxu0 %v5497
        %v5594 = vpop.f32.mrf.mxu0
        %v5595 = vadd.f32 0.0, %v5594
        %v5596 = vpop.f32.mrf.mxu0
        %5597 = vmatprep.mubr.f32.mxu0 0.0
        %5598 = vmatmul.mubr.f32.gmra.mxu0 %v5500
        %v5599 = vpop.f32.mrf.mxu0
        %v5600 = vadd.f32 0.0, %v5599
        %v5601 = vpop.f32.mrf.mxu0
        %5602 = vmatprep.mubr.f32.mxu0 0.0
        %5603 = vmatmul.mubr.f32.gmra.mxu0 %v5503
        %v5604 = vpop.f32.mrf.mxu0
        %v5605 = vadd.f32 0.0, %v5604
        %v5606 = vpop.f32.mrf.mxu0
        %5607 = vmatprep.mubr.f32.mxu0 0.0
        %5608 = vmatmul.mubr.f32.gmra.mxu0 %v5506
        %v5609 = vpop.f32.mrf.mxu0
        %v5610 = vadd.f32 0.0, %v5609
        %v5611 = vpop.f32.mrf.mxu0
        %5612 = vdwg.mxu0
        %v5613 = vadd.f32 %v4723, %v5575
        %v5614 = vadd.f32 %v4724, %v5580
        %v5615 = vadd.f32 %v4725, %v5585
        %v5616 = vadd.f32 %v4726, %v5590
        %v5617 = vadd.f32 %v4727, %v5595
        %v5618 = vadd.f32 %v4728, %v5600
        %v5619 = vadd.f32 %v4729, %v5605
        %v5620 = vadd.f32 %v4730, %v5610
        %s5621 = scalar_lea.vmem %s260, 192
        %v5622 = vld [vmem:[%s5621] sm:$0xf]
        %v5623 = vld [vmem:[%s5621 + $0x4] sm:$0xf]
        %v5624 = vld [vmem:[%s5621 + $0x8] sm:$0xf]
        %v5625 = vld [vmem:[%s5621 + $0xc] sm:$0xf]
        %v5626 = vld [vmem:[%s5621 + $0x10] sm:$0xf]
        %v5627 = vld [vmem:[%s5621 + $0x14] sm:$0xf]
        %v5628 = vld [vmem:[%s5621 + $0x18] sm:$0xf]
        %v5629 = vld [vmem:[%s5621 + $0x1c] sm:$0xf]
        %v5630 = vunpack.c.l.bf16 %v5622
        %v5631 = vunpack.c.l.bf16 %v5623
        %v5632 = vunpack.c.l.bf16 %v5624
        %v5633 = vunpack.c.l.bf16 %v5625
        %v5634 = vunpack.c.l.bf16 %v5626
        %v5635 = vunpack.c.l.bf16 %v5627
        %v5636 = vunpack.c.l.bf16 %v5628
        %v5637 = vunpack.c.l.bf16 %v5629
        %s5638 = scalar_lea.vmem %s273, 96
        %v5639 = vld [vmem:[%s5638] sm:$0xff]
        %v5640 = vld [vmem:[%s5638 + $0x8] sm:$0xff]
        %v5642 = vsel %vm312, %v5630, 0
        %v5645 = vsel %vm312, %v5631, 0
        %v5648 = vsel %vm312, %v5632, 0
        %v5651 = vsel %vm312, %v5633, 0
        %v5654 = vsel %vm312, %v5634, 0
        %v5657 = vsel %vm312, %v5635, 0
        %v5660 = vsel %vm312, %v5636, 0
        %v5663 = vsel %vm312, %v5637, 0
        %5665 = vmatprep.subr.mxu0 0.0
        %5666 = vmatpush1.msra.mxu0 0.0
        %5667 = vmatprep.subr.mxu0 0.0
        %5668 = vmatpush1.msra.mxu0 0.0
        %5669 = vmatprep.subr.mxu0 0.0
        %5670 = vmatpush1.msra.mxu0 0.0
        %5671 = vmatprep.subr.mxu0 0.0
        %5672 = vmatpush1.msra.mxu0 0.0
        %5673 = vmatprep.subr.mxu0 0.0
        %5674 = vmatpush1.msra.mxu0 0.0
        %5675 = vmatprep.subr.mxu0 0.0
        %5676 = vmatpush1.msra.mxu0 0.0
        %5677 = vmatprep.subr.mxu0 0.0
        %5678 = vmatpush1.msra.mxu0 0.0
        %5679 = vmatprep.subr.mxu0 0.0
        %5680 = vmatpush1.msra.mxu0 0.0
        %5681 = vmatprep.subr.mxu0 0.0
        %5682 = vmatpush1.msra.mxu0 0.0
        %5683 = vmatprep.subr.mxu0 0.0
        %5684 = vmatpush1.msra.mxu0 0.0
        %5685 = vmatprep.subr.mxu0 0.0
        %5686 = vmatpush1.msra.mxu0 0.0
        %5687 = vmatprep.subr.mxu0 0.0
        %5688 = vmatpush1.msra.mxu0 0.0
        %5689 = vmatprep.subr.mxu0 0.0
        %5690 = vmatpush1.msra.mxu0 0.0
        %5691 = vmatprep.subr.mxu0 0.0
        %5692 = vmatpush1.msra.mxu0 0.0
        %5693 = vmatprep.subr.mxu0 0.0
        %5694 = vmatpush1.msra.mxu0 %v5640
        %5695 = vmatprep.subr.mxu0 0.0
        %5696 = vmatpush1.msra.mxu0 %v5639
        %5697 = vmatprep.subr.mxu0 0.0
        %5698 = vmatpush2.msra.mxu0 0.0
        %5699 = vmatprep.subr.mxu0 0.0
        %5700 = vmatpush2.msra.mxu0 0.0
        %5701 = vmatprep.subr.mxu0 0.0
        %5702 = vmatpush2.msra.mxu0 0.0
        %5703 = vmatprep.subr.mxu0 0.0
        %5704 = vmatpush2.msra.mxu0 0.0
        %5705 = vmatprep.subr.mxu0 0.0
        %5706 = vmatpush2.msra.mxu0 0.0
        %5707 = vmatprep.subr.mxu0 0.0
        %5708 = vmatpush2.msra.mxu0 0.0
        %5709 = vmatprep.subr.mxu0 0.0
        %5710 = vmatpush2.msra.mxu0 0.0
        %5711 = vmatprep.subr.mxu0 0.0
        %5712 = vmatpush2.msra.mxu0 0.0
        %5713 = vmatprep.subr.mxu0 0.0
        %5714 = vmatpush2.msra.mxu0 0.0
        %5715 = vmatprep.subr.mxu0 0.0
        %5716 = vmatpush2.msra.mxu0 0.0
        %5717 = vmatprep.subr.mxu0 0.0
        %5718 = vmatpush2.msra.mxu0 0.0
        %5719 = vmatprep.subr.mxu0 0.0
        %5720 = vmatpush2.msra.mxu0 0.0
        %5721 = vmatprep.subr.mxu0 0.0
        %5722 = vmatpush2.msra.mxu0 0.0
        %5723 = vmatprep.subr.mxu0 0.0
        %5724 = vmatpush2.msra.mxu0 0.0
        %5725 = vmatprep.subr.mxu0 0.0
        %5726 = vmatpush2.msra.mxu0 0.0
        %5727 = vmatprep.subr.mxu0 0.0
        %5728 = vmatpush2.msra.mxu0 0.0
        %5729 = vmatprep.mubr.f32.mxu0 0.0
        %5730 = vmatmul.mubr.f32.gmra.mxu0 %v5642
        %v5731 = vpop.f32.mrf.mxu0
        %v5732 = vadd.f32 0.0, %v5731
        %v5733 = vpop.f32.mrf.mxu0
        %5734 = vmatprep.mubr.f32.mxu0 0.0
        %5735 = vmatmul.mubr.f32.gmra.mxu0 %v5645
        %v5736 = vpop.f32.mrf.mxu0
        %v5737 = vadd.f32 0.0, %v5736
        %v5738 = vpop.f32.mrf.mxu0
        %5739 = vmatprep.mubr.f32.mxu0 0.0
        %5740 = vmatmul.mubr.f32.gmra.mxu0 %v5648
        %v5741 = vpop.f32.mrf.mxu0
        %v5742 = vadd.f32 0.0, %v5741
        %v5743 = vpop.f32.mrf.mxu0
        %5744 = vmatprep.mubr.f32.mxu0 0.0
        %5745 = vmatmul.mubr.f32.gmra.mxu0 %v5651
        %v5746 = vpop.f32.mrf.mxu0
        %v5747 = vadd.f32 0.0, %v5746
        %v5748 = vpop.f32.mrf.mxu0
        %5749 = vmatprep.mubr.f32.mxu0 0.0
        %5750 = vmatmul.mubr.f32.gmra.mxu0 %v5654
        %v5751 = vpop.f32.mrf.mxu0
        %v5752 = vadd.f32 0.0, %v5751
        %v5753 = vpop.f32.mrf.mxu0
        %5754 = vmatprep.mubr.f32.mxu0 0.0
        %5755 = vmatmul.mubr.f32.gmra.mxu0 %v5657
        %v5756 = vpop.f32.mrf.mxu0
        %v5757 = vadd.f32 0.0, %v5756
        %v5758 = vpop.f32.mrf.mxu0
        %5759 = vmatprep.mubr.f32.mxu0 0.0
        %5760 = vmatmul.mubr.f32.gmra.mxu0 %v5660
        %v5761 = vpop.f32.mrf.mxu0
        %v5762 = vadd.f32 0.0, %v5761
        %v5763 = vpop.f32.mrf.mxu0
        %5764 = vmatprep.mubr.f32.mxu0 0.0
        %5765 = vmatmul.mubr.f32.gmra.mxu0 %v5663
        %v5766 = vpop.f32.mrf.mxu0
        %v5767 = vadd.f32 0.0, %v5766
        %v5768 = vpop.f32.mrf.mxu0
        %5769 = vdwg.mxu0
        %s5770 = scalar_lea.vmem %s266, 48
        %v5771 = vld [vmem:[%s5770] sm:$0xff]
        %v5773 = vsel %vm312, %v5771, 0
        %5775 = vmatprep.subr.mxu0 0.0
        %5776 = vmatpush1.msra.mxu0 0.0
        %5777 = vmatprep.subr.mxu0 0.0
        %5778 = vmatpush1.msra.mxu0 0.0
        %5779 = vmatprep.subr.mxu0 0.0
        %5780 = vmatpush1.msra.mxu0 0.0
        %5781 = vmatprep.subr.mxu0 0.0
        %5782 = vmatpush1.msra.mxu0 0.0
        %5783 = vmatprep.subr.mxu0 0.0
        %5784 = vmatpush1.msra.mxu0 0.0
        %5785 = vmatprep.subr.mxu0 0.0
        %5786 = vmatpush1.msra.mxu0 0.0
        %5787 = vmatprep.subr.mxu0 0.0
        %5788 = vmatpush1.msra.mxu0 0.0
        %5789 = vmatprep.subr.mxu0 0.0
        %5790 = vmatpush1.msra.mxu0 0.0
        %5791 = vmatprep.subr.mxu0 0.0
        %5792 = vmatpush1.msra.mxu0 0.0
        %5793 = vmatprep.subr.mxu0 0.0
        %5794 = vmatpush1.msra.mxu0 0.0
        %5795 = vmatprep.subr.mxu0 0.0
        %5796 = vmatpush1.msra.mxu0 0.0
        %5797 = vmatprep.subr.mxu0 0.0
        %5798 = vmatpush1.msra.mxu0 0.0
        %5799 = vmatprep.subr.mxu0 0.0
        %5800 = vmatpush1.msra.mxu0 0.0
        %5801 = vmatprep.subr.mxu0 0.0
        %5802 = vmatpush1.msra.mxu0 0.0
        %5803 = vmatprep.subr.mxu0 0.0
        %5804 = vmatpush1.msra.mxu0 %v5737
        %5805 = vmatprep.subr.mxu0 0.0
        %5806 = vmatpush1.msra.mxu0 %v5732
        %5807 = vmatprep.subr.mxu0 0.0
        %5808 = vmatpush2.msra.mxu0 0.0
        %5809 = vmatprep.subr.mxu0 0.0
        %5810 = vmatpush2.msra.mxu0 0.0
        %5811 = vmatprep.subr.mxu0 0.0
        %5812 = vmatpush2.msra.mxu0 0.0
        %5813 = vmatprep.subr.mxu0 0.0
        %5814 = vmatpush2.msra.mxu0 0.0
        %5815 = vmatprep.subr.mxu0 0.0
        %5816 = vmatpush2.msra.mxu0 0.0
        %5817 = vmatprep.subr.mxu0 0.0
        %5818 = vmatpush2.msra.mxu0 0.0
        %5819 = vmatprep.subr.mxu0 0.0
        %5820 = vmatpush2.msra.mxu0 0.0
        %5821 = vmatprep.subr.mxu0 0.0
        %5822 = vmatpush2.msra.mxu0 0.0
        %5823 = vmatprep.subr.mxu0 0.0
        %5824 = vmatpush2.msra.mxu0 0.0
        %5825 = vmatprep.subr.mxu0 0.0
        %5826 = vmatpush2.msra.mxu0 0.0
        %5827 = vmatprep.subr.mxu0 0.0
        %5828 = vmatpush2.msra.mxu0 0.0
        %5829 = vmatprep.subr.mxu0 0.0
        %5830 = vmatpush2.msra.mxu0 0.0
        %5831 = vmatprep.subr.mxu0 0.0
        %5832 = vmatpush2.msra.mxu0 0.0
        %5833 = vmatprep.subr.mxu0 0.0
        %5834 = vmatpush2.msra.mxu0 0.0
        %5835 = vmatprep.subr.mxu0 0.0
        %5836 = vmatpush2.msra.mxu0 0.0
        %5837 = vmatprep.subr.mxu0 0.0
        %5838 = vmatpush2.msra.mxu0 0.0
        %5839 = vmatprep.mubr.f32.mxu0 0.0
        %5840 = vmatmul.mubr.f32.gmra.mxu0 %v5773
        %v5841 = vpop.f32.mrf.mxu0
        %v5842 = vadd.f32 0.0, %v5841
        %v5843 = vpop.f32.mrf.mxu0
        %5844 = vdwg.mxu0
        %5845 = vmatprep.subr.mxu0 0.0
        %5846 = vmatpush1.msra.mxu0 0.0
        %5847 = vmatprep.subr.mxu0 0.0
        %5848 = vmatpush1.msra.mxu0 0.0
        %5849 = vmatprep.subr.mxu0 0.0
        %5850 = vmatpush1.msra.mxu0 0.0
        %5851 = vmatprep.subr.mxu0 0.0
        %5852 = vmatpush1.msra.mxu0 0.0
        %5853 = vmatprep.subr.mxu0 0.0
        %5854 = vmatpush1.msra.mxu0 0.0
        %5855 = vmatprep.subr.mxu0 0.0
        %5856 = vmatpush1.msra.mxu0 0.0
        %5857 = vmatprep.subr.mxu0 0.0
        %5858 = vmatpush1.msra.mxu0 0.0
        %5859 = vmatprep.subr.mxu0 0.0
        %5860 = vmatpush1.msra.mxu0 0.0
        %5861 = vmatprep.subr.mxu0 0.0
        %5862 = vmatpush1.msra.mxu0 0.0
        %5863 = vmatprep.subr.mxu0 0.0
        %5864 = vmatpush1.msra.mxu0 0.0
        %5865 = vmatprep.subr.mxu0 0.0
        %5866 = vmatpush1.msra.mxu0 0.0
        %5867 = vmatprep.subr.mxu0 0.0
        %5868 = vmatpush1.msra.mxu0 0.0
        %5869 = vmatprep.subr.mxu0 0.0
        %5870 = vmatpush1.msra.mxu0 0.0
        %5871 = vmatprep.subr.mxu0 0.0
        %5872 = vmatpush1.msra.mxu0 0.0
        %5873 = vmatprep.subr.mxu0 0.0
        %5874 = vmatpush1.msra.mxu0 %v5747
        %5875 = vmatprep.subr.mxu0 0.0
        %5876 = vmatpush1.msra.mxu0 %v5742
        %5877 = vmatprep.subr.mxu0 0.0
        %5878 = vmatpush2.msra.mxu0 0.0
        %5879 = vmatprep.subr.mxu0 0.0
        %5880 = vmatpush2.msra.mxu0 0.0
        %5881 = vmatprep.subr.mxu0 0.0
        %5882 = vmatpush2.msra.mxu0 0.0
        %5883 = vmatprep.subr.mxu0 0.0
        %5884 = vmatpush2.msra.mxu0 0.0
        %5885 = vmatprep.subr.mxu0 0.0
        %5886 = vmatpush2.msra.mxu0 0.0
        %5887 = vmatprep.subr.mxu0 0.0
        %5888 = vmatpush2.msra.mxu0 0.0
        %5889 = vmatprep.subr.mxu0 0.0
        %5890 = vmatpush2.msra.mxu0 0.0
        %5891 = vmatprep.subr.mxu0 0.0
        %5892 = vmatpush2.msra.mxu0 0.0
        %5893 = vmatprep.subr.mxu0 0.0
        %5894 = vmatpush2.msra.mxu0 0.0
        %5895 = vmatprep.subr.mxu0 0.0
        %5896 = vmatpush2.msra.mxu0 0.0
        %5897 = vmatprep.subr.mxu0 0.0
        %5898 = vmatpush2.msra.mxu0 0.0
        %5899 = vmatprep.subr.mxu0 0.0
        %5900 = vmatpush2.msra.mxu0 0.0
        %5901 = vmatprep.subr.mxu0 0.0
        %5902 = vmatpush2.msra.mxu0 0.0
        %5903 = vmatprep.subr.mxu0 0.0
        %5904 = vmatpush2.msra.mxu0 0.0
        %5905 = vmatprep.subr.mxu0 0.0
        %5906 = vmatpush2.msra.mxu0 0.0
        %5907 = vmatprep.subr.mxu0 0.0
        %5908 = vmatpush2.msra.mxu0 0.0
        %5909 = vmatprep.mubr.f32.mxu0 0.0
        %5910 = vmatmul.mubr.f32.gmra.mxu0 %v5773
        %v5911 = vpop.f32.mrf.mxu0
        %v5912 = vadd.f32 0.0, %v5911
        %v5913 = vpop.f32.mrf.mxu0
        %5914 = vdwg.mxu0
        %v5916 = vsel %vm586, %v5912, 0
        %5918 = vmatprep.subr.mxu0 0.0
        %5919 = vmatpush1.msra.mxu0 0.0
        %5920 = vmatprep.subr.mxu0 0.0
        %5921 = vmatpush1.msra.mxu0 0.0
        %5922 = vmatprep.subr.mxu0 0.0
        %5923 = vmatpush1.msra.mxu0 0.0
        %5924 = vmatprep.subr.mxu0 0.0
        %5925 = vmatpush1.msra.mxu0 0.0
        %5926 = vmatprep.subr.mxu0 0.0
        %5927 = vmatpush1.msra.mxu0 0.0
        %5928 = vmatprep.subr.mxu0 0.0
        %5929 = vmatpush1.msra.mxu0 0.0
        %5930 = vmatprep.subr.mxu0 0.0
        %5931 = vmatpush1.msra.mxu0 0.0
        %5932 = vmatprep.subr.mxu0 0.0
        %5933 = vmatpush1.msra.mxu0 0.0
        %5934 = vmatprep.subr.mxu0 0.0
        %5935 = vmatpush1.msra.mxu0 0.0
        %5936 = vmatprep.subr.mxu0 0.0
        %5937 = vmatpush1.msra.mxu0 0.0
        %5938 = vmatprep.subr.mxu0 0.0
        %5939 = vmatpush1.msra.mxu0 0.0
        %5940 = vmatprep.subr.mxu0 0.0
        %5941 = vmatpush1.msra.mxu0 0.0
        %5942 = vmatprep.subr.mxu0 0.0
        %5943 = vmatpush1.msra.mxu0 0.0
        %5944 = vmatprep.subr.mxu0 0.0
        %5945 = vmatpush1.msra.mxu0 0.0
        %5946 = vmatprep.subr.mxu0 0.0
        %5947 = vmatpush1.msra.mxu0 0.0
        %5948 = vmatprep.subr.mxu0 0.0
        %5949 = vmatpush1.msra.mxu0 %v285
        %5950 = vmatprep.subr.mxu0 0.0
        %5951 = vmatpush2.msra.mxu0 0.0
        %5952 = vmatprep.subr.mxu0 0.0
        %5953 = vmatpush2.msra.mxu0 0.0
        %5954 = vmatprep.subr.mxu0 0.0
        %5955 = vmatpush2.msra.mxu0 0.0
        %5956 = vmatprep.subr.mxu0 0.0
        %5957 = vmatpush2.msra.mxu0 0.0
        %5958 = vmatprep.subr.mxu0 0.0
        %5959 = vmatpush2.msra.mxu0 0.0
        %5960 = vmatprep.subr.mxu0 0.0
        %5961 = vmatpush2.msra.mxu0 0.0
        %5962 = vmatprep.subr.mxu0 0.0
        %5963 = vmatpush2.msra.mxu0 0.0
        %5964 = vmatprep.subr.mxu0 0.0
        %5965 = vmatpush2.msra.mxu0 0.0
        %5966 = vmatprep.subr.mxu0 0.0
        %5967 = vmatpush2.msra.mxu0 0.0
        %5968 = vmatprep.subr.mxu0 0.0
        %5969 = vmatpush2.msra.mxu0 0.0
        %5970 = vmatprep.subr.mxu0 0.0
        %5971 = vmatpush2.msra.mxu0 0.0
        %5972 = vmatprep.subr.mxu0 0.0
        %5973 = vmatpush2.msra.mxu0 0.0
        %5974 = vmatprep.subr.mxu0 0.0
        %5975 = vmatpush2.msra.mxu0 0.0
        %5976 = vmatprep.subr.mxu0 0.0
        %5977 = vmatpush2.msra.mxu0 0.0
        %5978 = vmatprep.subr.mxu0 0.0
        %5979 = vmatpush2.msra.mxu0 0.0
        %5980 = vmatprep.subr.mxu0 0.0
        %5981 = vmatpush2.msra.mxu0 0.0
        %5982 = vmatprep.mubr.f32.mxu0 0.0
        %5983 = vmatmul.mubr.f32.gmra.mxu0 %v5916
        %v5984 = vpop.f32.mrf.mxu0
        %v5985 = vadd.f32 0.0, %v5984
        %v5986 = vpop.f32.mrf.mxu0
        %5987 = vdwg.mxu0
        %v5989 = vsel %vm586, %v5842, 0
        %5991 = vmatprep.subr.mxu0 0.0
        %5992 = vmatpush1.msra.mxu0 0.0
        %5993 = vmatprep.subr.mxu0 0.0
        %5994 = vmatpush1.msra.mxu0 0.0
        %5995 = vmatprep.subr.mxu0 0.0
        %5996 = vmatpush1.msra.mxu0 0.0
        %5997 = vmatprep.subr.mxu0 0.0
        %5998 = vmatpush1.msra.mxu0 0.0
        %5999 = vmatprep.subr.mxu0 0.0
        %6000 = vmatpush1.msra.mxu0 0.0
        %6001 = vmatprep.subr.mxu0 0.0
        %6002 = vmatpush1.msra.mxu0 0.0
        %6003 = vmatprep.subr.mxu0 0.0
        %6004 = vmatpush1.msra.mxu0 0.0
        %6005 = vmatprep.subr.mxu0 0.0
        %6006 = vmatpush1.msra.mxu0 0.0
        %6007 = vmatprep.subr.mxu0 0.0
        %6008 = vmatpush1.msra.mxu0 0.0
        %6009 = vmatprep.subr.mxu0 0.0
        %6010 = vmatpush1.msra.mxu0 0.0
        %6011 = vmatprep.subr.mxu0 0.0
        %6012 = vmatpush1.msra.mxu0 0.0
        %6013 = vmatprep.subr.mxu0 0.0
        %6014 = vmatpush1.msra.mxu0 0.0
        %6015 = vmatprep.subr.mxu0 0.0
        %6016 = vmatpush1.msra.mxu0 0.0
        %6017 = vmatprep.subr.mxu0 0.0
        %6018 = vmatpush1.msra.mxu0 0.0
        %6019 = vmatprep.subr.mxu0 0.0
        %6020 = vmatpush1.msra.mxu0 0.0
        %6021 = vmatprep.subr.mxu0 0.0
        %6022 = vmatpush1.msra.mxu0 %v281
        %6023 = vmatprep.subr.mxu0 0.0
        %6024 = vmatpush2.msra.mxu0 0.0
        %6025 = vmatprep.subr.mxu0 0.0
        %6026 = vmatpush2.msra.mxu0 0.0
        %6027 = vmatprep.subr.mxu0 0.0
        %6028 = vmatpush2.msra.mxu0 0.0
        %6029 = vmatprep.subr.mxu0 0.0
        %6030 = vmatpush2.msra.mxu0 0.0
        %6031 = vmatprep.subr.mxu0 0.0
        %6032 = vmatpush2.msra.mxu0 0.0
        %6033 = vmatprep.subr.mxu0 0.0
        %6034 = vmatpush2.msra.mxu0 0.0
        %6035 = vmatprep.subr.mxu0 0.0
        %6036 = vmatpush2.msra.mxu0 0.0
        %6037 = vmatprep.subr.mxu0 0.0
        %6038 = vmatpush2.msra.mxu0 0.0
        %6039 = vmatprep.subr.mxu0 0.0
        %6040 = vmatpush2.msra.mxu0 0.0
        %6041 = vmatprep.subr.mxu0 0.0
        %6042 = vmatpush2.msra.mxu0 0.0
        %6043 = vmatprep.subr.mxu0 0.0
        %6044 = vmatpush2.msra.mxu0 0.0
        %6045 = vmatprep.subr.mxu0 0.0
        %6046 = vmatpush2.msra.mxu0 0.0
        %6047 = vmatprep.subr.mxu0 0.0
        %6048 = vmatpush2.msra.mxu0 0.0
        %6049 = vmatprep.subr.mxu0 0.0
        %6050 = vmatpush2.msra.mxu0 0.0
        %6051 = vmatprep.subr.mxu0 0.0
        %6052 = vmatpush2.msra.mxu0 0.0
        %6053 = vmatprep.subr.mxu0 0.0
        %6054 = vmatpush2.msra.mxu0 0.0
        %6055 = vmatprep.mubr.f32.mxu0 0.0
        %6056 = vmatmul.mubr.f32.gmra.mxu0 %v5989
        %v6057 = vpop.f32.mrf.mxu0
        %v6058 = vadd.f32 %v5985, %v6057
        %v6059 = vpop.f32.mrf.mxu0
        %6060 = vdwg.mxu0
        %6061 = vmatprep.subr.mxu0 0.0
        %6062 = vmatpush1.msra.mxu0 0.0
        %6063 = vmatprep.subr.mxu0 0.0
        %6064 = vmatpush1.msra.mxu0 0.0
        %6065 = vmatprep.subr.mxu0 0.0
        %6066 = vmatpush1.msra.mxu0 0.0
        %6067 = vmatprep.subr.mxu0 0.0
        %6068 = vmatpush1.msra.mxu0 0.0
        %6069 = vmatprep.subr.mxu0 0.0
        %6070 = vmatpush1.msra.mxu0 0.0
        %6071 = vmatprep.subr.mxu0 0.0
        %6072 = vmatpush1.msra.mxu0 0.0
        %6073 = vmatprep.subr.mxu0 0.0
        %6074 = vmatpush1.msra.mxu0 0.0
        %6075 = vmatprep.subr.mxu0 0.0
        %6076 = vmatpush1.msra.mxu0 0.0
        %6077 = vmatprep.subr.mxu0 0.0
        %6078 = vmatpush1.msra.mxu0 0.0
        %6079 = vmatprep.subr.mxu0 0.0
        %6080 = vmatpush1.msra.mxu0 0.0
        %6081 = vmatprep.subr.mxu0 0.0
        %6082 = vmatpush1.msra.mxu0 0.0
        %6083 = vmatprep.subr.mxu0 0.0
        %6084 = vmatpush1.msra.mxu0 0.0
        %6085 = vmatprep.subr.mxu0 0.0
        %6086 = vmatpush1.msra.mxu0 0.0
        %6087 = vmatprep.subr.mxu0 0.0
        %6088 = vmatpush1.msra.mxu0 0.0
        %6089 = vmatprep.subr.mxu0 0.0
        %6090 = vmatpush1.msra.mxu0 %v5757
        %6091 = vmatprep.subr.mxu0 0.0
        %6092 = vmatpush1.msra.mxu0 %v5752
        %6093 = vmatprep.subr.mxu0 0.0
        %6094 = vmatpush2.msra.mxu0 0.0
        %6095 = vmatprep.subr.mxu0 0.0
        %6096 = vmatpush2.msra.mxu0 0.0
        %6097 = vmatprep.subr.mxu0 0.0
        %6098 = vmatpush2.msra.mxu0 0.0
        %6099 = vmatprep.subr.mxu0 0.0
        %6100 = vmatpush2.msra.mxu0 0.0
        %6101 = vmatprep.subr.mxu0 0.0
        %6102 = vmatpush2.msra.mxu0 0.0
        %6103 = vmatprep.subr.mxu0 0.0
        %6104 = vmatpush2.msra.mxu0 0.0
        %6105 = vmatprep.subr.mxu0 0.0
        %6106 = vmatpush2.msra.mxu0 0.0
        %6107 = vmatprep.subr.mxu0 0.0
        %6108 = vmatpush2.msra.mxu0 0.0
        %6109 = vmatprep.subr.mxu0 0.0
        %6110 = vmatpush2.msra.mxu0 0.0
        %6111 = vmatprep.subr.mxu0 0.0
        %6112 = vmatpush2.msra.mxu0 0.0
        %6113 = vmatprep.subr.mxu0 0.0
        %6114 = vmatpush2.msra.mxu0 0.0
        %6115 = vmatprep.subr.mxu0 0.0
        %6116 = vmatpush2.msra.mxu0 0.0
        %6117 = vmatprep.subr.mxu0 0.0
        %6118 = vmatpush2.msra.mxu0 0.0
        %6119 = vmatprep.subr.mxu0 0.0
        %6120 = vmatpush2.msra.mxu0 0.0
        %6121 = vmatprep.subr.mxu0 0.0
        %6122 = vmatpush2.msra.mxu0 0.0
        %6123 = vmatprep.subr.mxu0 0.0
        %6124 = vmatpush2.msra.mxu0 0.0
        %6125 = vmatprep.mubr.f32.mxu0 0.0
        %6126 = vmatmul.mubr.f32.gmra.mxu0 %v5773
        %v6127 = vpop.f32.mrf.mxu0
        %v6128 = vadd.f32 0.0, %v6127
        %v6129 = vpop.f32.mrf.mxu0
        %6130 = vdwg.mxu0
        %v6132 = vsel %vm586, %v6128, 0
        %6134 = vmatprep.subr.mxu0 0.0
        %6135 = vmatpush1.msra.mxu0 0.0
        %6136 = vmatprep.subr.mxu0 0.0
        %6137 = vmatpush1.msra.mxu0 0.0
        %6138 = vmatprep.subr.mxu0 0.0
        %6139 = vmatpush1.msra.mxu0 0.0
        %6140 = vmatprep.subr.mxu0 0.0
        %6141 = vmatpush1.msra.mxu0 0.0
        %6142 = vmatprep.subr.mxu0 0.0
        %6143 = vmatpush1.msra.mxu0 0.0
        %6144 = vmatprep.subr.mxu0 0.0
        %6145 = vmatpush1.msra.mxu0 0.0
        %6146 = vmatprep.subr.mxu0 0.0
        %6147 = vmatpush1.msra.mxu0 0.0
        %6148 = vmatprep.subr.mxu0 0.0
        %6149 = vmatpush1.msra.mxu0 0.0
        %6150 = vmatprep.subr.mxu0 0.0
        %6151 = vmatpush1.msra.mxu0 0.0
        %6152 = vmatprep.subr.mxu0 0.0
        %6153 = vmatpush1.msra.mxu0 0.0
        %6154 = vmatprep.subr.mxu0 0.0
        %6155 = vmatpush1.msra.mxu0 0.0
        %6156 = vmatprep.subr.mxu0 0.0
        %6157 = vmatpush1.msra.mxu0 0.0
        %6158 = vmatprep.subr.mxu0 0.0
        %6159 = vmatpush1.msra.mxu0 0.0
        %6160 = vmatprep.subr.mxu0 0.0
        %6161 = vmatpush1.msra.mxu0 0.0
        %6162 = vmatprep.subr.mxu0 0.0
        %6163 = vmatpush1.msra.mxu0 0.0
        %6164 = vmatprep.subr.mxu0 0.0
        %6165 = vmatpush1.msra.mxu0 %v289
        %6166 = vmatprep.subr.mxu0 0.0
        %6167 = vmatpush2.msra.mxu0 0.0
        %6168 = vmatprep.subr.mxu0 0.0
        %6169 = vmatpush2.msra.mxu0 0.0
        %6170 = vmatprep.subr.mxu0 0.0
        %6171 = vmatpush2.msra.mxu0 0.0
        %6172 = vmatprep.subr.mxu0 0.0
        %6173 = vmatpush2.msra.mxu0 0.0
        %6174 = vmatprep.subr.mxu0 0.0
        %6175 = vmatpush2.msra.mxu0 0.0
        %6176 = vmatprep.subr.mxu0 0.0
        %6177 = vmatpush2.msra.mxu0 0.0
        %6178 = vmatprep.subr.mxu0 0.0
        %6179 = vmatpush2.msra.mxu0 0.0
        %6180 = vmatprep.subr.mxu0 0.0
        %6181 = vmatpush2.msra.mxu0 0.0
        %6182 = vmatprep.subr.mxu0 0.0
        %6183 = vmatpush2.msra.mxu0 0.0
        %6184 = vmatprep.subr.mxu0 0.0
        %6185 = vmatpush2.msra.mxu0 0.0
        %6186 = vmatprep.subr.mxu0 0.0
        %6187 = vmatpush2.msra.mxu0 0.0
        %6188 = vmatprep.subr.mxu0 0.0
        %6189 = vmatpush2.msra.mxu0 0.0
        %6190 = vmatprep.subr.mxu0 0.0
        %6191 = vmatpush2.msra.mxu0 0.0
        %6192 = vmatprep.subr.mxu0 0.0
        %6193 = vmatpush2.msra.mxu0 0.0
        %6194 = vmatprep.subr.mxu0 0.0
        %6195 = vmatpush2.msra.mxu0 0.0
        %6196 = vmatprep.subr.mxu0 0.0
        %6197 = vmatpush2.msra.mxu0 0.0
        %6198 = vmatprep.mubr.f32.mxu0 0.0
        %6199 = vmatmul.mubr.f32.gmra.mxu0 %v6132
        %v6200 = vpop.f32.mrf.mxu0
        %v6201 = vadd.f32 0.0, %v6200
        %v6202 = vpop.f32.mrf.mxu0
        %6203 = vdwg.mxu0
        %v6204 = vadd.f32 %v6058, %v6201
        %6205 = vmatprep.subr.mxu0 0.0
        %6206 = vmatpush1.msra.mxu0 0.0
        %6207 = vmatprep.subr.mxu0 0.0
        %6208 = vmatpush1.msra.mxu0 0.0
        %6209 = vmatprep.subr.mxu0 0.0
        %6210 = vmatpush1.msra.mxu0 0.0
        %6211 = vmatprep.subr.mxu0 0.0
        %6212 = vmatpush1.msra.mxu0 0.0
        %6213 = vmatprep.subr.mxu0 0.0
        %6214 = vmatpush1.msra.mxu0 0.0
        %6215 = vmatprep.subr.mxu0 0.0
        %6216 = vmatpush1.msra.mxu0 0.0
        %6217 = vmatprep.subr.mxu0 0.0
        %6218 = vmatpush1.msra.mxu0 0.0
        %6219 = vmatprep.subr.mxu0 0.0
        %6220 = vmatpush1.msra.mxu0 0.0
        %6221 = vmatprep.subr.mxu0 0.0
        %6222 = vmatpush1.msra.mxu0 0.0
        %6223 = vmatprep.subr.mxu0 0.0
        %6224 = vmatpush1.msra.mxu0 0.0
        %6225 = vmatprep.subr.mxu0 0.0
        %6226 = vmatpush1.msra.mxu0 0.0
        %6227 = vmatprep.subr.mxu0 0.0
        %6228 = vmatpush1.msra.mxu0 0.0
        %6229 = vmatprep.subr.mxu0 0.0
        %6230 = vmatpush1.msra.mxu0 0.0
        %6231 = vmatprep.subr.mxu0 0.0
        %6232 = vmatpush1.msra.mxu0 0.0
        %6233 = vmatprep.subr.mxu0 0.0
        %6234 = vmatpush1.msra.mxu0 %v5767
        %6235 = vmatprep.subr.mxu0 0.0
        %6236 = vmatpush1.msra.mxu0 %v5762
        %6237 = vmatprep.subr.mxu0 0.0
        %6238 = vmatpush2.msra.mxu0 0.0
        %6239 = vmatprep.subr.mxu0 0.0
        %6240 = vmatpush2.msra.mxu0 0.0
        %6241 = vmatprep.subr.mxu0 0.0
        %6242 = vmatpush2.msra.mxu0 0.0
        %6243 = vmatprep.subr.mxu0 0.0
        %6244 = vmatpush2.msra.mxu0 0.0
        %6245 = vmatprep.subr.mxu0 0.0
        %6246 = vmatpush2.msra.mxu0 0.0
        %6247 = vmatprep.subr.mxu0 0.0
        %6248 = vmatpush2.msra.mxu0 0.0
        %6249 = vmatprep.subr.mxu0 0.0
        %6250 = vmatpush2.msra.mxu0 0.0
        %6251 = vmatprep.subr.mxu0 0.0
        %6252 = vmatpush2.msra.mxu0 0.0
        %6253 = vmatprep.subr.mxu0 0.0
        %6254 = vmatpush2.msra.mxu0 0.0
        %6255 = vmatprep.subr.mxu0 0.0
        %6256 = vmatpush2.msra.mxu0 0.0
        %6257 = vmatprep.subr.mxu0 0.0
        %6258 = vmatpush2.msra.mxu0 0.0
        %6259 = vmatprep.subr.mxu0 0.0
        %6260 = vmatpush2.msra.mxu0 0.0
        %6261 = vmatprep.subr.mxu0 0.0
        %6262 = vmatpush2.msra.mxu0 0.0
        %6263 = vmatprep.subr.mxu0 0.0
        %6264 = vmatpush2.msra.mxu0 0.0
        %6265 = vmatprep.subr.mxu0 0.0
        %6266 = vmatpush2.msra.mxu0 0.0
        %6267 = vmatprep.subr.mxu0 0.0
        %6268 = vmatpush2.msra.mxu0 0.0
        %6269 = vmatprep.mubr.f32.mxu0 0.0
        %6270 = vmatmul.mubr.f32.gmra.mxu0 %v5773
        %v6271 = vpop.f32.mrf.mxu0
        %v6272 = vadd.f32 0.0, %v6271
        %v6273 = vpop.f32.mrf.mxu0
        %6274 = vdwg.mxu0
        %v6276 = vsel %vm586, %v6272, 0
        %6278 = vmatprep.subr.mxu0 0.0
        %6279 = vmatpush1.msra.mxu0 0.0
        %6280 = vmatprep.subr.mxu0 0.0
        %6281 = vmatpush1.msra.mxu0 0.0
        %6282 = vmatprep.subr.mxu0 0.0
        %6283 = vmatpush1.msra.mxu0 0.0
        %6284 = vmatprep.subr.mxu0 0.0
        %6285 = vmatpush1.msra.mxu0 0.0
        %6286 = vmatprep.subr.mxu0 0.0
        %6287 = vmatpush1.msra.mxu0 0.0
        %6288 = vmatprep.subr.mxu0 0.0
        %6289 = vmatpush1.msra.mxu0 0.0
        %6290 = vmatprep.subr.mxu0 0.0
        %6291 = vmatpush1.msra.mxu0 0.0
        %6292 = vmatprep.subr.mxu0 0.0
        %6293 = vmatpush1.msra.mxu0 0.0
        %6294 = vmatprep.subr.mxu0 0.0
        %6295 = vmatpush1.msra.mxu0 0.0
        %6296 = vmatprep.subr.mxu0 0.0
        %6297 = vmatpush1.msra.mxu0 0.0
        %6298 = vmatprep.subr.mxu0 0.0
        %6299 = vmatpush1.msra.mxu0 0.0
        %6300 = vmatprep.subr.mxu0 0.0
        %6301 = vmatpush1.msra.mxu0 0.0
        %6302 = vmatprep.subr.mxu0 0.0
        %6303 = vmatpush1.msra.mxu0 0.0
        %6304 = vmatprep.subr.mxu0 0.0
        %6305 = vmatpush1.msra.mxu0 0.0
        %6306 = vmatprep.subr.mxu0 0.0
        %6307 = vmatpush1.msra.mxu0 0.0
        %6308 = vmatprep.subr.mxu0 0.0
        %6309 = vmatpush1.msra.mxu0 %v293
        %6310 = vmatprep.subr.mxu0 0.0
        %6311 = vmatpush2.msra.mxu0 0.0
        %6312 = vmatprep.subr.mxu0 0.0
        %6313 = vmatpush2.msra.mxu0 0.0
        %6314 = vmatprep.subr.mxu0 0.0
        %6315 = vmatpush2.msra.mxu0 0.0
        %6316 = vmatprep.subr.mxu0 0.0
        %6317 = vmatpush2.msra.mxu0 0.0
        %6318 = vmatprep.subr.mxu0 0.0
        %6319 = vmatpush2.msra.mxu0 0.0
        %6320 = vmatprep.subr.mxu0 0.0
        %6321 = vmatpush2.msra.mxu0 0.0
        %6322 = vmatprep.subr.mxu0 0.0
        %6323 = vmatpush2.msra.mxu0 0.0
        %6324 = vmatprep.subr.mxu0 0.0
        %6325 = vmatpush2.msra.mxu0 0.0
        %6326 = vmatprep.subr.mxu0 0.0
        %6327 = vmatpush2.msra.mxu0 0.0
        %6328 = vmatprep.subr.mxu0 0.0
        %6329 = vmatpush2.msra.mxu0 0.0
        %6330 = vmatprep.subr.mxu0 0.0
        %6331 = vmatpush2.msra.mxu0 0.0
        %6332 = vmatprep.subr.mxu0 0.0
        %6333 = vmatpush2.msra.mxu0 0.0
        %6334 = vmatprep.subr.mxu0 0.0
        %6335 = vmatpush2.msra.mxu0 0.0
        %6336 = vmatprep.subr.mxu0 0.0
        %6337 = vmatpush2.msra.mxu0 0.0
        %6338 = vmatprep.subr.mxu0 0.0
        %6339 = vmatpush2.msra.mxu0 0.0
        %6340 = vmatprep.subr.mxu0 0.0
        %6341 = vmatpush2.msra.mxu0 0.0
        %6342 = vmatprep.mubr.f32.mxu0 0.0
        %6343 = vmatmul.mubr.f32.gmra.mxu0 %v6276
        %v6344 = vpop.f32.mrf.mxu0
        %v6345 = vadd.f32 0.0, %v6344
        %v6346 = vpop.f32.mrf.mxu0
        %6347 = vdwg.mxu0
        %v6348 = vadd.f32 %v6204, %v6345
        %v6349 = vadd.s32 %v1025, 6
        %vm6350 = vcmp.eq.s32.totalorder %v276, %v6349
        %vm6351 = vcmp.eq.s32.totalorder %v282, %v6349
        %vm6352 = vcmp.eq.s32.totalorder %v286, %v6349
        %vm6353 = vcmp.eq.s32.totalorder %v290, %v6349
        %vm6354 = vcmp.eq.s32.totalorder %v1021, %v6349
        %vm6355 = vcmp.eq.s32.totalorder %v1022, %v6349
        %vm6356 = vcmp.eq.s32.totalorder %v1023, %v6349
        %vm6357 = vcmp.eq.s32.totalorder %v1024, %v6349
        %v6358 = vsel %vm6350, 1, 0
        %v6359 = vsel %vm6351, 1, 0
        %v6360 = vsel %vm6352, 1, 0
        %v6361 = vsel %vm6353, 1, 0
        %v6362 = vsel %vm6354, 1, 0
        %v6363 = vsel %vm6355, 1, 0
        %v6364 = vsel %vm6356, 1, 0
        %v6365 = vsel %vm6357, 1, 0
        %v6366 = vcvt.s32.f32 %v6358
        %v6367 = vcvt.s32.f32 %v6359
        %v6368 = vcvt.s32.f32 %v6360
        %v6369 = vcvt.s32.f32 %v6361
        %v6370 = vcvt.s32.f32 %v6362
        %v6371 = vcvt.s32.f32 %v6363
        %v6372 = vcvt.s32.f32 %v6364
        %v6373 = vcvt.s32.f32 %v6365
        %v6375 = vsel %vm586, %v6366, 0
        %v6378 = vsel %vm586, %v6367, 0
        %v6381 = vsel %vm586, %v6368, 0
        %v6384 = vsel %vm586, %v6369, 0
        %v6387 = vsel %vm586, %v6370, 0
        %v6390 = vsel %vm586, %v6371, 0
        %v6393 = vsel %vm586, %v6372, 0
        %v6396 = vsel %vm586, %v6373, 0
        %6398 = vmatprep.subr.mxu0 0.0
        %6399 = vmatpush1.msra.mxu0 0.0
        %6400 = vmatprep.subr.mxu0 0.0
        %6401 = vmatpush1.msra.mxu0 0.0
        %6402 = vmatprep.subr.mxu0 0.0
        %6403 = vmatpush1.msra.mxu0 0.0
        %6404 = vmatprep.subr.mxu0 0.0
        %6405 = vmatpush1.msra.mxu0 0.0
        %6406 = vmatprep.subr.mxu0 0.0
        %6407 = vmatpush1.msra.mxu0 0.0
        %6408 = vmatprep.subr.mxu0 0.0
        %6409 = vmatpush1.msra.mxu0 0.0
        %6410 = vmatprep.subr.mxu0 0.0
        %6411 = vmatpush1.msra.mxu0 0.0
        %6412 = vmatprep.subr.mxu0 0.0
        %6413 = vmatpush1.msra.mxu0 0.0
        %6414 = vmatprep.subr.mxu0 0.0
        %6415 = vmatpush1.msra.mxu0 0.0
        %6416 = vmatprep.subr.mxu0 0.0
        %6417 = vmatpush1.msra.mxu0 0.0
        %6418 = vmatprep.subr.mxu0 0.0
        %6419 = vmatpush1.msra.mxu0 0.0
        %6420 = vmatprep.subr.mxu0 0.0
        %6421 = vmatpush1.msra.mxu0 0.0
        %6422 = vmatprep.subr.mxu0 0.0
        %6423 = vmatpush1.msra.mxu0 0.0
        %6424 = vmatprep.subr.mxu0 0.0
        %6425 = vmatpush1.msra.mxu0 0.0
        %6426 = vmatprep.subr.mxu0 0.0
        %6427 = vmatpush1.msra.mxu0 0.0
        %6428 = vmatprep.subr.mxu0 0.0
        %6429 = vmatpush1.msra.mxu0 %v6348
        %6430 = vmatprep.subr.mxu0 0.0
        %6431 = vmatpush2.msra.mxu0 0.0
        %6432 = vmatprep.subr.mxu0 0.0
        %6433 = vmatpush2.msra.mxu0 0.0
        %6434 = vmatprep.subr.mxu0 0.0
        %6435 = vmatpush2.msra.mxu0 0.0
        %6436 = vmatprep.subr.mxu0 0.0
        %6437 = vmatpush2.msra.mxu0 0.0
        %6438 = vmatprep.subr.mxu0 0.0
        %6439 = vmatpush2.msra.mxu0 0.0
        %6440 = vmatprep.subr.mxu0 0.0
        %6441 = vmatpush2.msra.mxu0 0.0
        %6442 = vmatprep.subr.mxu0 0.0
        %6443 = vmatpush2.msra.mxu0 0.0
        %6444 = vmatprep.subr.mxu0 0.0
        %6445 = vmatpush2.msra.mxu0 0.0
        %6446 = vmatprep.subr.mxu0 0.0
        %6447 = vmatpush2.msra.mxu0 0.0
        %6448 = vmatprep.subr.mxu0 0.0
        %6449 = vmatpush2.msra.mxu0 0.0
        %6450 = vmatprep.subr.mxu0 0.0
        %6451 = vmatpush2.msra.mxu0 0.0
        %6452 = vmatprep.subr.mxu0 0.0
        %6453 = vmatpush2.msra.mxu0 0.0
        %6454 = vmatprep.subr.mxu0 0.0
        %6455 = vmatpush2.msra.mxu0 0.0
        %6456 = vmatprep.subr.mxu0 0.0
        %6457 = vmatpush2.msra.mxu0 0.0
        %6458 = vmatprep.subr.mxu0 0.0
        %6459 = vmatpush2.msra.mxu0 0.0
        %6460 = vmatprep.subr.mxu0 0.0
        %6461 = vmatpush2.msra.mxu0 0.0
        %6462 = vmatprep.mubr.f32.mxu0 0.0
        %6463 = vmatmul.mubr.f32.gmra.mxu0 %v6375
        %v6464 = vpop.f32.mrf.mxu0
        %v6465 = vadd.f32 0.0, %v6464
        %v6466 = vpop.f32.mrf.mxu0
        %6467 = vmatprep.mubr.f32.mxu0 0.0
        %6468 = vmatmul.mubr.f32.gmra.mxu0 %v6378
        %v6469 = vpop.f32.mrf.mxu0
        %v6470 = vadd.f32 0.0, %v6469
        %v6471 = vpop.f32.mrf.mxu0
        %6472 = vmatprep.mubr.f32.mxu0 0.0
        %6473 = vmatmul.mubr.f32.gmra.mxu0 %v6381
        %v6474 = vpop.f32.mrf.mxu0
        %v6475 = vadd.f32 0.0, %v6474
        %v6476 = vpop.f32.mrf.mxu0
        %6477 = vmatprep.mubr.f32.mxu0 0.0
        %6478 = vmatmul.mubr.f32.gmra.mxu0 %v6384
        %v6479 = vpop.f32.mrf.mxu0
        %v6480 = vadd.f32 0.0, %v6479
        %v6481 = vpop.f32.mrf.mxu0
        %6482 = vmatprep.mubr.f32.mxu0 0.0
        %6483 = vmatmul.mubr.f32.gmra.mxu0 %v6387
        %v6484 = vpop.f32.mrf.mxu0
        %v6485 = vadd.f32 0.0, %v6484
        %v6486 = vpop.f32.mrf.mxu0
        %6487 = vmatprep.mubr.f32.mxu0 0.0
        %6488 = vmatmul.mubr.f32.gmra.mxu0 %v6390
        %v6489 = vpop.f32.mrf.mxu0
        %v6490 = vadd.f32 0.0, %v6489
        %v6491 = vpop.f32.mrf.mxu0
        %6492 = vmatprep.mubr.f32.mxu0 0.0
        %6493 = vmatmul.mubr.f32.gmra.mxu0 %v6393
        %v6494 = vpop.f32.mrf.mxu0
        %v6495 = vadd.f32 0.0, %v6494
        %v6496 = vpop.f32.mrf.mxu0
        %6497 = vmatprep.mubr.f32.mxu0 0.0
        %6498 = vmatmul.mubr.f32.gmra.mxu0 %v6396
        %v6499 = vpop.f32.mrf.mxu0
        %v6500 = vadd.f32 0.0, %v6499
        %v6501 = vpop.f32.mrf.mxu0
        %6502 = vdwg.mxu0
        %v6503 = vadd.f32 %v5613, %v6465
        %v6504 = vadd.f32 %v5614, %v6470
        %v6505 = vadd.f32 %v5615, %v6475
        %v6506 = vadd.f32 %v5616, %v6480
        %v6507 = vadd.f32 %v5617, %v6485
        %v6508 = vadd.f32 %v5618, %v6490
        %v6509 = vadd.f32 %v5619, %v6495
        %v6510 = vadd.f32 %v5620, %v6500
        %s6511 = scalar_lea.vmem %s260, 224
        %v6512 = vld [vmem:[%s6511] sm:$0xf]
        %v6513 = vld [vmem:[%s6511 + $0x4] sm:$0xf]
        %v6514 = vld [vmem:[%s6511 + $0x8] sm:$0xf]
        %v6515 = vld [vmem:[%s6511 + $0xc] sm:$0xf]
        %v6516 = vld [vmem:[%s6511 + $0x10] sm:$0xf]
        %v6517 = vld [vmem:[%s6511 + $0x14] sm:$0xf]
        %v6518 = vld [vmem:[%s6511 + $0x18] sm:$0xf]
        %v6519 = vld [vmem:[%s6511 + $0x1c] sm:$0xf]
        %v6520 = vunpack.c.l.bf16 %v6512
        %v6521 = vunpack.c.l.bf16 %v6513
        %v6522 = vunpack.c.l.bf16 %v6514
        %v6523 = vunpack.c.l.bf16 %v6515
        %v6524 = vunpack.c.l.bf16 %v6516
        %v6525 = vunpack.c.l.bf16 %v6517
        %v6526 = vunpack.c.l.bf16 %v6518
        %v6527 = vunpack.c.l.bf16 %v6519
        %s6528 = scalar_lea.vmem %s273, 112
        %v6529 = vld [vmem:[%s6528] sm:$0xff]
        %v6530 = vld [vmem:[%s6528 + $0x8] sm:$0xff]
        %v6532 = vsel %vm312, %v6520, 0
        %v6535 = vsel %vm312, %v6521, 0
        %v6538 = vsel %vm312, %v6522, 0
        %v6541 = vsel %vm312, %v6523, 0
        %v6544 = vsel %vm312, %v6524, 0
        %v6547 = vsel %vm312, %v6525, 0
        %v6550 = vsel %vm312, %v6526, 0
        %v6553 = vsel %vm312, %v6527, 0
        %6555 = vmatprep.subr.mxu0 0.0
        %6556 = vmatpush1.msra.mxu0 0.0
        %6557 = vmatprep.subr.mxu0 0.0
        %6558 = vmatpush1.msra.mxu0 0.0
        %6559 = vmatprep.subr.mxu0 0.0
        %6560 = vmatpush1.msra.mxu0 0.0
        %6561 = vmatprep.subr.mxu0 0.0
        %6562 = vmatpush1.msra.mxu0 0.0
        %6563 = vmatprep.subr.mxu0 0.0
        %6564 = vmatpush1.msra.mxu0 0.0
        %6565 = vmatprep.subr.mxu0 0.0
        %6566 = vmatpush1.msra.mxu0 0.0
        %6567 = vmatprep.subr.mxu0 0.0
        %6568 = vmatpush1.msra.mxu0 0.0
        %6569 = vmatprep.subr.mxu0 0.0
        %6570 = vmatpush1.msra.mxu0 0.0
        %6571 = vmatprep.subr.mxu0 0.0
        %6572 = vmatpush1.msra.mxu0 0.0
        %6573 = vmatprep.subr.mxu0 0.0
        %6574 = vmatpush1.msra.mxu0 0.0
        %6575 = vmatprep.subr.mxu0 0.0
        %6576 = vmatpush1.msra.mxu0 0.0
        %6577 = vmatprep.subr.mxu0 0.0
        %6578 = vmatpush1.msra.mxu0 0.0
        %6579 = vmatprep.subr.mxu0 0.0
        %6580 = vmatpush1.msra.mxu0 0.0
        %6581 = vmatprep.subr.mxu0 0.0
        %6582 = vmatpush1.msra.mxu0 0.0
        %6583 = vmatprep.subr.mxu0 0.0
        %6584 = vmatpush1.msra.mxu0 %v6530
        %6585 = vmatprep.subr.mxu0 0.0
        %6586 = vmatpush1.msra.mxu0 %v6529
        %6587 = vmatprep.subr.mxu0 0.0
        %6588 = vmatpush2.msra.mxu0 0.0
        %6589 = vmatprep.subr.mxu0 0.0
        %6590 = vmatpush2.msra.mxu0 0.0
        %6591 = vmatprep.subr.mxu0 0.0
        %6592 = vmatpush2.msra.mxu0 0.0
        %6593 = vmatprep.subr.mxu0 0.0
        %6594 = vmatpush2.msra.mxu0 0.0
        %6595 = vmatprep.subr.mxu0 0.0
        %6596 = vmatpush2.msra.mxu0 0.0
        %6597 = vmatprep.subr.mxu0 0.0
        %6598 = vmatpush2.msra.mxu0 0.0
        %6599 = vmatprep.subr.mxu0 0.0
        %6600 = vmatpush2.msra.mxu0 0.0
        %6601 = vmatprep.subr.mxu0 0.0
        %6602 = vmatpush2.msra.mxu0 0.0
        %6603 = vmatprep.subr.mxu0 0.0
        %6604 = vmatpush2.msra.mxu0 0.0
        %6605 = vmatprep.subr.mxu0 0.0
        %6606 = vmatpush2.msra.mxu0 0.0
        %6607 = vmatprep.subr.mxu0 0.0
        %6608 = vmatpush2.msra.mxu0 0.0
        %6609 = vmatprep.subr.mxu0 0.0
        %6610 = vmatpush2.msra.mxu0 0.0
        %6611 = vmatprep.subr.mxu0 0.0
        %6612 = vmatpush2.msra.mxu0 0.0
        %6613 = vmatprep.subr.mxu0 0.0
        %6614 = vmatpush2.msra.mxu0 0.0
        %6615 = vmatprep.subr.mxu0 0.0
        %6616 = vmatpush2.msra.mxu0 0.0
        %6617 = vmatprep.subr.mxu0 0.0
        %6618 = vmatpush2.msra.mxu0 0.0
        %6619 = vmatprep.mubr.f32.mxu0 0.0
        %6620 = vmatmul.mubr.f32.gmra.mxu0 %v6532
        %v6621 = vpop.f32.mrf.mxu0
        %v6622 = vadd.f32 0.0, %v6621
        %v6623 = vpop.f32.mrf.mxu0
        %6624 = vmatprep.mubr.f32.mxu0 0.0
        %6625 = vmatmul.mubr.f32.gmra.mxu0 %v6535
        %v6626 = vpop.f32.mrf.mxu0
        %v6627 = vadd.f32 0.0, %v6626
        %v6628 = vpop.f32.mrf.mxu0
        %6629 = vmatprep.mubr.f32.mxu0 0.0
        %6630 = vmatmul.mubr.f32.gmra.mxu0 %v6538
        %v6631 = vpop.f32.mrf.mxu0
        %v6632 = vadd.f32 0.0, %v6631
        %v6633 = vpop.f32.mrf.mxu0
        %6634 = vmatprep.mubr.f32.mxu0 0.0
        %6635 = vmatmul.mubr.f32.gmra.mxu0 %v6541
        %v6636 = vpop.f32.mrf.mxu0
        %v6637 = vadd.f32 0.0, %v6636
        %v6638 = vpop.f32.mrf.mxu0
        %6639 = vmatprep.mubr.f32.mxu0 0.0
        %6640 = vmatmul.mubr.f32.gmra.mxu0 %v6544
        %v6641 = vpop.f32.mrf.mxu0
        %v6642 = vadd.f32 0.0, %v6641
        %v6643 = vpop.f32.mrf.mxu0
        %6644 = vmatprep.mubr.f32.mxu0 0.0
        %6645 = vmatmul.mubr.f32.gmra.mxu0 %v6547
        %v6646 = vpop.f32.mrf.mxu0
        %v6647 = vadd.f32 0.0, %v6646
        %v6648 = vpop.f32.mrf.mxu0
        %6649 = vmatprep.mubr.f32.mxu0 0.0
        %6650 = vmatmul.mubr.f32.gmra.mxu0 %v6550
        %v6651 = vpop.f32.mrf.mxu0
        %v6652 = vadd.f32 0.0, %v6651
        %v6653 = vpop.f32.mrf.mxu0
        %6654 = vmatprep.mubr.f32.mxu0 0.0
        %6655 = vmatmul.mubr.f32.gmra.mxu0 %v6553
        %v6656 = vpop.f32.mrf.mxu0
        %v6657 = vadd.f32 0.0, %v6656
        %v6658 = vpop.f32.mrf.mxu0
        %6659 = vdwg.mxu0
        %s6660 = scalar_lea.vmem %s266, 56
        %v6661 = vld [vmem:[%s6660] sm:$0xff]
        %v6663 = vsel %vm312, %v6661, 0
        %6665 = vmatprep.subr.mxu0 0.0
        %6666 = vmatpush1.msra.mxu0 0.0
        %6667 = vmatprep.subr.mxu0 0.0
        %6668 = vmatpush1.msra.mxu0 0.0
        %6669 = vmatprep.subr.mxu0 0.0
        %6670 = vmatpush1.msra.mxu0 0.0
        %6671 = vmatprep.subr.mxu0 0.0
        %6672 = vmatpush1.msra.mxu0 0.0
        %6673 = vmatprep.subr.mxu0 0.0
        %6674 = vmatpush1.msra.mxu0 0.0
        %6675 = vmatprep.subr.mxu0 0.0
        %6676 = vmatpush1.msra.mxu0 0.0
        %6677 = vmatprep.subr.mxu0 0.0
        %6678 = vmatpush1.msra.mxu0 0.0
        %6679 = vmatprep.subr.mxu0 0.0
        %6680 = vmatpush1.msra.mxu0 0.0
        %6681 = vmatprep.subr.mxu0 0.0
        %6682 = vmatpush1.msra.mxu0 0.0
        %6683 = vmatprep.subr.mxu0 0.0
        %6684 = vmatpush1.msra.mxu0 0.0
        %6685 = vmatprep.subr.mxu0 0.0
        %6686 = vmatpush1.msra.mxu0 0.0
        %6687 = vmatprep.subr.mxu0 0.0
        %6688 = vmatpush1.msra.mxu0 0.0
        %6689 = vmatprep.subr.mxu0 0.0
        %6690 = vmatpush1.msra.mxu0 0.0
        %6691 = vmatprep.subr.mxu0 0.0
        %6692 = vmatpush1.msra.mxu0 0.0
        %6693 = vmatprep.subr.mxu0 0.0
        %6694 = vmatpush1.msra.mxu0 %v6627
        %6695 = vmatprep.subr.mxu0 0.0
        %6696 = vmatpush1.msra.mxu0 %v6622
        %6697 = vmatprep.subr.mxu0 0.0
        %6698 = vmatpush2.msra.mxu0 0.0
        %6699 = vmatprep.subr.mxu0 0.0
        %6700 = vmatpush2.msra.mxu0 0.0
        %6701 = vmatprep.subr.mxu0 0.0
        %6702 = vmatpush2.msra.mxu0 0.0
        %6703 = vmatprep.subr.mxu0 0.0
        %6704 = vmatpush2.msra.mxu0 0.0
        %6705 = vmatprep.subr.mxu0 0.0
        %6706 = vmatpush2.msra.mxu0 0.0
        %6707 = vmatprep.subr.mxu0 0.0
        %6708 = vmatpush2.msra.mxu0 0.0
        %6709 = vmatprep.subr.mxu0 0.0
        %6710 = vmatpush2.msra.mxu0 0.0
        %6711 = vmatprep.subr.mxu0 0.0
        %6712 = vmatpush2.msra.mxu0 0.0
        %6713 = vmatprep.subr.mxu0 0.0
        %6714 = vmatpush2.msra.mxu0 0.0
        %6715 = vmatprep.subr.mxu0 0.0
        %6716 = vmatpush2.msra.mxu0 0.0
        %6717 = vmatprep.subr.mxu0 0.0
        %6718 = vmatpush2.msra.mxu0 0.0
        %6719 = vmatprep.subr.mxu0 0.0
        %6720 = vmatpush2.msra.mxu0 0.0
        %6721 = vmatprep.subr.mxu0 0.0
        %6722 = vmatpush2.msra.mxu0 0.0
        %6723 = vmatprep.subr.mxu0 0.0
        %6724 = vmatpush2.msra.mxu0 0.0
        %6725 = vmatprep.subr.mxu0 0.0
        %6726 = vmatpush2.msra.mxu0 0.0
        %6727 = vmatprep.subr.mxu0 0.0
        %6728 = vmatpush2.msra.mxu0 0.0
        %6729 = vmatprep.mubr.f32.mxu0 0.0
        %6730 = vmatmul.mubr.f32.gmra.mxu0 %v6663
        %v6731 = vpop.f32.mrf.mxu0
        %v6732 = vadd.f32 0.0, %v6731
        %v6733 = vpop.f32.mrf.mxu0
        %6734 = vdwg.mxu0
        %6735 = vmatprep.subr.mxu0 0.0
        %6736 = vmatpush1.msra.mxu0 0.0
        %6737 = vmatprep.subr.mxu0 0.0
        %6738 = vmatpush1.msra.mxu0 0.0
        %6739 = vmatprep.subr.mxu0 0.0
        %6740 = vmatpush1.msra.mxu0 0.0
        %6741 = vmatprep.subr.mxu0 0.0
        %6742 = vmatpush1.msra.mxu0 0.0
        %6743 = vmatprep.subr.mxu0 0.0
        %6744 = vmatpush1.msra.mxu0 0.0
        %6745 = vmatprep.subr.mxu0 0.0
        %6746 = vmatpush1.msra.mxu0 0.0
        %6747 = vmatprep.subr.mxu0 0.0
        %6748 = vmatpush1.msra.mxu0 0.0
        %6749 = vmatprep.subr.mxu0 0.0
        %6750 = vmatpush1.msra.mxu0 0.0
        %6751 = vmatprep.subr.mxu0 0.0
        %6752 = vmatpush1.msra.mxu0 0.0
        %6753 = vmatprep.subr.mxu0 0.0
        %6754 = vmatpush1.msra.mxu0 0.0
        %6755 = vmatprep.subr.mxu0 0.0
        %6756 = vmatpush1.msra.mxu0 0.0
        %6757 = vmatprep.subr.mxu0 0.0
        %6758 = vmatpush1.msra.mxu0 0.0
        %6759 = vmatprep.subr.mxu0 0.0
        %6760 = vmatpush1.msra.mxu0 0.0
        %6761 = vmatprep.subr.mxu0 0.0
        %6762 = vmatpush1.msra.mxu0 0.0
        %6763 = vmatprep.subr.mxu0 0.0
        %6764 = vmatpush1.msra.mxu0 %v6637
        %6765 = vmatprep.subr.mxu0 0.0
        %6766 = vmatpush1.msra.mxu0 %v6632
        %6767 = vmatprep.subr.mxu0 0.0
        %6768 = vmatpush2.msra.mxu0 0.0
        %6769 = vmatprep.subr.mxu0 0.0
        %6770 = vmatpush2.msra.mxu0 0.0
        %6771 = vmatprep.subr.mxu0 0.0
        %6772 = vmatpush2.msra.mxu0 0.0
        %6773 = vmatprep.subr.mxu0 0.0
        %6774 = vmatpush2.msra.mxu0 0.0
        %6775 = vmatprep.subr.mxu0 0.0
        %6776 = vmatpush2.msra.mxu0 0.0
        %6777 = vmatprep.subr.mxu0 0.0
        %6778 = vmatpush2.msra.mxu0 0.0
        %6779 = vmatprep.subr.mxu0 0.0
        %6780 = vmatpush2.msra.mxu0 0.0
        %6781 = vmatprep.subr.mxu0 0.0
        %6782 = vmatpush2.msra.mxu0 0.0
        %6783 = vmatprep.subr.mxu0 0.0
        %6784 = vmatpush2.msra.mxu0 0.0
        %6785 = vmatprep.subr.mxu0 0.0
        %6786 = vmatpush2.msra.mxu0 0.0
        %6787 = vmatprep.subr.mxu0 0.0
        %6788 = vmatpush2.msra.mxu0 0.0
        %6789 = vmatprep.subr.mxu0 0.0
        %6790 = vmatpush2.msra.mxu0 0.0
        %6791 = vmatprep.subr.mxu0 0.0
        %6792 = vmatpush2.msra.mxu0 0.0
        %6793 = vmatprep.subr.mxu0 0.0
        %6794 = vmatpush2.msra.mxu0 0.0
        %6795 = vmatprep.subr.mxu0 0.0
        %6796 = vmatpush2.msra.mxu0 0.0
        %6797 = vmatprep.subr.mxu0 0.0
        %6798 = vmatpush2.msra.mxu0 0.0
        %6799 = vmatprep.mubr.f32.mxu0 0.0
        %6800 = vmatmul.mubr.f32.gmra.mxu0 %v6663
        %v6801 = vpop.f32.mrf.mxu0
        %v6802 = vadd.f32 0.0, %v6801
        %v6803 = vpop.f32.mrf.mxu0
        %6804 = vdwg.mxu0
        %v6806 = vsel %vm586, %v6802, 0
        %6808 = vmatprep.subr.mxu0 0.0
        %6809 = vmatpush1.msra.mxu0 0.0
        %6810 = vmatprep.subr.mxu0 0.0
        %6811 = vmatpush1.msra.mxu0 0.0
        %6812 = vmatprep.subr.mxu0 0.0
        %6813 = vmatpush1.msra.mxu0 0.0
        %6814 = vmatprep.subr.mxu0 0.0
        %6815 = vmatpush1.msra.mxu0 0.0
        %6816 = vmatprep.subr.mxu0 0.0
        %6817 = vmatpush1.msra.mxu0 0.0
        %6818 = vmatprep.subr.mxu0 0.0
        %6819 = vmatpush1.msra.mxu0 0.0
        %6820 = vmatprep.subr.mxu0 0.0
        %6821 = vmatpush1.msra.mxu0 0.0
        %6822 = vmatprep.subr.mxu0 0.0
        %6823 = vmatpush1.msra.mxu0 0.0
        %6824 = vmatprep.subr.mxu0 0.0
        %6825 = vmatpush1.msra.mxu0 0.0
        %6826 = vmatprep.subr.mxu0 0.0
        %6827 = vmatpush1.msra.mxu0 0.0
        %6828 = vmatprep.subr.mxu0 0.0
        %6829 = vmatpush1.msra.mxu0 0.0
        %6830 = vmatprep.subr.mxu0 0.0
        %6831 = vmatpush1.msra.mxu0 0.0
        %6832 = vmatprep.subr.mxu0 0.0
        %6833 = vmatpush1.msra.mxu0 0.0
        %6834 = vmatprep.subr.mxu0 0.0
        %6835 = vmatpush1.msra.mxu0 0.0
        %6836 = vmatprep.subr.mxu0 0.0
        %6837 = vmatpush1.msra.mxu0 0.0
        %6838 = vmatprep.subr.mxu0 0.0
        %6839 = vmatpush1.msra.mxu0 %v285
        %6840 = vmatprep.subr.mxu0 0.0
        %6841 = vmatpush2.msra.mxu0 0.0
        %6842 = vmatprep.subr.mxu0 0.0
        %6843 = vmatpush2.msra.mxu0 0.0
        %6844 = vmatprep.subr.mxu0 0.0
        %6845 = vmatpush2.msra.mxu0 0.0
        %6846 = vmatprep.subr.mxu0 0.0
        %6847 = vmatpush2.msra.mxu0 0.0
        %6848 = vmatprep.subr.mxu0 0.0
        %6849 = vmatpush2.msra.mxu0 0.0
        %6850 = vmatprep.subr.mxu0 0.0
        %6851 = vmatpush2.msra.mxu0 0.0
        %6852 = vmatprep.subr.mxu0 0.0
        %6853 = vmatpush2.msra.mxu0 0.0
        %6854 = vmatprep.subr.mxu0 0.0
        %6855 = vmatpush2.msra.mxu0 0.0
        %6856 = vmatprep.subr.mxu0 0.0
        %6857 = vmatpush2.msra.mxu0 0.0
        %6858 = vmatprep.subr.mxu0 0.0
        %6859 = vmatpush2.msra.mxu0 0.0
        %6860 = vmatprep.subr.mxu0 0.0
        %6861 = vmatpush2.msra.mxu0 0.0
        %6862 = vmatprep.subr.mxu0 0.0
        %6863 = vmatpush2.msra.mxu0 0.0
        %6864 = vmatprep.subr.mxu0 0.0
        %6865 = vmatpush2.msra.mxu0 0.0
        %6866 = vmatprep.subr.mxu0 0.0
        %6867 = vmatpush2.msra.mxu0 0.0
        %6868 = vmatprep.subr.mxu0 0.0
        %6869 = vmatpush2.msra.mxu0 0.0
        %6870 = vmatprep.subr.mxu0 0.0
        %6871 = vmatpush2.msra.mxu0 0.0
        %6872 = vmatprep.mubr.f32.mxu0 0.0
        %6873 = vmatmul.mubr.f32.gmra.mxu0 %v6806
        %v6874 = vpop.f32.mrf.mxu0
        %v6875 = vadd.f32 0.0, %v6874
        %v6876 = vpop.f32.mrf.mxu0
        %6877 = vdwg.mxu0
        %v6879 = vsel %vm586, %v6732, 0
        %6881 = vmatprep.subr.mxu0 0.0
        %6882 = vmatpush1.msra.mxu0 0.0
        %6883 = vmatprep.subr.mxu0 0.0
        %6884 = vmatpush1.msra.mxu0 0.0
        %6885 = vmatprep.subr.mxu0 0.0
        %6886 = vmatpush1.msra.mxu0 0.0
        %6887 = vmatprep.subr.mxu0 0.0
        %6888 = vmatpush1.msra.mxu0 0.0
        %6889 = vmatprep.subr.mxu0 0.0
        %6890 = vmatpush1.msra.mxu0 0.0
        %6891 = vmatprep.subr.mxu0 0.0
        %6892 = vmatpush1.msra.mxu0 0.0
        %6893 = vmatprep.subr.mxu0 0.0
        %6894 = vmatpush1.msra.mxu0 0.0
        %6895 = vmatprep.subr.mxu0 0.0
        %6896 = vmatpush1.msra.mxu0 0.0
        %6897 = vmatprep.subr.mxu0 0.0
        %6898 = vmatpush1.msra.mxu0 0.0
        %6899 = vmatprep.subr.mxu0 0.0
        %6900 = vmatpush1.msra.mxu0 0.0
        %6901 = vmatprep.subr.mxu0 0.0
        %6902 = vmatpush1.msra.mxu0 0.0
        %6903 = vmatprep.subr.mxu0 0.0
        %6904 = vmatpush1.msra.mxu0 0.0
        %6905 = vmatprep.subr.mxu0 0.0
        %6906 = vmatpush1.msra.mxu0 0.0
        %6907 = vmatprep.subr.mxu0 0.0
        %6908 = vmatpush1.msra.mxu0 0.0
        %6909 = vmatprep.subr.mxu0 0.0
        %6910 = vmatpush1.msra.mxu0 0.0
        %6911 = vmatprep.subr.mxu0 0.0
        %6912 = vmatpush1.msra.mxu0 %v281
        %6913 = vmatprep.subr.mxu0 0.0
        %6914 = vmatpush2.msra.mxu0 0.0
        %6915 = vmatprep.subr.mxu0 0.0
        %6916 = vmatpush2.msra.mxu0 0.0
        %6917 = vmatprep.subr.mxu0 0.0
        %6918 = vmatpush2.msra.mxu0 0.0
        %6919 = vmatprep.subr.mxu0 0.0
        %6920 = vmatpush2.msra.mxu0 0.0
        %6921 = vmatprep.subr.mxu0 0.0
        %6922 = vmatpush2.msra.mxu0 0.0
        %6923 = vmatprep.subr.mxu0 0.0
        %6924 = vmatpush2.msra.mxu0 0.0
        %6925 = vmatprep.subr.mxu0 0.0
        %6926 = vmatpush2.msra.mxu0 0.0
        %6927 = vmatprep.subr.mxu0 0.0
        %6928 = vmatpush2.msra.mxu0 0.0
        %6929 = vmatprep.subr.mxu0 0.0
        %6930 = vmatpush2.msra.mxu0 0.0
        %6931 = vmatprep.subr.mxu0 0.0
        %6932 = vmatpush2.msra.mxu0 0.0
        %6933 = vmatprep.subr.mxu0 0.0
        %6934 = vmatpush2.msra.mxu0 0.0
        %6935 = vmatprep.subr.mxu0 0.0
        %6936 = vmatpush2.msra.mxu0 0.0
        %6937 = vmatprep.subr.mxu0 0.0
        %6938 = vmatpush2.msra.mxu0 0.0
        %6939 = vmatprep.subr.mxu0 0.0
        %6940 = vmatpush2.msra.mxu0 0.0
        %6941 = vmatprep.subr.mxu0 0.0
        %6942 = vmatpush2.msra.mxu0 0.0
        %6943 = vmatprep.subr.mxu0 0.0
        %6944 = vmatpush2.msra.mxu0 0.0
        %6945 = vmatprep.mubr.f32.mxu0 0.0
        %6946 = vmatmul.mubr.f32.gmra.mxu0 %v6879
        %v6947 = vpop.f32.mrf.mxu0
        %v6948 = vadd.f32 %v6875, %v6947
        %v6949 = vpop.f32.mrf.mxu0
        %6950 = vdwg.mxu0
        %6951 = vmatprep.subr.mxu0 0.0
        %6952 = vmatpush1.msra.mxu0 0.0
        %6953 = vmatprep.subr.mxu0 0.0
        %6954 = vmatpush1.msra.mxu0 0.0
        %6955 = vmatprep.subr.mxu0 0.0
        %6956 = vmatpush1.msra.mxu0 0.0
        %6957 = vmatprep.subr.mxu0 0.0
        %6958 = vmatpush1.msra.mxu0 0.0
        %6959 = vmatprep.subr.mxu0 0.0
        %6960 = vmatpush1.msra.mxu0 0.0
        %6961 = vmatprep.subr.mxu0 0.0
        %6962 = vmatpush1.msra.mxu0 0.0
        %6963 = vmatprep.subr.mxu0 0.0
        %6964 = vmatpush1.msra.mxu0 0.0
        %6965 = vmatprep.subr.mxu0 0.0
        %6966 = vmatpush1.msra.mxu0 0.0
        %6967 = vmatprep.subr.mxu0 0.0
        %6968 = vmatpush1.msra.mxu0 0.0
        %6969 = vmatprep.subr.mxu0 0.0
        %6970 = vmatpush1.msra.mxu0 0.0
        %6971 = vmatprep.subr.mxu0 0.0
        %6972 = vmatpush1.msra.mxu0 0.0
        %6973 = vmatprep.subr.mxu0 0.0
        %6974 = vmatpush1.msra.mxu0 0.0
        %6975 = vmatprep.subr.mxu0 0.0
        %6976 = vmatpush1.msra.mxu0 0.0
        %6977 = vmatprep.subr.mxu0 0.0
        %6978 = vmatpush1.msra.mxu0 0.0
        %6979 = vmatprep.subr.mxu0 0.0
        %6980 = vmatpush1.msra.mxu0 %v6647
        %6981 = vmatprep.subr.mxu0 0.0
        %6982 = vmatpush1.msra.mxu0 %v6642
        %6983 = vmatprep.subr.mxu0 0.0
        %6984 = vmatpush2.msra.mxu0 0.0
        %6985 = vmatprep.subr.mxu0 0.0
        %6986 = vmatpush2.msra.mxu0 0.0
        %6987 = vmatprep.subr.mxu0 0.0
        %6988 = vmatpush2.msra.mxu0 0.0
        %6989 = vmatprep.subr.mxu0 0.0
        %6990 = vmatpush2.msra.mxu0 0.0
        %6991 = vmatprep.subr.mxu0 0.0
        %6992 = vmatpush2.msra.mxu0 0.0
        %6993 = vmatprep.subr.mxu0 0.0
        %6994 = vmatpush2.msra.mxu0 0.0
        %6995 = vmatprep.subr.mxu0 0.0
        %6996 = vmatpush2.msra.mxu0 0.0
        %6997 = vmatprep.subr.mxu0 0.0
        %6998 = vmatpush2.msra.mxu0 0.0
        %6999 = vmatprep.subr.mxu0 0.0
        %7000 = vmatpush2.msra.mxu0 0.0
        %7001 = vmatprep.subr.mxu0 0.0
        %7002 = vmatpush2.msra.mxu0 0.0
        %7003 = vmatprep.subr.mxu0 0.0
        %7004 = vmatpush2.msra.mxu0 0.0
        %7005 = vmatprep.subr.mxu0 0.0
        %7006 = vmatpush2.msra.mxu0 0.0
        %7007 = vmatprep.subr.mxu0 0.0
        %7008 = vmatpush2.msra.mxu0 0.0
        %7009 = vmatprep.subr.mxu0 0.0
        %7010 = vmatpush2.msra.mxu0 0.0
        %7011 = vmatprep.subr.mxu0 0.0
        %7012 = vmatpush2.msra.mxu0 0.0
        %7013 = vmatprep.subr.mxu0 0.0
        %7014 = vmatpush2.msra.mxu0 0.0
        %7015 = vmatprep.mubr.f32.mxu0 0.0
        %7016 = vmatmul.mubr.f32.gmra.mxu0 %v6663
        %v7017 = vpop.f32.mrf.mxu0
        %v7018 = vadd.f32 0.0, %v7017
        %v7019 = vpop.f32.mrf.mxu0
        %7020 = vdwg.mxu0
        %v7022 = vsel %vm586, %v7018, 0
        %7024 = vmatprep.subr.mxu0 0.0
        %7025 = vmatpush1.msra.mxu0 0.0
        %7026 = vmatprep.subr.mxu0 0.0
        %7027 = vmatpush1.msra.mxu0 0.0
        %7028 = vmatprep.subr.mxu0 0.0
        %7029 = vmatpush1.msra.mxu0 0.0
        %7030 = vmatprep.subr.mxu0 0.0
        %7031 = vmatpush1.msra.mxu0 0.0
        %7032 = vmatprep.subr.mxu0 0.0
        %7033 = vmatpush1.msra.mxu0 0.0
        %7034 = vmatprep.subr.mxu0 0.0
        %7035 = vmatpush1.msra.mxu0 0.0
        %7036 = vmatprep.subr.mxu0 0.0
        %7037 = vmatpush1.msra.mxu0 0.0
        %7038 = vmatprep.subr.mxu0 0.0
        %7039 = vmatpush1.msra.mxu0 0.0
        %7040 = vmatprep.subr.mxu0 0.0
        %7041 = vmatpush1.msra.mxu0 0.0
        %7042 = vmatprep.subr.mxu0 0.0
        %7043 = vmatpush1.msra.mxu0 0.0
        %7044 = vmatprep.subr.mxu0 0.0
        %7045 = vmatpush1.msra.mxu0 0.0
        %7046 = vmatprep.subr.mxu0 0.0
        %7047 = vmatpush1.msra.mxu0 0.0
        %7048 = vmatprep.subr.mxu0 0.0
        %7049 = vmatpush1.msra.mxu0 0.0
        %7050 = vmatprep.subr.mxu0 0.0
        %7051 = vmatpush1.msra.mxu0 0.0
        %7052 = vmatprep.subr.mxu0 0.0
        %7053 = vmatpush1.msra.mxu0 0.0
        %7054 = vmatprep.subr.mxu0 0.0
        %7055 = vmatpush1.msra.mxu0 %v289
        %7056 = vmatprep.subr.mxu0 0.0
        %7057 = vmatpush2.msra.mxu0 0.0
        %7058 = vmatprep.subr.mxu0 0.0
        %7059 = vmatpush2.msra.mxu0 0.0
        %7060 = vmatprep.subr.mxu0 0.0
        %7061 = vmatpush2.msra.mxu0 0.0
        %7062 = vmatprep.subr.mxu0 0.0
        %7063 = vmatpush2.msra.mxu0 0.0
        %7064 = vmatprep.subr.mxu0 0.0
        %7065 = vmatpush2.msra.mxu0 0.0
        %7066 = vmatprep.subr.mxu0 0.0
        %7067 = vmatpush2.msra.mxu0 0.0
        %7068 = vmatprep.subr.mxu0 0.0
        %7069 = vmatpush2.msra.mxu0 0.0
        %7070 = vmatprep.subr.mxu0 0.0
        %7071 = vmatpush2.msra.mxu0 0.0
        %7072 = vmatprep.subr.mxu0 0.0
        %7073 = vmatpush2.msra.mxu0 0.0
        %7074 = vmatprep.subr.mxu0 0.0
        %7075 = vmatpush2.msra.mxu0 0.0
        %7076 = vmatprep.subr.mxu0 0.0
        %7077 = vmatpush2.msra.mxu0 0.0
        %7078 = vmatprep.subr.mxu0 0.0
        %7079 = vmatpush2.msra.mxu0 0.0
        %7080 = vmatprep.subr.mxu0 0.0
        %7081 = vmatpush2.msra.mxu0 0.0
        %7082 = vmatprep.subr.mxu0 0.0
        %7083 = vmatpush2.msra.mxu0 0.0
        %7084 = vmatprep.subr.mxu0 0.0
        %7085 = vmatpush2.msra.mxu0 0.0
        %7086 = vmatprep.subr.mxu0 0.0
        %7087 = vmatpush2.msra.mxu0 0.0
        %7088 = vmatprep.mubr.f32.mxu0 0.0
        %7089 = vmatmul.mubr.f32.gmra.mxu0 %v7022
        %v7090 = vpop.f32.mrf.mxu0
        %v7091 = vadd.f32 0.0, %v7090
        %v7092 = vpop.f32.mrf.mxu0
        %7093 = vdwg.mxu0
        %v7094 = vadd.f32 %v6948, %v7091
        %7095 = vmatprep.subr.mxu0 0.0
        %7096 = vmatpush1.msra.mxu0 0.0
        %7097 = vmatprep.subr.mxu0 0.0
        %7098 = vmatpush1.msra.mxu0 0.0
        %7099 = vmatprep.subr.mxu0 0.0
        %7100 = vmatpush1.msra.mxu0 0.0
        %7101 = vmatprep.subr.mxu0 0.0
        %7102 = vmatpush1.msra.mxu0 0.0
        %7103 = vmatprep.subr.mxu0 0.0
        %7104 = vmatpush1.msra.mxu0 0.0
        %7105 = vmatprep.subr.mxu0 0.0
        %7106 = vmatpush1.msra.mxu0 0.0
        %7107 = vmatprep.subr.mxu0 0.0
        %7108 = vmatpush1.msra.mxu0 0.0
        %7109 = vmatprep.subr.mxu0 0.0
        %7110 = vmatpush1.msra.mxu0 0.0
        %7111 = vmatprep.subr.mxu0 0.0
        %7112 = vmatpush1.msra.mxu0 0.0
        %7113 = vmatprep.subr.mxu0 0.0
        %7114 = vmatpush1.msra.mxu0 0.0
        %7115 = vmatprep.subr.mxu0 0.0
        %7116 = vmatpush1.msra.mxu0 0.0
        %7117 = vmatprep.subr.mxu0 0.0
        %7118 = vmatpush1.msra.mxu0 0.0
        %7119 = vmatprep.subr.mxu0 0.0
        %7120 = vmatpush1.msra.mxu0 0.0
        %7121 = vmatprep.subr.mxu0 0.0
        %7122 = vmatpush1.msra.mxu0 0.0
        %7123 = vmatprep.subr.mxu0 0.0
        %7124 = vmatpush1.msra.mxu0 %v6657
        %7125 = vmatprep.subr.mxu0 0.0
        %7126 = vmatpush1.msra.mxu0 %v6652
        %7127 = vmatprep.subr.mxu0 0.0
        %7128 = vmatpush2.msra.mxu0 0.0
        %7129 = vmatprep.subr.mxu0 0.0
        %7130 = vmatpush2.msra.mxu0 0.0
        %7131 = vmatprep.subr.mxu0 0.0
        %7132 = vmatpush2.msra.mxu0 0.0
        %7133 = vmatprep.subr.mxu0 0.0
        %7134 = vmatpush2.msra.mxu0 0.0
        %7135 = vmatprep.subr.mxu0 0.0
        %7136 = vmatpush2.msra.mxu0 0.0
        %7137 = vmatprep.subr.mxu0 0.0
        %7138 = vmatpush2.msra.mxu0 0.0
        %7139 = vmatprep.subr.mxu0 0.0
        %7140 = vmatpush2.msra.mxu0 0.0
        %7141 = vmatprep.subr.mxu0 0.0
        %7142 = vmatpush2.msra.mxu0 0.0
        %7143 = vmatprep.subr.mxu0 0.0
        %7144 = vmatpush2.msra.mxu0 0.0
        %7145 = vmatprep.subr.mxu0 0.0
        %7146 = vmatpush2.msra.mxu0 0.0
        %7147 = vmatprep.subr.mxu0 0.0
        %7148 = vmatpush2.msra.mxu0 0.0
        %7149 = vmatprep.subr.mxu0 0.0
        %7150 = vmatpush2.msra.mxu0 0.0
        %7151 = vmatprep.subr.mxu0 0.0
        %7152 = vmatpush2.msra.mxu0 0.0
        %7153 = vmatprep.subr.mxu0 0.0
        %7154 = vmatpush2.msra.mxu0 0.0
        %7155 = vmatprep.subr.mxu0 0.0
        %7156 = vmatpush2.msra.mxu0 0.0
        %7157 = vmatprep.subr.mxu0 0.0
        %7158 = vmatpush2.msra.mxu0 0.0
        %7159 = vmatprep.mubr.f32.mxu0 0.0
        %7160 = vmatmul.mubr.f32.gmra.mxu0 %v6663
        %v7161 = vpop.f32.mrf.mxu0
        %v7162 = vadd.f32 0.0, %v7161
        %v7163 = vpop.f32.mrf.mxu0
        %7164 = vdwg.mxu0
        %v7166 = vsel %vm586, %v7162, 0
        %7168 = vmatprep.subr.mxu0 0.0
        %7169 = vmatpush1.msra.mxu0 0.0
        %7170 = vmatprep.subr.mxu0 0.0
        %7171 = vmatpush1.msra.mxu0 0.0
        %7172 = vmatprep.subr.mxu0 0.0
        %7173 = vmatpush1.msra.mxu0 0.0
        %7174 = vmatprep.subr.mxu0 0.0
        %7175 = vmatpush1.msra.mxu0 0.0
        %7176 = vmatprep.subr.mxu0 0.0
        %7177 = vmatpush1.msra.mxu0 0.0
        %7178 = vmatprep.subr.mxu0 0.0
        %7179 = vmatpush1.msra.mxu0 0.0
        %7180 = vmatprep.subr.mxu0 0.0
        %7181 = vmatpush1.msra.mxu0 0.0
        %7182 = vmatprep.subr.mxu0 0.0
        %7183 = vmatpush1.msra.mxu0 0.0
        %7184 = vmatprep.subr.mxu0 0.0
        %7185 = vmatpush1.msra.mxu0 0.0
        %7186 = vmatprep.subr.mxu0 0.0
        %7187 = vmatpush1.msra.mxu0 0.0
        %7188 = vmatprep.subr.mxu0 0.0
        %7189 = vmatpush1.msra.mxu0 0.0
        %7190 = vmatprep.subr.mxu0 0.0
        %7191 = vmatpush1.msra.mxu0 0.0
        %7192 = vmatprep.subr.mxu0 0.0
        %7193 = vmatpush1.msra.mxu0 0.0
        %7194 = vmatprep.subr.mxu0 0.0
        %7195 = vmatpush1.msra.mxu0 0.0
        %7196 = vmatprep.subr.mxu0 0.0
        %7197 = vmatpush1.msra.mxu0 0.0
        %7198 = vmatprep.subr.mxu0 0.0
        %7199 = vmatpush1.msra.mxu0 %v293
        %7200 = vmatprep.subr.mxu0 0.0
        %7201 = vmatpush2.msra.mxu0 0.0
        %7202 = vmatprep.subr.mxu0 0.0
        %7203 = vmatpush2.msra.mxu0 0.0
        %7204 = vmatprep.subr.mxu0 0.0
        %7205 = vmatpush2.msra.mxu0 0.0
        %7206 = vmatprep.subr.mxu0 0.0
        %7207 = vmatpush2.msra.mxu0 0.0
        %7208 = vmatprep.subr.mxu0 0.0
        %7209 = vmatpush2.msra.mxu0 0.0
        %7210 = vmatprep.subr.mxu0 0.0
        %7211 = vmatpush2.msra.mxu0 0.0
        %7212 = vmatprep.subr.mxu0 0.0
        %7213 = vmatpush2.msra.mxu0 0.0
        %7214 = vmatprep.subr.mxu0 0.0
        %7215 = vmatpush2.msra.mxu0 0.0
        %7216 = vmatprep.subr.mxu0 0.0
        %7217 = vmatpush2.msra.mxu0 0.0
        %7218 = vmatprep.subr.mxu0 0.0
        %7219 = vmatpush2.msra.mxu0 0.0
        %7220 = vmatprep.subr.mxu0 0.0
        %7221 = vmatpush2.msra.mxu0 0.0
        %7222 = vmatprep.subr.mxu0 0.0
        %7223 = vmatpush2.msra.mxu0 0.0
        %7224 = vmatprep.subr.mxu0 0.0
        %7225 = vmatpush2.msra.mxu0 0.0
        %7226 = vmatprep.subr.mxu0 0.0
        %7227 = vmatpush2.msra.mxu0 0.0
        %7228 = vmatprep.subr.mxu0 0.0
        %7229 = vmatpush2.msra.mxu0 0.0
        %7230 = vmatprep.subr.mxu0 0.0
        %7231 = vmatpush2.msra.mxu0 0.0
        %7232 = vmatprep.mubr.f32.mxu0 0.0
        %7233 = vmatmul.mubr.f32.gmra.mxu0 %v7166
        %v7234 = vpop.f32.mrf.mxu0
        %v7235 = vadd.f32 0.0, %v7234
        %v7236 = vpop.f32.mrf.mxu0
        %7237 = vdwg.mxu0
        %v7238 = vadd.f32 %v7094, %v7235
        %v7239 = vadd.s32 %v1025, 7
        %vm7240 = vcmp.eq.s32.totalorder %v276, %v7239
        %vm7241 = vcmp.eq.s32.totalorder %v282, %v7239
        %vm7242 = vcmp.eq.s32.totalorder %v286, %v7239
        %vm7243 = vcmp.eq.s32.totalorder %v290, %v7239
        %vm7244 = vcmp.eq.s32.totalorder %v1021, %v7239
        %vm7245 = vcmp.eq.s32.totalorder %v1022, %v7239
        %vm7246 = vcmp.eq.s32.totalorder %v1023, %v7239
        %vm7247 = vcmp.eq.s32.totalorder %v1024, %v7239
        %v7248 = vsel %vm7240, 1, 0
        %v7249 = vsel %vm7241, 1, 0
        %v7250 = vsel %vm7242, 1, 0
        %v7251 = vsel %vm7243, 1, 0
        %v7252 = vsel %vm7244, 1, 0
        %v7253 = vsel %vm7245, 1, 0
        %v7254 = vsel %vm7246, 1, 0
        %v7255 = vsel %vm7247, 1, 0
        %v7256 = vcvt.s32.f32 %v7248
        %v7257 = vcvt.s32.f32 %v7249
        %v7258 = vcvt.s32.f32 %v7250
        %v7259 = vcvt.s32.f32 %v7251
        %v7260 = vcvt.s32.f32 %v7252
        %v7261 = vcvt.s32.f32 %v7253
        %v7262 = vcvt.s32.f32 %v7254
        %v7263 = vcvt.s32.f32 %v7255
        %v7265 = vsel %vm586, %v7256, 0
        %v7268 = vsel %vm586, %v7257, 0
        %v7271 = vsel %vm586, %v7258, 0
        %v7274 = vsel %vm586, %v7259, 0
        %v7277 = vsel %vm586, %v7260, 0
        %v7280 = vsel %vm586, %v7261, 0
        %v7283 = vsel %vm586, %v7262, 0
        %v7286 = vsel %vm586, %v7263, 0
        %7288 = vmatprep.subr.mxu0 0.0
        %7289 = vmatpush1.msra.mxu0 0.0
        %7290 = vmatprep.subr.mxu0 0.0
        %7291 = vmatpush1.msra.mxu0 0.0
        %7292 = vmatprep.subr.mxu0 0.0
        %7293 = vmatpush1.msra.mxu0 0.0
        %7294 = vmatprep.subr.mxu0 0.0
        %7295 = vmatpush1.msra.mxu0 0.0
        %7296 = vmatprep.subr.mxu0 0.0
        %7297 = vmatpush1.msra.mxu0 0.0
        %7298 = vmatprep.subr.mxu0 0.0
        %7299 = vmatpush1.msra.mxu0 0.0
        %7300 = vmatprep.subr.mxu0 0.0
        %7301 = vmatpush1.msra.mxu0 0.0
        %7302 = vmatprep.subr.mxu0 0.0
        %7303 = vmatpush1.msra.mxu0 0.0
        %7304 = vmatprep.subr.mxu0 0.0
        %7305 = vmatpush1.msra.mxu0 0.0
        %7306 = vmatprep.subr.mxu0 0.0
        %7307 = vmatpush1.msra.mxu0 0.0
        %7308 = vmatprep.subr.mxu0 0.0
        %7309 = vmatpush1.msra.mxu0 0.0
        %7310 = vmatprep.subr.mxu0 0.0
        %7311 = vmatpush1.msra.mxu0 0.0
        %7312 = vmatprep.subr.mxu0 0.0
        %7313 = vmatpush1.msra.mxu0 0.0
        %7314 = vmatprep.subr.mxu0 0.0
        %7315 = vmatpush1.msra.mxu0 0.0
        %7316 = vmatprep.subr.mxu0 0.0
        %7317 = vmatpush1.msra.mxu0 0.0
        %7318 = vmatprep.subr.mxu0 0.0
        %7319 = vmatpush1.msra.mxu0 %v7238
        %7320 = vmatprep.subr.mxu0 0.0
        %7321 = vmatpush2.msra.mxu0 0.0
        %7322 = vmatprep.subr.mxu0 0.0
        %7323 = vmatpush2.msra.mxu0 0.0
        %7324 = vmatprep.subr.mxu0 0.0
        %7325 = vmatpush2.msra.mxu0 0.0
        %7326 = vmatprep.subr.mxu0 0.0
        %7327 = vmatpush2.msra.mxu0 0.0
        %7328 = vmatprep.subr.mxu0 0.0
        %7329 = vmatpush2.msra.mxu0 0.0
        %7330 = vmatprep.subr.mxu0 0.0
        %7331 = vmatpush2.msra.mxu0 0.0
        %7332 = vmatprep.subr.mxu0 0.0
        %7333 = vmatpush2.msra.mxu0 0.0
        %7334 = vmatprep.subr.mxu0 0.0
        %7335 = vmatpush2.msra.mxu0 0.0
        %7336 = vmatprep.subr.mxu0 0.0
        %7337 = vmatpush2.msra.mxu0 0.0
        %7338 = vmatprep.subr.mxu0 0.0
        %7339 = vmatpush2.msra.mxu0 0.0
        %7340 = vmatprep.subr.mxu0 0.0
        %7341 = vmatpush2.msra.mxu0 0.0
        %7342 = vmatprep.subr.mxu0 0.0
        %7343 = vmatpush2.msra.mxu0 0.0
        %7344 = vmatprep.subr.mxu0 0.0
        %7345 = vmatpush2.msra.mxu0 0.0
        %7346 = vmatprep.subr.mxu0 0.0
        %7347 = vmatpush2.msra.mxu0 0.0
        %7348 = vmatprep.subr.mxu0 0.0
        %7349 = vmatpush2.msra.mxu0 0.0
        %7350 = vmatprep.subr.mxu0 0.0
        %7351 = vmatpush2.msra.mxu0 0.0
        %7352 = vmatprep.mubr.f32.mxu0 0.0
        %7353 = vmatmul.mubr.f32.gmra.mxu0 %v7265
        %v7354 = vpop.f32.mrf.mxu0
        %v7355 = vadd.f32 0.0, %v7354
        %v7356 = vpop.f32.mrf.mxu0
        %7357 = vmatprep.mubr.f32.mxu0 0.0
        %7358 = vmatmul.mubr.f32.gmra.mxu0 %v7268
        %v7359 = vpop.f32.mrf.mxu0
        %v7360 = vadd.f32 0.0, %v7359
        %v7361 = vpop.f32.mrf.mxu0
        %7362 = vmatprep.mubr.f32.mxu0 0.0
        %7363 = vmatmul.mubr.f32.gmra.mxu0 %v7271
        %v7364 = vpop.f32.mrf.mxu0
        %v7365 = vadd.f32 0.0, %v7364
        %v7366 = vpop.f32.mrf.mxu0
        %7367 = vmatprep.mubr.f32.mxu0 0.0
        %7368 = vmatmul.mubr.f32.gmra.mxu0 %v7274
        %v7369 = vpop.f32.mrf.mxu0
        %v7370 = vadd.f32 0.0, %v7369
        %v7371 = vpop.f32.mrf.mxu0
        %7372 = vmatprep.mubr.f32.mxu0 0.0
        %7373 = vmatmul.mubr.f32.gmra.mxu0 %v7277
        %v7374 = vpop.f32.mrf.mxu0
        %v7375 = vadd.f32 0.0, %v7374
        %v7376 = vpop.f32.mrf.mxu0
        %7377 = vmatprep.mubr.f32.mxu0 0.0
        %7378 = vmatmul.mubr.f32.gmra.mxu0 %v7280
        %v7379 = vpop.f32.mrf.mxu0
        %v7380 = vadd.f32 0.0, %v7379
        %v7381 = vpop.f32.mrf.mxu0
        %7382 = vmatprep.mubr.f32.mxu0 0.0
        %7383 = vmatmul.mubr.f32.gmra.mxu0 %v7283
        %v7384 = vpop.f32.mrf.mxu0
        %v7385 = vadd.f32 0.0, %v7384
        %v7386 = vpop.f32.mrf.mxu0
        %7387 = vmatprep.mubr.f32.mxu0 0.0
        %7388 = vmatmul.mubr.f32.gmra.mxu0 %v7286
        %v7389 = vpop.f32.mrf.mxu0
        %v7390 = vadd.f32 0.0, %v7389
        %v7391 = vpop.f32.mrf.mxu0
        %7392 = vdwg.mxu0
        %v7393 = vadd.f32 %v6503, %v7355
        %v7394 = vadd.f32 %v6504, %v7360
        %v7395 = vadd.f32 %v6505, %v7365
        %v7396 = vadd.f32 %v6506, %v7370
        %v7397 = vadd.f32 %v6507, %v7375
        %v7398 = vadd.f32 %v6508, %v7380
        %v7399 = vadd.f32 %v6509, %v7385
        %v7400 = vadd.f32 %v6510, %v7390
        %v7401 = vld [vmem:[%s3] sm:$0xff]
        %v7402 = vld [vmem:[%s3 + $0x8] sm:$0xff]
        %v7403 = vld [vmem:[%s3 + $0x10] sm:$0xff]
        %v7404 = vld [vmem:[%s3 + $0x18] sm:$0xff]
        %s7405 = scalar_lea.vmem %s3, 32
        %v7406 = vld [vmem:[%s7405] sm:$0xff]
        %v7407 = vld [vmem:[%s7405 + $0x8] sm:$0xff]
        %v7408 = vld [vmem:[%s7405 + $0x10] sm:$0xff]
        %v7409 = vld [vmem:[%s7405 + $0x18] sm:$0xff]
        %vm7410 = vcmask 261120
        %v7412 = vsel %vm7410, %v7394, 0
        %7414 = vmatprep.subr.mxu0 0.0
        %7415 = vmatpush1.msra.mxu0 0.0
        %7416 = vmatprep.subr.mxu0 0.0
        %7417 = vmatpush1.msra.mxu0 0.0
        %7418 = vmatprep.subr.mxu0 0.0
        %7419 = vmatpush1.msra.mxu0 0.0
        %7420 = vmatprep.subr.mxu0 0.0
        %7421 = vmatpush1.msra.mxu0 0.0
        %7422 = vmatprep.subr.mxu0 0.0
        %7423 = vmatpush1.msra.mxu0 0.0
        %7424 = vmatprep.subr.mxu0 0.0
        %7425 = vmatpush1.msra.mxu0 0.0
        %7426 = vmatprep.subr.mxu0 0.0
        %7427 = vmatpush1.msra.mxu0 0.0
        %7428 = vmatprep.subr.mxu0 0.0
        %7429 = vmatpush1.msra.mxu0 0.0
        %7430 = vmatprep.subr.mxu0 0.0
        %7431 = vmatpush1.msra.mxu0 0.0
        %7432 = vmatprep.subr.mxu0 0.0
        %7433 = vmatpush1.msra.mxu0 0.0
        %7434 = vmatprep.subr.mxu0 0.0
        %7435 = vmatpush1.msra.mxu0 0.0
        %7436 = vmatprep.subr.mxu0 0.0
        %7437 = vmatpush1.msra.mxu0 0.0
        %7438 = vmatprep.subr.mxu0 0.0
        %7439 = vmatpush1.msra.mxu0 %v7409
        %7440 = vmatprep.subr.mxu0 0.0
        %7441 = vmatpush1.msra.mxu0 %v7408
        %7442 = vmatprep.subr.mxu0 0.0
        %7443 = vmatpush1.msra.mxu0 %v7407
        %7444 = vmatprep.subr.mxu0 0.0
        %7445 = vmatpush1.msra.mxu0 %v7406
        %7446 = vmatprep.subr.mxu0 0.0
        %7447 = vmatpush2.msra.mxu0 0.0
        %7448 = vmatprep.subr.mxu0 0.0
        %7449 = vmatpush2.msra.mxu0 0.0
        %7450 = vmatprep.subr.mxu0 0.0
        %7451 = vmatpush2.msra.mxu0 0.0
        %7452 = vmatprep.subr.mxu0 0.0
        %7453 = vmatpush2.msra.mxu0 0.0
        %7454 = vmatprep.subr.mxu0 0.0
        %7455 = vmatpush2.msra.mxu0 0.0
        %7456 = vmatprep.subr.mxu0 0.0
        %7457 = vmatpush2.msra.mxu0 0.0
        %7458 = vmatprep.subr.mxu0 0.0
        %7459 = vmatpush2.msra.mxu0 0.0
        %7460 = vmatprep.subr.mxu0 0.0
        %7461 = vmatpush2.msra.mxu0 0.0
        %7462 = vmatprep.subr.mxu0 0.0
        %7463 = vmatpush2.msra.mxu0 0.0
        %7464 = vmatprep.subr.mxu0 0.0
        %7465 = vmatpush2.msra.mxu0 0.0
        %7466 = vmatprep.subr.mxu0 0.0
        %7467 = vmatpush2.msra.mxu0 0.0
        %7468 = vmatprep.subr.mxu0 0.0
        %7469 = vmatpush2.msra.mxu0 0.0
        %7470 = vmatprep.subr.mxu0 0.0
        %7471 = vmatpush2.msra.mxu0 0.0
        %7472 = vmatprep.subr.mxu0 0.0
        %7473 = vmatpush2.msra.mxu0 0.0
        %7474 = vmatprep.subr.mxu0 0.0
        %7475 = vmatpush2.msra.mxu0 0.0
        %7476 = vmatprep.subr.mxu0 0.0
        %7477 = vmatpush2.msra.mxu0 0.0
        %7478 = vmatprep.mubr.f32.mxu0 0.0
        %7479 = vmatmul.mubr.f32.gmra.mxu0 %v7412
        %v7480 = vpop.f32.mrf.mxu0
        %v7481 = vadd.f32 0.0, %v7480
        %v7482 = vpop.f32.mrf.mxu0
        %7483 = vdwg.mxu0
        %v7485 = vsel %vm7410, %v7393, 0
        %7487 = vmatprep.subr.mxu0 0.0
        %7488 = vmatpush1.msra.mxu0 0.0
        %7489 = vmatprep.subr.mxu0 0.0
        %7490 = vmatpush1.msra.mxu0 0.0
        %7491 = vmatprep.subr.mxu0 0.0
        %7492 = vmatpush1.msra.mxu0 0.0
        %7493 = vmatprep.subr.mxu0 0.0
        %7494 = vmatpush1.msra.mxu0 0.0
        %7495 = vmatprep.subr.mxu0 0.0
        %7496 = vmatpush1.msra.mxu0 0.0
        %7497 = vmatprep.subr.mxu0 0.0
        %7498 = vmatpush1.msra.mxu0 0.0
        %7499 = vmatprep.subr.mxu0 0.0
        %7500 = vmatpush1.msra.mxu0 0.0
        %7501 = vmatprep.subr.mxu0 0.0
        %7502 = vmatpush1.msra.mxu0 0.0
        %7503 = vmatprep.subr.mxu0 0.0
        %7504 = vmatpush1.msra.mxu0 0.0
        %7505 = vmatprep.subr.mxu0 0.0
        %7506 = vmatpush1.msra.mxu0 0.0
        %7507 = vmatprep.subr.mxu0 0.0
        %7508 = vmatpush1.msra.mxu0 0.0
        %7509 = vmatprep.subr.mxu0 0.0
        %7510 = vmatpush1.msra.mxu0 0.0
        %7511 = vmatprep.subr.mxu0 0.0
        %7512 = vmatpush1.msra.mxu0 %v7404
        %7513 = vmatprep.subr.mxu0 0.0
        %7514 = vmatpush1.msra.mxu0 %v7403
        %7515 = vmatprep.subr.mxu0 0.0
        %7516 = vmatpush1.msra.mxu0 %v7402
        %7517 = vmatprep.subr.mxu0 0.0
        %7518 = vmatpush1.msra.mxu0 %v7401
        %7519 = vmatprep.subr.mxu0 0.0
        %7520 = vmatpush2.msra.mxu0 0.0
        %7521 = vmatprep.subr.mxu0 0.0
        %7522 = vmatpush2.msra.mxu0 0.0
        %7523 = vmatprep.subr.mxu0 0.0
        %7524 = vmatpush2.msra.mxu0 0.0
        %7525 = vmatprep.subr.mxu0 0.0
        %7526 = vmatpush2.msra.mxu0 0.0
        %7527 = vmatprep.subr.mxu0 0.0
        %7528 = vmatpush2.msra.mxu0 0.0
        %7529 = vmatprep.subr.mxu0 0.0
        %7530 = vmatpush2.msra.mxu0 0.0
        %7531 = vmatprep.subr.mxu0 0.0
        %7532 = vmatpush2.msra.mxu0 0.0
        %7533 = vmatprep.subr.mxu0 0.0
        %7534 = vmatpush2.msra.mxu0 0.0
        %7535 = vmatprep.subr.mxu0 0.0
        %7536 = vmatpush2.msra.mxu0 0.0
        %7537 = vmatprep.subr.mxu0 0.0
        %7538 = vmatpush2.msra.mxu0 0.0
        %7539 = vmatprep.subr.mxu0 0.0
        %7540 = vmatpush2.msra.mxu0 0.0
        %7541 = vmatprep.subr.mxu0 0.0
        %7542 = vmatpush2.msra.mxu0 0.0
        %7543 = vmatprep.subr.mxu0 0.0
        %7544 = vmatpush2.msra.mxu0 0.0
        %7545 = vmatprep.subr.mxu0 0.0
        %7546 = vmatpush2.msra.mxu0 0.0
        %7547 = vmatprep.subr.mxu0 0.0
        %7548 = vmatpush2.msra.mxu0 0.0
        %7549 = vmatprep.subr.mxu0 0.0
        %7550 = vmatpush2.msra.mxu0 0.0
        %7551 = vmatprep.mubr.f32.mxu0 0.0
        %7552 = vmatmul.mubr.f32.gmra.mxu0 %v7485
        %v7553 = vpop.f32.mrf.mxu0
        %v7554 = vadd.f32 %v7481, %v7553
        %v7555 = vpop.f32.mrf.mxu0
        %7556 = vdwg.mxu0
        %s7557 = scalar_lea.vmem %s3, 64
        %v7558 = vld [vmem:[%s7557] sm:$0xff]
        %v7559 = vld [vmem:[%s7557 + $0x8] sm:$0xff]
        %v7560 = vld [vmem:[%s7557 + $0x10] sm:$0xff]
        %v7561 = vld [vmem:[%s7557 + $0x18] sm:$0xff]
        %v7563 = vsel %vm7410, %v7395, 0
        %7565 = vmatprep.subr.mxu0 0.0
        %7566 = vmatpush1.msra.mxu0 0.0
        %7567 = vmatprep.subr.mxu0 0.0
        %7568 = vmatpush1.msra.mxu0 0.0
        %7569 = vmatprep.subr.mxu0 0.0
        %7570 = vmatpush1.msra.mxu0 0.0
        %7571 = vmatprep.subr.mxu0 0.0
        %7572 = vmatpush1.msra.mxu0 0.0
        %7573 = vmatprep.subr.mxu0 0.0
        %7574 = vmatpush1.msra.mxu0 0.0
        %7575 = vmatprep.subr.mxu0 0.0
        %7576 = vmatpush1.msra.mxu0 0.0
        %7577 = vmatprep.subr.mxu0 0.0
        %7578 = vmatpush1.msra.mxu0 0.0
        %7579 = vmatprep.subr.mxu0 0.0
        %7580 = vmatpush1.msra.mxu0 0.0
        %7581 = vmatprep.subr.mxu0 0.0
        %7582 = vmatpush1.msra.mxu0 0.0
        %7583 = vmatprep.subr.mxu0 0.0
        %7584 = vmatpush1.msra.mxu0 0.0
        %7585 = vmatprep.subr.mxu0 0.0
        %7586 = vmatpush1.msra.mxu0 0.0
        %7587 = vmatprep.subr.mxu0 0.0
        %7588 = vmatpush1.msra.mxu0 0.0
        %7589 = vmatprep.subr.mxu0 0.0
        %7590 = vmatpush1.msra.mxu0 %v7561
        %7591 = vmatprep.subr.mxu0 0.0
        %7592 = vmatpush1.msra.mxu0 %v7560
        %7593 = vmatprep.subr.mxu0 0.0
        %7594 = vmatpush1.msra.mxu0 %v7559
        %7595 = vmatprep.subr.mxu0 0.0
        %7596 = vmatpush1.msra.mxu0 %v7558
        %7597 = vmatprep.subr.mxu0 0.0
        %7598 = vmatpush2.msra.mxu0 0.0
        %7599 = vmatprep.subr.mxu0 0.0
        %7600 = vmatpush2.msra.mxu0 0.0
        %7601 = vmatprep.subr.mxu0 0.0
        %7602 = vmatpush2.msra.mxu0 0.0
        %7603 = vmatprep.subr.mxu0 0.0
        %7604 = vmatpush2.msra.mxu0 0.0
        %7605 = vmatprep.subr.mxu0 0.0
        %7606 = vmatpush2.msra.mxu0 0.0
        %7607 = vmatprep.subr.mxu0 0.0
        %7608 = vmatpush2.msra.mxu0 0.0
        %7609 = vmatprep.subr.mxu0 0.0
        %7610 = vmatpush2.msra.mxu0 0.0
        %7611 = vmatprep.subr.mxu0 0.0
        %7612 = vmatpush2.msra.mxu0 0.0
        %7613 = vmatprep.subr.mxu0 0.0
        %7614 = vmatpush2.msra.mxu0 0.0
        %7615 = vmatprep.subr.mxu0 0.0
        %7616 = vmatpush2.msra.mxu0 0.0
        %7617 = vmatprep.subr.mxu0 0.0
        %7618 = vmatpush2.msra.mxu0 0.0
        %7619 = vmatprep.subr.mxu0 0.0
        %7620 = vmatpush2.msra.mxu0 0.0
        %7621 = vmatprep.subr.mxu0 0.0
        %7622 = vmatpush2.msra.mxu0 0.0
        %7623 = vmatprep.subr.mxu0 0.0
        %7624 = vmatpush2.msra.mxu0 0.0
        %7625 = vmatprep.subr.mxu0 0.0
        %7626 = vmatpush2.msra.mxu0 0.0
        %7627 = vmatprep.subr.mxu0 0.0
        %7628 = vmatpush2.msra.mxu0 0.0
        %7629 = vmatprep.mubr.f32.mxu0 0.0
        %7630 = vmatmul.mubr.f32.gmra.mxu0 %v7563
        %v7631 = vpop.f32.mrf.mxu0
        %v7632 = vadd.f32 0.0, %v7631
        %v7633 = vpop.f32.mrf.mxu0
        %7634 = vdwg.mxu0
        %v7635 = vadd.f32 %v7554, %v7632
        %s7636 = scalar_lea.vmem %s3, 96
        %v7637 = vld [vmem:[%s7636] sm:$0xff]
        %v7638 = vld [vmem:[%s7636 + $0x8] sm:$0xff]
        %v7639 = vld [vmem:[%s7636 + $0x10] sm:$0xff]
        %v7640 = vld [vmem:[%s7636 + $0x18] sm:$0xff]
        %v7642 = vsel %vm7410, %v7396, 0
        %7644 = vmatprep.subr.mxu0 0.0
        %7645 = vmatpush1.msra.mxu0 0.0
        %7646 = vmatprep.subr.mxu0 0.0
        %7647 = vmatpush1.msra.mxu0 0.0
        %7648 = vmatprep.subr.mxu0 0.0
        %7649 = vmatpush1.msra.mxu0 0.0
        %7650 = vmatprep.subr.mxu0 0.0
        %7651 = vmatpush1.msra.mxu0 0.0
        %7652 = vmatprep.subr.mxu0 0.0
        %7653 = vmatpush1.msra.mxu0 0.0
        %7654 = vmatprep.subr.mxu0 0.0
        %7655 = vmatpush1.msra.mxu0 0.0
        %7656 = vmatprep.subr.mxu0 0.0
        %7657 = vmatpush1.msra.mxu0 0.0
        %7658 = vmatprep.subr.mxu0 0.0
        %7659 = vmatpush1.msra.mxu0 0.0
        %7660 = vmatprep.subr.mxu0 0.0
        %7661 = vmatpush1.msra.mxu0 0.0
        %7662 = vmatprep.subr.mxu0 0.0
        %7663 = vmatpush1.msra.mxu0 0.0
        %7664 = vmatprep.subr.mxu0 0.0
        %7665 = vmatpush1.msra.mxu0 0.0
        %7666 = vmatprep.subr.mxu0 0.0
        %7667 = vmatpush1.msra.mxu0 0.0
        %7668 = vmatprep.subr.mxu0 0.0
        %7669 = vmatpush1.msra.mxu0 %v7640
        %7670 = vmatprep.subr.mxu0 0.0
        %7671 = vmatpush1.msra.mxu0 %v7639
        %7672 = vmatprep.subr.mxu0 0.0
        %7673 = vmatpush1.msra.mxu0 %v7638
        %7674 = vmatprep.subr.mxu0 0.0
        %7675 = vmatpush1.msra.mxu0 %v7637
        %7676 = vmatprep.subr.mxu0 0.0
        %7677 = vmatpush2.msra.mxu0 0.0
        %7678 = vmatprep.subr.mxu0 0.0
        %7679 = vmatpush2.msra.mxu0 0.0
        %7680 = vmatprep.subr.mxu0 0.0
        %7681 = vmatpush2.msra.mxu0 0.0
        %7682 = vmatprep.subr.mxu0 0.0
        %7683 = vmatpush2.msra.mxu0 0.0
        %7684 = vmatprep.subr.mxu0 0.0
        %7685 = vmatpush2.msra.mxu0 0.0
        %7686 = vmatprep.subr.mxu0 0.0
        %7687 = vmatpush2.msra.mxu0 0.0
        %7688 = vmatprep.subr.mxu0 0.0
        %7689 = vmatpush2.msra.mxu0 0.0
        %7690 = vmatprep.subr.mxu0 0.0
        %7691 = vmatpush2.msra.mxu0 0.0
        %7692 = vmatprep.subr.mxu0 0.0
        %7693 = vmatpush2.msra.mxu0 0.0
        %7694 = vmatprep.subr.mxu0 0.0
        %7695 = vmatpush2.msra.mxu0 0.0
        %7696 = vmatprep.subr.mxu0 0.0
        %7697 = vmatpush2.msra.mxu0 0.0
        %7698 = vmatprep.subr.mxu0 0.0
        %7699 = vmatpush2.msra.mxu0 0.0
        %7700 = vmatprep.subr.mxu0 0.0
        %7701 = vmatpush2.msra.mxu0 0.0
        %7702 = vmatprep.subr.mxu0 0.0
        %7703 = vmatpush2.msra.mxu0 0.0
        %7704 = vmatprep.subr.mxu0 0.0
        %7705 = vmatpush2.msra.mxu0 0.0
        %7706 = vmatprep.subr.mxu0 0.0
        %7707 = vmatpush2.msra.mxu0 0.0
        %7708 = vmatprep.mubr.f32.mxu0 0.0
        %7709 = vmatmul.mubr.f32.gmra.mxu0 %v7642
        %v7710 = vpop.f32.mrf.mxu0
        %v7711 = vadd.f32 0.0, %v7710
        %v7712 = vpop.f32.mrf.mxu0
        %7713 = vdwg.mxu0
        %v7714 = vadd.f32 %v7635, %v7711
        %s7715 = scalar_lea.vmem %s3, 128
        %v7716 = vld [vmem:[%s7715] sm:$0xff]
        %v7717 = vld [vmem:[%s7715 + $0x8] sm:$0xff]
        %v7718 = vld [vmem:[%s7715 + $0x10] sm:$0xff]
        %v7719 = vld [vmem:[%s7715 + $0x18] sm:$0xff]
        %v7721 = vsel %vm7410, %v7397, 0
        %7723 = vmatprep.subr.mxu0 0.0
        %7724 = vmatpush1.msra.mxu0 0.0
        %7725 = vmatprep.subr.mxu0 0.0
        %7726 = vmatpush1.msra.mxu0 0.0
        %7727 = vmatprep.subr.mxu0 0.0
        %7728 = vmatpush1.msra.mxu0 0.0
        %7729 = vmatprep.subr.mxu0 0.0
        %7730 = vmatpush1.msra.mxu0 0.0
        %7731 = vmatprep.subr.mxu0 0.0
        %7732 = vmatpush1.msra.mxu0 0.0
        %7733 = vmatprep.subr.mxu0 0.0
        %7734 = vmatpush1.msra.mxu0 0.0
        %7735 = vmatprep.subr.mxu0 0.0
        %7736 = vmatpush1.msra.mxu0 0.0
        %7737 = vmatprep.subr.mxu0 0.0
        %7738 = vmatpush1.msra.mxu0 0.0
        %7739 = vmatprep.subr.mxu0 0.0
        %7740 = vmatpush1.msra.mxu0 0.0
        %7741 = vmatprep.subr.mxu0 0.0
        %7742 = vmatpush1.msra.mxu0 0.0
        %7743 = vmatprep.subr.mxu0 0.0
        %7744 = vmatpush1.msra.mxu0 0.0
        %7745 = vmatprep.subr.mxu0 0.0
        %7746 = vmatpush1.msra.mxu0 0.0
        %7747 = vmatprep.subr.mxu0 0.0
        %7748 = vmatpush1.msra.mxu0 %v7719
        %7749 = vmatprep.subr.mxu0 0.0
        %7750 = vmatpush1.msra.mxu0 %v7718
        %7751 = vmatprep.subr.mxu0 0.0
        %7752 = vmatpush1.msra.mxu0 %v7717
        %7753 = vmatprep.subr.mxu0 0.0
        %7754 = vmatpush1.msra.mxu0 %v7716
        %7755 = vmatprep.subr.mxu0 0.0
        %7756 = vmatpush2.msra.mxu0 0.0
        %7757 = vmatprep.subr.mxu0 0.0
        %7758 = vmatpush2.msra.mxu0 0.0
        %7759 = vmatprep.subr.mxu0 0.0
        %7760 = vmatpush2.msra.mxu0 0.0
        %7761 = vmatprep.subr.mxu0 0.0
        %7762 = vmatpush2.msra.mxu0 0.0
        %7763 = vmatprep.subr.mxu0 0.0
        %7764 = vmatpush2.msra.mxu0 0.0
        %7765 = vmatprep.subr.mxu0 0.0
        %7766 = vmatpush2.msra.mxu0 0.0
        %7767 = vmatprep.subr.mxu0 0.0
        %7768 = vmatpush2.msra.mxu0 0.0
        %7769 = vmatprep.subr.mxu0 0.0
        %7770 = vmatpush2.msra.mxu0 0.0
        %7771 = vmatprep.subr.mxu0 0.0
        %7772 = vmatpush2.msra.mxu0 0.0
        %7773 = vmatprep.subr.mxu0 0.0
        %7774 = vmatpush2.msra.mxu0 0.0
        %7775 = vmatprep.subr.mxu0 0.0
        %7776 = vmatpush2.msra.mxu0 0.0
        %7777 = vmatprep.subr.mxu0 0.0
        %7778 = vmatpush2.msra.mxu0 0.0
        %7779 = vmatprep.subr.mxu0 0.0
        %7780 = vmatpush2.msra.mxu0 0.0
        %7781 = vmatprep.subr.mxu0 0.0
        %7782 = vmatpush2.msra.mxu0 0.0
        %7783 = vmatprep.subr.mxu0 0.0
        %7784 = vmatpush2.msra.mxu0 0.0
        %7785 = vmatprep.subr.mxu0 0.0
        %7786 = vmatpush2.msra.mxu0 0.0
        %7787 = vmatprep.mubr.f32.mxu0 0.0
        %7788 = vmatmul.mubr.f32.gmra.mxu0 %v7721
        %v7789 = vpop.f32.mrf.mxu0
        %v7790 = vadd.f32 0.0, %v7789
        %v7791 = vpop.f32.mrf.mxu0
        %7792 = vdwg.mxu0
        %v7793 = vadd.f32 %v7714, %v7790
        %s7794 = scalar_lea.vmem %s3, 160
        %v7795 = vld [vmem:[%s7794] sm:$0xff]
        %v7796 = vld [vmem:[%s7794 + $0x8] sm:$0xff]
        %v7797 = vld [vmem:[%s7794 + $0x10] sm:$0xff]
        %v7798 = vld [vmem:[%s7794 + $0x18] sm:$0xff]
        %v7800 = vsel %vm7410, %v7398, 0
        %7802 = vmatprep.subr.mxu0 0.0
        %7803 = vmatpush1.msra.mxu0 0.0
        %7804 = vmatprep.subr.mxu0 0.0
        %7805 = vmatpush1.msra.mxu0 0.0
        %7806 = vmatprep.subr.mxu0 0.0
        %7807 = vmatpush1.msra.mxu0 0.0
        %7808 = vmatprep.subr.mxu0 0.0
        %7809 = vmatpush1.msra.mxu0 0.0
        %7810 = vmatprep.subr.mxu0 0.0
        %7811 = vmatpush1.msra.mxu0 0.0
        %7812 = vmatprep.subr.mxu0 0.0
        %7813 = vmatpush1.msra.mxu0 0.0
        %7814 = vmatprep.subr.mxu0 0.0
        %7815 = vmatpush1.msra.mxu0 0.0
        %7816 = vmatprep.subr.mxu0 0.0
        %7817 = vmatpush1.msra.mxu0 0.0
        %7818 = vmatprep.subr.mxu0 0.0
        %7819 = vmatpush1.msra.mxu0 0.0
        %7820 = vmatprep.subr.mxu0 0.0
        %7821 = vmatpush1.msra.mxu0 0.0
        %7822 = vmatprep.subr.mxu0 0.0
        %7823 = vmatpush1.msra.mxu0 0.0
        %7824 = vmatprep.subr.mxu0 0.0
        %7825 = vmatpush1.msra.mxu0 0.0
        %7826 = vmatprep.subr.mxu0 0.0
        %7827 = vmatpush1.msra.mxu0 %v7798
        %7828 = vmatprep.subr.mxu0 0.0
        %7829 = vmatpush1.msra.mxu0 %v7797
        %7830 = vmatprep.subr.mxu0 0.0
        %7831 = vmatpush1.msra.mxu0 %v7796
        %7832 = vmatprep.subr.mxu0 0.0
        %7833 = vmatpush1.msra.mxu0 %v7795
        %7834 = vmatprep.subr.mxu0 0.0
        %7835 = vmatpush2.msra.mxu0 0.0
        %7836 = vmatprep.subr.mxu0 0.0
        %7837 = vmatpush2.msra.mxu0 0.0
        %7838 = vmatprep.subr.mxu0 0.0
        %7839 = vmatpush2.msra.mxu0 0.0
        %7840 = vmatprep.subr.mxu0 0.0
        %7841 = vmatpush2.msra.mxu0 0.0
        %7842 = vmatprep.subr.mxu0 0.0
        %7843 = vmatpush2.msra.mxu0 0.0
        %7844 = vmatprep.subr.mxu0 0.0
        %7845 = vmatpush2.msra.mxu0 0.0
        %7846 = vmatprep.subr.mxu0 0.0
        %7847 = vmatpush2.msra.mxu0 0.0
        %7848 = vmatprep.subr.mxu0 0.0
        %7849 = vmatpush2.msra.mxu0 0.0
        %7850 = vmatprep.subr.mxu0 0.0
        %7851 = vmatpush2.msra.mxu0 0.0
        %7852 = vmatprep.subr.mxu0 0.0
        %7853 = vmatpush2.msra.mxu0 0.0
        %7854 = vmatprep.subr.mxu0 0.0
        %7855 = vmatpush2.msra.mxu0 0.0
        %7856 = vmatprep.subr.mxu0 0.0
        %7857 = vmatpush2.msra.mxu0 0.0
        %7858 = vmatprep.subr.mxu0 0.0
        %7859 = vmatpush2.msra.mxu0 0.0
        %7860 = vmatprep.subr.mxu0 0.0
        %7861 = vmatpush2.msra.mxu0 0.0
        %7862 = vmatprep.subr.mxu0 0.0
        %7863 = vmatpush2.msra.mxu0 0.0
        %7864 = vmatprep.subr.mxu0 0.0
        %7865 = vmatpush2.msra.mxu0 0.0
        %7866 = vmatprep.mubr.f32.mxu0 0.0
        %7867 = vmatmul.mubr.f32.gmra.mxu0 %v7800
        %v7868 = vpop.f32.mrf.mxu0
        %v7869 = vadd.f32 0.0, %v7868
        %v7870 = vpop.f32.mrf.mxu0
        %7871 = vdwg.mxu0
        %v7872 = vadd.f32 %v7793, %v7869
        %s7873 = scalar_lea.vmem %s3, 192
        %v7874 = vld [vmem:[%s7873] sm:$0xff]
        %v7875 = vld [vmem:[%s7873 + $0x8] sm:$0xff]
        %v7876 = vld [vmem:[%s7873 + $0x10] sm:$0xff]
        %v7877 = vld [vmem:[%s7873 + $0x18] sm:$0xff]
        %v7879 = vsel %vm7410, %v7399, 0
        %7881 = vmatprep.subr.mxu0 0.0
        %7882 = vmatpush1.msra.mxu0 0.0
        %7883 = vmatprep.subr.mxu0 0.0
        %7884 = vmatpush1.msra.mxu0 0.0
        %7885 = vmatprep.subr.mxu0 0.0
        %7886 = vmatpush1.msra.mxu0 0.0
        %7887 = vmatprep.subr.mxu0 0.0
        %7888 = vmatpush1.msra.mxu0 0.0
        %7889 = vmatprep.subr.mxu0 0.0
        %7890 = vmatpush1.msra.mxu0 0.0
        %7891 = vmatprep.subr.mxu0 0.0
        %7892 = vmatpush1.msra.mxu0 0.0
        %7893 = vmatprep.subr.mxu0 0.0
        %7894 = vmatpush1.msra.mxu0 0.0
        %7895 = vmatprep.subr.mxu0 0.0
        %7896 = vmatpush1.msra.mxu0 0.0
        %7897 = vmatprep.subr.mxu0 0.0
        %7898 = vmatpush1.msra.mxu0 0.0
        %7899 = vmatprep.subr.mxu0 0.0
        %7900 = vmatpush1.msra.mxu0 0.0
        %7901 = vmatprep.subr.mxu0 0.0
        %7902 = vmatpush1.msra.mxu0 0.0
        %7903 = vmatprep.subr.mxu0 0.0
        %7904 = vmatpush1.msra.mxu0 0.0
        %7905 = vmatprep.subr.mxu0 0.0
        %7906 = vmatpush1.msra.mxu0 %v7877
        %7907 = vmatprep.subr.mxu0 0.0
        %7908 = vmatpush1.msra.mxu0 %v7876
        %7909 = vmatprep.subr.mxu0 0.0
        %7910 = vmatpush1.msra.mxu0 %v7875
        %7911 = vmatprep.subr.mxu0 0.0
        %7912 = vmatpush1.msra.mxu0 %v7874
        %7913 = vmatprep.subr.mxu0 0.0
        %7914 = vmatpush2.msra.mxu0 0.0
        %7915 = vmatprep.subr.mxu0 0.0
        %7916 = vmatpush2.msra.mxu0 0.0
        %7917 = vmatprep.subr.mxu0 0.0
        %7918 = vmatpush2.msra.mxu0 0.0
        %7919 = vmatprep.subr.mxu0 0.0
        %7920 = vmatpush2.msra.mxu0 0.0
        %7921 = vmatprep.subr.mxu0 0.0
        %7922 = vmatpush2.msra.mxu0 0.0
        %7923 = vmatprep.subr.mxu0 0.0
        %7924 = vmatpush2.msra.mxu0 0.0
        %7925 = vmatprep.subr.mxu0 0.0
        %7926 = vmatpush2.msra.mxu0 0.0
        %7927 = vmatprep.subr.mxu0 0.0
        %7928 = vmatpush2.msra.mxu0 0.0
        %7929 = vmatprep.subr.mxu0 0.0
        %7930 = vmatpush2.msra.mxu0 0.0
        %7931 = vmatprep.subr.mxu0 0.0
        %7932 = vmatpush2.msra.mxu0 0.0
        %7933 = vmatprep.subr.mxu0 0.0
        %7934 = vmatpush2.msra.mxu0 0.0
        %7935 = vmatprep.subr.mxu0 0.0
        %7936 = vmatpush2.msra.mxu0 0.0
        %7937 = vmatprep.subr.mxu0 0.0
        %7938 = vmatpush2.msra.mxu0 0.0
        %7939 = vmatprep.subr.mxu0 0.0
        %7940 = vmatpush2.msra.mxu0 0.0
        %7941 = vmatprep.subr.mxu0 0.0
        %7942 = vmatpush2.msra.mxu0 0.0
        %7943 = vmatprep.subr.mxu0 0.0
        %7944 = vmatpush2.msra.mxu0 0.0
        %7945 = vmatprep.mubr.f32.mxu0 0.0
        %7946 = vmatmul.mubr.f32.gmra.mxu0 %v7879
        %v7947 = vpop.f32.mrf.mxu0
        %v7948 = vadd.f32 0.0, %v7947
        %v7949 = vpop.f32.mrf.mxu0
        %7950 = vdwg.mxu0
        %v7951 = vadd.f32 %v7872, %v7948
        %s7952 = scalar_lea.vmem %s3, 224
        %v7953 = vld [vmem:[%s7952] sm:$0xff]
        %v7954 = vld [vmem:[%s7952 + $0x8] sm:$0xff]
        %v7955 = vld [vmem:[%s7952 + $0x10] sm:$0xff]
        %v7956 = vld [vmem:[%s7952 + $0x18] sm:$0xff]
        %v7958 = vsel %vm7410, %v7400, 0
        %7960 = vmatprep.subr.mxu0 0.0
        %7961 = vmatpush1.msra.mxu0 0.0
        %7962 = vmatprep.subr.mxu0 0.0
        %7963 = vmatpush1.msra.mxu0 0.0
        %7964 = vmatprep.subr.mxu0 0.0
        %7965 = vmatpush1.msra.mxu0 0.0
        %7966 = vmatprep.subr.mxu0 0.0
        %7967 = vmatpush1.msra.mxu0 0.0
        %7968 = vmatprep.subr.mxu0 0.0
        %7969 = vmatpush1.msra.mxu0 0.0
        %7970 = vmatprep.subr.mxu0 0.0
        %7971 = vmatpush1.msra.mxu0 0.0
        %7972 = vmatprep.subr.mxu0 0.0
        %7973 = vmatpush1.msra.mxu0 0.0
        %7974 = vmatprep.subr.mxu0 0.0
        %7975 = vmatpush1.msra.mxu0 0.0
        %7976 = vmatprep.subr.mxu0 0.0
        %7977 = vmatpush1.msra.mxu0 0.0
        %7978 = vmatprep.subr.mxu0 0.0
        %7979 = vmatpush1.msra.mxu0 0.0
        %7980 = vmatprep.subr.mxu0 0.0
        %7981 = vmatpush1.msra.mxu0 0.0
        %7982 = vmatprep.subr.mxu0 0.0
        %7983 = vmatpush1.msra.mxu0 0.0
        %7984 = vmatprep.subr.mxu0 0.0
        %7985 = vmatpush1.msra.mxu0 %v7956
        %7986 = vmatprep.subr.mxu0 0.0
        %7987 = vmatpush1.msra.mxu0 %v7955
        %7988 = vmatprep.subr.mxu0 0.0
        %7989 = vmatpush1.msra.mxu0 %v7954
        %7990 = vmatprep.subr.mxu0 0.0
        %7991 = vmatpush1.msra.mxu0 %v7953
        %7992 = vmatprep.subr.mxu0 0.0
        %7993 = vmatpush2.msra.mxu0 0.0
        %7994 = vmatprep.subr.mxu0 0.0
        %7995 = vmatpush2.msra.mxu0 0.0
        %7996 = vmatprep.subr.mxu0 0.0
        %7997 = vmatpush2.msra.mxu0 0.0
        %7998 = vmatprep.subr.mxu0 0.0
        %7999 = vmatpush2.msra.mxu0 0.0
        %8000 = vmatprep.subr.mxu0 0.0
        %8001 = vmatpush2.msra.mxu0 0.0
        %8002 = vmatprep.subr.mxu0 0.0
        %8003 = vmatpush2.msra.mxu0 0.0
        %8004 = vmatprep.subr.mxu0 0.0
        %8005 = vmatpush2.msra.mxu0 0.0
        %8006 = vmatprep.subr.mxu0 0.0
        %8007 = vmatpush2.msra.mxu0 0.0
        %8008 = vmatprep.subr.mxu0 0.0
        %8009 = vmatpush2.msra.mxu0 0.0
        %8010 = vmatprep.subr.mxu0 0.0
        %8011 = vmatpush2.msra.mxu0 0.0
        %8012 = vmatprep.subr.mxu0 0.0
        %8013 = vmatpush2.msra.mxu0 0.0
        %8014 = vmatprep.subr.mxu0 0.0
        %8015 = vmatpush2.msra.mxu0 0.0
        %8016 = vmatprep.subr.mxu0 0.0
        %8017 = vmatpush2.msra.mxu0 0.0
        %8018 = vmatprep.subr.mxu0 0.0
        %8019 = vmatpush2.msra.mxu0 0.0
        %8020 = vmatprep.subr.mxu0 0.0
        %8021 = vmatpush2.msra.mxu0 0.0
        %8022 = vmatprep.subr.mxu0 0.0
        %8023 = vmatpush2.msra.mxu0 0.0
        %8024 = vmatprep.mubr.f32.mxu0 0.0
        %8025 = vmatmul.mubr.f32.gmra.mxu0 %v7958
        %v8026 = vpop.f32.mrf.mxu0
        %v8027 = vadd.f32 0.0, %v8026
        %v8028 = vpop.f32.mrf.mxu0
        %8029 = vdwg.mxu0
        %v8030 = vadd.f32 %v7951, %v8027
        %v8031 = vld [vmem:[%s4] sm:$0x1]
        %v8033 = vlaneseq
        %v8034 = vshrl.u32 %v8033, 7
        %v8035 = vsub.s32 0, %v8034
        %v8036 = vrot.slane %v8031, %v8035
        %v8038 = vadd.f32 %v8030, %v8036
        %8039 = vst.msk [vmem:[%s254] sm:$0xff] %vm7410, %v8038
        %s8040 = sand.u32 %s147, 1
        %s8041 = scalar_lea.sflag [#allocation3], %s8040
        %s8042 = sand.u32 %s147, 1
        %s8043 = smul.addr %s8042, 8
        %s8044 = scalar_lea.vmem [#allocation2], %s8043
        // Predicated region
        $region41: #{saccadic_patch_embeddings.1} parent=39 // pred_check
          %p8045 = pneg %p157
        $region42: #{saccadic_patch_embeddings.1} parent=39 // pred_check_branch
          %8047 = sbr.rel (%p8045) target = $region44
        $region43: #{saccadic_patch_embeddings.1} parent=39 // pred_region
          %s8049 = ssub.s32 128, 128
          %8050 = vsyncadd %s8041, %s8049
          %s8051 = smul.addr %s19, 128
          %s8052 = scalar_lea.hbm %s5, %s8051
          %s8054 = sshll.u32 %s8044, 4
          %s8055 = int_to_ptr.vmem [resolvable:$true] %s8054
          %8057 = dma.vmem_to_hbm [thread:$0]  %s8055, 128, %s8052, %s8041
        $region44: #{saccadic_patch_embeddings.1} parent=39 // pred_fallthru
          _
      $region40: #{saccadic_patch_embeddings.1} parent=5 // pred_fallthru
        _
      %p8058 = scmp.le.s32.totalorder 2, %s14
      // Predicated region
      $region45: #{saccadic_patch_embeddings.1} parent=5 // pred_check
        %p8059 = pneg %p8058
      $region46: #{saccadic_patch_embeddings.1} parent=5 // pred_check_branch
        %8061 = sbr.rel (%p8059) target = $region48
      $region47: #{saccadic_patch_embeddings.1} parent=5 // pred_region
        %s8062 = ssub.s32 %s14, 2
        // Predicated region
        $region49: #{saccadic_patch_embeddings.1} parent=47 // pred_check
          %p8063 = pneg %p163
        $region50: #{saccadic_patch_embeddings.1} parent=47 // pred_check_branch
          %8065 = sbr.rel (%p8063) target = $region52
        $region51: #{saccadic_patch_embeddings.1} parent=47 // pred_region
          %s8066 = sand.u32 %s148, 1
          %s8067 = scalar_lea.sflag [#allocation3], %s8066
          %s8068 = sand.u32 %s148, 1
          %s8069 = smul.addr %s8068, 8
          %s8070 = scalar_lea.vmem [#allocation2], %s8069
          %8071 = dma.done %s8067, 128
        $region52: #{saccadic_patch_embeddings.1} parent=47 // pred_fallthru
          _
      $region48: #{saccadic_patch_embeddings.1} parent=5 // pred_fallthru
        _
    $region6: #{saccadic_patch_embeddings.1} parent=1 // loop_footer
      %s18 = sadd.s32 1, %s14
    $region7: #{saccadic_patch_embeddings.1} parent=1 // loop_footer_branch
      %13 = sbr.rel target = $region3
    $region8: #{saccadic_patch_embeddings.1} parent=1 // loop_exit
      _
    %8072 = vsyncpa [#allocation3], 1
    %s8073 = scalar_lea.sflag [#allocation3], 1
    %8074 = vsyncpa %s8073, 1

</llo_original>
